<compile_context>
chip_gen: v5e
topology: v5e:2x2
jax: 0.10.0
libtpu: 0.0.40
codegen_flags: <defaults>
</compile_context>

<pallas_src>
import functools

import numpy as np
import jax
import jax.numpy as jnp
from jax.experimental import pallas as pl
from jax.experimental.pallas import tpu as pltpu

# ---------------- MS-SSIM constants (pytorch_msssim defaults) ----------------
WIN_SIZE = 11
WIN_SIGMA = 1.5
DATA_RANGE = 1.0
K1, K2 = 0.01, 0.03
C1 = (K1 * DATA_RANGE) ** 2
C2 = (K2 * DATA_RANGE) ** 2
MS_WEIGHTS = np.array([0.0448, 0.2856, 0.3001, 0.2363, 0.1333], np.float32)
LEVELS = MS_WEIGHTS.shape[0]


def _gauss_1d(size=WIN_SIZE, sigma=WIN_SIGMA):
    coords = np.arange(size, dtype=np.float64) - size // 2
    g = np.exp(-(coords ** 2) / (2.0 * sigma ** 2))
    g /= g.sum()
    return g.astype(np.float32)


def _band_matrix(n_out, n_in, w):
    """[n_out, n_in] matrix M with M[i, i:i+len(w)] = w  (valid 1-D conv)."""
    M = np.zeros((n_out, n_in), np.float32)
    for i in range(n_out):
        M[i, i:i + w.shape[0]] = w
    return M


def _pool_matrix(n):
    """[n//2, n] matrix implementing 2-tap mean pooling (stride 2)."""
    M = np.zeros((n // 2, n), np.float32)
    idx = np.arange(n // 2)
    M[idx, 2 * idx] = 0.5
    M[idx, 2 * idx + 1] = 0.5
    return M


def _build_const_mats(H, W):
    """Per-level bf16-friendly constant matrices.

    ah[l]: [Hp_l, Hs_l]  left Gaussian filter (cols zero-padded for padded rows)
    r[l] : [W_l, Wp_l + W_l//2]  = [Aw | Dw]  (Gaussian right-filter + 2x2 pool;
           last level has no Dw columns)
    dh[l]: [Hs_{l+1}, Hs_l]  left 2x2 pooling, zero rows/cols for padding.
    Stored row counts Hs are rounded up to multiples of 8 (padding rows are
    zero and ignored via the zero columns of ah/dh).
    """
    w1d = _gauss_1d()
    ah_list, r_list, dh_list = [], [], []
    h, w, hs = H, W, H
    for lvl in range(LEVELS):
        hp, wp = h - WIN_SIZE + 1, w - WIN_SIZE + 1
        Ah = _band_matrix(hp, h, w1d)
        Ah = np.pad(Ah, ((0, 0), (0, hs - h)))
        ah_list.append(Ah)
        Aw = _band_matrix(wp, w, w1d).T                       # [w, wp]
        if lvl < LEVELS - 1:
            assert h % 2 == 0 and w % 2 == 0
            r_list.append(np.concatenate([Aw, _pool_matrix(w).T], axis=1))
            h_next = h // 2
            hs_next = ((h_next + 7) // 8) * 8
            Dh = _pool_matrix(h)                              # [h//2, h]
            Dh = np.pad(Dh, ((0, hs_next - h_next), (0, hs - h)))
            dh_list.append(Dh)
            h, w, hs = h_next, w // 2, hs_next
        else:
            r_list.append(Aw)
    return ah_list, r_list, dh_list


# --------------------------- Fused Pallas kernel ------------------------------
def _msssim_kernel(x_ref, y_ref, *refs):
    """One grid step = one image, all LEVELS scales computed in VMEM."""
    L = LEVELS
    ah_refs = refs[0:L]                      # bf16 [Hp_l, Hs_l]
    r_refs = refs[L:2 * L]                   # bf16 [W_l, Wp_l (+ W_l//2)]
    dh_refs = refs[2 * L:3 * L - 1]          # bf16 [Hs_{l+1}, Hs_l]
    out_ref = refs[3 * L - 1]                # f32  (1, 8, 128)

    # Center at 0.5: sigma = E[(x-c)^2] - E[x-c]^2 is shift-invariant and this
    # keeps the bf16 matmul path free of large cancellation; mu is re-shifted
    # below for the luminance term.  Pooling preserves centering (weights sum 1).
    x = x_ref[0, 0].astype(jnp.float32) - 0.5
    y = y_ref[0, 0].astype(jnp.float32) - 0.5

    row_idx = jax.lax.broadcasted_iota(jnp.int32, (8, 128), 0)   # hoisted once
    vals = jnp.zeros((8, 128), jnp.float32)

    for lvl in range(L):
        Hs, W = x.shape                      # stored rows (8-aligned), width
        Wp = W - WIN_SIZE + 1                # valid Gaussian output width
        Ah = ah_refs[lvl][...]               # bf16 [Hp, Hs]
        R = r_refs[lvl][...]                 # bf16 [W, Wp (+ W//2)]

        xb = x.astype(jnp.bfloat16)
        yb = y.astype(jnp.bfloat16)
        slab = jnp.concatenate(
            [xb, yb,
             (x * x).astype(jnp.bfloat16),
             (y * y).astype(jnp.bfloat16),
             (x * y).astype(jnp.bfloat16)], axis=0)                   # [5*Hs, W]
        # One bf16 MXU call does both the Gaussian right-filter (cols :Wp) and,
        # on levels < L-1, the folded 2x2 avg-pool right half (cols Wp:).
        slab_r = jnp.dot(slab, R, preferred_element_type=jnp.float32)

        g = slab_r[:, :Wp].astype(jnp.bfloat16)

        def lfilt(i):
            return jnp.dot(Ah, g[i * Hs:(i + 1) * Hs],
                           preferred_element_type=jnp.float32)

        mu_x, mu_y, sxx, syy, sxy = lfilt(0), lfilt(1), lfilt(2), lfilt(3), lfilt(4)

        sigma_x = sxx - mu_x * mu_x          # compensation == 1.0
        sigma_y = syy - mu_y * mu_y
        sigma_xy = sxy - mu_x * mu_y
        cs_map = (2.0 * sigma_xy + C2) * pl.reciprocal(
            sigma_x + sigma_y + C2, approx=True)
        if lvl < L - 1:
            val = jnp.mean(cs_map)
        else:
            mx = mu_x + 0.5                  # undo centering for luminance term
            my = mu_y + 0.5
            lum = (2.0 * mx * my + C1) * pl.reciprocal(
                mx * mx + my * my + C1, approx=True)
            val = jnp.mean(lum * cs_map)
        val = jnp.maximum(val, 0.0)          # relu, as in pytorch_msssim
        vals = jnp.where(row_idx == lvl, val, vals)

        if lvl < L - 1:
            # 2x2 avg-pool downsample: the right half was already computed in
            # the slab matmul; only the two small left matmuls remain.
            Dh = dh_refs[lvl][...]                                    # [Hs', Hs]
            pooled_r = slab_r[0:2 * Hs, Wp:].astype(jnp.bfloat16)     # [2Hs, W//2]
            x = jnp.dot(Dh, pooled_r[0:Hs], preferred_element_type=jnp.float32)
            y = jnp.dot(Dh, pooled_r[Hs:2 * Hs], preferred_element_type=jnp.float32)

    out_ref[0] = vals


@functools.partial(jax.jit, static_argnames=("reduction",))
def g_ms_ssim_loss(output, target, reduction="mean"):
    """Equivalent of G_MS_SSIM.forward: 1 - MS_SSIM(green, green), data_range=1."""
    B, C, H, W = output.shape
    assert C >= 2, "need a green channel at index 1"
    assert min(H, W) > (WIN_SIZE - 1) * 2 ** (LEVELS - 1), \
        "image too small for 5-scale MS-SSIM"
    # TODO(synk): odd spatial dims at any scale would need avg_pool edge
    # padding like pytorch_msssim; this kernel assumes even H, W per scale.
    assert H % 16 == 0 and W % 16 == 0, "H, W must stay even across 4 poolings"

    ah_np, r_np, dh_np = _build_const_mats(H, W)
    const_mats = [jnp.asarray(m, jnp.bfloat16) for m in (ah_np + r_np + dh_np)]

    # Green channel (index 1) is picked straight out of the NCHW tensor by the
    # BlockSpec index_map -> no wrapper slice / extra HBM traffic.
    green_spec = pl.BlockSpec((1, 1, H, W), lambda b: (b, 1, 0, 0))
    in_specs = [green_spec, green_spec] + [
        pl.BlockSpec(m.shape, lambda b: (0, 0)) for m in const_mats]

    vals = pl.pallas_call(
        _msssim_kernel,
        out_shape=jax.ShapeDtypeStruct((B, 8, 128), jnp.float32),
        grid=(B,),
        in_specs=in_specs,
        out_specs=pl.BlockSpec((1, 8, 128), lambda b: (b, 0, 0)),
        compiler_params=pltpu.CompilerParams(
            dimension_semantics=("parallel",),
            vmem_limit_bytes=32 * 1024 * 1024),
    )(output, target, *const_mats)

    # Tiny epilogue: weighted product over levels, then mean over batch.
    level_vals = vals[:, :LEVELS, 0]                       # [B, LEVELS] (relu'd)
    weights = jnp.asarray(MS_WEIGHTS)[None, :]             # [1, LEVELS]
    ms_ssim_val = jnp.prod(level_vals ** weights, axis=1)  # [B]
    loss = 1.0 - jnp.mean(ms_ssim_val)                     # size_average=True
    if reduction == "mean":
        return jnp.mean(loss)
    elif reduction == "sum":
        return jnp.sum(loss)
    return loss


if __name__ == "__main__":
    # MS-SSIM with 5 scales and an 11-tap window needs spatial > 160,
    # so 192x192 is the smallest convenient size.
    key = jax.random.PRNGKey(0)
    k1, k2 = jax.random.split(key)
    B, C, Hs_, Ws_ = 2, 4, 192, 192
    output = jax.random.uniform(k1, (B, C, Hs_, Ws_), jnp.float32)
    target = jax.random.uniform(k2, (B, C, Hs_, Ws_), jnp.float32)

    loss = g_ms_ssim_loss(output, target)
    loss = jax.block_until_ready(loss)
    assert jnp.isfinite(loss), "loss is not finite"
    print("KERNEL_OK")
</pallas_src>

<mosaic_0001>
module attributes {stable_mosaic.version = 11 : i64} {
  func.func @_msssim_kernel(%arg0: i32, %arg1: memref<1x1x192x192xf32, #tpu.memory_space<vmem>>, %arg2: memref<1x1x192x192xf32, #tpu.memory_space<vmem>>, %arg3: memref<182x192xbf16, #tpu.memory_space<vmem>>, %arg4: memref<86x96xbf16, #tpu.memory_space<vmem>>, %arg5: memref<38x48xbf16, #tpu.memory_space<vmem>>, %arg6: memref<14x24xbf16, #tpu.memory_space<vmem>>, %arg7: memref<2x16xbf16, #tpu.memory_space<vmem>>, %arg8: memref<192x278xbf16, #tpu.memory_space<vmem>>, %arg9: memref<96x134xbf16, #tpu.memory_space<vmem>>, %arg10: memref<48x62xbf16, #tpu.memory_space<vmem>>, %arg11: memref<24x26xbf16, #tpu.memory_space<vmem>>, %arg12: memref<12x2xbf16, #tpu.memory_space<vmem>>, %arg13: memref<96x192xbf16, #tpu.memory_space<vmem>>, %arg14: memref<48x96xbf16, #tpu.memory_space<vmem>>, %arg15: memref<24x48xbf16, #tpu.memory_space<vmem>>, %arg16: memref<16x24xbf16, #tpu.memory_space<vmem>>, %arg17: memref<1x8x128xf32, #tpu.memory_space<vmem>>) attributes {dimension_semantics = [#tpu.dimension_semantics<parallel>], iteration_bounds = array<i64: 2>, scalar_prefetch = 0 : i64, scratch_operands = 0 : i64, tpu.core_type = #tpu.core_type<tc>, window_params = [{transform_indices = @transform_0, window_bounds = array<i64: 1, 1, 192, 192>}, {transform_indices = @transform_1, window_bounds = array<i64: 1, 1, 192, 192>}, {pipeline_mode = #tpu.pipeline_mode<synchronous>, transform_indices = @transform_2, window_bounds = array<i64: 182, 192>}, {pipeline_mode = #tpu.pipeline_mode<synchronous>, transform_indices = @transform_3, window_bounds = array<i64: 86, 96>}, {pipeline_mode = #tpu.pipeline_mode<synchronous>, transform_indices = @transform_4, window_bounds = array<i64: 38, 48>}, {pipeline_mode = #tpu.pipeline_mode<synchronous>, transform_indices = @transform_5, window_bounds = array<i64: 14, 24>}, {pipeline_mode = #tpu.pipeline_mode<synchronous>, transform_indices = @transform_6, window_bounds = array<i64: 2, 16>}, {pipeline_mode = #tpu.pipeline_mode<synchronous>, transform_indices = @transform_7, window_bounds = array<i64: 192, 278>}, {pipeline_mode = #tpu.pipeline_mode<synchronous>, transform_indices = @transform_8, window_bounds = array<i64: 96, 134>}, {pipeline_mode = #tpu.pipeline_mode<synchronous>, transform_indices = @transform_9, window_bounds = array<i64: 48, 62>}, {pipeline_mode = #tpu.pipeline_mode<synchronous>, transform_indices = @transform_10, window_bounds = array<i64: 24, 26>}, {pipeline_mode = #tpu.pipeline_mode<synchronous>, transform_indices = @transform_11, window_bounds = array<i64: 12, 2>}, {pipeline_mode = #tpu.pipeline_mode<synchronous>, transform_indices = @transform_12, window_bounds = array<i64: 96, 192>}, {pipeline_mode = #tpu.pipeline_mode<synchronous>, transform_indices = @transform_13, window_bounds = array<i64: 48, 96>}, {pipeline_mode = #tpu.pipeline_mode<synchronous>, transform_indices = @transform_14, window_bounds = array<i64: 24, 48>}, {pipeline_mode = #tpu.pipeline_mode<synchronous>, transform_indices = @transform_15, window_bounds = array<i64: 16, 24>}, {transform_indices = @transform_16, window_bounds = array<i64: 1, 8, 128>}]} {
    %c0 = arith.constant 0 : index
    %c0_0 = arith.constant 0 : index
    %c0_1 = arith.constant 0 : index
    %c0_2 = arith.constant 0 : index
    %0 = vector.load %arg1[%c0, %c0_0, %c0_1, %c0_2] : memref<1x1x192x192xf32, #tpu.memory_space<vmem>>, vector<1x1x192x192xf32>
    %1 = vector.shape_cast %0 : vector<1x1x192x192xf32> to vector<192x192xf32>
    %cst = arith.constant 5.000000e-01 : f32
    %2 = vector.broadcast %cst : f32 to vector<192x192xf32>
    %3 = arith.subf %1, %2 : vector<192x192xf32>
    %c0_3 = arith.constant 0 : index
    %c0_4 = arith.constant 0 : index
    %c0_5 = arith.constant 0 : index
    %c0_6 = arith.constant 0 : index
    %4 = vector.load %arg2[%c0_3, %c0_4, %c0_5, %c0_6] : memref<1x1x192x192xf32, #tpu.memory_space<vmem>>, vector<1x1x192x192xf32>
    %5 = vector.shape_cast %4 : vector<1x1x192x192xf32> to vector<192x192xf32>
    %cst_7 = arith.constant 5.000000e-01 : f32
    %6 = vector.broadcast %cst_7 : f32 to vector<192x192xf32>
    %7 = arith.subf %5, %6 : vector<192x192xf32>
    %8 = tpu.iota {dimensions = array<i32: 0>} : vector<8x128xi32>
    %cst_8 = arith.constant 0.000000e+00 : f32
    %9 = vector.broadcast %cst_8 : f32 to vector<8x128xf32>
    %c0_9 = arith.constant 0 : index
    %c0_10 = arith.constant 0 : index
    %10 = vector.load %arg3[%c0_9, %c0_10] : memref<182x192xbf16, #tpu.memory_space<vmem>>, vector<182x192xbf16>
    %c0_11 = arith.constant 0 : index
    %c0_12 = arith.constant 0 : index
    %11 = vector.load %arg8[%c0_11, %c0_12] : memref<192x278xbf16, #tpu.memory_space<vmem>>, vector<192x278xbf16>
    %12 = arith.truncf %3 : vector<192x192xf32> to vector<192x192xbf16>
    %13 = arith.truncf %7 : vector<192x192xf32> to vector<192x192xbf16>
    %14 = arith.mulf %3, %3 : vector<192x192xf32>
    %15 = arith.truncf %14 : vector<192x192xf32> to vector<192x192xbf16>
    %16 = arith.mulf %7, %7 : vector<192x192xf32>
    %17 = arith.truncf %16 : vector<192x192xf32> to vector<192x192xbf16>
    %18 = arith.mulf %3, %7 : vector<192x192xf32>
    %19 = arith.truncf %18 : vector<192x192xf32> to vector<192x192xbf16>
    %20 = tpu.concatenate %12, %13, %15, %17, %19 in 0 : vector<192x192xbf16>, vector<192x192xbf16>, vector<192x192xbf16>, vector<192x192xbf16>, vector<192x192xbf16> -> vector<960x192xbf16>
    %cst_13 = arith.constant dense<0.000000e+00> : vector<960x278xf32>
    %21 = tpu.matmul %20, %11, %cst_13 {dimension_numbers = #tpu.dot_dimension_numbers<[1], [0], [0], [1], [0, 0, 1, 1], [], []>} : vector<960x192xbf16>, vector<192x278xbf16>, vector<960x278xf32> -> vector<960x278xf32>
    %22 = vector.extract_strided_slice %21 {offsets = [0, 0], sizes = [960, 182], strides = [1, 1]} : vector<960x278xf32> to vector<960x182xf32>
    %23 = arith.truncf %22 : vector<960x182xf32> to vector<960x182xbf16>
    %24 = vector.extract_strided_slice %23 {offsets = [0, 0], sizes = [192, 182], strides = [1, 1]} : vector<960x182xbf16> to vector<192x182xbf16>
    %cst_14 = arith.constant dense<0.000000e+00> : vector<182x182xf32>
    %25 = tpu.matmul %10, %24, %cst_14 {dimension_numbers = #tpu.dot_dimension_numbers<[1], [0], [0], [1], [0, 0, 1, 1], [], []>} : vector<182x192xbf16>, vector<192x182xbf16>, vector<182x182xf32> -> vector<182x182xf32>
    %26 = vector.extract_strided_slice %23 {offsets = [192, 0], sizes = [192, 182], strides = [1, 1]} : vector<960x182xbf16> to vector<192x182xbf16>
    %cst_15 = arith.constant dense<0.000000e+00> : vector<182x182xf32>
    %27 = tpu.matmul %10, %26, %cst_15 {dimension_numbers = #tpu.dot_dimension_numbers<[1], [0], [0], [1], [0, 0, 1, 1], [], []>} : vector<182x192xbf16>, vector<192x182xbf16>, vector<182x182xf32> -> vector<182x182xf32>
    %28 = vector.extract_strided_slice %23 {offsets = [384, 0], sizes = [192, 182], strides = [1, 1]} : vector<960x182xbf16> to vector<192x182xbf16>
    %cst_16 = arith.constant dense<0.000000e+00> : vector<182x182xf32>
    %29 = tpu.matmul %10, %28, %cst_16 {dimension_numbers = #tpu.dot_dimension_numbers<[1], [0], [0], [1], [0, 0, 1, 1], [], []>} : vector<182x192xbf16>, vector<192x182xbf16>, vector<182x182xf32> -> vector<182x182xf32>
    %30 = vector.extract_strided_slice %23 {offsets = [576, 0], sizes = [192, 182], strides = [1, 1]} : vector<960x182xbf16> to vector<192x182xbf16>
    %cst_17 = arith.constant dense<0.000000e+00> : vector<182x182xf32>
    %31 = tpu.matmul %10, %30, %cst_17 {dimension_numbers = #tpu.dot_dimension_numbers<[1], [0], [0], [1], [0, 0, 1, 1], [], []>} : vector<182x192xbf16>, vector<192x182xbf16>, vector<182x182xf32> -> vector<182x182xf32>
    %32 = vector.extract_strided_slice %23 {offsets = [768, 0], sizes = [192, 182], strides = [1, 1]} : vector<960x182xbf16> to vector<192x182xbf16>
    %cst_18 = arith.constant dense<0.000000e+00> : vector<182x182xf32>
    %33 = tpu.matmul %10, %32, %cst_18 {dimension_numbers = #tpu.dot_dimension_numbers<[1], [0], [0], [1], [0, 0, 1, 1], [], []>} : vector<182x192xbf16>, vector<192x182xbf16>, vector<182x182xf32> -> vector<182x182xf32>
    %34 = arith.mulf %25, %25 : vector<182x182xf32>
    %35 = arith.subf %29, %34 : vector<182x182xf32>
    %36 = arith.mulf %27, %27 : vector<182x182xf32>
    %37 = arith.subf %31, %36 : vector<182x182xf32>
    %38 = arith.mulf %25, %27 : vector<182x182xf32>
    %39 = arith.subf %33, %38 : vector<182x182xf32>
    %cst_19 = arith.constant 2.000000e+00 : f32
    %40 = vector.broadcast %cst_19 : f32 to vector<182x182xf32>
    %41 = arith.mulf %40, %39 : vector<182x182xf32>
    %cst_20 = arith.constant 8.99999984E-4 : f32
    %42 = vector.broadcast %cst_20 : f32 to vector<182x182xf32>
    %43 = arith.addf %41, %42 : vector<182x182xf32>
    %44 = arith.addf %35, %37 : vector<182x182xf32>
    %cst_21 = arith.constant 8.99999984E-4 : f32
    %45 = vector.broadcast %cst_21 : f32 to vector<182x182xf32>
    %46 = arith.addf %44, %45 : vector<182x182xf32>
    %47 = tpu.reciprocal %46 {approx = true} : vector<182x182xf32> -> vector<182x182xf32>
    %48 = arith.mulf %43, %47 : vector<182x182xf32>
    %49 = vector.shape_cast %48 : vector<182x182xf32> to vector<1x182x182xf32>
    %cst_22 = arith.constant dense<0.000000e+00> : vector<1xf32>
    %50 = vector.multi_reduction <add>, %49, %cst_22 [1, 2] : vector<1x182x182xf32> to vector<1xf32>
    %51 = vector.shape_cast %50 : vector<1xf32> to vector<1x1x1xf32>
    %52 = vector.extract %51[0, 0, 0] : f32 from vector<1x1x1xf32>
    %cst_23 = arith.constant 3.312400e+04 : f32
    %53 = arith.divf %52, %cst_23 : f32
    %cst_24 = arith.constant 0.000000e+00 : f32
    %54 = arith.maximumf %53, %cst_24 : f32
    %c0_i32 = arith.constant 0 : i32
    %55 = vector.broadcast %c0_i32 : i32 to vector<8x128xi32>
    %56 = arith.cmpi eq, %8, %55 : vector<8x128xi32>
    %57 = vector.broadcast %54 : f32 to vector<8x128xf32>
    %58 = arith.select %56, %57, %9 : vector<8x128xi1>, vector<8x128xf32>
    %c0_25 = arith.constant 0 : index
    %c0_26 = arith.constant 0 : index
    %59 = vector.load %arg13[%c0_25, %c0_26] : memref<96x192xbf16, #tpu.memory_space<vmem>>, vector<96x192xbf16>
    %60 = vector.extract_strided_slice %21 {offsets = [0, 182], sizes = [384, 96], strides = [1, 1]} : vector<960x278xf32> to vector<384x96xf32>
    %61 = arith.truncf %60 : vector<384x96xf32> to vector<384x96xbf16>
    %62 = vector.extract_strided_slice %61 {offsets = [0, 0], sizes = [192, 96], strides = [1, 1]} : vector<384x96xbf16> to vector<192x96xbf16>
    %cst_27 = arith.constant dense<0.000000e+00> : vector<96x96xf32>
    %63 = tpu.matmul %59, %62, %cst_27 {dimension_numbers = #tpu.dot_dimension_numbers<[1], [0], [0], [1], [0, 0, 1, 1], [], []>} : vector<96x192xbf16>, vector<192x96xbf16>, vector<96x96xf32> -> vector<96x96xf32>
    %64 = vector.extract_strided_slice %61 {offsets = [192, 0], sizes = [192, 96], strides = [1, 1]} : vector<384x96xbf16> to vector<192x96xbf16>
    %cst_28 = arith.constant dense<0.000000e+00> : vector<96x96xf32>
    %65 = tpu.matmul %59, %64, %cst_28 {dimension_numbers = #tpu.dot_dimension_numbers<[1], [0], [0], [1], [0, 0, 1, 1], [], []>} : vector<96x192xbf16>, vector<192x96xbf16>, vector<96x96xf32> -> vector<96x96xf32>
    %c0_29 = arith.constant 0 : index
    %c0_30 = arith.constant 0 : index
    %66 = vector.load %arg4[%c0_29, %c0_30] : memref<86x96xbf16, #tpu.memory_space<vmem>>, vector<86x96xbf16>
    %c0_31 = arith.constant 0 : index
    %c0_32 = arith.constant 0 : index
    %67 = vector.load %arg9[%c0_31, %c0_32] : memref<96x134xbf16, #tpu.memory_space<vmem>>, vector<96x134xbf16>
    %68 = arith.truncf %63 : vector<96x96xf32> to vector<96x96xbf16>
    %69 = arith.truncf %65 : vector<96x96xf32> to vector<96x96xbf16>
    %70 = arith.mulf %63, %63 : vector<96x96xf32>
    %71 = arith.truncf %70 : vector<96x96xf32> to vector<96x96xbf16>
    %72 = arith.mulf %65, %65 : vector<96x96xf32>
    %73 = arith.truncf %72 : vector<96x96xf32> to vector<96x96xbf16>
    %74 = arith.mulf %63, %65 : vector<96x96xf32>
    %75 = arith.truncf %74 : vector<96x96xf32> to vector<96x96xbf16>
    %76 = tpu.concatenate %68, %69, %71, %73, %75 in 0 : vector<96x96xbf16>, vector<96x96xbf16>, vector<96x96xbf16>, vector<96x96xbf16>, vector<96x96xbf16> -> vector<480x96xbf16>
    %cst_33 = arith.constant dense<0.000000e+00> : vector<480x134xf32>
    %77 = tpu.matmul %76, %67, %cst_33 {dimension_numbers = #tpu.dot_dimension_numbers<[1], [0], [0], [1], [0, 0, 1, 1], [], []>} : vector<480x96xbf16>, vector<96x134xbf16>, vector<480x134xf32> -> vector<480x134xf32>
    %78 = vector.extract_strided_slice %77 {offsets = [0, 0], sizes = [480, 86], strides = [1, 1]} : vector<480x134xf32> to vector<480x86xf32>
    %79 = arith.truncf %78 : vector<480x86xf32> to vector<480x86xbf16>
    %80 = vector.extract_strided_slice %79 {offsets = [0, 0], sizes = [96, 86], strides = [1, 1]} : vector<480x86xbf16> to vector<96x86xbf16>
    %cst_34 = arith.constant dense<0.000000e+00> : vector<86x86xf32>
    %81 = tpu.matmul %66, %80, %cst_34 {dimension_numbers = #tpu.dot_dimension_numbers<[1], [0], [0], [1], [0, 0, 1, 1], [], []>} : vector<86x96xbf16>, vector<96x86xbf16>, vector<86x86xf32> -> vector<86x86xf32>
    %82 = vector.extract_strided_slice %79 {offsets = [96, 0], sizes = [96, 86], strides = [1, 1]} : vector<480x86xbf16> to vector<96x86xbf16>
    %cst_35 = arith.constant dense<0.000000e+00> : vector<86x86xf32>
    %83 = tpu.matmul %66, %82, %cst_35 {dimension_numbers = #tpu.dot_dimension_numbers<[1], [0], [0], [1], [0, 0, 1, 1], [], []>} : vector<86x96xbf16>, vector<96x86xbf16>, vector<86x86xf32> -> vector<86x86xf32>
    %84 = vector.extract_strided_slice %79 {offsets = [192, 0], sizes = [96, 86], strides = [1, 1]} : vector<480x86xbf16> to vector<96x86xbf16>
    %cst_36 = arith.constant dense<0.000000e+00> : vector<86x86xf32>
    %85 = tpu.matmul %66, %84, %cst_36 {dimension_numbers = #tpu.dot_dimension_numbers<[1], [0], [0], [1], [0, 0, 1, 1], [], []>} : vector<86x96xbf16>, vector<96x86xbf16>, vector<86x86xf32> -> vector<86x86xf32>
    %86 = vector.extract_strided_slice %79 {offsets = [288, 0], sizes = [96, 86], strides = [1, 1]} : vector<480x86xbf16> to vector<96x86xbf16>
    %cst_37 = arith.constant dense<0.000000e+00> : vector<86x86xf32>
    %87 = tpu.matmul %66, %86, %cst_37 {dimension_numbers = #tpu.dot_dimension_numbers<[1], [0], [0], [1], [0, 0, 1, 1], [], []>} : vector<86x96xbf16>, vector<96x86xbf16>, vector<86x86xf32> -> vector<86x86xf32>
    %88 = vector.extract_strided_slice %79 {offsets = [384, 0], sizes = [96, 86], strides = [1, 1]} : vector<480x86xbf16> to vector<96x86xbf16>
    %cst_38 = arith.constant dense<0.000000e+00> : vector<86x86xf32>
    %89 = tpu.matmul %66, %88, %cst_38 {dimension_numbers = #tpu.dot_dimension_numbers<[1], [0], [0], [1], [0, 0, 1, 1], [], []>} : vector<86x96xbf16>, vector<96x86xbf16>, vector<86x86xf32> -> vector<86x86xf32>
    %90 = arith.mulf %81, %81 : vector<86x86xf32>
    %91 = arith.subf %85, %90 : vector<86x86xf32>
    %92 = arith.mulf %83, %83 : vector<86x86xf32>
    %93 = arith.subf %87, %92 : vector<86x86xf32>
    %94 = arith.mulf %81, %83 : vector<86x86xf32>
    %95 = arith.subf %89, %94 : vector<86x86xf32>
    %cst_39 = arith.constant 2.000000e+00 : f32
    %96 = vector.broadcast %cst_39 : f32 to vector<86x86xf32>
    %97 = arith.mulf %96, %95 : vector<86x86xf32>
    %cst_40 = arith.constant 8.99999984E-4 : f32
    %98 = vector.broadcast %cst_40 : f32 to vector<86x86xf32>
    %99 = arith.addf %97, %98 : vector<86x86xf32>
    %100 = arith.addf %91, %93 : vector<86x86xf32>
    %cst_41 = arith.constant 8.99999984E-4 : f32
    %101 = vector.broadcast %cst_41 : f32 to vector<86x86xf32>
    %102 = arith.addf %100, %101 : vector<86x86xf32>
    %103 = tpu.reciprocal %102 {approx = true} : vector<86x86xf32> -> vector<86x86xf32>
    %104 = arith.mulf %99, %103 : vector<86x86xf32>
    %105 = vector.shape_cast %104 : vector<86x86xf32> to vector<1x86x86xf32>
    %cst_42 = arith.constant dense<0.000000e+00> : vector<1xf32>
    %106 = vector.multi_reduction <add>, %105, %cst_42 [1, 2] : vector<1x86x86xf32> to vector<1xf32>
    %107 = vector.shape_cast %106 : vector<1xf32> to vector<1x1x1xf32>
    %108 = vector.extract %107[0, 0, 0] : f32 from vector<1x1x1xf32>
    %cst_43 = arith.constant 7.396000e+03 : f32
    %109 = arith.divf %108, %cst_43 : f32
    %cst_44 = arith.constant 0.000000e+00 : f32
    %110 = arith.maximumf %109, %cst_44 : f32
    %c1_i32 = arith.constant 1 : i32
    %111 = vector.broadcast %c1_i32 : i32 to vector<8x128xi32>
    %112 = arith.cmpi eq, %8, %111 : vector<8x128xi32>
    %113 = vector.broadcast %110 : f32 to vector<8x128xf32>
    %114 = arith.select %112, %113, %58 : vector<8x128xi1>, vector<8x128xf32>
    %c0_45 = arith.constant 0 : index
    %c0_46 = arith.constant 0 : index
    %115 = vector.load %arg14[%c0_45, %c0_46] : memref<48x96xbf16, #tpu.memory_space<vmem>>, vector<48x96xbf16>
    %116 = vector.extract_strided_slice %77 {offsets = [0, 86], sizes = [192, 48], strides = [1, 1]} : vector<480x134xf32> to vector<192x48xf32>
    %117 = arith.truncf %116 : vector<192x48xf32> to vector<192x48xbf16>
    %118 = vector.extract_strided_slice %117 {offsets = [0, 0], sizes = [96, 48], strides = [1, 1]} : vector<192x48xbf16> to vector<96x48xbf16>
    %cst_47 = arith.constant dense<0.000000e+00> : vector<48x48xf32>
    %119 = tpu.matmul %115, %118, %cst_47 {dimension_numbers = #tpu.dot_dimension_numbers<[1], [0], [0], [1], [0, 0, 1, 1], [], []>} : vector<48x96xbf16>, vector<96x48xbf16>, vector<48x48xf32> -> vector<48x48xf32>
    %120 = vector.extract_strided_slice %117 {offsets = [96, 0], sizes = [96, 48], strides = [1, 1]} : vector<192x48xbf16> to vector<96x48xbf16>
    %cst_48 = arith.constant dense<0.000000e+00> : vector<48x48xf32>
    %121 = tpu.matmul %115, %120, %cst_48 {dimension_numbers = #tpu.dot_dimension_numbers<[1], [0], [0], [1], [0, 0, 1, 1], [], []>} : vector<48x96xbf16>, vector<96x48xbf16>, vector<48x48xf32> -> vector<48x48xf32>
    %c0_49 = arith.constant 0 : index
    %c0_50 = arith.constant 0 : index
    %122 = vector.load %arg5[%c0_49, %c0_50] : memref<38x48xbf16, #tpu.memory_space<vmem>>, vector<38x48xbf16>
    %c0_51 = arith.constant 0 : index
    %c0_52 = arith.constant 0 : index
    %123 = vector.load %arg10[%c0_51, %c0_52] : memref<48x62xbf16, #tpu.memory_space<vmem>>, vector<48x62xbf16>
    %124 = arith.truncf %119 : vector<48x48xf32> to vector<48x48xbf16>
    %125 = arith.truncf %121 : vector<48x48xf32> to vector<48x48xbf16>
    %126 = arith.mulf %119, %119 : vector<48x48xf32>
    %127 = arith.truncf %126 : vector<48x48xf32> to vector<48x48xbf16>
    %128 = arith.mulf %121, %121 : vector<48x48xf32>
    %129 = arith.truncf %128 : vector<48x48xf32> to vector<48x48xbf16>
    %130 = arith.mulf %119, %121 : vector<48x48xf32>
    %131 = arith.truncf %130 : vector<48x48xf32> to vector<48x48xbf16>
    %132 = tpu.concatenate %124, %125, %127, %129, %131 in 0 : vector<48x48xbf16>, vector<48x48xbf16>, vector<48x48xbf16>, vector<48x48xbf16>, vector<48x48xbf16> -> vector<240x48xbf16>
    %cst_53 = arith.constant dense<0.000000e+00> : vector<240x62xf32>
    %133 = tpu.matmul %132, %123, %cst_53 {dimension_numbers = #tpu.dot_dimension_numbers<[1], [0], [0], [1], [0, 0, 1, 1], [], []>} : vector<240x48xbf16>, vector<48x62xbf16>, vector<240x62xf32> -> vector<240x62xf32>
    %134 = vector.extract_strided_slice %133 {offsets = [0, 0], sizes = [240, 38], strides = [1, 1]} : vector<240x62xf32> to vector<240x38xf32>
    %135 = arith.truncf %134 : vector<240x38xf32> to vector<240x38xbf16>
    %136 = vector.extract_strided_slice %135 {offsets = [0, 0], sizes = [48, 38], strides = [1, 1]} : vector<240x38xbf16> to vector<48x38xbf16>
    %cst_54 = arith.constant dense<0.000000e+00> : vector<38x38xf32>
    %137 = tpu.matmul %122, %136, %cst_54 {dimension_numbers = #tpu.dot_dimension_numbers<[1], [0], [0], [1], [0, 0, 1, 1], [], []>} : vector<38x48xbf16>, vector<48x38xbf16>, vector<38x38xf32> -> vector<38x38xf32>
    %138 = vector.extract_strided_slice %135 {offsets = [48, 0], sizes = [48, 38], strides = [1, 1]} : vector<240x38xbf16> to vector<48x38xbf16>
    %cst_55 = arith.constant dense<0.000000e+00> : vector<38x38xf32>
    %139 = tpu.matmul %122, %138, %cst_55 {dimension_numbers = #tpu.dot_dimension_numbers<[1], [0], [0], [1], [0, 0, 1, 1], [], []>} : vector<38x48xbf16>, vector<48x38xbf16>, vector<38x38xf32> -> vector<38x38xf32>
    %140 = vector.extract_strided_slice %135 {offsets = [96, 0], sizes = [48, 38], strides = [1, 1]} : vector<240x38xbf16> to vector<48x38xbf16>
    %cst_56 = arith.constant dense<0.000000e+00> : vector<38x38xf32>
    %141 = tpu.matmul %122, %140, %cst_56 {dimension_numbers = #tpu.dot_dimension_numbers<[1], [0], [0], [1], [0, 0, 1, 1], [], []>} : vector<38x48xbf16>, vector<48x38xbf16>, vector<38x38xf32> -> vector<38x38xf32>
    %142 = vector.extract_strided_slice %135 {offsets = [144, 0], sizes = [48, 38], strides = [1, 1]} : vector<240x38xbf16> to vector<48x38xbf16>
    %cst_57 = arith.constant dense<0.000000e+00> : vector<38x38xf32>
    %143 = tpu.matmul %122, %142, %cst_57 {dimension_numbers = #tpu.dot_dimension_numbers<[1], [0], [0], [1], [0, 0, 1, 1], [], []>} : vector<38x48xbf16>, vector<48x38xbf16>, vector<38x38xf32> -> vector<38x38xf32>
    %144 = vector.extract_strided_slice %135 {offsets = [192, 0], sizes = [48, 38], strides = [1, 1]} : vector<240x38xbf16> to vector<48x38xbf16>
    %cst_58 = arith.constant dense<0.000000e+00> : vector<38x38xf32>
    %145 = tpu.matmul %122, %144, %cst_58 {dimension_numbers = #tpu.dot_dimension_numbers<[1], [0], [0], [1], [0, 0, 1, 1], [], []>} : vector<38x48xbf16>, vector<48x38xbf16>, vector<38x38xf32> -> vector<38x38xf32>
    %146 = arith.mulf %137, %137 : vector<38x38xf32>
    %147 = arith.subf %141, %146 : vector<38x38xf32>
    %148 = arith.mulf %139, %139 : vector<38x38xf32>
    %149 = arith.subf %143, %148 : vector<38x38xf32>
    %150 = arith.mulf %137, %139 : vector<38x38xf32>
    %151 = arith.subf %145, %150 : vector<38x38xf32>
    %cst_59 = arith.constant 2.000000e+00 : f32
    %152 = vector.broadcast %cst_59 : f32 to vector<38x38xf32>
    %153 = arith.mulf %152, %151 : vector<38x38xf32>
    %cst_60 = arith.constant 8.99999984E-4 : f32
    %154 = vector.broadcast %cst_60 : f32 to vector<38x38xf32>
    %155 = arith.addf %153, %154 : vector<38x38xf32>
    %156 = arith.addf %147, %149 : vector<38x38xf32>
    %cst_61 = arith.constant 8.99999984E-4 : f32
    %157 = vector.broadcast %cst_61 : f32 to vector<38x38xf32>
    %158 = arith.addf %156, %157 : vector<38x38xf32>
    %159 = tpu.reciprocal %158 {approx = true} : vector<38x38xf32> -> vector<38x38xf32>
    %160 = arith.mulf %155, %159 : vector<38x38xf32>
    %161 = vector.shape_cast %160 : vector<38x38xf32> to vector<1x38x38xf32>
    %cst_62 = arith.constant dense<0.000000e+00> : vector<1xf32>
    %162 = vector.multi_reduction <add>, %161, %cst_62 [1, 2] : vector<1x38x38xf32> to vector<1xf32>
    %163 = vector.shape_cast %162 : vector<1xf32> to vector<1x1x1xf32>
    %164 = vector.extract %163[0, 0, 0] : f32 from vector<1x1x1xf32>
    %cst_63 = arith.constant 1.444000e+03 : f32
    %165 = arith.divf %164, %cst_63 : f32
    %cst_64 = arith.constant 0.000000e+00 : f32
    %166 = arith.maximumf %165, %cst_64 : f32
    %c2_i32 = arith.constant 2 : i32
    %167 = vector.broadcast %c2_i32 : i32 to vector<8x128xi32>
    %168 = arith.cmpi eq, %8, %167 : vector<8x128xi32>
    %169 = vector.broadcast %166 : f32 to vector<8x128xf32>
    %170 = arith.select %168, %169, %114 : vector<8x128xi1>, vector<8x128xf32>
    %c0_65 = arith.constant 0 : index
    %c0_66 = arith.constant 0 : index
    %171 = vector.load %arg15[%c0_65, %c0_66] : memref<24x48xbf16, #tpu.memory_space<vmem>>, vector<24x48xbf16>
    %172 = vector.extract_strided_slice %133 {offsets = [0, 38], sizes = [96, 24], strides = [1, 1]} : vector<240x62xf32> to vector<96x24xf32>
    %173 = arith.truncf %172 : vector<96x24xf32> to vector<96x24xbf16>
    %174 = vector.extract_strided_slice %173 {offsets = [0, 0], sizes = [48, 24], strides = [1, 1]} : vector<96x24xbf16> to vector<48x24xbf16>
    %cst_67 = arith.constant dense<0.000000e+00> : vector<24x24xf32>
    %175 = tpu.matmul %171, %174, %cst_67 {dimension_numbers = #tpu.dot_dimension_numbers<[1], [0], [0], [1], [0, 0, 1, 1], [], []>} : vector<24x48xbf16>, vector<48x24xbf16>, vector<24x24xf32> -> vector<24x24xf32>
    %176 = vector.extract_strided_slice %173 {offsets = [48, 0], sizes = [48, 24], strides = [1, 1]} : vector<96x24xbf16> to vector<48x24xbf16>
    %cst_68 = arith.constant dense<0.000000e+00> : vector<24x24xf32>
    %177 = tpu.matmul %171, %176, %cst_68 {dimension_numbers = #tpu.dot_dimension_numbers<[1], [0], [0], [1], [0, 0, 1, 1], [], []>} : vector<24x48xbf16>, vector<48x24xbf16>, vector<24x24xf32> -> vector<24x24xf32>
    %c0_69 = arith.constant 0 : index
    %c0_70 = arith.constant 0 : index
    %178 = vector.load %arg6[%c0_69, %c0_70] : memref<14x24xbf16, #tpu.memory_space<vmem>>, vector<14x24xbf16>
    %c0_71 = arith.constant 0 : index
    %c0_72 = arith.constant 0 : index
    %179 = vector.load %arg11[%c0_71, %c0_72] : memref<24x26xbf16, #tpu.memory_space<vmem>>, vector<24x26xbf16>
    %180 = arith.truncf %175 : vector<24x24xf32> to vector<24x24xbf16>
    %181 = arith.truncf %177 : vector<24x24xf32> to vector<24x24xbf16>
    %182 = arith.mulf %175, %175 : vector<24x24xf32>
    %183 = arith.truncf %182 : vector<24x24xf32> to vector<24x24xbf16>
    %184 = arith.mulf %177, %177 : vector<24x24xf32>
    %185 = arith.truncf %184 : vector<24x24xf32> to vector<24x24xbf16>
    %186 = arith.mulf %175, %177 : vector<24x24xf32>
    %187 = arith.truncf %186 : vector<24x24xf32> to vector<24x24xbf16>
    %188 = tpu.concatenate %180, %181, %183, %185, %187 in 0 : vector<24x24xbf16>, vector<24x24xbf16>, vector<24x24xbf16>, vector<24x24xbf16>, vector<24x24xbf16> -> vector<120x24xbf16>
    %cst_73 = arith.constant dense<0.000000e+00> : vector<120x26xf32>
    %189 = tpu.matmul %188, %179, %cst_73 {dimension_numbers = #tpu.dot_dimension_numbers<[1], [0], [0], [1], [0, 0, 1, 1], [], []>} : vector<120x24xbf16>, vector<24x26xbf16>, vector<120x26xf32> -> vector<120x26xf32>
    %190 = vector.extract_strided_slice %189 {offsets = [0, 0], sizes = [120, 14], strides = [1, 1]} : vector<120x26xf32> to vector<120x14xf32>
    %191 = arith.truncf %190 : vector<120x14xf32> to vector<120x14xbf16>
    %192 = vector.extract_strided_slice %191 {offsets = [0, 0], sizes = [24, 14], strides = [1, 1]} : vector<120x14xbf16> to vector<24x14xbf16>
    %cst_74 = arith.constant dense<0.000000e+00> : vector<14x14xf32>
    %193 = tpu.matmul %178, %192, %cst_74 {dimension_numbers = #tpu.dot_dimension_numbers<[1], [0], [0], [1], [0, 0, 1, 1], [], []>} : vector<14x24xbf16>, vector<24x14xbf16>, vector<14x14xf32> -> vector<14x14xf32>
    %194 = vector.extract_strided_slice %191 {offsets = [24, 0], sizes = [24, 14], strides = [1, 1]} : vector<120x14xbf16> to vector<24x14xbf16>
    %cst_75 = arith.constant dense<0.000000e+00> : vector<14x14xf32>
    %195 = tpu.matmul %178, %194, %cst_75 {dimension_numbers = #tpu.dot_dimension_numbers<[1], [0], [0], [1], [0, 0, 1, 1], [], []>} : vector<14x24xbf16>, vector<24x14xbf16>, vector<14x14xf32> -> vector<14x14xf32>
    %196 = vector.extract_strided_slice %191 {offsets = [48, 0], sizes = [24, 14], strides = [1, 1]} : vector<120x14xbf16> to vector<24x14xbf16>
    %cst_76 = arith.constant dense<0.000000e+00> : vector<14x14xf32>
    %197 = tpu.matmul %178, %196, %cst_76 {dimension_numbers = #tpu.dot_dimension_numbers<[1], [0], [0], [1], [0, 0, 1, 1], [], []>} : vector<14x24xbf16>, vector<24x14xbf16>, vector<14x14xf32> -> vector<14x14xf32>
    %198 = vector.extract_strided_slice %191 {offsets = [72, 0], sizes = [24, 14], strides = [1, 1]} : vector<120x14xbf16> to vector<24x14xbf16>
    %cst_77 = arith.constant dense<0.000000e+00> : vector<14x14xf32>
    %199 = tpu.matmul %178, %198, %cst_77 {dimension_numbers = #tpu.dot_dimension_numbers<[1], [0], [0], [1], [0, 0, 1, 1], [], []>} : vector<14x24xbf16>, vector<24x14xbf16>, vector<14x14xf32> -> vector<14x14xf32>
    %200 = vector.extract_strided_slice %191 {offsets = [96, 0], sizes = [24, 14], strides = [1, 1]} : vector<120x14xbf16> to vector<24x14xbf16>
    %cst_78 = arith.constant dense<0.000000e+00> : vector<14x14xf32>
    %201 = tpu.matmul %178, %200, %cst_78 {dimension_numbers = #tpu.dot_dimension_numbers<[1], [0], [0], [1], [0, 0, 1, 1], [], []>} : vector<14x24xbf16>, vector<24x14xbf16>, vector<14x14xf32> -> vector<14x14xf32>
    %202 = arith.mulf %193, %193 : vector<14x14xf32>
    %203 = arith.subf %197, %202 : vector<14x14xf32>
    %204 = arith.mulf %195, %195 : vector<14x14xf32>
    %205 = arith.subf %199, %204 : vector<14x14xf32>
    %206 = arith.mulf %193, %195 : vector<14x14xf32>
    %207 = arith.subf %201, %206 : vector<14x14xf32>
    %cst_79 = arith.constant 2.000000e+00 : f32
    %208 = vector.broadcast %cst_79 : f32 to vector<14x14xf32>
    %209 = arith.mulf %208, %207 : vector<14x14xf32>
    %cst_80 = arith.constant 8.99999984E-4 : f32
    %210 = vector.broadcast %cst_80 : f32 to vector<14x14xf32>
    %211 = arith.addf %209, %210 : vector<14x14xf32>
    %212 = arith.addf %203, %205 : vector<14x14xf32>
    %cst_81 = arith.constant 8.99999984E-4 : f32
    %213 = vector.broadcast %cst_81 : f32 to vector<14x14xf32>
    %214 = arith.addf %212, %213 : vector<14x14xf32>
    %215 = tpu.reciprocal %214 {approx = true} : vector<14x14xf32> -> vector<14x14xf32>
    %216 = arith.mulf %211, %215 : vector<14x14xf32>
    %217 = vector.shape_cast %216 : vector<14x14xf32> to vector<1x14x14xf32>
    %cst_82 = arith.constant dense<0.000000e+00> : vector<1xf32>
    %218 = vector.multi_reduction <add>, %217, %cst_82 [1, 2] : vector<1x14x14xf32> to vector<1xf32>
    %219 = vector.shape_cast %218 : vector<1xf32> to vector<1x1x1xf32>
    %220 = vector.extract %219[0, 0, 0] : f32 from vector<1x1x1xf32>
    %cst_83 = arith.constant 1.960000e+02 : f32
    %221 = arith.divf %220, %cst_83 : f32
    %cst_84 = arith.constant 0.000000e+00 : f32
    %222 = arith.maximumf %221, %cst_84 : f32
    %c3_i32 = arith.constant 3 : i32
    %223 = vector.broadcast %c3_i32 : i32 to vector<8x128xi32>
    %224 = arith.cmpi eq, %8, %223 : vector<8x128xi32>
    %225 = vector.broadcast %222 : f32 to vector<8x128xf32>
    %226 = arith.select %224, %225, %170 : vector<8x128xi1>, vector<8x128xf32>
    %c0_85 = arith.constant 0 : index
    %c0_86 = arith.constant 0 : index
    %227 = vector.load %arg16[%c0_85, %c0_86] : memref<16x24xbf16, #tpu.memory_space<vmem>>, vector<16x24xbf16>
    %228 = vector.extract_strided_slice %189 {offsets = [0, 14], sizes = [48, 12], strides = [1, 1]} : vector<120x26xf32> to vector<48x12xf32>
    %229 = arith.truncf %228 : vector<48x12xf32> to vector<48x12xbf16>
    %230 = vector.extract_strided_slice %229 {offsets = [0, 0], sizes = [24, 12], strides = [1, 1]} : vector<48x12xbf16> to vector<24x12xbf16>
    %cst_87 = arith.constant dense<0.000000e+00> : vector<16x12xf32>
    %231 = tpu.matmul %227, %230, %cst_87 {dimension_numbers = #tpu.dot_dimension_numbers<[1], [0], [0], [1], [0, 0, 1, 1], [], []>} : vector<16x24xbf16>, vector<24x12xbf16>, vector<16x12xf32> -> vector<16x12xf32>
    %232 = vector.extract_strided_slice %229 {offsets = [24, 0], sizes = [24, 12], strides = [1, 1]} : vector<48x12xbf16> to vector<24x12xbf16>
    %cst_88 = arith.constant dense<0.000000e+00> : vector<16x12xf32>
    %233 = tpu.matmul %227, %232, %cst_88 {dimension_numbers = #tpu.dot_dimension_numbers<[1], [0], [0], [1], [0, 0, 1, 1], [], []>} : vector<16x24xbf16>, vector<24x12xbf16>, vector<16x12xf32> -> vector<16x12xf32>
    %c0_89 = arith.constant 0 : index
    %c0_90 = arith.constant 0 : index
    %234 = vector.load %arg7[%c0_89, %c0_90] : memref<2x16xbf16, #tpu.memory_space<vmem>>, vector<2x16xbf16>
    %c0_91 = arith.constant 0 : index
    %c0_92 = arith.constant 0 : index
    %235 = vector.load %arg12[%c0_91, %c0_92] : memref<12x2xbf16, #tpu.memory_space<vmem>>, vector<12x2xbf16>
    %236 = arith.truncf %231 : vector<16x12xf32> to vector<16x12xbf16>
    %237 = arith.truncf %233 : vector<16x12xf32> to vector<16x12xbf16>
    %238 = arith.mulf %231, %231 : vector<16x12xf32>
    %239 = arith.truncf %238 : vector<16x12xf32> to vector<16x12xbf16>
    %240 = arith.mulf %233, %233 : vector<16x12xf32>
    %241 = arith.truncf %240 : vector<16x12xf32> to vector<16x12xbf16>
    %242 = arith.mulf %231, %233 : vector<16x12xf32>
    %243 = arith.truncf %242 : vector<16x12xf32> to vector<16x12xbf16>
    %244 = tpu.concatenate %236, %237, %239, %241, %243 in 0 : vector<16x12xbf16>, vector<16x12xbf16>, vector<16x12xbf16>, vector<16x12xbf16>, vector<16x12xbf16> -> vector<80x12xbf16>
    %cst_93 = arith.constant dense<0.000000e+00> : vector<80x2xf32>
    %245 = tpu.matmul %244, %235, %cst_93 {dimension_numbers = #tpu.dot_dimension_numbers<[1], [0], [0], [1], [0, 0, 1, 1], [], []>} : vector<80x12xbf16>, vector<12x2xbf16>, vector<80x2xf32> -> vector<80x2xf32>
    %246 = arith.truncf %245 : vector<80x2xf32> to vector<80x2xbf16>
    %247 = vector.extract_strided_slice %246 {offsets = [0, 0], sizes = [16, 2], strides = [1, 1]} : vector<80x2xbf16> to vector<16x2xbf16>
    %cst_94 = arith.constant dense<0.000000e+00> : vector<2x2xf32>
    %248 = tpu.matmul %234, %247, %cst_94 {dimension_numbers = #tpu.dot_dimension_numbers<[1], [0], [0], [1], [0, 0, 1, 1], [], []>} : vector<2x16xbf16>, vector<16x2xbf16>, vector<2x2xf32> -> vector<2x2xf32>
    %249 = vector.extract_strided_slice %246 {offsets = [16, 0], sizes = [16, 2], strides = [1, 1]} : vector<80x2xbf16> to vector<16x2xbf16>
    %cst_95 = arith.constant dense<0.000000e+00> : vector<2x2xf32>
    %250 = tpu.matmul %234, %249, %cst_95 {dimension_numbers = #tpu.dot_dimension_numbers<[1], [0], [0], [1], [0, 0, 1, 1], [], []>} : vector<2x16xbf16>, vector<16x2xbf16>, vector<2x2xf32> -> vector<2x2xf32>
    %251 = vector.extract_strided_slice %246 {offsets = [32, 0], sizes = [16, 2], strides = [1, 1]} : vector<80x2xbf16> to vector<16x2xbf16>
    %cst_96 = arith.constant dense<0.000000e+00> : vector<2x2xf32>
    %252 = tpu.matmul %234, %251, %cst_96 {dimension_numbers = #tpu.dot_dimension_numbers<[1], [0], [0], [1], [0, 0, 1, 1], [], []>} : vector<2x16xbf16>, vector<16x2xbf16>, vector<2x2xf32> -> vector<2x2xf32>
    %253 = vector.extract_strided_slice %246 {offsets = [48, 0], sizes = [16, 2], strides = [1, 1]} : vector<80x2xbf16> to vector<16x2xbf16>
    %cst_97 = arith.constant dense<0.000000e+00> : vector<2x2xf32>
    %254 = tpu.matmul %234, %253, %cst_97 {dimension_numbers = #tpu.dot_dimension_numbers<[1], [0], [0], [1], [0, 0, 1, 1], [], []>} : vector<2x16xbf16>, vector<16x2xbf16>, vector<2x2xf32> -> vector<2x2xf32>
    %255 = vector.extract_strided_slice %246 {offsets = [64, 0], sizes = [16, 2], strides = [1, 1]} : vector<80x2xbf16> to vector<16x2xbf16>
    %cst_98 = arith.constant dense<0.000000e+00> : vector<2x2xf32>
    %256 = tpu.matmul %234, %255, %cst_98 {dimension_numbers = #tpu.dot_dimension_numbers<[1], [0], [0], [1], [0, 0, 1, 1], [], []>} : vector<2x16xbf16>, vector<16x2xbf16>, vector<2x2xf32> -> vector<2x2xf32>
    %257 = arith.mulf %248, %248 : vector<2x2xf32>
    %258 = arith.subf %252, %257 : vector<2x2xf32>
    %259 = arith.mulf %250, %250 : vector<2x2xf32>
    %260 = arith.subf %254, %259 : vector<2x2xf32>
    %261 = arith.mulf %248, %250 : vector<2x2xf32>
    %262 = arith.subf %256, %261 : vector<2x2xf32>
    %cst_99 = arith.constant 2.000000e+00 : f32
    %263 = vector.broadcast %cst_99 : f32 to vector<2x2xf32>
    %264 = arith.mulf %263, %262 : vector<2x2xf32>
    %cst_100 = arith.constant 8.99999984E-4 : f32
    %265 = vector.broadcast %cst_100 : f32 to vector<2x2xf32>
    %266 = arith.addf %264, %265 : vector<2x2xf32>
    %267 = arith.addf %258, %260 : vector<2x2xf32>
    %cst_101 = arith.constant 8.99999984E-4 : f32
    %268 = vector.broadcast %cst_101 : f32 to vector<2x2xf32>
    %269 = arith.addf %267, %268 : vector<2x2xf32>
    %270 = tpu.reciprocal %269 {approx = true} : vector<2x2xf32> -> vector<2x2xf32>
    %271 = arith.mulf %266, %270 : vector<2x2xf32>
    %cst_102 = arith.constant 5.000000e-01 : f32
    %272 = vector.broadcast %cst_102 : f32 to vector<2x2xf32>
    %273 = arith.addf %248, %272 : vector<2x2xf32>
    %cst_103 = arith.constant 5.000000e-01 : f32
    %274 = vector.broadcast %cst_103 : f32 to vector<2x2xf32>
    %275 = arith.addf %250, %274 : vector<2x2xf32>
    %cst_104 = arith.constant 2.000000e+00 : f32
    %276 = vector.broadcast %cst_104 : f32 to vector<2x2xf32>
    %277 = arith.mulf %276, %273 : vector<2x2xf32>
    %278 = arith.mulf %277, %275 : vector<2x2xf32>
    %cst_105 = arith.constant 9.99999974E-5 : f32
    %279 = vector.broadcast %cst_105 : f32 to vector<2x2xf32>
    %280 = arith.addf %278, %279 : vector<2x2xf32>
    %281 = arith.mulf %273, %273 : vector<2x2xf32>
    %282 = arith.mulf %275, %275 : vector<2x2xf32>
    %283 = arith.addf %281, %282 : vector<2x2xf32>
    %cst_106 = arith.constant 9.99999974E-5 : f32
    %284 = vector.broadcast %cst_106 : f32 to vector<2x2xf32>
    %285 = arith.addf %283, %284 : vector<2x2xf32>
    %286 = tpu.reciprocal %285 {approx = true} : vector<2x2xf32> -> vector<2x2xf32>
    %287 = arith.mulf %280, %286 : vector<2x2xf32>
    %288 = arith.mulf %287, %271 : vector<2x2xf32>
    %289 = vector.shape_cast %288 : vector<2x2xf32> to vector<1x2x2xf32>
    %cst_107 = arith.constant dense<0.000000e+00> : vector<1xf32>
    %290 = vector.multi_reduction <add>, %289, %cst_107 [1, 2] : vector<1x2x2xf32> to vector<1xf32>
    %291 = vector.shape_cast %290 : vector<1xf32> to vector<1x1x1xf32>
    %292 = vector.extract %291[0, 0, 0] : f32 from vector<1x1x1xf32>
    %cst_108 = arith.constant 4.000000e+00 : f32
    %293 = arith.divf %292, %cst_108 : f32
    %cst_109 = arith.constant 0.000000e+00 : f32
    %294 = arith.maximumf %293, %cst_109 : f32
    %c4_i32 = arith.constant 4 : i32
    %295 = vector.broadcast %c4_i32 : i32 to vector<8x128xi32>
    %296 = arith.cmpi eq, %8, %295 : vector<8x128xi32>
    %297 = vector.broadcast %294 : f32 to vector<8x128xf32>
    %298 = arith.select %296, %297, %226 : vector<8x128xi1>, vector<8x128xf32>
    %c0_110 = arith.constant 0 : index
    %c0_111 = arith.constant 0 : index
    %c0_112 = arith.constant 0 : index
    %299 = vector.load %arg17[%c0_110, %c0_111, %c0_112] : memref<1x8x128xf32, #tpu.memory_space<vmem>>, vector<1x8x128xf32>
    %300 = vector.shape_cast %299 : vector<1x8x128xf32> to vector<8x128xf32>
    %301 = vector.shape_cast %298 : vector<8x128xf32> to vector<1x8x128xf32>
    tpu.vector_store %arg17[%c0_110, %c0_111, %c0_112], %301 {strides = array<i32>} : memref<1x8x128xf32, #tpu.memory_space<vmem>>, vector<1x8x128xf32>,
    return
  }
  func.func @transform_0(%arg0: i32) -> (i32, i32, i32, i32) {
    %c1_i32 = arith.constant 1 : i32
    %c0_i32 = arith.constant 0 : i32
    %c0_i32_0 = arith.constant 0 : i32
    %c0_i32_1 = arith.constant 0 : i32
    return %arg0, %c1_i32, %c0_i32, %c0_i32_0 : i32, i32, i32, i32
  }
  func.func @transform_1(%arg0: i32) -> (i32, i32, i32, i32) {
    %c1_i32 = arith.constant 1 : i32
    %c0_i32 = arith.constant 0 : i32
    %c0_i32_0 = arith.constant 0 : i32
    %c0_i32_1 = arith.constant 0 : i32
    return %arg0, %c1_i32, %c0_i32, %c0_i32_0 : i32, i32, i32, i32
  }
  func.func @transform_2(%arg0: i32) -> (i32, i32) {
    %c0_i32 = arith.constant 0 : i32
    %c0_i32_0 = arith.constant 0 : i32
    %c0_i32_1 = arith.constant 0 : i32
    return %c0_i32, %c0_i32_0 : i32, i32
  }
  func.func @transform_3(%arg0: i32) -> (i32, i32) {
    %c0_i32 = arith.constant 0 : i32
    %c0_i32_0 = arith.constant 0 : i32
    %c0_i32_1 = arith.constant 0 : i32
    return %c0_i32, %c0_i32_0 : i32, i32
  }
  func.func @transform_4(%arg0: i32) -> (i32, i32) {
    %c0_i32 = arith.constant 0 : i32
    %c0_i32_0 = arith.constant 0 : i32
    %c0_i32_1 = arith.constant 0 : i32
    return %c0_i32, %c0_i32_0 : i32, i32
  }
  func.func @transform_5(%arg0: i32) -> (i32, i32) {
    %c0_i32 = arith.constant 0 : i32
    %c0_i32_0 = arith.constant 0 : i32
    %c0_i32_1 = arith.constant 0 : i32
    return %c0_i32, %c0_i32_0 : i32, i32
  }
  func.func @transform_6(%arg0: i32) -> (i32, i32) {
    %c0_i32 = arith.constant 0 : i32
    %c0_i32_0 = arith.constant 0 : i32
    %c0_i32_1 = arith.constant 0 : i32
    return %c0_i32, %c0_i32_0 : i32, i32
  }
  func.func @transform_7(%arg0: i32) -> (i32, i32) {
    %c0_i32 = arith.constant 0 : i32
    %c0_i32_0 = arith.constant 0 : i32
    %c0_i32_1 = arith.constant 0 : i32
    return %c0_i32, %c0_i32_0 : i32, i32
  }
  func.func @transform_8(%arg0: i32) -> (i32, i32) {
    %c0_i32 = arith.constant 0 : i32
    %c0_i32_0 = arith.constant 0 : i32
    %c0_i32_1 = arith.constant 0 : i32
    return %c0_i32, %c0_i32_0 : i32, i32
  }
  func.func @transform_9(%arg0: i32) -> (i32, i32) {
    %c0_i32 = arith.constant 0 : i32
    %c0_i32_0 = arith.constant 0 : i32
    %c0_i32_1 = arith.constant 0 : i32
    return %c0_i32, %c0_i32_0 : i32, i32
  }
  func.func @transform_10(%arg0: i32) -> (i32, i32) {
    %c0_i32 = arith.constant 0 : i32
    %c0_i32_0 = arith.constant 0 : i32
    %c0_i32_1 = arith.constant 0 : i32
    return %c0_i32, %c0_i32_0 : i32, i32
  }
  func.func @transform_11(%arg0: i32) -> (i32, i32) {
    %c0_i32 = arith.constant 0 : i32
    %c0_i32_0 = arith.constant 0 : i32
    %c0_i32_1 = arith.constant 0 : i32
    return %c0_i32, %c0_i32_0 : i32, i32
  }
  func.func @transform_12(%arg0: i32) -> (i32, i32) {
    %c0_i32 = arith.constant 0 : i32
    %c0_i32_0 = arith.constant 0 : i32
    %c0_i32_1 = arith.constant 0 : i32
    return %c0_i32, %c0_i32_0 : i32, i32
  }
  func.func @transform_13(%arg0: i32) -> (i32, i32) {
    %c0_i32 = arith.constant 0 : i32
    %c0_i32_0 = arith.constant 0 : i32
    %c0_i32_1 = arith.constant 0 : i32
    return %c0_i32, %c0_i32_0 : i32, i32
  }
  func.func @transform_14(%arg0: i32) -> (i32, i32) {
    %c0_i32 = arith.constant 0 : i32
    %c0_i32_0 = arith.constant 0 : i32
    %c0_i32_1 = arith.constant 0 : i32
    return %c0_i32, %c0_i32_0 : i32, i32
  }
  func.func @transform_15(%arg0: i32) -> (i32, i32) {
    %c0_i32 = arith.constant 0 : i32
    %c0_i32_0 = arith.constant 0 : i32
    %c0_i32_1 = arith.constant 0 : i32
    return %c0_i32, %c0_i32_0 : i32, i32
  }
  func.func @transform_16(%arg0: i32) -> (i32, i32, i32) {
    %c0_i32 = arith.constant 0 : i32
    %c0_i32_0 = arith.constant 0 : i32
    %c0_i32_1 = arith.constant 0 : i32
    return %arg0, %c0_i32, %c0_i32_0 : i32, i32, i32
  }
}

</mosaic_0001>

<llo_original>
// kernel: g_ms_ssim_loss.1
$region0: #{g_ms_ssim_loss.1}
  #allocation0 [shape = 'u32[]', space=smem, size = 0x4, offset = 0x4, fixed_abs, tag = 'smem constant byte address 0x4 - core index']
  #allocation1 [shape = 'u32[72,128]{1,0:T(1,128)}', space=vmem, size = 0x9000, scoped, tag = 'internal scratch']
  %s0 = inlined_call_operand.hbm [shape: f32[2,4,192,192], index: 0, kind: input, shape index: {}]
  %s1 = inlined_call_operand.hbm [shape: f32[2,4,192,192], index: 1, kind: input, shape index: {}]
  %s2 = inlined_call_operand.hbm [shape: bf16[182,192], index: 2, kind: input, shape index: {}]
  %s3 = inlined_call_operand.hbm [shape: bf16[86,96], index: 3, kind: input, shape index: {}]
  %s4 = inlined_call_operand.hbm [shape: bf16[38,48], index: 4, kind: input, shape index: {}]
  %s5 = inlined_call_operand.hbm [shape: bf16[14,24], index: 5, kind: input, shape index: {}]
  %s6 = inlined_call_operand.hbm [shape: bf16[2,16], index: 6, kind: input, shape index: {}]
  %s7 = inlined_call_operand.hbm [shape: bf16[192,278], index: 7, kind: input, shape index: {}]
  %s8 = inlined_call_operand.hbm [shape: bf16[96,134], index: 8, kind: input, shape index: {}]
  %s9 = inlined_call_operand.hbm [shape: bf16[48,62], index: 9, kind: input, shape index: {}]
  %s10 = inlined_call_operand.hbm [shape: bf16[24,26], index: 10, kind: input, shape index: {}]
  %s11 = inlined_call_operand.hbm [shape: bf16[12,2], index: 11, kind: input, shape index: {}]
  %s12 = inlined_call_operand.hbm [shape: bf16[96,192], index: 12, kind: input, shape index: {}]
  %s13 = inlined_call_operand.hbm [shape: bf16[48,96], index: 13, kind: input, shape index: {}]
  %s14 = inlined_call_operand.hbm [shape: bf16[24,48], index: 14, kind: input, shape index: {}]
  %s15 = inlined_call_operand.hbm [shape: bf16[16,24], index: 15, kind: input, shape index: {}]
  %s16 = inlined_call_operand.vmem [shape: f32[2,8,128], index: 16, kind: output, shape index: {}]
  %s17 = sld [smem:[#allocation0]]
  $region161: #{g_ms_ssim_loss.1} parent=0
    _
  %s19 = ssub.s32 1, %s17
  %s20 = scalar_select 0, %s19, %s17
  $region1: #{g_ms_ssim_loss.1} parent=0
    #allocation2 [shape = 'u8[393216]{0}', space=vmem, size = 0x60000, scoped, tag = 'input window, operand 0']
    #allocation3 [shape = 's32[2]{0}', space=sflag, size = 0x8, scoped, tag = 'scoped memory for g_ms_ssim_loss.1']
    #allocation4 [shape = 'u8[393216]{0}', space=vmem, size = 0x60000, scoped, tag = 'input window, operand 1']
    #allocation5 [shape = 's32[2]{0}', space=sflag, size = 0x8, scoped, tag = 'scoped memory for g_ms_ssim_loss.1']
    #allocation6 [shape = 'u8[94208]{0}', space=vmem, size = 0x17000, scoped, tag = 'input window, operand 2, single buffered']
    #allocation7 [shape = 'u8[22528]{0}', space=vmem, size = 0x5800, scoped, tag = 'input window, operand 3, single buffered']
    #allocation8 [shape = 's32[1]{0}', space=sflag, size = 0x4, scoped, tag = 'scoped memory for g_ms_ssim_loss.1']
    #allocation9 [shape = 'u8[10240]{0}', space=vmem, size = 0x2800, scoped, tag = 'input window, operand 4, single buffered']
    #allocation10 [shape = 'u8[4096]{0}', space=vmem, size = 0x1000, scoped, tag = 'input window, operand 5, single buffered']
    #allocation11 [shape = 's32[1]{0}', space=sflag, size = 0x4, scoped, tag = 'scoped memory for g_ms_ssim_loss.1']
    #allocation12 [shape = 'u8[512]{0}', space=vmem, size = 0x400, scoped, tag = 'input window, operand 6, single buffered']
    #allocation13 [shape = 'u8[147456]{0}', space=vmem, size = 0x24000, scoped, tag = 'input window, operand 7, single buffered']
    #allocation14 [shape = 's32[1]{0}', space=sflag, size = 0x4, scoped, tag = 'scoped memory for g_ms_ssim_loss.1']
    #allocation15 [shape = 'u8[49152]{0}', space=vmem, size = 0xc000, scoped, tag = 'input window, operand 8, single buffered']
    #allocation16 [shape = 'u8[12288]{0}', space=vmem, size = 0x3000, scoped, tag = 'input window, operand 9, single buffered']
    #allocation17 [shape = 's32[1]{0}', space=sflag, size = 0x4, scoped, tag = 'scoped memory for g_ms_ssim_loss.1']
    #allocation18 [shape = 'u8[6144]{0}', space=vmem, size = 0x1800, scoped, tag = 'input window, operand 10, single buffered']
    #allocation19 [shape = 'u8[4096]{0}', space=vmem, size = 0x1000, scoped, tag = 'input window, operand 11, single buffered']
    #allocation20 [shape = 's32[1]{0}', space=sflag, size = 0x4, scoped, tag = 'scoped memory for g_ms_ssim_loss.1']
    #allocation21 [shape = 'u8[49152]{0}', space=vmem, size = 0xc000, scoped, tag = 'input window, operand 12, single buffered']
    #allocation22 [shape = 'u8[12288]{0}', space=vmem, size = 0x3000, scoped, tag = 'input window, operand 13, single buffered']
    #allocation23 [shape = 's32[1]{0}', space=sflag, size = 0x4, scoped, tag = 'scoped memory for g_ms_ssim_loss.1']
    #allocation24 [shape = 'u8[6144]{0}', space=vmem, size = 0x1800, scoped, tag = 'input window, operand 14, single buffered']
    #allocation25 [shape = 'u8[4096]{0}', space=vmem, size = 0x1000, scoped, tag = 'input window, operand 15, single buffered']
    #allocation26 [shape = 's32[1]{0}', space=sflag, size = 0x4, scoped, tag = 'scoped memory for g_ms_ssim_loss.1']
    %21 = vsyncpa [#allocation3], 0
    %s22 = scalar_lea.sflag [#allocation3], 1
    %23 = vsyncpa %s22, 0
    %24 = vsyncpa [#allocation5], 0
    %s25 = scalar_lea.sflag [#allocation5], 1
    %26 = vsyncpa %s25, 0
    %27 = vsyncpa [#allocation8], 0
    %28 = vsyncpa [#allocation11], 0
    %29 = vsyncpa [#allocation14], 0
    %30 = vsyncpa [#allocation17], 0
    %31 = vsyncpa [#allocation20], 0
    %32 = vsyncpa [#allocation23], 0
    %33 = vsyncpa [#allocation26], 0
    loop: start=0, step=1, limit=4
    $region2: #{g_ms_ssim_loss.1} parent=1 // loop_pre_header
      _
    $region3: #{g_ms_ssim_loss.1} parent=1 // loop_header
      %s35 = sphi 0, %s39
      %p36 = scmp.ge.s32.totalorder %s35, 4
      %s45 = sphi 0, %s47
      %s48 = sphi 0, %s45
      %s49 = sphi 0, %s48
      %s65 = sphi 0, %s49
      %s71 = sphi 0, %s73
      %s74 = sphi 0, %s71
      %s75 = sphi 0, %s74
      %s91 = sphi 0, %s75
      %s95 = sphi 0, %s95
      %s97 = sphi 0, %s95
      %s98 = sphi 0, %s97
      %s112 = sphi 0, %s98
      %s116 = sphi 0, %s116
      %s118 = sphi 0, %s116
      %s119 = sphi 0, %s118
      %s133 = sphi 0, %s119
      %s137 = sphi 0, %s137
      %s139 = sphi 0, %s137
      %s140 = sphi 0, %s139
      %s154 = sphi 0, %s140
      %s158 = sphi 0, %s158
      %s160 = sphi 0, %s158
      %s161 = sphi 0, %s160
      %s175 = sphi 0, %s161
      %s179 = sphi 0, %s179
      %s181 = sphi 0, %s179
      %s182 = sphi 0, %s181
      %s196 = sphi 0, %s182
      %s200 = sphi 0, %s200
      %s202 = sphi 0, %s200
      %s203 = sphi 0, %s202
      %s217 = sphi 0, %s203
      %s221 = sphi 0, %s221
      %s223 = sphi 0, %s221
      %s224 = sphi 0, %s223
      %s238 = sphi 0, %s224
      %s242 = sphi 0, %s242
      %s244 = sphi 0, %s242
      %s245 = sphi 0, %s244
      %s259 = sphi 0, %s245
      %s263 = sphi 0, %s263
      %s265 = sphi 0, %s263
      %s266 = sphi 0, %s265
      %s280 = sphi 0, %s266
      %s284 = sphi 0, %s284
      %s286 = sphi 0, %s284
      %s287 = sphi 0, %s286
      %s301 = sphi 0, %s287
      %s305 = sphi 0, %s305
      %s307 = sphi 0, %s305
      %s308 = sphi 0, %s307
      %s322 = sphi 0, %s308
      %s326 = sphi 0, %s326
      %s328 = sphi 0, %s326
      %s329 = sphi 0, %s328
      %s343 = sphi 0, %s329
      %s347 = sphi 0, %s347
      %s349 = sphi 0, %s347
      %s350 = sphi 0, %s349
      %s364 = sphi 0, %s350
      %s368 = sphi 0, %s368
      %s370 = sphi 0, %s368
      %s371 = sphi 0, %s370
      %s385 = sphi 0, %s371
      %s391 = sphi 0, %s393
      %s394 = sphi 0, %s391
      %s395 = sphi 0, %s394
      %s411 = sphi 0, %s395
    $region4: #{g_ms_ssim_loss.1} parent=1 // loop_header_branch
      %38 = sbr.rel (%p36) target = $region8
    $region5: #{g_ms_ssim_loss.1} parent=1 // loop_body
      %s40 = ssub.s32 %s35, 1
      %s41 = ssub.s32 %s35, 2
      %s42 = sadd.s32 %s35, 1
      %s43 = ssub.s32 %s35, %s42
      %p44 = scmp.eq.s32.totalorder %s43, 0
      %s46 = sadd.s32 %s45, 1
      %s47 = scalar_select %p44, %s45, %s46
      %p50 = pneg %p44
      %p51 = scmp.eq.s32.totalorder %s35, 1
      %p52 = por %p50, %p51
      %p53 = scmp.ne.s32.totalorder %s45, %s48
      %p54 = scmp.eq.s32.totalorder %s35, 0
      %p55 = por %p53, %p54
      %p56 = scmp.ne.s32.totalorder %s45, %s48
      %p57 = scmp.eq.s32.totalorder %s40, 1
      %p58 = por %p56, %p57
      %p59 = scmp.ne.s32.totalorder %s48, %s49
      %p60 = scmp.eq.s32.totalorder %s40, 0
      %p61 = por %p59, %p60
      %p62 = scmp.ne.s32.totalorder %s48, %s49
      %p63 = scmp.eq.s32.totalorder %s41, 1
      %p64 = por %p62, %p63
      %p66 = scmp.ne.s32.totalorder %s49, %s65
      %p67 = scmp.eq.s32.totalorder %s41, 0
      %p68 = por %p66, %p67
      %s69 = ssub.s32 %s35, %s42
      %p70 = scmp.eq.s32.totalorder %s69, 0
      %s72 = sadd.s32 %s71, 1
      %s73 = scalar_select %p70, %s71, %s72
      %p76 = pneg %p70
      %p77 = scmp.eq.s32.totalorder %s35, 1
      %p78 = por %p76, %p77
      %p79 = scmp.ne.s32.totalorder %s71, %s74
      %p80 = scmp.eq.s32.totalorder %s35, 0
      %p81 = por %p79, %p80
      %p82 = scmp.ne.s32.totalorder %s71, %s74
      %p83 = scmp.eq.s32.totalorder %s40, 1
      %p84 = por %p82, %p83
      %p85 = scmp.ne.s32.totalorder %s74, %s75
      %p86 = scmp.eq.s32.totalorder %s40, 0
      %p87 = por %p85, %p86
      %p88 = scmp.ne.s32.totalorder %s74, %s75
      %p89 = scmp.eq.s32.totalorder %s41, 1
      %p90 = por %p88, %p89
      %p92 = scmp.ne.s32.totalorder %s75, %s91
      %p93 = scmp.eq.s32.totalorder %s41, 0
      %p94 = por %p92, %p93
      %s96 = sadd.s32 %s95, 1
      %p99 = scmp.eq.s32.totalorder %s35, 1
      %p100 = scmp.ne.s32.totalorder %s95, %s97
      %p101 = scmp.eq.s32.totalorder %s35, 0
      %p102 = por %p100, %p101
      %p103 = scmp.ne.s32.totalorder %s95, %s97
      %p104 = scmp.eq.s32.totalorder %s40, 1
      %p105 = por %p103, %p104
      %p106 = scmp.ne.s32.totalorder %s97, %s98
      %p107 = scmp.eq.s32.totalorder %s40, 0
      %p108 = por %p106, %p107
      %p109 = scmp.ne.s32.totalorder %s97, %s98
      %p110 = scmp.eq.s32.totalorder %s41, 1
      %p111 = por %p109, %p110
      %p113 = scmp.ne.s32.totalorder %s98, %s112
      %p114 = scmp.eq.s32.totalorder %s41, 0
      %p115 = por %p113, %p114
      %s117 = sadd.s32 %s116, 1
      %p120 = scmp.eq.s32.totalorder %s35, 1
      %p121 = scmp.ne.s32.totalorder %s116, %s118
      %p122 = scmp.eq.s32.totalorder %s35, 0
      %p123 = por %p121, %p122
      %p124 = scmp.ne.s32.totalorder %s116, %s118
      %p125 = scmp.eq.s32.totalorder %s40, 1
      %p126 = por %p124, %p125
      %p127 = scmp.ne.s32.totalorder %s118, %s119
      %p128 = scmp.eq.s32.totalorder %s40, 0
      %p129 = por %p127, %p128
      %p130 = scmp.ne.s32.totalorder %s118, %s119
      %p131 = scmp.eq.s32.totalorder %s41, 1
      %p132 = por %p130, %p131
      %p134 = scmp.ne.s32.totalorder %s119, %s133
      %p135 = scmp.eq.s32.totalorder %s41, 0
      %p136 = por %p134, %p135
      %s138 = sadd.s32 %s137, 1
      %p141 = scmp.eq.s32.totalorder %s35, 1
      %p142 = scmp.ne.s32.totalorder %s137, %s139
      %p143 = scmp.eq.s32.totalorder %s35, 0
      %p144 = por %p142, %p143
      %p145 = scmp.ne.s32.totalorder %s137, %s139
      %p146 = scmp.eq.s32.totalorder %s40, 1
      %p147 = por %p145, %p146
      %p148 = scmp.ne.s32.totalorder %s139, %s140
      %p149 = scmp.eq.s32.totalorder %s40, 0
      %p150 = por %p148, %p149
      %p151 = scmp.ne.s32.totalorder %s139, %s140
      %p152 = scmp.eq.s32.totalorder %s41, 1
      %p153 = por %p151, %p152
      %p155 = scmp.ne.s32.totalorder %s140, %s154
      %p156 = scmp.eq.s32.totalorder %s41, 0
      %p157 = por %p155, %p156
      %s159 = sadd.s32 %s158, 1
      %p162 = scmp.eq.s32.totalorder %s35, 1
      %p163 = scmp.ne.s32.totalorder %s158, %s160
      %p164 = scmp.eq.s32.totalorder %s35, 0
      %p165 = por %p163, %p164
      %p166 = scmp.ne.s32.totalorder %s158, %s160
      %p167 = scmp.eq.s32.totalorder %s40, 1
      %p168 = por %p166, %p167
      %p169 = scmp.ne.s32.totalorder %s160, %s161
      %p170 = scmp.eq.s32.totalorder %s40, 0
      %p171 = por %p169, %p170
      %p172 = scmp.ne.s32.totalorder %s160, %s161
      %p173 = scmp.eq.s32.totalorder %s41, 1
      %p174 = por %p172, %p173
      %p176 = scmp.ne.s32.totalorder %s161, %s175
      %p177 = scmp.eq.s32.totalorder %s41, 0
      %p178 = por %p176, %p177
      %s180 = sadd.s32 %s179, 1
      %p183 = scmp.eq.s32.totalorder %s35, 1
      %p184 = scmp.ne.s32.totalorder %s179, %s181
      %p185 = scmp.eq.s32.totalorder %s35, 0
      %p186 = por %p184, %p185
      %p187 = scmp.ne.s32.totalorder %s179, %s181
      %p188 = scmp.eq.s32.totalorder %s40, 1
      %p189 = por %p187, %p188
      %p190 = scmp.ne.s32.totalorder %s181, %s182
      %p191 = scmp.eq.s32.totalorder %s40, 0
      %p192 = por %p190, %p191
      %p193 = scmp.ne.s32.totalorder %s181, %s182
      %p194 = scmp.eq.s32.totalorder %s41, 1
      %p195 = por %p193, %p194
      %p197 = scmp.ne.s32.totalorder %s182, %s196
      %p198 = scmp.eq.s32.totalorder %s41, 0
      %p199 = por %p197, %p198
      %s201 = sadd.s32 %s200, 1
      %p204 = scmp.eq.s32.totalorder %s35, 1
      %p205 = scmp.ne.s32.totalorder %s200, %s202
      %p206 = scmp.eq.s32.totalorder %s35, 0
      %p207 = por %p205, %p206
      %p208 = scmp.ne.s32.totalorder %s200, %s202
      %p209 = scmp.eq.s32.totalorder %s40, 1
      %p210 = por %p208, %p209
      %p211 = scmp.ne.s32.totalorder %s202, %s203
      %p212 = scmp.eq.s32.totalorder %s40, 0
      %p213 = por %p211, %p212
      %p214 = scmp.ne.s32.totalorder %s202, %s203
      %p215 = scmp.eq.s32.totalorder %s41, 1
      %p216 = por %p214, %p215
      %p218 = scmp.ne.s32.totalorder %s203, %s217
      %p219 = scmp.eq.s32.totalorder %s41, 0
      %p220 = por %p218, %p219
      %s222 = sadd.s32 %s221, 1
      %p225 = scmp.eq.s32.totalorder %s35, 1
      %p226 = scmp.ne.s32.totalorder %s221, %s223
      %p227 = scmp.eq.s32.totalorder %s35, 0
      %p228 = por %p226, %p227
      %p229 = scmp.ne.s32.totalorder %s221, %s223
      %p230 = scmp.eq.s32.totalorder %s40, 1
      %p231 = por %p229, %p230
      %p232 = scmp.ne.s32.totalorder %s223, %s224
      %p233 = scmp.eq.s32.totalorder %s40, 0
      %p234 = por %p232, %p233
      %p235 = scmp.ne.s32.totalorder %s223, %s224
      %p236 = scmp.eq.s32.totalorder %s41, 1
      %p237 = por %p235, %p236
      %p239 = scmp.ne.s32.totalorder %s224, %s238
      %p240 = scmp.eq.s32.totalorder %s41, 0
      %p241 = por %p239, %p240
      %s243 = sadd.s32 %s242, 1
      %p246 = scmp.eq.s32.totalorder %s35, 1
      %p247 = scmp.ne.s32.totalorder %s242, %s244
      %p248 = scmp.eq.s32.totalorder %s35, 0
      %p249 = por %p247, %p248
      %p250 = scmp.ne.s32.totalorder %s242, %s244
      %p251 = scmp.eq.s32.totalorder %s40, 1
      %p252 = por %p250, %p251
      %p253 = scmp.ne.s32.totalorder %s244, %s245
      %p254 = scmp.eq.s32.totalorder %s40, 0
      %p255 = por %p253, %p254
      %p256 = scmp.ne.s32.totalorder %s244, %s245
      %p257 = scmp.eq.s32.totalorder %s41, 1
      %p258 = por %p256, %p257
      %p260 = scmp.ne.s32.totalorder %s245, %s259
      %p261 = scmp.eq.s32.totalorder %s41, 0
      %p262 = por %p260, %p261
      %s264 = sadd.s32 %s263, 1
      %p267 = scmp.eq.s32.totalorder %s35, 1
      %p268 = scmp.ne.s32.totalorder %s263, %s265
      %p269 = scmp.eq.s32.totalorder %s35, 0
      %p270 = por %p268, %p269
      %p271 = scmp.ne.s32.totalorder %s263, %s265
      %p272 = scmp.eq.s32.totalorder %s40, 1
      %p273 = por %p271, %p272
      %p274 = scmp.ne.s32.totalorder %s265, %s266
      %p275 = scmp.eq.s32.totalorder %s40, 0
      %p276 = por %p274, %p275
      %p277 = scmp.ne.s32.totalorder %s265, %s266
      %p278 = scmp.eq.s32.totalorder %s41, 1
      %p279 = por %p277, %p278
      %p281 = scmp.ne.s32.totalorder %s266, %s280
      %p282 = scmp.eq.s32.totalorder %s41, 0
      %p283 = por %p281, %p282
      %s285 = sadd.s32 %s284, 1
      %p288 = scmp.eq.s32.totalorder %s35, 1
      %p289 = scmp.ne.s32.totalorder %s284, %s286
      %p290 = scmp.eq.s32.totalorder %s35, 0
      %p291 = por %p289, %p290
      %p292 = scmp.ne.s32.totalorder %s284, %s286
      %p293 = scmp.eq.s32.totalorder %s40, 1
      %p294 = por %p292, %p293
      %p295 = scmp.ne.s32.totalorder %s286, %s287
      %p296 = scmp.eq.s32.totalorder %s40, 0
      %p297 = por %p295, %p296
      %p298 = scmp.ne.s32.totalorder %s286, %s287
      %p299 = scmp.eq.s32.totalorder %s41, 1
      %p300 = por %p298, %p299
      %p302 = scmp.ne.s32.totalorder %s287, %s301
      %p303 = scmp.eq.s32.totalorder %s41, 0
      %p304 = por %p302, %p303
      %s306 = sadd.s32 %s305, 1
      %p309 = scmp.eq.s32.totalorder %s35, 1
      %p310 = scmp.ne.s32.totalorder %s305, %s307
      %p311 = scmp.eq.s32.totalorder %s35, 0
      %p312 = por %p310, %p311
      %p313 = scmp.ne.s32.totalorder %s305, %s307
      %p314 = scmp.eq.s32.totalorder %s40, 1
      %p315 = por %p313, %p314
      %p316 = scmp.ne.s32.totalorder %s307, %s308
      %p317 = scmp.eq.s32.totalorder %s40, 0
      %p318 = por %p316, %p317
      %p319 = scmp.ne.s32.totalorder %s307, %s308
      %p320 = scmp.eq.s32.totalorder %s41, 1
      %p321 = por %p319, %p320
      %p323 = scmp.ne.s32.totalorder %s308, %s322
      %p324 = scmp.eq.s32.totalorder %s41, 0
      %p325 = por %p323, %p324
      %s327 = sadd.s32 %s326, 1
      %p330 = scmp.eq.s32.totalorder %s35, 1
      %p331 = scmp.ne.s32.totalorder %s326, %s328
      %p332 = scmp.eq.s32.totalorder %s35, 0
      %p333 = por %p331, %p332
      %p334 = scmp.ne.s32.totalorder %s326, %s328
      %p335 = scmp.eq.s32.totalorder %s40, 1
      %p336 = por %p334, %p335
      %p337 = scmp.ne.s32.totalorder %s328, %s329
      %p338 = scmp.eq.s32.totalorder %s40, 0
      %p339 = por %p337, %p338
      %p340 = scmp.ne.s32.totalorder %s328, %s329
      %p341 = scmp.eq.s32.totalorder %s41, 1
      %p342 = por %p340, %p341
      %p344 = scmp.ne.s32.totalorder %s329, %s343
      %p345 = scmp.eq.s32.totalorder %s41, 0
      %p346 = por %p344, %p345
      %s348 = sadd.s32 %s347, 1
      %p351 = scmp.eq.s32.totalorder %s35, 1
      %p352 = scmp.ne.s32.totalorder %s347, %s349
      %p353 = scmp.eq.s32.totalorder %s35, 0
      %p354 = por %p352, %p353
      %p355 = scmp.ne.s32.totalorder %s347, %s349
      %p356 = scmp.eq.s32.totalorder %s40, 1
      %p357 = por %p355, %p356
      %p358 = scmp.ne.s32.totalorder %s349, %s350
      %p359 = scmp.eq.s32.totalorder %s40, 0
      %p360 = por %p358, %p359
      %p361 = scmp.ne.s32.totalorder %s349, %s350
      %p362 = scmp.eq.s32.totalorder %s41, 1
      %p363 = por %p361, %p362
      %p365 = scmp.ne.s32.totalorder %s350, %s364
      %p366 = scmp.eq.s32.totalorder %s41, 0
      %p367 = por %p365, %p366
      %s369 = sadd.s32 %s368, 1
      %p372 = scmp.eq.s32.totalorder %s35, 1
      %p373 = scmp.ne.s32.totalorder %s368, %s370
      %p374 = scmp.eq.s32.totalorder %s35, 0
      %p375 = por %p373, %p374
      %p376 = scmp.ne.s32.totalorder %s368, %s370
      %p377 = scmp.eq.s32.totalorder %s40, 1
      %p378 = por %p376, %p377
      %p379 = scmp.ne.s32.totalorder %s370, %s371
      %p380 = scmp.eq.s32.totalorder %s40, 0
      %p381 = por %p379, %p380
      %p382 = scmp.ne.s32.totalorder %s370, %s371
      %p383 = scmp.eq.s32.totalorder %s41, 1
      %p384 = por %p382, %p383
      %p386 = scmp.ne.s32.totalorder %s371, %s385
      %p387 = scmp.eq.s32.totalorder %s41, 0
      %p388 = por %p386, %p387
      %s389 = ssub.s32 %s35, %s42
      %p390 = scmp.eq.s32.totalorder %s389, 0
      %s392 = sadd.s32 %s391, 1
      %s393 = scalar_select %p390, %s391, %s392
      %p396 = pneg %p390
      %p397 = scmp.eq.s32.totalorder %s35, 1
      %p398 = por %p396, %p397
      %p399 = scmp.ne.s32.totalorder %s391, %s394
      %p400 = scmp.eq.s32.totalorder %s35, 0
      %p401 = por %p399, %p400
      %p402 = scmp.ne.s32.totalorder %s391, %s394
      %p403 = scmp.eq.s32.totalorder %s40, 1
      %p404 = por %p402, %p403
      %p405 = scmp.ne.s32.totalorder %s394, %s395
      %p406 = scmp.eq.s32.totalorder %s40, 0
      %p407 = por %p405, %p406
      %p408 = scmp.ne.s32.totalorder %s394, %s395
      %p409 = scmp.eq.s32.totalorder %s41, 1
      %p410 = por %p408, %p409
      %p412 = scmp.ne.s32.totalorder %s395, %s411
      %p413 = scmp.eq.s32.totalorder %s41, 0
      %p414 = por %p412, %p413
      %p415 = scmp.le.s32.totalorder 1, %s35
      %p416 = scmp.lt.s32.totalorder %s35, 3
      %p417 = pnand %p415, %p416
      %p418 = pneg %p417
      // Predicated region
      $region9: #{g_ms_ssim_loss.1} parent=5 // pred_check
        _
      $region10: #{g_ms_ssim_loss.1} parent=5 // pred_check_branch
        %420 = sbr.rel (%p417) target = $region12
      $region11: #{g_ms_ssim_loss.1} parent=5 // pred_region
        %s421 = ssub.s32 %s35, 1
        // Predicated region
        $region13: #{g_ms_ssim_loss.1} parent=11 // pred_check
          %p422 = pneg %p108
        $region14: #{g_ms_ssim_loss.1} parent=11 // pred_check_branch
          %424 = sbr.rel (%p422) target = $region16
        $region15: #{g_ms_ssim_loss.1} parent=11 // pred_region
          %426 = vsyncadd [#allocation5], 0
          %s427 = sshll.u32 %s2, 4
          %s428 = int_to_ptr.hbm [resolvable:$true] %s427
          %s429 = sshll.u32 [#allocation6], 4
          %s430 = int_to_ptr.vmem [resolvable:$true] %s429
          %435 = dma.hbm_to_vmem [thread:$0]  %s428, 2944, %s430, [#allocation5], 128, 128, 8
        $region16: #{g_ms_ssim_loss.1} parent=11 // pred_fallthru
          _
        // Predicated region
        $region17: #{g_ms_ssim_loss.1} parent=11 // pred_check
          %p436 = pneg %p129
        $region18: #{g_ms_ssim_loss.1} parent=11 // pred_check_branch
          %438 = sbr.rel (%p436) target = $region20
        $region19: #{g_ms_ssim_loss.1} parent=11 // pred_region
          %440 = vsyncadd [#allocation8], 0
          %s441 = sshll.u32 %s3, 4
          %s442 = int_to_ptr.hbm [resolvable:$true] %s441
          %s443 = sshll.u32 [#allocation7], 4
          %s444 = int_to_ptr.vmem [resolvable:$true] %s443
          %449 = dma.hbm_to_vmem [thread:$0]  %s442, 704, %s444, [#allocation8], 64, 64, 4
        $region20: #{g_ms_ssim_loss.1} parent=11 // pred_fallthru
          _
        // Predicated region
        $region21: #{g_ms_ssim_loss.1} parent=11 // pred_check
          %p450 = pneg %p150
        $region22: #{g_ms_ssim_loss.1} parent=11 // pred_check_branch
          %452 = sbr.rel (%p450) target = $region24
        $region23: #{g_ms_ssim_loss.1} parent=11 // pred_region
          %454 = vsyncadd [#allocation8], 0
          %s455 = sshll.u32 %s4, 4
          %s456 = int_to_ptr.hbm [resolvable:$true] %s455
          %s457 = sshll.u32 [#allocation9], 4
          %s458 = int_to_ptr.vmem [resolvable:$true] %s457
          %463 = dma.hbm_to_vmem [thread:$0]  %s456, 320, %s458, [#allocation8], 64, 64, 4
        $region24: #{g_ms_ssim_loss.1} parent=11 // pred_fallthru
          _
        // Predicated region
        $region25: #{g_ms_ssim_loss.1} parent=11 // pred_check
          %p464 = pneg %p171
        $region26: #{g_ms_ssim_loss.1} parent=11 // pred_check_branch
          %466 = sbr.rel (%p464) target = $region28
        $region27: #{g_ms_ssim_loss.1} parent=11 // pred_region
          %468 = vsyncadd [#allocation11], 0
          %s469 = sshll.u32 %s5, 4
          %s470 = int_to_ptr.hbm [resolvable:$true] %s469
          %s471 = sshll.u32 [#allocation10], 4
          %s472 = int_to_ptr.vmem [resolvable:$true] %s471
          %477 = dma.hbm_to_vmem [thread:$0]  %s470, 128, %s472, [#allocation11], 64, 64, 4
        $region28: #{g_ms_ssim_loss.1} parent=11 // pred_fallthru
          _
        // Predicated region
        $region29: #{g_ms_ssim_loss.1} parent=11 // pred_check
          %p478 = pneg %p192
        $region30: #{g_ms_ssim_loss.1} parent=11 // pred_check_branch
          %480 = sbr.rel (%p478) target = $region32
        $region31: #{g_ms_ssim_loss.1} parent=11 // pred_region
          %482 = vsyncadd [#allocation11], 0
          %s484 = sshll.u32 %s6, 4
          %s485 = int_to_ptr.hbm [resolvable:$true] %s484
          %s486 = sshll.u32 [#allocation12], 4
          %s487 = int_to_ptr.vmem [resolvable:$true] %s486
          %489 = dma.hbm_to_vmem [thread:$0]  %s485, 16, %s487, [#allocation11]
        $region32: #{g_ms_ssim_loss.1} parent=11 // pred_fallthru
          _
        // Predicated region
        $region33: #{g_ms_ssim_loss.1} parent=11 // pred_check
          %p490 = pneg %p213
        $region34: #{g_ms_ssim_loss.1} parent=11 // pred_check_branch
          %492 = sbr.rel (%p490) target = $region36
        $region35: #{g_ms_ssim_loss.1} parent=11 // pred_region
          %494 = vsyncadd [#allocation14], 0
          %s495 = sshll.u32 %s7, 4
          %s496 = int_to_ptr.hbm [resolvable:$true] %s495
          %s497 = sshll.u32 [#allocation13], 4
          %s498 = int_to_ptr.vmem [resolvable:$true] %s497
          %503 = dma.hbm_to_vmem [thread:$0]  %s496, 4608, %s498, [#allocation14], 192, 192, 12
        $region36: #{g_ms_ssim_loss.1} parent=11 // pred_fallthru
          _
        // Predicated region
        $region37: #{g_ms_ssim_loss.1} parent=11 // pred_check
          %p504 = pneg %p234
        $region38: #{g_ms_ssim_loss.1} parent=11 // pred_check_branch
          %506 = sbr.rel (%p504) target = $region40
        $region39: #{g_ms_ssim_loss.1} parent=11 // pred_region
          %508 = vsyncadd [#allocation14], 0
          %s509 = sshll.u32 %s8, 4
          %s510 = int_to_ptr.hbm [resolvable:$true] %s509
          %s511 = sshll.u32 [#allocation15], 4
          %s512 = int_to_ptr.vmem [resolvable:$true] %s511
          %517 = dma.hbm_to_vmem [thread:$0]  %s510, 1536, %s512, [#allocation14], 128, 128, 8
        $region40: #{g_ms_ssim_loss.1} parent=11 // pred_fallthru
          _
        // Predicated region
        $region41: #{g_ms_ssim_loss.1} parent=11 // pred_check
          %p518 = pneg %p255
        $region42: #{g_ms_ssim_loss.1} parent=11 // pred_check_branch
          %520 = sbr.rel (%p518) target = $region44
        $region43: #{g_ms_ssim_loss.1} parent=11 // pred_region
          %522 = vsyncadd [#allocation17], 0
          %s523 = sshll.u32 %s9, 4
          %s524 = int_to_ptr.hbm [resolvable:$true] %s523
          %s525 = sshll.u32 [#allocation16], 4
          %s526 = int_to_ptr.vmem [resolvable:$true] %s525
          %531 = dma.hbm_to_vmem [thread:$0]  %s524, 384, %s526, [#allocation17], 64, 64, 4
        $region44: #{g_ms_ssim_loss.1} parent=11 // pred_fallthru
          _
        // Predicated region
        $region45: #{g_ms_ssim_loss.1} parent=11 // pred_check
          %p532 = pneg %p276
        $region46: #{g_ms_ssim_loss.1} parent=11 // pred_check_branch
          %534 = sbr.rel (%p532) target = $region48
        $region47: #{g_ms_ssim_loss.1} parent=11 // pred_region
          %536 = vsyncadd [#allocation17], 0
          %s537 = sshll.u32 %s10, 4
          %s538 = int_to_ptr.hbm [resolvable:$true] %s537
          %s539 = sshll.u32 [#allocation18], 4
          %s540 = int_to_ptr.vmem [resolvable:$true] %s539
          %545 = dma.hbm_to_vmem [thread:$0]  %s538, 192, %s540, [#allocation17], 64, 64, 4
        $region48: #{g_ms_ssim_loss.1} parent=11 // pred_fallthru
          _
        // Predicated region
        $region49: #{g_ms_ssim_loss.1} parent=11 // pred_check
          %p546 = pneg %p297
        $region50: #{g_ms_ssim_loss.1} parent=11 // pred_check_branch
          %548 = sbr.rel (%p546) target = $region52
        $region51: #{g_ms_ssim_loss.1} parent=11 // pred_region
          %550 = vsyncadd [#allocation20], 0
          %s551 = sshll.u32 %s11, 4
          %s552 = int_to_ptr.hbm [resolvable:$true] %s551
          %s553 = sshll.u32 [#allocation19], 4
          %s554 = int_to_ptr.vmem [resolvable:$true] %s553
          %559 = dma.hbm_to_vmem [thread:$0]  %s552, 128, %s554, [#allocation20], 64, 64, 4
        $region52: #{g_ms_ssim_loss.1} parent=11 // pred_fallthru
          _
        // Predicated region
        $region53: #{g_ms_ssim_loss.1} parent=11 // pred_check
          %p560 = pneg %p318
        $region54: #{g_ms_ssim_loss.1} parent=11 // pred_check_branch
          %562 = sbr.rel (%p560) target = $region56
        $region55: #{g_ms_ssim_loss.1} parent=11 // pred_region
          %564 = vsyncadd [#allocation20], 0
          %s565 = sshll.u32 %s12, 4
          %s566 = int_to_ptr.hbm [resolvable:$true] %s565
          %s567 = sshll.u32 [#allocation21], 4
          %s568 = int_to_ptr.vmem [resolvable:$true] %s567
          %573 = dma.hbm_to_vmem [thread:$0]  %s566, 1536, %s568, [#allocation20], 128, 128, 8
        $region56: #{g_ms_ssim_loss.1} parent=11 // pred_fallthru
          _
        // Predicated region
        $region57: #{g_ms_ssim_loss.1} parent=11 // pred_check
          %p574 = pneg %p339
        $region58: #{g_ms_ssim_loss.1} parent=11 // pred_check_branch
          %576 = sbr.rel (%p574) target = $region60
        $region59: #{g_ms_ssim_loss.1} parent=11 // pred_region
          %578 = vsyncadd [#allocation23], 0
          %s579 = sshll.u32 %s13, 4
          %s580 = int_to_ptr.hbm [resolvable:$true] %s579
          %s581 = sshll.u32 [#allocation22], 4
          %s582 = int_to_ptr.vmem [resolvable:$true] %s581
          %587 = dma.hbm_to_vmem [thread:$0]  %s580, 384, %s582, [#allocation23], 64, 64, 4
        $region60: #{g_ms_ssim_loss.1} parent=11 // pred_fallthru
          _
        // Predicated region
        $region61: #{g_ms_ssim_loss.1} parent=11 // pred_check
          %p588 = pneg %p360
        $region62: #{g_ms_ssim_loss.1} parent=11 // pred_check_branch
          %590 = sbr.rel (%p588) target = $region64
        $region63: #{g_ms_ssim_loss.1} parent=11 // pred_region
          %592 = vsyncadd [#allocation23], 0
          %s593 = sshll.u32 %s14, 4
          %s594 = int_to_ptr.hbm [resolvable:$true] %s593
          %s595 = sshll.u32 [#allocation24], 4
          %s596 = int_to_ptr.vmem [resolvable:$true] %s595
          %601 = dma.hbm_to_vmem [thread:$0]  %s594, 192, %s596, [#allocation23], 64, 64, 4
        $region64: #{g_ms_ssim_loss.1} parent=11 // pred_fallthru
          _
        // Predicated region
        $region65: #{g_ms_ssim_loss.1} parent=11 // pred_check
          %p602 = pneg %p381
        $region66: #{g_ms_ssim_loss.1} parent=11 // pred_check_branch
          %604 = sbr.rel (%p602) target = $region68
        $region67: #{g_ms_ssim_loss.1} parent=11 // pred_region
          %606 = vsyncadd [#allocation26], 0
          %s607 = sshll.u32 %s15, 4
          %s608 = int_to_ptr.hbm [resolvable:$true] %s607
          %s609 = sshll.u32 [#allocation25], 4
          %s610 = int_to_ptr.vmem [resolvable:$true] %s609
          %615 = dma.hbm_to_vmem [thread:$0]  %s608, 128, %s610, [#allocation26], 64, 64, 4
        $region68: #{g_ms_ssim_loss.1} parent=11 // pred_fallthru
          _
      $region12: #{g_ms_ssim_loss.1} parent=5 // pred_fallthru
        _
      %p616 = scmp.lt.s32.totalorder %s35, 2
      // Predicated region
      $region69: #{g_ms_ssim_loss.1} parent=5 // pred_check
        %p617 = pneg %p616
      $region70: #{g_ms_ssim_loss.1} parent=5 // pred_check_branch
        %619 = sbr.rel (%p617) target = $region72
      $region71: #{g_ms_ssim_loss.1} parent=5 // pred_region
        // Predicated region
        $region73: #{g_ms_ssim_loss.1} parent=71 // pred_check
          %p620 = pneg %p55
        $region74: #{g_ms_ssim_loss.1} parent=71 // pred_check_branch
          %622 = sbr.rel (%p620) target = $region76
        $region75: #{g_ms_ssim_loss.1} parent=71 // pred_region
          %s623 = sand.u32 %s45, 1
          %s624 = scalar_lea.sflag [#allocation3], %s623
          %s625 = sand.u32 %s45, 1
          %s626 = smul.addr %s625, 384
          %s627 = scalar_lea.vmem [#allocation2], %s626
          %629 = vsyncadd %s624, 0
          %s630 = smul.addr %s35, 192
          %s631 = sadd.s32 48, %s630
          %s632 = smul.addr %s631, 8
          %s633 = scalar_lea.hbm %s0, %s632
          %s634 = sshll.u32 %s633, 4
          %s635 = int_to_ptr.hbm [resolvable:$true] %s634
          %s636 = sshll.u32 %s627, 4
          %s637 = int_to_ptr.vmem [resolvable:$true] %s636
          %642 = dma.hbm_to_vmem [thread:$0]  %s635, 6144, %s637, %s624, 256, 256, 16
        $region76: #{g_ms_ssim_loss.1} parent=71 // pred_fallthru
          _
        // Predicated region
        $region77: #{g_ms_ssim_loss.1} parent=71 // pred_check
          %p643 = pneg %p81
        $region78: #{g_ms_ssim_loss.1} parent=71 // pred_check_branch
          %645 = sbr.rel (%p643) target = $region80
        $region79: #{g_ms_ssim_loss.1} parent=71 // pred_region
          %s646 = sand.u32 %s35, 1
          %s647 = scalar_lea.sflag [#allocation5], %s646
          %s648 = sand.u32 %s71, 1
          %s649 = smul.addr %s648, 384
          %s650 = scalar_lea.vmem [#allocation4], %s649
          %652 = vsyncadd %s647, 0
          %s653 = smul.addr %s35, 192
          %s654 = sadd.s32 48, %s653
          %s655 = smul.addr %s654, 8
          %s656 = scalar_lea.hbm %s1, %s655
          %s657 = sshll.u32 %s656, 4
          %s658 = int_to_ptr.hbm [resolvable:$true] %s657
          %s659 = sshll.u32 %s650, 4
          %s660 = int_to_ptr.vmem [resolvable:$true] %s659
          %665 = dma.hbm_to_vmem [thread:$0]  %s658, 6144, %s660, %s647, 256, 256, 16
        $region80: #{g_ms_ssim_loss.1} parent=71 // pred_fallthru
          _
      $region72: #{g_ms_ssim_loss.1} parent=5 // pred_fallthru
        _
      %p666 = scmp.le.s32.totalorder 1, %s35
      %p667 = scmp.lt.s32.totalorder %s35, 3
      %p668 = pnand %p666, %p667
      %p669 = pneg %p668
      // Predicated region
      $region81: #{g_ms_ssim_loss.1} parent=5 // pred_check
        _
      $region82: #{g_ms_ssim_loss.1} parent=5 // pred_check_branch
        %671 = sbr.rel (%p668) target = $region84
      $region83: #{g_ms_ssim_loss.1} parent=5 // pred_region
        %s672 = ssub.s32 %s35, 1
        %s673 = sand.u32 %s48, 1
        %s674 = scalar_lea.sflag [#allocation3], %s673
        %s675 = sand.u32 %s48, 1
        %s676 = smul.addr %s675, 384
        %s677 = scalar_lea.vmem [#allocation2], %s676
        // Predicated region
        $region85: #{g_ms_ssim_loss.1} parent=83 // pred_check
          %p678 = pneg %p61
        $region86: #{g_ms_ssim_loss.1} parent=83 // pred_check_branch
          %680 = sbr.rel (%p678) target = $region88
        $region87: #{g_ms_ssim_loss.1} parent=83 // pred_region
          %682 = dma.done %s674, 6144
        $region88: #{g_ms_ssim_loss.1} parent=83 // pred_fallthru
          _
        %s683 = sand.u32 %s40, 1
        %s684 = scalar_lea.sflag [#allocation5], %s683
        %s685 = sand.u32 %s74, 1
        %s686 = smul.addr %s685, 384
        %s687 = scalar_lea.vmem [#allocation4], %s686
        // Predicated region
        $region89: #{g_ms_ssim_loss.1} parent=83 // pred_check
          %p688 = pneg %p87
        $region90: #{g_ms_ssim_loss.1} parent=83 // pred_check_branch
          %690 = sbr.rel (%p688) target = $region92
        $region91: #{g_ms_ssim_loss.1} parent=83 // pred_region
          %692 = dma.done %s684, 6144
        $region92: #{g_ms_ssim_loss.1} parent=83 // pred_fallthru
          _
        // Predicated region
        $region93: #{g_ms_ssim_loss.1} parent=83 // pred_check
          %p693 = pneg %p108
        $region94: #{g_ms_ssim_loss.1} parent=83 // pred_check_branch
          %695 = sbr.rel (%p693) target = $region96
        $region95: #{g_ms_ssim_loss.1} parent=83 // pred_region
          %697 = dma.done [#allocation5], 2944
        $region96: #{g_ms_ssim_loss.1} parent=83 // pred_fallthru
          _
        // Predicated region
        $region97: #{g_ms_ssim_loss.1} parent=83 // pred_check
          %p698 = pneg %p129
        $region98: #{g_ms_ssim_loss.1} parent=83 // pred_check_branch
          %700 = sbr.rel (%p698) target = $region100
        $region99: #{g_ms_ssim_loss.1} parent=83 // pred_region
          %702 = dma.done [#allocation8], 704
        $region100: #{g_ms_ssim_loss.1} parent=83 // pred_fallthru
          _
        // Predicated region
        $region101: #{g_ms_ssim_loss.1} parent=83 // pred_check
          %p703 = pneg %p150
        $region102: #{g_ms_ssim_loss.1} parent=83 // pred_check_branch
          %705 = sbr.rel (%p703) target = $region104
        $region103: #{g_ms_ssim_loss.1} parent=83 // pred_region
          %707 = dma.done [#allocation8], 320
        $region104: #{g_ms_ssim_loss.1} parent=83 // pred_fallthru
          _
        // Predicated region
        $region105: #{g_ms_ssim_loss.1} parent=83 // pred_check
          %p708 = pneg %p171
        $region106: #{g_ms_ssim_loss.1} parent=83 // pred_check_branch
          %710 = sbr.rel (%p708) target = $region108
        $region107: #{g_ms_ssim_loss.1} parent=83 // pred_region
          %712 = dma.done [#allocation11], 128
        $region108: #{g_ms_ssim_loss.1} parent=83 // pred_fallthru
          _
        // Predicated region
        $region109: #{g_ms_ssim_loss.1} parent=83 // pred_check
          %p713 = pneg %p192
        $region110: #{g_ms_ssim_loss.1} parent=83 // pred_check_branch
          %715 = sbr.rel (%p713) target = $region112
        $region111: #{g_ms_ssim_loss.1} parent=83 // pred_region
          %717 = dma.done [#allocation11], 16
        $region112: #{g_ms_ssim_loss.1} parent=83 // pred_fallthru
          _
        // Predicated region
        $region113: #{g_ms_ssim_loss.1} parent=83 // pred_check
          %p718 = pneg %p213
        $region114: #{g_ms_ssim_loss.1} parent=83 // pred_check_branch
          %720 = sbr.rel (%p718) target = $region116
        $region115: #{g_ms_ssim_loss.1} parent=83 // pred_region
          %722 = dma.done [#allocation14], 4608
        $region116: #{g_ms_ssim_loss.1} parent=83 // pred_fallthru
          _
        // Predicated region
        $region117: #{g_ms_ssim_loss.1} parent=83 // pred_check
          %p723 = pneg %p234
        $region118: #{g_ms_ssim_loss.1} parent=83 // pred_check_branch
          %725 = sbr.rel (%p723) target = $region120
        $region119: #{g_ms_ssim_loss.1} parent=83 // pred_region
          %727 = dma.done [#allocation14], 1536
        $region120: #{g_ms_ssim_loss.1} parent=83 // pred_fallthru
          _
        // Predicated region
        $region121: #{g_ms_ssim_loss.1} parent=83 // pred_check
          %p728 = pneg %p255
        $region122: #{g_ms_ssim_loss.1} parent=83 // pred_check_branch
          %730 = sbr.rel (%p728) target = $region124
        $region123: #{g_ms_ssim_loss.1} parent=83 // pred_region
          %732 = dma.done [#allocation17], 384
        $region124: #{g_ms_ssim_loss.1} parent=83 // pred_fallthru
          _
        // Predicated region
        $region125: #{g_ms_ssim_loss.1} parent=83 // pred_check
          %p733 = pneg %p276
        $region126: #{g_ms_ssim_loss.1} parent=83 // pred_check_branch
          %735 = sbr.rel (%p733) target = $region128
        $region127: #{g_ms_ssim_loss.1} parent=83 // pred_region
          %737 = dma.done [#allocation17], 192
        $region128: #{g_ms_ssim_loss.1} parent=83 // pred_fallthru
          _
        // Predicated region
        $region129: #{g_ms_ssim_loss.1} parent=83 // pred_check
          %p738 = pneg %p297
        $region130: #{g_ms_ssim_loss.1} parent=83 // pred_check_branch
          %740 = sbr.rel (%p738) target = $region132
        $region131: #{g_ms_ssim_loss.1} parent=83 // pred_region
          %742 = dma.done [#allocation20], 128
        $region132: #{g_ms_ssim_loss.1} parent=83 // pred_fallthru
          _
        // Predicated region
        $region133: #{g_ms_ssim_loss.1} parent=83 // pred_check
          %p743 = pneg %p318
        $region134: #{g_ms_ssim_loss.1} parent=83 // pred_check_branch
          %745 = sbr.rel (%p743) target = $region136
        $region135: #{g_ms_ssim_loss.1} parent=83 // pred_region
          %747 = dma.done [#allocation20], 1536
        $region136: #{g_ms_ssim_loss.1} parent=83 // pred_fallthru
          _
        // Predicated region
        $region137: #{g_ms_ssim_loss.1} parent=83 // pred_check
          %p748 = pneg %p339
        $region138: #{g_ms_ssim_loss.1} parent=83 // pred_check_branch
          %750 = sbr.rel (%p748) target = $region140
        $region139: #{g_ms_ssim_loss.1} parent=83 // pred_region
          %752 = dma.done [#allocation23], 384
        $region140: #{g_ms_ssim_loss.1} parent=83 // pred_fallthru
          _
        // Predicated region
        $region141: #{g_ms_ssim_loss.1} parent=83 // pred_check
          %p753 = pneg %p360
        $region142: #{g_ms_ssim_loss.1} parent=83 // pred_check_branch
          %755 = sbr.rel (%p753) target = $region144
        $region143: #{g_ms_ssim_loss.1} parent=83 // pred_region
          %757 = dma.done [#allocation23], 192
        $region144: #{g_ms_ssim_loss.1} parent=83 // pred_fallthru
          _
        // Predicated region
        $region145: #{g_ms_ssim_loss.1} parent=83 // pred_check
          %p758 = pneg %p381
        $region146: #{g_ms_ssim_loss.1} parent=83 // pred_check_branch
          %760 = sbr.rel (%p758) target = $region148
        $region147: #{g_ms_ssim_loss.1} parent=83 // pred_region
          %762 = dma.done [#allocation26], 128
        $region148: #{g_ms_ssim_loss.1} parent=83 // pred_fallthru
          _
        %s763 = sand.u32 %s48, 1
        %s764 = scalar_lea.sflag [#allocation3], %s763
        %s765 = sand.u32 %s48, 1
        %s766 = smul.addr %s765, 384
        %s767 = scalar_lea.vmem [#allocation2], %s766
        %p768 = pneg %p61
        %p769 = pneg %p58
        %s770 = sand.u32 %s40, 1
        %s771 = scalar_lea.sflag [#allocation5], %s770
        %s772 = sand.u32 %s74, 1
        %s773 = smul.addr %s772, 384
        %s774 = scalar_lea.vmem [#allocation4], %s773
        %p775 = pneg %p87
        %p776 = pneg %p84
        %p777 = pneg %p108
        %p778 = pneg %p105
        %p779 = pneg %p129
        %p780 = pneg %p126
        %p781 = pneg %p150
        %p782 = pneg %p147
        %p783 = pneg %p171
        %p784 = pneg %p168
        %p785 = pneg %p192
        %p786 = pneg %p189
        %p787 = pneg %p213
        %p788 = pneg %p210
        %p789 = pneg %p234
        %p790 = pneg %p231
        %p791 = pneg %p255
        %p792 = pneg %p252
        %p793 = pneg %p276
        %p794 = pneg %p273
        %p795 = pneg %p297
        %p796 = pneg %p294
        %p797 = pneg %p318
        %p798 = pneg %p315
        %p799 = pneg %p339
        %p800 = pneg %p336
        %p801 = pneg %p360
        %p802 = pneg %p357
        %p803 = pneg %p381
        %p804 = pneg %p378
        %p805 = pneg %p407
        %p806 = pneg %p404
        %p807 = scmp.lt.s32.totalorder %s40, 1
        %s808 = scalar_select %p807, %s40, 1
        %s809 = smul.addr %s808, 8
        %s810 = scalar_lea.vmem %s16, %s809
        %p811 = scmp.lt.s32.totalorder %s40, 1
        %s812 = scalar_select %p811, %s40, 1
        %s813 = smul.addr %s812, 8
        %s814 = scalar_lea.vmem %s16, %s813
        %v816 = vld [vmem:[%s677] sm:$0xff]
        %v817 = vld [vmem:[%s677 + $0x8] sm:$0xff]
        %v818 = vld [vmem:[%s677 + $0x10] sm:$0xff]
        %v819 = vld [vmem:[%s677 + $0x18] sm:$0xff]
        %v820 = vld [vmem:[%s677 + $0x20] sm:$0xff]
        %v821 = vld [vmem:[%s677 + $0x28] sm:$0xff]
        %v822 = vld [vmem:[%s677 + $0x30] sm:$0xff]
        %v823 = vld [vmem:[%s677 + $0x38] sm:$0xff]
        %v824 = vld [vmem:[%s677 + $0x40] sm:$0xff]
        %v825 = vld [vmem:[%s677 + $0x48] sm:$0xff]
        %v826 = vld [vmem:[%s677 + $0x50] sm:$0xff]
        %v827 = vld [vmem:[%s677 + $0x58] sm:$0xff]
        %v828 = vld [vmem:[%s677 + $0x60] sm:$0xff]
        %v829 = vld [vmem:[%s677 + $0x68] sm:$0xff]
        %v830 = vld [vmem:[%s677 + $0x70] sm:$0xff]
        %v831 = vld [vmem:[%s677 + $0x78] sm:$0xff]
        %v832 = vld [vmem:[%s677 + $0x80] sm:$0xff]
        %v833 = vld [vmem:[%s677 + $0x88] sm:$0xff]
        %v834 = vld [vmem:[%s677 + $0x90] sm:$0xff]
        %v835 = vld [vmem:[%s677 + $0x98] sm:$0xff]
        %v836 = vld [vmem:[%s677 + $0xa0] sm:$0xff]
        %v837 = vld [vmem:[%s677 + $0xa8] sm:$0xff]
        %v838 = vld [vmem:[%s677 + $0xb0] sm:$0xff]
        %v839 = vld [vmem:[%s677 + $0xb8] sm:$0xff]
        %v840 = vld [vmem:[%s677 + $0xc0] sm:$0xff]
        %v841 = vld [vmem:[%s677 + $0xc8] sm:$0xff]
        %v842 = vld [vmem:[%s677 + $0xd0] sm:$0xff]
        %v843 = vld [vmem:[%s677 + $0xd8] sm:$0xff]
        %v844 = vld [vmem:[%s677 + $0xe0] sm:$0xff]
        %v845 = vld [vmem:[%s677 + $0xe8] sm:$0xff]
        %v846 = vld [vmem:[%s677 + $0xf0] sm:$0xff]
        %v847 = vld [vmem:[%s677 + $0xf8] sm:$0xff]
        %v848 = vld [vmem:[%s677 + $0x100] sm:$0xff]
        %v849 = vld [vmem:[%s677 + $0x108] sm:$0xff]
        %v850 = vld [vmem:[%s677 + $0x110] sm:$0xff]
        %v851 = vld [vmem:[%s677 + $0x118] sm:$0xff]
        %v852 = vld [vmem:[%s677 + $0x120] sm:$0xff]
        %v853 = vld [vmem:[%s677 + $0x128] sm:$0xff]
        %v854 = vld [vmem:[%s677 + $0x130] sm:$0xff]
        %v855 = vld [vmem:[%s677 + $0x138] sm:$0xff]
        %v856 = vld [vmem:[%s677 + $0x140] sm:$0xff]
        %v857 = vld [vmem:[%s677 + $0x148] sm:$0xff]
        %v858 = vld [vmem:[%s677 + $0x150] sm:$0xff]
        %v859 = vld [vmem:[%s677 + $0x158] sm:$0xff]
        %v860 = vld [vmem:[%s677 + $0x160] sm:$0xff]
        %v861 = vld [vmem:[%s677 + $0x168] sm:$0xff]
        %v862 = vld [vmem:[%s677 + $0x170] sm:$0xff]
        %v863 = vld [vmem:[%s677 + $0x178] sm:$0xff]
        %v864 = vsub.f32 %v816, 0.5
        %v865 = vsub.f32 %v817, 0.5
        %v866 = vsub.f32 %v818, 0.5
        %v867 = vsub.f32 %v819, 0.5
        %v868 = vsub.f32 %v820, 0.5
        %v869 = vsub.f32 %v821, 0.5
        %v870 = vsub.f32 %v822, 0.5
        %v871 = vsub.f32 %v823, 0.5
        %v872 = vsub.f32 %v824, 0.5
        %v873 = vsub.f32 %v825, 0.5
        %v874 = vsub.f32 %v826, 0.5
        %v875 = vsub.f32 %v827, 0.5
        %v876 = vsub.f32 %v828, 0.5
        %v877 = vsub.f32 %v829, 0.5
        %v878 = vsub.f32 %v830, 0.5
        %v879 = vsub.f32 %v831, 0.5
        %v880 = vsub.f32 %v832, 0.5
        %v881 = vsub.f32 %v833, 0.5
        %v882 = vsub.f32 %v834, 0.5
        %v883 = vsub.f32 %v835, 0.5
        %v884 = vsub.f32 %v836, 0.5
        %v885 = vsub.f32 %v837, 0.5
        %v886 = vsub.f32 %v838, 0.5
        %v887 = vsub.f32 %v839, 0.5
        %v888 = vsub.f32 %v840, 0.5
        %v889 = vsub.f32 %v841, 0.5
        %v890 = vsub.f32 %v842, 0.5
        %v891 = vsub.f32 %v843, 0.5
        %v892 = vsub.f32 %v844, 0.5
        %v893 = vsub.f32 %v845, 0.5
        %v894 = vsub.f32 %v846, 0.5
        %v895 = vsub.f32 %v847, 0.5
        %v896 = vsub.f32 %v848, 0.5
        %v897 = vsub.f32 %v849, 0.5
        %v898 = vsub.f32 %v850, 0.5
        %v899 = vsub.f32 %v851, 0.5
        %v900 = vsub.f32 %v852, 0.5
        %v901 = vsub.f32 %v853, 0.5
        %v902 = vsub.f32 %v854, 0.5
        %v903 = vsub.f32 %v855, 0.5
        %v904 = vsub.f32 %v856, 0.5
        %v905 = vsub.f32 %v857, 0.5
        %v906 = vsub.f32 %v858, 0.5
        %v907 = vsub.f32 %v859, 0.5
        %v908 = vsub.f32 %v860, 0.5
        %v909 = vsub.f32 %v861, 0.5
        %v910 = vsub.f32 %v862, 0.5
        %v911 = vsub.f32 %v863, 0.5
        %v912 = vld [vmem:[%s687] sm:$0xff]
        %v913 = vld [vmem:[%s687 + $0x8] sm:$0xff]
        %v914 = vld [vmem:[%s687 + $0x10] sm:$0xff]
        %v915 = vld [vmem:[%s687 + $0x18] sm:$0xff]
        %v916 = vld [vmem:[%s687 + $0x20] sm:$0xff]
        %v917 = vld [vmem:[%s687 + $0x28] sm:$0xff]
        %v918 = vld [vmem:[%s687 + $0x30] sm:$0xff]
        %v919 = vld [vmem:[%s687 + $0x38] sm:$0xff]
        %v920 = vld [vmem:[%s687 + $0x40] sm:$0xff]
        %v921 = vld [vmem:[%s687 + $0x48] sm:$0xff]
        %v922 = vld [vmem:[%s687 + $0x50] sm:$0xff]
        %v923 = vld [vmem:[%s687 + $0x58] sm:$0xff]
        %v924 = vld [vmem:[%s687 + $0x60] sm:$0xff]
        %v925 = vld [vmem:[%s687 + $0x68] sm:$0xff]
        %v926 = vld [vmem:[%s687 + $0x70] sm:$0xff]
        %v927 = vld [vmem:[%s687 + $0x78] sm:$0xff]
        %v928 = vld [vmem:[%s687 + $0x80] sm:$0xff]
        %v929 = vld [vmem:[%s687 + $0x88] sm:$0xff]
        %v930 = vld [vmem:[%s687 + $0x90] sm:$0xff]
        %v931 = vld [vmem:[%s687 + $0x98] sm:$0xff]
        %v932 = vld [vmem:[%s687 + $0xa0] sm:$0xff]
        %v933 = vld [vmem:[%s687 + $0xa8] sm:$0xff]
        %v934 = vld [vmem:[%s687 + $0xb0] sm:$0xff]
        %v935 = vld [vmem:[%s687 + $0xb8] sm:$0xff]
        %v936 = vld [vmem:[%s687 + $0xc0] sm:$0xff]
        %v937 = vld [vmem:[%s687 + $0xc8] sm:$0xff]
        %v938 = vld [vmem:[%s687 + $0xd0] sm:$0xff]
        %v939 = vld [vmem:[%s687 + $0xd8] sm:$0xff]
        %v940 = vld [vmem:[%s687 + $0xe0] sm:$0xff]
        %v941 = vld [vmem:[%s687 + $0xe8] sm:$0xff]
        %v942 = vld [vmem:[%s687 + $0xf0] sm:$0xff]
        %v943 = vld [vmem:[%s687 + $0xf8] sm:$0xff]
        %v944 = vld [vmem:[%s687 + $0x100] sm:$0xff]
        %v945 = vld [vmem:[%s687 + $0x108] sm:$0xff]
        %v946 = vld [vmem:[%s687 + $0x110] sm:$0xff]
        %v947 = vld [vmem:[%s687 + $0x118] sm:$0xff]
        %v948 = vld [vmem:[%s687 + $0x120] sm:$0xff]
        %v949 = vld [vmem:[%s687 + $0x128] sm:$0xff]
        %v950 = vld [vmem:[%s687 + $0x130] sm:$0xff]
        %v951 = vld [vmem:[%s687 + $0x138] sm:$0xff]
        %v952 = vld [vmem:[%s687 + $0x140] sm:$0xff]
        %v953 = vld [vmem:[%s687 + $0x148] sm:$0xff]
        %v954 = vld [vmem:[%s687 + $0x150] sm:$0xff]
        %v955 = vld [vmem:[%s687 + $0x158] sm:$0xff]
        %v956 = vld [vmem:[%s687 + $0x160] sm:$0xff]
        %v957 = vld [vmem:[%s687 + $0x168] sm:$0xff]
        %v958 = vld [vmem:[%s687 + $0x170] sm:$0xff]
        %v959 = vld [vmem:[%s687 + $0x178] sm:$0xff]
        %v960 = vsub.f32 %v912, 0.5
        %v961 = vsub.f32 %v913, 0.5
        %v962 = vsub.f32 %v914, 0.5
        %v963 = vsub.f32 %v915, 0.5
        %v964 = vsub.f32 %v916, 0.5
        %v965 = vsub.f32 %v917, 0.5
        %v966 = vsub.f32 %v918, 0.5
        %v967 = vsub.f32 %v919, 0.5
        %v968 = vsub.f32 %v920, 0.5
        %v969 = vsub.f32 %v921, 0.5
        %v970 = vsub.f32 %v922, 0.5
        %v971 = vsub.f32 %v923, 0.5
        %v972 = vsub.f32 %v924, 0.5
        %v973 = vsub.f32 %v925, 0.5
        %v974 = vsub.f32 %v926, 0.5
        %v975 = vsub.f32 %v927, 0.5
        %v976 = vsub.f32 %v928, 0.5
        %v977 = vsub.f32 %v929, 0.5
        %v978 = vsub.f32 %v930, 0.5
        %v979 = vsub.f32 %v931, 0.5
        %v980 = vsub.f32 %v932, 0.5
        %v981 = vsub.f32 %v933, 0.5
        %v982 = vsub.f32 %v934, 0.5
        %v983 = vsub.f32 %v935, 0.5
        %v984 = vsub.f32 %v936, 0.5
        %v985 = vsub.f32 %v937, 0.5
        %v986 = vsub.f32 %v938, 0.5
        %v987 = vsub.f32 %v939, 0.5
        %v988 = vsub.f32 %v940, 0.5
        %v989 = vsub.f32 %v941, 0.5
        %v990 = vsub.f32 %v942, 0.5
        %v991 = vsub.f32 %v943, 0.5
        %v992 = vsub.f32 %v944, 0.5
        %v993 = vsub.f32 %v945, 0.5
        %v994 = vsub.f32 %v946, 0.5
        %v995 = vsub.f32 %v947, 0.5
        %v996 = vsub.f32 %v948, 0.5
        %v997 = vsub.f32 %v949, 0.5
        %v998 = vsub.f32 %v950, 0.5
        %v999 = vsub.f32 %v951, 0.5
        %v1000 = vsub.f32 %v952, 0.5
        %v1001 = vsub.f32 %v953, 0.5
        %v1002 = vsub.f32 %v954, 0.5
        %v1003 = vsub.f32 %v955, 0.5
        %v1004 = vsub.f32 %v956, 0.5
        %v1005 = vsub.f32 %v957, 0.5
        %v1006 = vsub.f32 %v958, 0.5
        %v1007 = vsub.f32 %v959, 0.5
        %v1008 = vlaneseq
        %v1009 = vshrl.u32 %v1008, 7
        %v1010 = vld [vmem:[#allocation6] sm:$0xff]
        %v1011 = vld [vmem:[#allocation6 + $0x8] sm:$0xff]
        %v1012 = vld [vmem:[#allocation6 + $0x10] sm:$0xff]
        %v1013 = vld [vmem:[#allocation6 + $0x18] sm:$0xff]
        %v1014 = vld [vmem:[#allocation6 + $0x20] sm:$0xff]
        %v1015 = vld [vmem:[#allocation6 + $0x28] sm:$0xff]
        %v1016 = vld [vmem:[#allocation6 + $0x30] sm:$0xff]
        %v1017 = vld [vmem:[#allocation6 + $0x38] sm:$0xff]
        %v1018 = vld [vmem:[#allocation6 + $0x40] sm:$0xff]
        %v1019 = vld [vmem:[#allocation6 + $0x48] sm:$0xff]
        %v1020 = vld [vmem:[#allocation6 + $0x50] sm:$0xff]
        %v1021 = vld [vmem:[#allocation6 + $0x58] sm:$0xff]
        %v1022 = vld [vmem:[#allocation6 + $0x60] sm:$0xff]
        %v1023 = vld [vmem:[#allocation6 + $0x68] sm:$0xff]
        %v1024 = vld [vmem:[#allocation6 + $0x70] sm:$0xff]
        %v1025 = vld [vmem:[#allocation6 + $0x78] sm:$0xff]
        %v1026 = vld [vmem:[#allocation6 + $0x80] sm:$0xff]
        %v1027 = vld [vmem:[#allocation6 + $0x88] sm:$0xff]
        %v1028 = vld [vmem:[#allocation6 + $0x90] sm:$0xff]
        %v1029 = vld [vmem:[#allocation6 + $0x98] sm:$0xff]
        %v1030 = vld [vmem:[#allocation6 + $0xa0] sm:$0xff]
        %v1031 = vld [vmem:[#allocation6 + $0xa8] sm:$0xff]
        %v1032 = vld [vmem:[#allocation6 + $0xb0] sm:$0x77]
        %v1033 = vld [vmem:[#allocation13] sm:$0xff]
        %v1034 = vld [vmem:[#allocation13 + $0x8] sm:$0xf]
        %v1035 = vld [vmem:[#allocation13 + $0xc] sm:$0xff]
        %v1036 = vld [vmem:[#allocation13 + $0x14] sm:$0xf]
        %v1037 = vld [vmem:[#allocation13 + $0x18] sm:$0xff]
        %v1038 = vld [vmem:[#allocation13 + $0x20] sm:$0xf]
        %v1039 = vld [vmem:[#allocation13 + $0x24] sm:$0xff]
        %v1040 = vld [vmem:[#allocation13 + $0x2c] sm:$0xf]
        %v1041 = vld [vmem:[#allocation13 + $0x30] sm:$0xff]
        %v1042 = vld [vmem:[#allocation13 + $0x38] sm:$0xf]
        %v1043 = vld [vmem:[#allocation13 + $0x3c] sm:$0xff]
        %v1044 = vld [vmem:[#allocation13 + $0x44] sm:$0xf]
        %v1045 = vld [vmem:[#allocation13 + $0x48] sm:$0xff]
        %v1046 = vld [vmem:[#allocation13 + $0x50] sm:$0xf]
        %v1047 = vld [vmem:[#allocation13 + $0x54] sm:$0xff]
        %v1048 = vld [vmem:[#allocation13 + $0x5c] sm:$0xf]
        %v1049 = vld [vmem:[#allocation13 + $0x60] sm:$0xff]
        %v1050 = vld [vmem:[#allocation13 + $0x68] sm:$0xf]
        %v1051 = vld [vmem:[#allocation13 + $0x6c] sm:$0xff]
        %v1052 = vld [vmem:[#allocation13 + $0x74] sm:$0xf]
        %v1053 = vld [vmem:[#allocation13 + $0x78] sm:$0xff]
        %v1054 = vld [vmem:[#allocation13 + $0x80] sm:$0xf]
        %v1055 = vld [vmem:[#allocation13 + $0x84] sm:$0xff]
        %v1056 = vld [vmem:[#allocation13 + $0x8c] sm:$0xf]
        %v1057 = vld [vmem:[#allocation13 + $0x90] sm:$0xff]
        %v1058 = vld [vmem:[#allocation13 + $0x98] sm:$0xf]
        %v1059 = vld [vmem:[#allocation13 + $0x9c] sm:$0xff]
        %v1060 = vld [vmem:[#allocation13 + $0xa4] sm:$0xf]
        %v1061 = vld [vmem:[#allocation13 + $0xa8] sm:$0xff]
        %v1062 = vld [vmem:[#allocation13 + $0xb0] sm:$0xf]
        %v1063 = vld [vmem:[#allocation13 + $0xb4] sm:$0xff]
        %v1064 = vld [vmem:[#allocation13 + $0xbc] sm:$0xf]
        %v1065 = vld [vmem:[#allocation13 + $0xc0] sm:$0xff]
        %v1066 = vld [vmem:[#allocation13 + $0xc8] sm:$0xf]
        %v1067 = vld [vmem:[#allocation13 + $0xcc] sm:$0xff]
        %v1068 = vld [vmem:[#allocation13 + $0xd4] sm:$0xf]
        %v1069 = vld [vmem:[#allocation13 + $0xd8] sm:$0xff]
        %v1070 = vld [vmem:[#allocation13 + $0xe0] sm:$0xf]
        %v1071 = vld [vmem:[#allocation13 + $0xe4] sm:$0xff]
        %v1072 = vld [vmem:[#allocation13 + $0xec] sm:$0xf]
        %v1073 = vld [vmem:[#allocation13 + $0xf0] sm:$0xff]
        %v1074 = vld [vmem:[#allocation13 + $0xf8] sm:$0xf]
        %v1075 = vld [vmem:[#allocation13 + $0xfc] sm:$0xff]
        %v1076 = vld [vmem:[#allocation13 + $0x104] sm:$0xf]
        %v1077 = vld [vmem:[#allocation13 + $0x108] sm:$0xff]
        %v1078 = vld [vmem:[#allocation13 + $0x110] sm:$0xf]
        %v1079 = vld [vmem:[#allocation13 + $0x114] sm:$0xff]
        %v1080 = vld [vmem:[#allocation13 + $0x11c] sm:$0xf]
        %v1081 = vpack.c.bf16 %v865, %v864
        %v1082 = vpack.c.bf16 %v867, %v866
        %v1083 = vpack.c.bf16 %v869, %v868
        %v1084 = vpack.c.bf16 %v871, %v870
        %v1085 = vpack.c.bf16 %v873, %v872
        %v1086 = vpack.c.bf16 %v875, %v874
        %v1087 = vpack.c.bf16 %v877, %v876
        %v1088 = vpack.c.bf16 %v879, %v878
        %v1089 = vpack.c.bf16 %v881, %v880
        %v1090 = vpack.c.bf16 %v883, %v882
        %v1091 = vpack.c.bf16 %v885, %v884
        %v1092 = vpack.c.bf16 %v887, %v886
        %v1093 = vpack.c.bf16 %v889, %v888
        %v1094 = vpack.c.bf16 %v891, %v890
        %v1095 = vpack.c.bf16 %v893, %v892
        %v1096 = vpack.c.bf16 %v895, %v894
        %v1097 = vpack.c.bf16 %v897, %v896
        %v1098 = vpack.c.bf16 %v899, %v898
        %v1099 = vpack.c.bf16 %v901, %v900
        %v1100 = vpack.c.bf16 %v903, %v902
        %v1101 = vpack.c.bf16 %v905, %v904
        %v1102 = vpack.c.bf16 %v907, %v906
        %v1103 = vpack.c.bf16 %v909, %v908
        %v1104 = vpack.c.bf16 %v911, %v910
        %v1105 = vpack.c.bf16 %v961, %v960
        %v1106 = vpack.c.bf16 %v963, %v962
        %v1107 = vpack.c.bf16 %v965, %v964
        %v1108 = vpack.c.bf16 %v967, %v966
        %v1109 = vpack.c.bf16 %v969, %v968
        %v1110 = vpack.c.bf16 %v971, %v970
        %v1111 = vpack.c.bf16 %v973, %v972
        %v1112 = vpack.c.bf16 %v975, %v974
        %v1113 = vpack.c.bf16 %v977, %v976
        %v1114 = vpack.c.bf16 %v979, %v978
        %v1115 = vpack.c.bf16 %v981, %v980
        %v1116 = vpack.c.bf16 %v983, %v982
        %v1117 = vpack.c.bf16 %v985, %v984
        %v1118 = vpack.c.bf16 %v987, %v986
        %v1119 = vpack.c.bf16 %v989, %v988
        %v1120 = vpack.c.bf16 %v991, %v990
        %v1121 = vpack.c.bf16 %v993, %v992
        %v1122 = vpack.c.bf16 %v995, %v994
        %v1123 = vpack.c.bf16 %v997, %v996
        %v1124 = vpack.c.bf16 %v999, %v998
        %v1125 = vpack.c.bf16 %v1001, %v1000
        %v1126 = vpack.c.bf16 %v1003, %v1002
        %v1127 = vpack.c.bf16 %v1005, %v1004
        %v1128 = vpack.c.bf16 %v1007, %v1006
        %v1129 = vmul.f32 %v864, %v864
        %v1130 = vmul.f32 %v865, %v865
        %v1131 = vmul.f32 %v866, %v866
        %v1132 = vmul.f32 %v867, %v867
        %v1133 = vmul.f32 %v868, %v868
        %v1134 = vmul.f32 %v869, %v869
        %v1135 = vmul.f32 %v870, %v870
        %v1136 = vmul.f32 %v871, %v871
        %v1137 = vmul.f32 %v872, %v872
        %v1138 = vmul.f32 %v873, %v873
        %v1139 = vmul.f32 %v874, %v874
        %v1140 = vmul.f32 %v875, %v875
        %v1141 = vmul.f32 %v876, %v876
        %v1142 = vmul.f32 %v877, %v877
        %v1143 = vmul.f32 %v878, %v878
        %v1144 = vmul.f32 %v879, %v879
        %v1145 = vmul.f32 %v880, %v880
        %v1146 = vmul.f32 %v881, %v881
        %v1147 = vmul.f32 %v882, %v882
        %v1148 = vmul.f32 %v883, %v883
        %v1149 = vmul.f32 %v884, %v884
        %v1150 = vmul.f32 %v885, %v885
        %v1151 = vmul.f32 %v886, %v886
        %v1152 = vmul.f32 %v887, %v887
        %v1153 = vmul.f32 %v888, %v888
        %v1154 = vmul.f32 %v889, %v889
        %v1155 = vmul.f32 %v890, %v890
        %v1156 = vmul.f32 %v891, %v891
        %v1157 = vmul.f32 %v892, %v892
        %v1158 = vmul.f32 %v893, %v893
        %v1159 = vmul.f32 %v894, %v894
        %v1160 = vmul.f32 %v895, %v895
        %v1161 = vmul.f32 %v896, %v896
        %v1162 = vmul.f32 %v897, %v897
        %v1163 = vmul.f32 %v898, %v898
        %v1164 = vmul.f32 %v899, %v899
        %v1165 = vmul.f32 %v900, %v900
        %v1166 = vmul.f32 %v901, %v901
        %v1167 = vmul.f32 %v902, %v902
        %v1168 = vmul.f32 %v903, %v903
        %v1169 = vmul.f32 %v904, %v904
        %v1170 = vmul.f32 %v905, %v905
        %v1171 = vmul.f32 %v906, %v906
        %v1172 = vmul.f32 %v907, %v907
        %v1173 = vmul.f32 %v908, %v908
        %v1174 = vmul.f32 %v909, %v909
        %v1175 = vmul.f32 %v910, %v910
        %v1176 = vmul.f32 %v911, %v911
        %v1177 = vpack.c.bf16 %v1130, %v1129
        %v1178 = vpack.c.bf16 %v1132, %v1131
        %v1179 = vpack.c.bf16 %v1134, %v1133
        %v1180 = vpack.c.bf16 %v1136, %v1135
        %v1181 = vpack.c.bf16 %v1138, %v1137
        %v1182 = vpack.c.bf16 %v1140, %v1139
        %v1183 = vpack.c.bf16 %v1142, %v1141
        %v1184 = vpack.c.bf16 %v1144, %v1143
        %v1185 = vpack.c.bf16 %v1146, %v1145
        %v1186 = vpack.c.bf16 %v1148, %v1147
        %v1187 = vpack.c.bf16 %v1150, %v1149
        %v1188 = vpack.c.bf16 %v1152, %v1151
        %v1189 = vpack.c.bf16 %v1154, %v1153
        %v1190 = vpack.c.bf16 %v1156, %v1155
        %v1191 = vpack.c.bf16 %v1158, %v1157
        %v1192 = vpack.c.bf16 %v1160, %v1159
        %v1193 = vpack.c.bf16 %v1162, %v1161
        %v1194 = vpack.c.bf16 %v1164, %v1163
        %v1195 = vpack.c.bf16 %v1166, %v1165
        %v1196 = vpack.c.bf16 %v1168, %v1167
        %v1197 = vpack.c.bf16 %v1170, %v1169
        %v1198 = vpack.c.bf16 %v1172, %v1171
        %v1199 = vpack.c.bf16 %v1174, %v1173
        %v1200 = vpack.c.bf16 %v1176, %v1175
        %v1201 = vmul.f32 %v960, %v960
        %v1202 = vmul.f32 %v961, %v961
        %v1203 = vmul.f32 %v962, %v962
        %v1204 = vmul.f32 %v963, %v963
        %v1205 = vmul.f32 %v964, %v964
        %v1206 = vmul.f32 %v965, %v965
        %v1207 = vmul.f32 %v966, %v966
        %v1208 = vmul.f32 %v967, %v967
        %v1209 = vmul.f32 %v968, %v968
        %v1210 = vmul.f32 %v969, %v969
        %v1211 = vmul.f32 %v970, %v970
        %v1212 = vmul.f32 %v971, %v971
        %v1213 = vmul.f32 %v972, %v972
        %v1214 = vmul.f32 %v973, %v973
        %v1215 = vmul.f32 %v974, %v974
        %v1216 = vmul.f32 %v975, %v975
        %v1217 = vmul.f32 %v976, %v976
        %v1218 = vmul.f32 %v977, %v977
        %v1219 = vmul.f32 %v978, %v978
        %v1220 = vmul.f32 %v979, %v979
        %v1221 = vmul.f32 %v980, %v980
        %v1222 = vmul.f32 %v981, %v981
        %v1223 = vmul.f32 %v982, %v982
        %v1224 = vmul.f32 %v983, %v983
        %v1225 = vmul.f32 %v984, %v984
        %v1226 = vmul.f32 %v985, %v985
        %v1227 = vmul.f32 %v986, %v986
        %v1228 = vmul.f32 %v987, %v987
        %v1229 = vmul.f32 %v988, %v988
        %v1230 = vmul.f32 %v989, %v989
        %v1231 = vmul.f32 %v990, %v990
        %v1232 = vmul.f32 %v991, %v991
        %v1233 = vmul.f32 %v992, %v992
        %v1234 = vmul.f32 %v993, %v993
        %v1235 = vmul.f32 %v994, %v994
        %v1236 = vmul.f32 %v995, %v995
        %v1237 = vmul.f32 %v996, %v996
        %v1238 = vmul.f32 %v997, %v997
        %v1239 = vmul.f32 %v998, %v998
        %v1240 = vmul.f32 %v999, %v999
        %v1241 = vmul.f32 %v1000, %v1000
        %v1242 = vmul.f32 %v1001, %v1001
        %v1243 = vmul.f32 %v1002, %v1002
        %v1244 = vmul.f32 %v1003, %v1003
        %v1245 = vmul.f32 %v1004, %v1004
        %v1246 = vmul.f32 %v1005, %v1005
        %v1247 = vmul.f32 %v1006, %v1006
        %v1248 = vmul.f32 %v1007, %v1007
        %v1249 = vpack.c.bf16 %v1202, %v1201
        %v1250 = vpack.c.bf16 %v1204, %v1203
        %v1251 = vpack.c.bf16 %v1206, %v1205
        %v1252 = vpack.c.bf16 %v1208, %v1207
        %v1253 = vpack.c.bf16 %v1210, %v1209
        %v1254 = vpack.c.bf16 %v1212, %v1211
        %v1255 = vpack.c.bf16 %v1214, %v1213
        %v1256 = vpack.c.bf16 %v1216, %v1215
        %v1257 = vpack.c.bf16 %v1218, %v1217
        %v1258 = vpack.c.bf16 %v1220, %v1219
        %v1259 = vpack.c.bf16 %v1222, %v1221
        %v1260 = vpack.c.bf16 %v1224, %v1223
        %v1261 = vpack.c.bf16 %v1226, %v1225
        %v1262 = vpack.c.bf16 %v1228, %v1227
        %v1263 = vpack.c.bf16 %v1230, %v1229
        %v1264 = vpack.c.bf16 %v1232, %v1231
        %v1265 = vpack.c.bf16 %v1234, %v1233
        %v1266 = vpack.c.bf16 %v1236, %v1235
        %v1267 = vpack.c.bf16 %v1238, %v1237
        %v1268 = vpack.c.bf16 %v1240, %v1239
        %v1269 = vpack.c.bf16 %v1242, %v1241
        %v1270 = vpack.c.bf16 %v1244, %v1243
        %v1271 = vpack.c.bf16 %v1246, %v1245
        %v1272 = vpack.c.bf16 %v1248, %v1247
        %v1273 = vmul.f32 %v864, %v960
        %v1274 = vmul.f32 %v865, %v961
        %v1275 = vmul.f32 %v866, %v962
        %v1276 = vmul.f32 %v867, %v963
        %v1277 = vmul.f32 %v868, %v964
        %v1278 = vmul.f32 %v869, %v965
        %v1279 = vmul.f32 %v870, %v966
        %v1280 = vmul.f32 %v871, %v967
        %v1281 = vmul.f32 %v872, %v968
        %v1282 = vmul.f32 %v873, %v969
        %v1283 = vmul.f32 %v874, %v970
        %v1284 = vmul.f32 %v875, %v971
        %v1285 = vmul.f32 %v876, %v972
        %v1286 = vmul.f32 %v877, %v973
        %v1287 = vmul.f32 %v878, %v974
        %v1288 = vmul.f32 %v879, %v975
        %v1289 = vmul.f32 %v880, %v976
        %v1290 = vmul.f32 %v881, %v977
        %v1291 = vmul.f32 %v882, %v978
        %v1292 = vmul.f32 %v883, %v979
        %v1293 = vmul.f32 %v884, %v980
        %v1294 = vmul.f32 %v885, %v981
        %v1295 = vmul.f32 %v886, %v982
        %v1296 = vmul.f32 %v887, %v983
        %v1297 = vmul.f32 %v888, %v984
        %v1298 = vmul.f32 %v889, %v985
        %v1299 = vmul.f32 %v890, %v986
        %v1300 = vmul.f32 %v891, %v987
        %v1301 = vmul.f32 %v892, %v988
        %v1302 = vmul.f32 %v893, %v989
        %v1303 = vmul.f32 %v894, %v990
        %v1304 = vmul.f32 %v895, %v991
        %v1305 = vmul.f32 %v896, %v992
        %v1306 = vmul.f32 %v897, %v993
        %v1307 = vmul.f32 %v898, %v994
        %v1308 = vmul.f32 %v899, %v995
        %v1309 = vmul.f32 %v900, %v996
        %v1310 = vmul.f32 %v901, %v997
        %v1311 = vmul.f32 %v902, %v998
        %v1312 = vmul.f32 %v903, %v999
        %v1313 = vmul.f32 %v904, %v1000
        %v1314 = vmul.f32 %v905, %v1001
        %v1315 = vmul.f32 %v906, %v1002
        %v1316 = vmul.f32 %v907, %v1003
        %v1317 = vmul.f32 %v908, %v1004
        %v1318 = vmul.f32 %v909, %v1005
        %v1319 = vmul.f32 %v910, %v1006
        %v1320 = vmul.f32 %v911, %v1007
        %v1321 = vpack.c.bf16 %v1274, %v1273
        %v1322 = vpack.c.bf16 %v1276, %v1275
        %v1323 = vpack.c.bf16 %v1278, %v1277
        %v1324 = vpack.c.bf16 %v1280, %v1279
        %v1325 = vpack.c.bf16 %v1282, %v1281
        %v1326 = vpack.c.bf16 %v1284, %v1283
        %v1327 = vpack.c.bf16 %v1286, %v1285
        %v1328 = vpack.c.bf16 %v1288, %v1287
        %v1329 = vpack.c.bf16 %v1290, %v1289
        %v1330 = vpack.c.bf16 %v1292, %v1291
        %v1331 = vpack.c.bf16 %v1294, %v1293
        %v1332 = vpack.c.bf16 %v1296, %v1295
        %v1333 = vpack.c.bf16 %v1298, %v1297
        %v1334 = vpack.c.bf16 %v1300, %v1299
        %v1335 = vpack.c.bf16 %v1302, %v1301
        %v1336 = vpack.c.bf16 %v1304, %v1303
        %v1337 = vpack.c.bf16 %v1306, %v1305
        %v1338 = vpack.c.bf16 %v1308, %v1307
        %v1339 = vpack.c.bf16 %v1310, %v1309
        %v1340 = vpack.c.bf16 %v1312, %v1311
        %v1341 = vpack.c.bf16 %v1314, %v1313
        %v1342 = vpack.c.bf16 %v1316, %v1315
        %v1343 = vpack.c.bf16 %v1318, %v1317
        %v1344 = vpack.c.bf16 %v1320, %v1319
        %v1369 = vunpack.c.l.b16 %v1081
        %v1370 = vunpack.c.h.b16 %v1081
        %v1371 = vunpack.c.l.b16 %v1082
        %v1372 = vunpack.c.h.b16 %v1082
        %v1373 = vunpack.c.l.b16 %v1083
        %v1374 = vunpack.c.h.b16 %v1083
        %v1375 = vunpack.c.l.b16 %v1084
        %v1376 = vunpack.c.h.b16 %v1084
        %v1377 = vunpack.c.l.b16 %v1085
        %v1378 = vunpack.c.h.b16 %v1085
        %v1379 = vunpack.c.l.b16 %v1086
        %v1380 = vunpack.c.h.b16 %v1086
        %v1381 = vunpack.c.l.b16 %v1087
        %v1382 = vunpack.c.h.b16 %v1087
        %v1383 = vunpack.c.l.b16 %v1088
        %v1384 = vunpack.c.h.b16 %v1088
        %v1385 = vunpack.c.l.b16 %v1089
        %v1386 = vunpack.c.h.b16 %v1089
        %v1387 = vunpack.c.l.b16 %v1090
        %v1388 = vunpack.c.h.b16 %v1090
        %v1389 = vunpack.c.l.b16 %v1091
        %v1390 = vunpack.c.h.b16 %v1091
        %v1391 = vunpack.c.l.b16 %v1092
        %v1392 = vunpack.c.h.b16 %v1092
        %v1393 = vunpack.c.l.b16 %v1093
        %v1394 = vunpack.c.h.b16 %v1093
        %v1395 = vunpack.c.l.b16 %v1094
        %v1396 = vunpack.c.h.b16 %v1094
        %v1397 = vunpack.c.l.b16 %v1095
        %v1398 = vunpack.c.h.b16 %v1095
        %v1399 = vunpack.c.l.b16 %v1096
        %v1400 = vunpack.c.h.b16 %v1096
        %v1401 = vunpack.c.l.b16 %v1097
        %v1402 = vunpack.c.h.b16 %v1097
        %v1403 = vunpack.c.l.b16 %v1098
        %v1404 = vunpack.c.h.b16 %v1098
        %v1405 = vunpack.c.l.b16 %v1099
        %v1406 = vunpack.c.h.b16 %v1099
        %v1407 = vunpack.c.l.b16 %v1100
        %v1408 = vunpack.c.h.b16 %v1100
        %v1409 = vunpack.c.l.b16 %v1101
        %v1410 = vunpack.c.h.b16 %v1101
        %v1411 = vunpack.c.l.b16 %v1102
        %v1412 = vunpack.c.h.b16 %v1102
        %v1413 = vunpack.c.l.b16 %v1103
        %v1414 = vunpack.c.h.b16 %v1103
        %v1415 = vunpack.c.l.b16 %v1104
        %v1416 = vunpack.c.h.b16 %v1104
        %v1417 = vpack.c.b16 %v1371, %v1369
        %v1418 = vpack.c.b16 %v1372, %v1370
        %v1419 = vpack.c.b16 %v1375, %v1373
        %v1420 = vpack.c.b16 %v1376, %v1374
        %v1421 = vpack.c.b16 %v1379, %v1377
        %v1422 = vpack.c.b16 %v1380, %v1378
        %v1423 = vpack.c.b16 %v1383, %v1381
        %v1424 = vpack.c.b16 %v1384, %v1382
        %v1425 = vpack.c.b16 %v1387, %v1385
        %v1426 = vpack.c.b16 %v1388, %v1386
        %v1427 = vpack.c.b16 %v1391, %v1389
        %v1428 = vpack.c.b16 %v1392, %v1390
        %v1429 = vpack.c.b16 %v1395, %v1393
        %v1430 = vpack.c.b16 %v1396, %v1394
        %v1431 = vpack.c.b16 %v1399, %v1397
        %v1432 = vpack.c.b16 %v1400, %v1398
        %v1433 = vpack.c.b16 %v1403, %v1401
        %v1434 = vpack.c.b16 %v1404, %v1402
        %v1435 = vpack.c.b16 %v1407, %v1405
        %v1436 = vpack.c.b16 %v1408, %v1406
        %v1437 = vpack.c.b16 %v1411, %v1409
        %v1438 = vpack.c.b16 %v1412, %v1410
        %v1439 = vpack.c.b16 %v1415, %v1413
        %v1440 = vpack.c.b16 %v1416, %v1414
        %v1477 = vunpack.c.l.b16 %v1105
        %v1478 = vunpack.c.h.b16 %v1105
        %v1479 = vunpack.c.l.b16 %v1106
        %v1480 = vunpack.c.h.b16 %v1106
        %v1481 = vunpack.c.l.b16 %v1107
        %v1482 = vunpack.c.h.b16 %v1107
        %v1483 = vunpack.c.l.b16 %v1108
        %v1484 = vunpack.c.h.b16 %v1108
        %v1485 = vunpack.c.l.b16 %v1109
        %v1486 = vunpack.c.h.b16 %v1109
        %v1487 = vunpack.c.l.b16 %v1110
        %v1488 = vunpack.c.h.b16 %v1110
        %v1489 = vunpack.c.l.b16 %v1111
        %v1490 = vunpack.c.h.b16 %v1111
        %v1491 = vunpack.c.l.b16 %v1112
        %v1492 = vunpack.c.h.b16 %v1112
        %v1493 = vunpack.c.l.b16 %v1113
        %v1494 = vunpack.c.h.b16 %v1113
        %v1495 = vunpack.c.l.b16 %v1114
        %v1496 = vunpack.c.h.b16 %v1114
        %v1497 = vunpack.c.l.b16 %v1115
        %v1498 = vunpack.c.h.b16 %v1115
        %v1499 = vunpack.c.l.b16 %v1116
        %v1500 = vunpack.c.h.b16 %v1116
        %v1501 = vunpack.c.l.b16 %v1117
        %v1502 = vunpack.c.h.b16 %v1117
        %v1503 = vunpack.c.l.b16 %v1118
        %v1504 = vunpack.c.h.b16 %v1118
        %v1505 = vunpack.c.l.b16 %v1119
        %v1506 = vunpack.c.h.b16 %v1119
        %v1507 = vunpack.c.l.b16 %v1120
        %v1508 = vunpack.c.h.b16 %v1120
        %v1509 = vunpack.c.l.b16 %v1121
        %v1510 = vunpack.c.h.b16 %v1121
        %v1511 = vunpack.c.l.b16 %v1122
        %v1512 = vunpack.c.h.b16 %v1122
        %v1513 = vunpack.c.l.b16 %v1123
        %v1514 = vunpack.c.h.b16 %v1123
        %v1515 = vunpack.c.l.b16 %v1124
        %v1516 = vunpack.c.h.b16 %v1124
        %v1517 = vunpack.c.l.b16 %v1125
        %v1518 = vunpack.c.h.b16 %v1125
        %v1519 = vunpack.c.l.b16 %v1126
        %v1520 = vunpack.c.h.b16 %v1126
        %v1521 = vunpack.c.l.b16 %v1127
        %v1522 = vunpack.c.h.b16 %v1127
        %v1523 = vunpack.c.l.b16 %v1128
        %v1524 = vunpack.c.h.b16 %v1128
        %v1525 = vpack.c.b16 %v1479, %v1477
        %v1526 = vpack.c.b16 %v1480, %v1478
        %v1527 = vpack.c.b16 %v1483, %v1481
        %v1528 = vpack.c.b16 %v1484, %v1482
        %v1529 = vpack.c.b16 %v1487, %v1485
        %v1530 = vpack.c.b16 %v1488, %v1486
        %v1531 = vpack.c.b16 %v1491, %v1489
        %v1532 = vpack.c.b16 %v1492, %v1490
        %v1533 = vpack.c.b16 %v1495, %v1493
        %v1534 = vpack.c.b16 %v1496, %v1494
        %v1535 = vpack.c.b16 %v1499, %v1497
        %v1536 = vpack.c.b16 %v1500, %v1498
        %v1537 = vpack.c.b16 %v1503, %v1501
        %v1538 = vpack.c.b16 %v1504, %v1502
        %v1539 = vpack.c.b16 %v1507, %v1505
        %v1540 = vpack.c.b16 %v1508, %v1506
        %v1541 = vpack.c.b16 %v1511, %v1509
        %v1542 = vpack.c.b16 %v1512, %v1510
        %v1543 = vpack.c.b16 %v1515, %v1513
        %v1544 = vpack.c.b16 %v1516, %v1514
        %v1545 = vpack.c.b16 %v1519, %v1517
        %v1546 = vpack.c.b16 %v1520, %v1518
        %v1547 = vpack.c.b16 %v1523, %v1521
        %v1548 = vpack.c.b16 %v1524, %v1522
        %v1585 = vunpack.c.l.b16 %v1177
        %v1586 = vunpack.c.h.b16 %v1177
        %v1587 = vunpack.c.l.b16 %v1178
        %v1588 = vunpack.c.h.b16 %v1178
        %v1589 = vunpack.c.l.b16 %v1179
        %v1590 = vunpack.c.h.b16 %v1179
        %v1591 = vunpack.c.l.b16 %v1180
        %v1592 = vunpack.c.h.b16 %v1180
        %v1593 = vunpack.c.l.b16 %v1181
        %v1594 = vunpack.c.h.b16 %v1181
        %v1595 = vunpack.c.l.b16 %v1182
        %v1596 = vunpack.c.h.b16 %v1182
        %v1597 = vunpack.c.l.b16 %v1183
        %v1598 = vunpack.c.h.b16 %v1183
        %v1599 = vunpack.c.l.b16 %v1184
        %v1600 = vunpack.c.h.b16 %v1184
        %v1601 = vunpack.c.l.b16 %v1185
        %v1602 = vunpack.c.h.b16 %v1185
        %v1603 = vunpack.c.l.b16 %v1186
        %v1604 = vunpack.c.h.b16 %v1186
        %v1605 = vunpack.c.l.b16 %v1187
        %v1606 = vunpack.c.h.b16 %v1187
        %v1607 = vunpack.c.l.b16 %v1188
        %v1608 = vunpack.c.h.b16 %v1188
        %v1609 = vunpack.c.l.b16 %v1189
        %v1610 = vunpack.c.h.b16 %v1189
        %v1611 = vunpack.c.l.b16 %v1190
        %v1612 = vunpack.c.h.b16 %v1190
        %v1613 = vunpack.c.l.b16 %v1191
        %v1614 = vunpack.c.h.b16 %v1191
        %v1615 = vunpack.c.l.b16 %v1192
        %v1616 = vunpack.c.h.b16 %v1192
        %v1617 = vunpack.c.l.b16 %v1193
        %v1618 = vunpack.c.h.b16 %v1193
        %v1619 = vunpack.c.l.b16 %v1194
        %v1620 = vunpack.c.h.b16 %v1194
        %v1621 = vunpack.c.l.b16 %v1195
        %v1622 = vunpack.c.h.b16 %v1195
        %v1623 = vunpack.c.l.b16 %v1196
        %v1624 = vunpack.c.h.b16 %v1196
        %v1625 = vunpack.c.l.b16 %v1197
        %v1626 = vunpack.c.h.b16 %v1197
        %v1627 = vunpack.c.l.b16 %v1198
        %v1628 = vunpack.c.h.b16 %v1198
        %v1629 = vunpack.c.l.b16 %v1199
        %v1630 = vunpack.c.h.b16 %v1199
        %v1631 = vunpack.c.l.b16 %v1200
        %v1632 = vunpack.c.h.b16 %v1200
        %v1633 = vpack.c.b16 %v1587, %v1585
        %v1634 = vpack.c.b16 %v1588, %v1586
        %v1635 = vpack.c.b16 %v1591, %v1589
        %v1636 = vpack.c.b16 %v1592, %v1590
        %v1637 = vpack.c.b16 %v1595, %v1593
        %v1638 = vpack.c.b16 %v1596, %v1594
        %v1639 = vpack.c.b16 %v1599, %v1597
        %v1640 = vpack.c.b16 %v1600, %v1598
        %v1641 = vpack.c.b16 %v1603, %v1601
        %v1642 = vpack.c.b16 %v1604, %v1602
        %v1643 = vpack.c.b16 %v1607, %v1605
        %v1644 = vpack.c.b16 %v1608, %v1606
        %v1645 = vpack.c.b16 %v1611, %v1609
        %v1646 = vpack.c.b16 %v1612, %v1610
        %v1647 = vpack.c.b16 %v1615, %v1613
        %v1648 = vpack.c.b16 %v1616, %v1614
        %v1649 = vpack.c.b16 %v1619, %v1617
        %v1650 = vpack.c.b16 %v1620, %v1618
        %v1651 = vpack.c.b16 %v1623, %v1621
        %v1652 = vpack.c.b16 %v1624, %v1622
        %v1653 = vpack.c.b16 %v1627, %v1625
        %v1654 = vpack.c.b16 %v1628, %v1626
        %v1655 = vpack.c.b16 %v1631, %v1629
        %v1656 = vpack.c.b16 %v1632, %v1630
        %v1693 = vunpack.c.l.b16 %v1249
        %v1694 = vunpack.c.h.b16 %v1249
        %v1695 = vunpack.c.l.b16 %v1250
        %v1696 = vunpack.c.h.b16 %v1250
        %v1697 = vunpack.c.l.b16 %v1251
        %v1698 = vunpack.c.h.b16 %v1251
        %v1699 = vunpack.c.l.b16 %v1252
        %v1700 = vunpack.c.h.b16 %v1252
        %v1701 = vunpack.c.l.b16 %v1253
        %v1702 = vunpack.c.h.b16 %v1253
        %v1703 = vunpack.c.l.b16 %v1254
        %v1704 = vunpack.c.h.b16 %v1254
        %v1705 = vunpack.c.l.b16 %v1255
        %v1706 = vunpack.c.h.b16 %v1255
        %v1707 = vunpack.c.l.b16 %v1256
        %v1708 = vunpack.c.h.b16 %v1256
        %v1709 = vunpack.c.l.b16 %v1257
        %v1710 = vunpack.c.h.b16 %v1257
        %v1711 = vunpack.c.l.b16 %v1258
        %v1712 = vunpack.c.h.b16 %v1258
        %v1713 = vunpack.c.l.b16 %v1259
        %v1714 = vunpack.c.h.b16 %v1259
        %v1715 = vunpack.c.l.b16 %v1260
        %v1716 = vunpack.c.h.b16 %v1260
        %v1717 = vunpack.c.l.b16 %v1261
        %v1718 = vunpack.c.h.b16 %v1261
        %v1719 = vunpack.c.l.b16 %v1262
        %v1720 = vunpack.c.h.b16 %v1262
        %v1721 = vunpack.c.l.b16 %v1263
        %v1722 = vunpack.c.h.b16 %v1263
        %v1723 = vunpack.c.l.b16 %v1264
        %v1724 = vunpack.c.h.b16 %v1264
        %v1725 = vunpack.c.l.b16 %v1265
        %v1726 = vunpack.c.h.b16 %v1265
        %v1727 = vunpack.c.l.b16 %v1266
        %v1728 = vunpack.c.h.b16 %v1266
        %v1729 = vunpack.c.l.b16 %v1267
        %v1730 = vunpack.c.h.b16 %v1267
        %v1731 = vunpack.c.l.b16 %v1268
        %v1732 = vunpack.c.h.b16 %v1268
        %v1733 = vunpack.c.l.b16 %v1269
        %v1734 = vunpack.c.h.b16 %v1269
        %v1735 = vunpack.c.l.b16 %v1270
        %v1736 = vunpack.c.h.b16 %v1270
        %v1737 = vunpack.c.l.b16 %v1271
        %v1738 = vunpack.c.h.b16 %v1271
        %v1739 = vunpack.c.l.b16 %v1272
        %v1740 = vunpack.c.h.b16 %v1272
        %v1741 = vpack.c.b16 %v1695, %v1693
        %v1742 = vpack.c.b16 %v1696, %v1694
        %v1743 = vpack.c.b16 %v1699, %v1697
        %v1744 = vpack.c.b16 %v1700, %v1698
        %v1745 = vpack.c.b16 %v1703, %v1701
        %v1746 = vpack.c.b16 %v1704, %v1702
        %v1747 = vpack.c.b16 %v1707, %v1705
        %v1748 = vpack.c.b16 %v1708, %v1706
        %v1749 = vpack.c.b16 %v1711, %v1709
        %v1750 = vpack.c.b16 %v1712, %v1710
        %v1751 = vpack.c.b16 %v1715, %v1713
        %v1752 = vpack.c.b16 %v1716, %v1714
        %v1753 = vpack.c.b16 %v1719, %v1717
        %v1754 = vpack.c.b16 %v1720, %v1718
        %v1755 = vpack.c.b16 %v1723, %v1721
        %v1756 = vpack.c.b16 %v1724, %v1722
        %v1757 = vpack.c.b16 %v1727, %v1725
        %v1758 = vpack.c.b16 %v1728, %v1726
        %v1759 = vpack.c.b16 %v1731, %v1729
        %v1760 = vpack.c.b16 %v1732, %v1730
        %v1761 = vpack.c.b16 %v1735, %v1733
        %v1762 = vpack.c.b16 %v1736, %v1734
        %v1763 = vpack.c.b16 %v1739, %v1737
        %v1764 = vpack.c.b16 %v1740, %v1738
        %v1801 = vunpack.c.l.b16 %v1321
        %v1802 = vunpack.c.h.b16 %v1321
        %v1803 = vunpack.c.l.b16 %v1322
        %v1804 = vunpack.c.h.b16 %v1322
        %v1805 = vunpack.c.l.b16 %v1323
        %v1806 = vunpack.c.h.b16 %v1323
        %v1807 = vunpack.c.l.b16 %v1324
        %v1808 = vunpack.c.h.b16 %v1324
        %v1809 = vunpack.c.l.b16 %v1325
        %v1810 = vunpack.c.h.b16 %v1325
        %v1811 = vunpack.c.l.b16 %v1326
        %v1812 = vunpack.c.h.b16 %v1326
        %v1813 = vunpack.c.l.b16 %v1327
        %v1814 = vunpack.c.h.b16 %v1327
        %v1815 = vunpack.c.l.b16 %v1328
        %v1816 = vunpack.c.h.b16 %v1328
        %v1817 = vunpack.c.l.b16 %v1329
        %v1818 = vunpack.c.h.b16 %v1329
        %v1819 = vunpack.c.l.b16 %v1330
        %v1820 = vunpack.c.h.b16 %v1330
        %v1821 = vunpack.c.l.b16 %v1331
        %v1822 = vunpack.c.h.b16 %v1331
        %v1823 = vunpack.c.l.b16 %v1332
        %v1824 = vunpack.c.h.b16 %v1332
        %v1825 = vunpack.c.l.b16 %v1333
        %v1826 = vunpack.c.h.b16 %v1333
        %v1827 = vunpack.c.l.b16 %v1334
        %v1828 = vunpack.c.h.b16 %v1334
        %v1829 = vunpack.c.l.b16 %v1335
        %v1830 = vunpack.c.h.b16 %v1335
        %v1831 = vunpack.c.l.b16 %v1336
        %v1832 = vunpack.c.h.b16 %v1336
        %v1833 = vunpack.c.l.b16 %v1337
        %v1834 = vunpack.c.h.b16 %v1337
        %v1835 = vunpack.c.l.b16 %v1338
        %v1836 = vunpack.c.h.b16 %v1338
        %v1837 = vunpack.c.l.b16 %v1339
        %v1838 = vunpack.c.h.b16 %v1339
        %v1839 = vunpack.c.l.b16 %v1340
        %v1840 = vunpack.c.h.b16 %v1340
        %v1841 = vunpack.c.l.b16 %v1341
        %v1842 = vunpack.c.h.b16 %v1341
        %v1843 = vunpack.c.l.b16 %v1342
        %v1844 = vunpack.c.h.b16 %v1342
        %v1845 = vunpack.c.l.b16 %v1343
        %v1846 = vunpack.c.h.b16 %v1343
        %v1847 = vunpack.c.l.b16 %v1344
        %v1848 = vunpack.c.h.b16 %v1344
        %v1849 = vpack.c.b16 %v1803, %v1801
        %v1850 = vpack.c.b16 %v1804, %v1802
        %v1851 = vpack.c.b16 %v1807, %v1805
        %v1852 = vpack.c.b16 %v1808, %v1806
        %v1853 = vpack.c.b16 %v1811, %v1809
        %v1854 = vpack.c.b16 %v1812, %v1810
        %v1855 = vpack.c.b16 %v1815, %v1813
        %v1856 = vpack.c.b16 %v1816, %v1814
        %v1857 = vpack.c.b16 %v1819, %v1817
        %v1858 = vpack.c.b16 %v1820, %v1818
        %v1859 = vpack.c.b16 %v1823, %v1821
        %v1860 = vpack.c.b16 %v1824, %v1822
        %v1861 = vpack.c.b16 %v1827, %v1825
        %v1862 = vpack.c.b16 %v1828, %v1826
        %v1863 = vpack.c.b16 %v1831, %v1829
        %v1864 = vpack.c.b16 %v1832, %v1830
        %v1865 = vpack.c.b16 %v1835, %v1833
        %v1866 = vpack.c.b16 %v1836, %v1834
        %v1867 = vpack.c.b16 %v1839, %v1837
        %v1868 = vpack.c.b16 %v1840, %v1838
        %v1869 = vpack.c.b16 %v1843, %v1841
        %v1870 = vpack.c.b16 %v1844, %v1842
        %v1871 = vpack.c.b16 %v1847, %v1845
        %v1872 = vpack.c.b16 %v1848, %v1846
        %v1933 = vunpack.c.l.b16 %v1033
        %v1934 = vunpack.c.h.b16 %v1033
        %v1935 = vunpack.c.l.b16 %v1034
        %v1936 = vunpack.c.l.b16 %v1035
        %v1937 = vunpack.c.h.b16 %v1035
        %v1938 = vunpack.c.l.b16 %v1036
        %v1939 = vunpack.c.l.b16 %v1037
        %v1940 = vunpack.c.h.b16 %v1037
        %v1941 = vunpack.c.l.b16 %v1038
        %v1942 = vunpack.c.l.b16 %v1039
        %v1943 = vunpack.c.h.b16 %v1039
        %v1944 = vunpack.c.l.b16 %v1040
        %v1945 = vunpack.c.l.b16 %v1041
        %v1946 = vunpack.c.h.b16 %v1041
        %v1947 = vunpack.c.l.b16 %v1042
        %v1948 = vunpack.c.l.b16 %v1043
        %v1949 = vunpack.c.h.b16 %v1043
        %v1950 = vunpack.c.l.b16 %v1044
        %v1951 = vunpack.c.l.b16 %v1045
        %v1952 = vunpack.c.h.b16 %v1045
        %v1953 = vunpack.c.l.b16 %v1046
        %v1954 = vunpack.c.l.b16 %v1047
        %v1955 = vunpack.c.h.b16 %v1047
        %v1956 = vunpack.c.l.b16 %v1048
        %v1957 = vunpack.c.l.b16 %v1049
        %v1958 = vunpack.c.h.b16 %v1049
        %v1959 = vunpack.c.l.b16 %v1050
        %v1960 = vunpack.c.l.b16 %v1051
        %v1961 = vunpack.c.h.b16 %v1051
        %v1962 = vunpack.c.l.b16 %v1052
        %v1963 = vunpack.c.l.b16 %v1053
        %v1964 = vunpack.c.h.b16 %v1053
        %v1965 = vunpack.c.l.b16 %v1054
        %v1966 = vunpack.c.l.b16 %v1055
        %v1967 = vunpack.c.h.b16 %v1055
        %v1968 = vunpack.c.l.b16 %v1056
        %v1969 = vunpack.c.l.b16 %v1057
        %v1970 = vunpack.c.h.b16 %v1057
        %v1971 = vunpack.c.l.b16 %v1058
        %v1972 = vunpack.c.l.b16 %v1059
        %v1973 = vunpack.c.h.b16 %v1059
        %v1974 = vunpack.c.l.b16 %v1060
        %v1975 = vunpack.c.l.b16 %v1061
        %v1976 = vunpack.c.h.b16 %v1061
        %v1977 = vunpack.c.l.b16 %v1062
        %v1978 = vunpack.c.l.b16 %v1063
        %v1979 = vunpack.c.h.b16 %v1063
        %v1980 = vunpack.c.l.b16 %v1064
        %v1981 = vunpack.c.l.b16 %v1065
        %v1982 = vunpack.c.h.b16 %v1065
        %v1983 = vunpack.c.l.b16 %v1066
        %v1984 = vunpack.c.l.b16 %v1067
        %v1985 = vunpack.c.h.b16 %v1067
        %v1986 = vunpack.c.l.b16 %v1068
        %v1987 = vunpack.c.l.b16 %v1069
        %v1988 = vunpack.c.h.b16 %v1069
        %v1989 = vunpack.c.l.b16 %v1070
        %v1990 = vunpack.c.l.b16 %v1071
        %v1991 = vunpack.c.h.b16 %v1071
        %v1992 = vunpack.c.l.b16 %v1072
        %v1993 = vunpack.c.l.b16 %v1073
        %v1994 = vunpack.c.h.b16 %v1073
        %v1995 = vunpack.c.l.b16 %v1074
        %v1996 = vunpack.c.l.b16 %v1075
        %v1997 = vunpack.c.h.b16 %v1075
        %v1998 = vunpack.c.l.b16 %v1076
        %v1999 = vunpack.c.l.b16 %v1077
        %v2000 = vunpack.c.h.b16 %v1077
        %v2001 = vunpack.c.l.b16 %v1078
        %v2002 = vunpack.c.l.b16 %v1079
        %v2003 = vunpack.c.h.b16 %v1079
        %v2004 = vunpack.c.l.b16 %v1080
        %v2005 = vpack.c.b16 %v1936, %v1933
        %v2006 = vpack.c.b16 %v1937, %v1934
        %v2007 = vpack.c.b16 %v1938, %v1935
        %v2008 = vpack.c.b16 %v1942, %v1939
        %v2009 = vpack.c.b16 %v1943, %v1940
        %v2010 = vpack.c.b16 %v1944, %v1941
        %v2011 = vpack.c.b16 %v1948, %v1945
        %v2012 = vpack.c.b16 %v1949, %v1946
        %v2013 = vpack.c.b16 %v1950, %v1947
        %v2014 = vpack.c.b16 %v1954, %v1951
        %v2015 = vpack.c.b16 %v1955, %v1952
        %v2016 = vpack.c.b16 %v1956, %v1953
        %v2017 = vpack.c.b16 %v1960, %v1957
        %v2018 = vpack.c.b16 %v1961, %v1958
        %v2019 = vpack.c.b16 %v1962, %v1959
        %v2020 = vpack.c.b16 %v1966, %v1963
        %v2021 = vpack.c.b16 %v1967, %v1964
        %v2022 = vpack.c.b16 %v1968, %v1965
        %v2023 = vpack.c.b16 %v1972, %v1969
        %v2024 = vpack.c.b16 %v1973, %v1970
        %v2025 = vpack.c.b16 %v1974, %v1971
        %v2026 = vpack.c.b16 %v1978, %v1975
        %v2027 = vpack.c.b16 %v1979, %v1976
        %v2028 = vpack.c.b16 %v1980, %v1977
        %v2029 = vpack.c.b16 %v1984, %v1981
        %v2030 = vpack.c.b16 %v1985, %v1982
        %v2031 = vpack.c.b16 %v1986, %v1983
        %v2032 = vpack.c.b16 %v1990, %v1987
        %v2033 = vpack.c.b16 %v1991, %v1988
        %v2034 = vpack.c.b16 %v1992, %v1989
        %v2035 = vpack.c.b16 %v1996, %v1993
        %v2036 = vpack.c.b16 %v1997, %v1994
        %v2037 = vpack.c.b16 %v1998, %v1995
        %v2038 = vpack.c.b16 %v2002, %v1999
        %v2039 = vpack.c.b16 %v2003, %v2000
        %v2040 = vpack.c.b16 %v2004, %v2001
        %vm2077 = vcmask 523264
        %v2079 = vsel %vm2077, %v1418, 0
        %v2082 = vsel %vm2077, %v1420, 0
        %v2085 = vsel %vm2077, %v1422, 0
        %v2088 = vsel %vm2077, %v1424, 0
        %v2091 = vsel %vm2077, %v1426, 0
        %v2094 = vsel %vm2077, %v1428, 0
        %v2097 = vsel %vm2077, %v1430, 0
        %v2100 = vsel %vm2077, %v1432, 0
        %v2103 = vsel %vm2077, %v1434, 0
        %v2106 = vsel %vm2077, %v1436, 0
        %v2109 = vsel %vm2077, %v1438, 0
        %v2112 = vsel %vm2077, %v1440, 0
        %v2115 = vsel %vm2077, %v1526, 0
        %v2118 = vsel %vm2077, %v1528, 0
        %v2121 = vsel %vm2077, %v1530, 0
        %v2124 = vsel %vm2077, %v1532, 0
        %v2127 = vsel %vm2077, %v1534, 0
        %v2130 = vsel %vm2077, %v1536, 0
        %v2133 = vsel %vm2077, %v1538, 0
        %v2136 = vsel %vm2077, %v1540, 0
        %v2139 = vsel %vm2077, %v1542, 0
        %v2142 = vsel %vm2077, %v1544, 0
        %v2145 = vsel %vm2077, %v1546, 0
        %v2148 = vsel %vm2077, %v1548, 0
        %v2151 = vsel %vm2077, %v1634, 0
        %v2154 = vsel %vm2077, %v1636, 0
        %v2157 = vsel %vm2077, %v1638, 0
        %v2160 = vsel %vm2077, %v1640, 0
        %v2163 = vsel %vm2077, %v1642, 0
        %v2166 = vsel %vm2077, %v1644, 0
        %v2169 = vsel %vm2077, %v1646, 0
        %v2172 = vsel %vm2077, %v1648, 0
        %v2175 = vsel %vm2077, %v1650, 0
        %v2178 = vsel %vm2077, %v1652, 0
        %v2181 = vsel %vm2077, %v1654, 0
        %v2184 = vsel %vm2077, %v1656, 0
        %v2187 = vsel %vm2077, %v1742, 0
        %v2190 = vsel %vm2077, %v1744, 0
        %v2193 = vsel %vm2077, %v1746, 0
        %v2196 = vsel %vm2077, %v1748, 0
        %v2199 = vsel %vm2077, %v1750, 0
        %v2202 = vsel %vm2077, %v1752, 0
        %v2205 = vsel %vm2077, %v1754, 0
        %v2208 = vsel %vm2077, %v1756, 0
        %v2211 = vsel %vm2077, %v1758, 0
        %v2214 = vsel %vm2077, %v1760, 0
        %v2217 = vsel %vm2077, %v1762, 0
        %v2220 = vsel %vm2077, %v1764, 0
        %v2223 = vsel %vm2077, %v1850, 0
        %v2226 = vsel %vm2077, %v1852, 0
        %v2229 = vsel %vm2077, %v1854, 0
        %v2232 = vsel %vm2077, %v1856, 0
        %v2235 = vsel %vm2077, %v1858, 0
        %v2238 = vsel %vm2077, %v1860, 0
        %v2241 = vsel %vm2077, %v1862, 0
        %v2244 = vsel %vm2077, %v1864, 0
        %v2247 = vsel %vm2077, %v1866, 0
        %v2250 = vsel %vm2077, %v1868, 0
        %v2253 = vsel %vm2077, %v1870, 0
        %v2256 = vsel %vm2077, %v1872, 0
        %2258 = vmatpush.bf16.msra.mxu0 %v2026
        %2259 = vmatpush.bf16.msra.mxu0 %v2023
        %2260 = vmatpush.bf16.msra.mxu0 %v2020
        %2261 = vmatpush.bf16.msra.mxu0 %v2017
        %2262 = vmatpush.bf16.msra.mxu0 %v2014
        %2263 = vmatpush.bf16.msra.mxu0 %v2011
        %2264 = vmatpush.bf16.msra.mxu0 %v2008
        %2265 = vmatpush.bf16.msra.mxu0 %v2005
        %2266 = vmatmul.bf16.gmra.mxu0 %v1417
        %v2267 = vpop.f32.mrf.mxu0
        %v2268 = vadd.f32 0.0, %v2267
        %v2269 = vpop.f32.mrf.mxu0
        %v2270 = vadd.f32 0.0, %v2269
        %2271 = vmatmul.bf16.gmra.mxu0 %v1419
        %v2272 = vpop.f32.mrf.mxu0
        %v2273 = vadd.f32 0.0, %v2272
        %v2274 = vpop.f32.mrf.mxu0
        %v2275 = vadd.f32 0.0, %v2274
        %2276 = vmatmul.bf16.gmra.mxu0 %v1421
        %v2277 = vpop.f32.mrf.mxu0
        %v2278 = vadd.f32 0.0, %v2277
        %v2279 = vpop.f32.mrf.mxu0
        %v2280 = vadd.f32 0.0, %v2279
        %2281 = vmatmul.bf16.gmra.mxu0 %v1423
        %v2282 = vpop.f32.mrf.mxu0
        %v2283 = vadd.f32 0.0, %v2282
        %v2284 = vpop.f32.mrf.mxu0
        %v2285 = vadd.f32 0.0, %v2284
        %2286 = vmatmul.bf16.gmra.mxu0 %v1425
        %v2287 = vpop.f32.mrf.mxu0
        %v2288 = vadd.f32 0.0, %v2287
        %v2289 = vpop.f32.mrf.mxu0
        %v2290 = vadd.f32 0.0, %v2289
        %2291 = vmatmul.bf16.gmra.mxu0 %v1427
        %v2292 = vpop.f32.mrf.mxu0
        %v2293 = vadd.f32 0.0, %v2292
        %v2294 = vpop.f32.mrf.mxu0
        %v2295 = vadd.f32 0.0, %v2294
        %2296 = vmatmul.bf16.gmra.mxu0 %v1429
        %v2297 = vpop.f32.mrf.mxu0
        %v2298 = vadd.f32 0.0, %v2297
        %v2299 = vpop.f32.mrf.mxu0
        %v2300 = vadd.f32 0.0, %v2299
        %2301 = vmatmul.bf16.gmra.mxu0 %v1431
        %v2302 = vpop.f32.mrf.mxu0
        %v2303 = vadd.f32 0.0, %v2302
        %v2304 = vpop.f32.mrf.mxu0
        %v2305 = vadd.f32 0.0, %v2304
        %2306 = vmatmul.bf16.gmra.mxu0 %v1433
        %v2307 = vpop.f32.mrf.mxu0
        %v2308 = vadd.f32 0.0, %v2307
        %v2309 = vpop.f32.mrf.mxu0
        %v2310 = vadd.f32 0.0, %v2309
        %2311 = vmatmul.bf16.gmra.mxu0 %v1435
        %v2312 = vpop.f32.mrf.mxu0
        %v2313 = vadd.f32 0.0, %v2312
        %v2314 = vpop.f32.mrf.mxu0
        %v2315 = vadd.f32 0.0, %v2314
        %2316 = vmatmul.bf16.gmra.mxu0 %v1437
        %v2317 = vpop.f32.mrf.mxu0
        %v2318 = vadd.f32 0.0, %v2317
        %v2319 = vpop.f32.mrf.mxu0
        %v2320 = vadd.f32 0.0, %v2319
        %2321 = vmatmul.bf16.gmra.mxu0 %v1439
        %v2322 = vpop.f32.mrf.mxu0
        %v2323 = vadd.f32 0.0, %v2322
        %v2324 = vpop.f32.mrf.mxu0
        %v2325 = vadd.f32 0.0, %v2324
        %2326 = vmatmul.bf16.gmra.mxu0 %v1525
        %v2327 = vpop.f32.mrf.mxu0
        %v2328 = vadd.f32 0.0, %v2327
        %v2329 = vpop.f32.mrf.mxu0
        %v2330 = vadd.f32 0.0, %v2329
        %2331 = vmatmul.bf16.gmra.mxu0 %v1527
        %v2332 = vpop.f32.mrf.mxu0
        %v2333 = vadd.f32 0.0, %v2332
        %v2334 = vpop.f32.mrf.mxu0
        %v2335 = vadd.f32 0.0, %v2334
        %2336 = vmatmul.bf16.gmra.mxu0 %v1529
        %v2337 = vpop.f32.mrf.mxu0
        %v2338 = vadd.f32 0.0, %v2337
        %v2339 = vpop.f32.mrf.mxu0
        %v2340 = vadd.f32 0.0, %v2339
        %2341 = vmatmul.bf16.gmra.mxu0 %v1531
        %v2342 = vpop.f32.mrf.mxu0
        %v2343 = vadd.f32 0.0, %v2342
        %v2344 = vpop.f32.mrf.mxu0
        %v2345 = vadd.f32 0.0, %v2344
        %2346 = vmatmul.bf16.gmra.mxu0 %v1533
        %v2347 = vpop.f32.mrf.mxu0
        %v2348 = vadd.f32 0.0, %v2347
        %v2349 = vpop.f32.mrf.mxu0
        %v2350 = vadd.f32 0.0, %v2349
        %2351 = vmatmul.bf16.gmra.mxu0 %v1535
        %v2352 = vpop.f32.mrf.mxu0
        %v2353 = vadd.f32 0.0, %v2352
        %v2354 = vpop.f32.mrf.mxu0
        %v2355 = vadd.f32 0.0, %v2354
        %2356 = vmatmul.bf16.gmra.mxu0 %v1537
        %v2357 = vpop.f32.mrf.mxu0
        %v2358 = vadd.f32 0.0, %v2357
        %v2359 = vpop.f32.mrf.mxu0
        %v2360 = vadd.f32 0.0, %v2359
        %2361 = vmatmul.bf16.gmra.mxu0 %v1539
        %v2362 = vpop.f32.mrf.mxu0
        %v2363 = vadd.f32 0.0, %v2362
        %v2364 = vpop.f32.mrf.mxu0
        %v2365 = vadd.f32 0.0, %v2364
        %2366 = vmatmul.bf16.gmra.mxu0 %v1541
        %v2367 = vpop.f32.mrf.mxu0
        %v2368 = vadd.f32 0.0, %v2367
        %v2369 = vpop.f32.mrf.mxu0
        %v2370 = vadd.f32 0.0, %v2369
        %2371 = vmatmul.bf16.gmra.mxu0 %v1543
        %v2372 = vpop.f32.mrf.mxu0
        %v2373 = vadd.f32 0.0, %v2372
        %v2374 = vpop.f32.mrf.mxu0
        %v2375 = vadd.f32 0.0, %v2374
        %2376 = vmatmul.bf16.gmra.mxu0 %v1545
        %v2377 = vpop.f32.mrf.mxu0
        %v2378 = vadd.f32 0.0, %v2377
        %v2379 = vpop.f32.mrf.mxu0
        %v2380 = vadd.f32 0.0, %v2379
        %2381 = vmatmul.bf16.gmra.mxu0 %v1547
        %v2382 = vpop.f32.mrf.mxu0
        %v2383 = vadd.f32 0.0, %v2382
        %v2384 = vpop.f32.mrf.mxu0
        %v2385 = vadd.f32 0.0, %v2384
        %2386 = vmatmul.bf16.gmra.mxu0 %v1633
        %v2387 = vpop.f32.mrf.mxu0
        %v2388 = vadd.f32 0.0, %v2387
        %v2389 = vpop.f32.mrf.mxu0
        %v2390 = vadd.f32 0.0, %v2389
        %2391 = vmatmul.bf16.gmra.mxu0 %v1635
        %v2392 = vpop.f32.mrf.mxu0
        %v2393 = vadd.f32 0.0, %v2392
        %v2394 = vpop.f32.mrf.mxu0
        %v2395 = vadd.f32 0.0, %v2394
        %2396 = vmatmul.bf16.gmra.mxu0 %v1637
        %v2397 = vpop.f32.mrf.mxu0
        %v2398 = vadd.f32 0.0, %v2397
        %v2399 = vpop.f32.mrf.mxu0
        %v2400 = vadd.f32 0.0, %v2399
        %2401 = vmatmul.bf16.gmra.mxu0 %v1639
        %v2402 = vpop.f32.mrf.mxu0
        %v2403 = vadd.f32 0.0, %v2402
        %v2404 = vpop.f32.mrf.mxu0
        %v2405 = vadd.f32 0.0, %v2404
        %2406 = vmatmul.bf16.gmra.mxu0 %v1641
        %v2407 = vpop.f32.mrf.mxu0
        %v2408 = vadd.f32 0.0, %v2407
        %v2409 = vpop.f32.mrf.mxu0
        %v2410 = vadd.f32 0.0, %v2409
        %2411 = vmatmul.bf16.gmra.mxu0 %v1643
        %v2412 = vpop.f32.mrf.mxu0
        %v2413 = vadd.f32 0.0, %v2412
        %v2414 = vpop.f32.mrf.mxu0
        %v2415 = vadd.f32 0.0, %v2414
        %2416 = vmatmul.bf16.gmra.mxu0 %v1645
        %v2417 = vpop.f32.mrf.mxu0
        %v2418 = vadd.f32 0.0, %v2417
        %v2419 = vpop.f32.mrf.mxu0
        %v2420 = vadd.f32 0.0, %v2419
        %2421 = vmatmul.bf16.gmra.mxu0 %v1647
        %v2422 = vpop.f32.mrf.mxu0
        %v2423 = vadd.f32 0.0, %v2422
        %v2424 = vpop.f32.mrf.mxu0
        %v2425 = vadd.f32 0.0, %v2424
        %2426 = vmatmul.bf16.gmra.mxu0 %v1649
        %v2427 = vpop.f32.mrf.mxu0
        %v2428 = vadd.f32 0.0, %v2427
        %v2429 = vpop.f32.mrf.mxu0
        %v2430 = vadd.f32 0.0, %v2429
        %2431 = vmatmul.bf16.gmra.mxu0 %v1651
        %v2432 = vpop.f32.mrf.mxu0
        %v2433 = vadd.f32 0.0, %v2432
        %v2434 = vpop.f32.mrf.mxu0
        %v2435 = vadd.f32 0.0, %v2434
        %2436 = vmatmul.bf16.gmra.mxu0 %v1653
        %v2437 = vpop.f32.mrf.mxu0
        %v2438 = vadd.f32 0.0, %v2437
        %v2439 = vpop.f32.mrf.mxu0
        %v2440 = vadd.f32 0.0, %v2439
        %2441 = vmatmul.bf16.gmra.mxu0 %v1655
        %v2442 = vpop.f32.mrf.mxu0
        %v2443 = vadd.f32 0.0, %v2442
        %v2444 = vpop.f32.mrf.mxu0
        %v2445 = vadd.f32 0.0, %v2444
        %2446 = vmatmul.bf16.gmra.mxu0 %v1741
        %v2447 = vpop.f32.mrf.mxu0
        %v2448 = vadd.f32 0.0, %v2447
        %v2449 = vpop.f32.mrf.mxu0
        %v2450 = vadd.f32 0.0, %v2449
        %2451 = vmatmul.bf16.gmra.mxu0 %v1743
        %v2452 = vpop.f32.mrf.mxu0
        %v2453 = vadd.f32 0.0, %v2452
        %v2454 = vpop.f32.mrf.mxu0
        %v2455 = vadd.f32 0.0, %v2454
        %2456 = vmatmul.bf16.gmra.mxu0 %v1745
        %v2457 = vpop.f32.mrf.mxu0
        %v2458 = vadd.f32 0.0, %v2457
        %v2459 = vpop.f32.mrf.mxu0
        %v2460 = vadd.f32 0.0, %v2459
        %2461 = vmatmul.bf16.gmra.mxu0 %v1747
        %v2462 = vpop.f32.mrf.mxu0
        %v2463 = vadd.f32 0.0, %v2462
        %v2464 = vpop.f32.mrf.mxu0
        %v2465 = vadd.f32 0.0, %v2464
        %2466 = vmatmul.bf16.gmra.mxu0 %v1749
        %v2467 = vpop.f32.mrf.mxu0
        %v2468 = vadd.f32 0.0, %v2467
        %v2469 = vpop.f32.mrf.mxu0
        %v2470 = vadd.f32 0.0, %v2469
        %2471 = vmatmul.bf16.gmra.mxu0 %v1751
        %v2472 = vpop.f32.mrf.mxu0
        %v2473 = vadd.f32 0.0, %v2472
        %v2474 = vpop.f32.mrf.mxu0
        %v2475 = vadd.f32 0.0, %v2474
        %2476 = vmatmul.bf16.gmra.mxu0 %v1753
        %v2477 = vpop.f32.mrf.mxu0
        %v2478 = vadd.f32 0.0, %v2477
        %v2479 = vpop.f32.mrf.mxu0
        %v2480 = vadd.f32 0.0, %v2479
        %2481 = vmatmul.bf16.gmra.mxu0 %v1755
        %v2482 = vpop.f32.mrf.mxu0
        %v2483 = vadd.f32 0.0, %v2482
        %v2484 = vpop.f32.mrf.mxu0
        %v2485 = vadd.f32 0.0, %v2484
        %2486 = vmatmul.bf16.gmra.mxu0 %v1757
        %v2487 = vpop.f32.mrf.mxu0
        %v2488 = vadd.f32 0.0, %v2487
        %v2489 = vpop.f32.mrf.mxu0
        %v2490 = vadd.f32 0.0, %v2489
        %2491 = vmatmul.bf16.gmra.mxu0 %v1759
        %v2492 = vpop.f32.mrf.mxu0
        %v2493 = vadd.f32 0.0, %v2492
        %v2494 = vpop.f32.mrf.mxu0
        %v2495 = vadd.f32 0.0, %v2494
        %2496 = vmatmul.bf16.gmra.mxu0 %v1761
        %v2497 = vpop.f32.mrf.mxu0
        %v2498 = vadd.f32 0.0, %v2497
        %v2499 = vpop.f32.mrf.mxu0
        %v2500 = vadd.f32 0.0, %v2499
        %2501 = vmatmul.bf16.gmra.mxu0 %v1763
        %v2502 = vpop.f32.mrf.mxu0
        %v2503 = vadd.f32 0.0, %v2502
        %v2504 = vpop.f32.mrf.mxu0
        %v2505 = vadd.f32 0.0, %v2504
        %2506 = vmatmul.bf16.gmra.mxu0 %v1849
        %v2507 = vpop.f32.mrf.mxu0
        %v2508 = vadd.f32 0.0, %v2507
        %v2509 = vpop.f32.mrf.mxu0
        %v2510 = vadd.f32 0.0, %v2509
        %2511 = vmatmul.bf16.gmra.mxu0 %v1851
        %v2512 = vpop.f32.mrf.mxu0
        %v2513 = vadd.f32 0.0, %v2512
        %v2514 = vpop.f32.mrf.mxu0
        %v2515 = vadd.f32 0.0, %v2514
        %2516 = vmatmul.bf16.gmra.mxu0 %v1853
        %v2517 = vpop.f32.mrf.mxu0
        %v2518 = vadd.f32 0.0, %v2517
        %v2519 = vpop.f32.mrf.mxu0
        %v2520 = vadd.f32 0.0, %v2519
        %2521 = vmatmul.bf16.gmra.mxu0 %v1855
        %v2522 = vpop.f32.mrf.mxu0
        %v2523 = vadd.f32 0.0, %v2522
        %v2524 = vpop.f32.mrf.mxu0
        %v2525 = vadd.f32 0.0, %v2524
        %2526 = vmatmul.bf16.gmra.mxu0 %v1857
        %v2527 = vpop.f32.mrf.mxu0
        %v2528 = vadd.f32 0.0, %v2527
        %v2529 = vpop.f32.mrf.mxu0
        %v2530 = vadd.f32 0.0, %v2529
        %2531 = vmatmul.bf16.gmra.mxu0 %v1859
        %v2532 = vpop.f32.mrf.mxu0
        %v2533 = vadd.f32 0.0, %v2532
        %v2534 = vpop.f32.mrf.mxu0
        %v2535 = vadd.f32 0.0, %v2534
        %2536 = vmatmul.bf16.gmra.mxu0 %v1861
        %v2537 = vpop.f32.mrf.mxu0
        %v2538 = vadd.f32 0.0, %v2537
        %v2539 = vpop.f32.mrf.mxu0
        %v2540 = vadd.f32 0.0, %v2539
        %2541 = vmatmul.bf16.gmra.mxu0 %v1863
        %v2542 = vpop.f32.mrf.mxu0
        %v2543 = vadd.f32 0.0, %v2542
        %v2544 = vpop.f32.mrf.mxu0
        %v2545 = vadd.f32 0.0, %v2544
        %2546 = vmatmul.bf16.gmra.mxu0 %v1865
        %v2547 = vpop.f32.mrf.mxu0
        %v2548 = vadd.f32 0.0, %v2547
        %v2549 = vpop.f32.mrf.mxu0
        %v2550 = vadd.f32 0.0, %v2549
        %2551 = vmatmul.bf16.gmra.mxu0 %v1867
        %v2552 = vpop.f32.mrf.mxu0
        %v2553 = vadd.f32 0.0, %v2552
        %v2554 = vpop.f32.mrf.mxu0
        %v2555 = vadd.f32 0.0, %v2554
        %2556 = vmatmul.bf16.gmra.mxu0 %v1869
        %v2557 = vpop.f32.mrf.mxu0
        %v2558 = vadd.f32 0.0, %v2557
        %v2559 = vpop.f32.mrf.mxu0
        %v2560 = vadd.f32 0.0, %v2559
        %2561 = vmatmul.bf16.gmra.mxu0 %v1871
        %v2562 = vpop.f32.mrf.mxu0
        %v2563 = vadd.f32 0.0, %v2562
        %v2564 = vpop.f32.mrf.mxu0
        %v2565 = vadd.f32 0.0, %v2564
        %2566 = vdwg.mxu0
        %2567 = vmatpush.bf16.msra.mxu0 0
        %2568 = vmatpush.bf16.msra.mxu0 0
        %2569 = vmatpush.bf16.msra.mxu0 0
        %2570 = vmatpush.bf16.msra.mxu0 0
        %2571 = vmatpush.bf16.msra.mxu0 %v2038
        %2572 = vmatpush.bf16.msra.mxu0 %v2035
        %2573 = vmatpush.bf16.msra.mxu0 %v2032
        %2574 = vmatpush.bf16.msra.mxu0 %v2029
        %2575 = vmatmul.bf16.gmra.mxu0 %v2079
        %v2576 = vpop.f32.mrf.mxu0
        %v2577 = vadd.f32 %v2268, %v2576
        %v2578 = vpop.f32.mrf.mxu0
        %v2579 = vadd.f32 %v2270, %v2578
        %2580 = vmatmul.bf16.gmra.mxu0 %v2082
        %v2581 = vpop.f32.mrf.mxu0
        %v2582 = vadd.f32 %v2273, %v2581
        %v2583 = vpop.f32.mrf.mxu0
        %v2584 = vadd.f32 %v2275, %v2583
        %2585 = vmatmul.bf16.gmra.mxu0 %v2085
        %v2586 = vpop.f32.mrf.mxu0
        %v2587 = vadd.f32 %v2278, %v2586
        %v2588 = vpop.f32.mrf.mxu0
        %v2589 = vadd.f32 %v2280, %v2588
        %2590 = vmatmul.bf16.gmra.mxu0 %v2088
        %v2591 = vpop.f32.mrf.mxu0
        %v2592 = vadd.f32 %v2283, %v2591
        %v2593 = vpop.f32.mrf.mxu0
        %v2594 = vadd.f32 %v2285, %v2593
        %2595 = vmatmul.bf16.gmra.mxu0 %v2091
        %v2596 = vpop.f32.mrf.mxu0
        %v2597 = vadd.f32 %v2288, %v2596
        %v2598 = vpop.f32.mrf.mxu0
        %v2599 = vadd.f32 %v2290, %v2598
        %2600 = vmatmul.bf16.gmra.mxu0 %v2094
        %v2601 = vpop.f32.mrf.mxu0
        %v2602 = vadd.f32 %v2293, %v2601
        %v2603 = vpop.f32.mrf.mxu0
        %v2604 = vadd.f32 %v2295, %v2603
        %2605 = vmatmul.bf16.gmra.mxu0 %v2097
        %v2606 = vpop.f32.mrf.mxu0
        %v2607 = vadd.f32 %v2298, %v2606
        %v2608 = vpop.f32.mrf.mxu0
        %v2609 = vadd.f32 %v2300, %v2608
        %2610 = vmatmul.bf16.gmra.mxu0 %v2100
        %v2611 = vpop.f32.mrf.mxu0
        %v2612 = vadd.f32 %v2303, %v2611
        %v2613 = vpop.f32.mrf.mxu0
        %v2614 = vadd.f32 %v2305, %v2613
        %2615 = vmatmul.bf16.gmra.mxu0 %v2103
        %v2616 = vpop.f32.mrf.mxu0
        %v2617 = vadd.f32 %v2308, %v2616
        %v2618 = vpop.f32.mrf.mxu0
        %v2619 = vadd.f32 %v2310, %v2618
        %2620 = vmatmul.bf16.gmra.mxu0 %v2106
        %v2621 = vpop.f32.mrf.mxu0
        %v2622 = vadd.f32 %v2313, %v2621
        %v2623 = vpop.f32.mrf.mxu0
        %v2624 = vadd.f32 %v2315, %v2623
        %2625 = vmatmul.bf16.gmra.mxu0 %v2109
        %v2626 = vpop.f32.mrf.mxu0
        %v2627 = vadd.f32 %v2318, %v2626
        %v2628 = vpop.f32.mrf.mxu0
        %v2629 = vadd.f32 %v2320, %v2628
        %2630 = vmatmul.bf16.gmra.mxu0 %v2112
        %v2631 = vpop.f32.mrf.mxu0
        %v2632 = vadd.f32 %v2323, %v2631
        %v2633 = vpop.f32.mrf.mxu0
        %v2634 = vadd.f32 %v2325, %v2633
        %2635 = vmatmul.bf16.gmra.mxu0 %v2115
        %v2636 = vpop.f32.mrf.mxu0
        %v2637 = vadd.f32 %v2328, %v2636
        %v2638 = vpop.f32.mrf.mxu0
        %v2639 = vadd.f32 %v2330, %v2638
        %2640 = vmatmul.bf16.gmra.mxu0 %v2118
        %v2641 = vpop.f32.mrf.mxu0
        %v2642 = vadd.f32 %v2333, %v2641
        %v2643 = vpop.f32.mrf.mxu0
        %v2644 = vadd.f32 %v2335, %v2643
        %2645 = vmatmul.bf16.gmra.mxu0 %v2121
        %v2646 = vpop.f32.mrf.mxu0
        %v2647 = vadd.f32 %v2338, %v2646
        %v2648 = vpop.f32.mrf.mxu0
        %v2649 = vadd.f32 %v2340, %v2648
        %2650 = vmatmul.bf16.gmra.mxu0 %v2124
        %v2651 = vpop.f32.mrf.mxu0
        %v2652 = vadd.f32 %v2343, %v2651
        %v2653 = vpop.f32.mrf.mxu0
        %v2654 = vadd.f32 %v2345, %v2653
        %2655 = vmatmul.bf16.gmra.mxu0 %v2127
        %v2656 = vpop.f32.mrf.mxu0
        %v2657 = vadd.f32 %v2348, %v2656
        %v2658 = vpop.f32.mrf.mxu0
        %v2659 = vadd.f32 %v2350, %v2658
        %2660 = vmatmul.bf16.gmra.mxu0 %v2130
        %v2661 = vpop.f32.mrf.mxu0
        %v2662 = vadd.f32 %v2353, %v2661
        %v2663 = vpop.f32.mrf.mxu0
        %v2664 = vadd.f32 %v2355, %v2663
        %2665 = vmatmul.bf16.gmra.mxu0 %v2133
        %v2666 = vpop.f32.mrf.mxu0
        %v2667 = vadd.f32 %v2358, %v2666
        %v2668 = vpop.f32.mrf.mxu0
        %v2669 = vadd.f32 %v2360, %v2668
        %2670 = vmatmul.bf16.gmra.mxu0 %v2136
        %v2671 = vpop.f32.mrf.mxu0
        %v2672 = vadd.f32 %v2363, %v2671
        %v2673 = vpop.f32.mrf.mxu0
        %v2674 = vadd.f32 %v2365, %v2673
        %2675 = vmatmul.bf16.gmra.mxu0 %v2139
        %v2676 = vpop.f32.mrf.mxu0
        %v2677 = vadd.f32 %v2368, %v2676
        %v2678 = vpop.f32.mrf.mxu0
        %v2679 = vadd.f32 %v2370, %v2678
        %2680 = vmatmul.bf16.gmra.mxu0 %v2142
        %v2681 = vpop.f32.mrf.mxu0
        %v2682 = vadd.f32 %v2373, %v2681
        %v2683 = vpop.f32.mrf.mxu0
        %v2684 = vadd.f32 %v2375, %v2683
        %2685 = vmatmul.bf16.gmra.mxu0 %v2145
        %v2686 = vpop.f32.mrf.mxu0
        %v2687 = vadd.f32 %v2378, %v2686
        %v2688 = vpop.f32.mrf.mxu0
        %v2689 = vadd.f32 %v2380, %v2688
        %2690 = vmatmul.bf16.gmra.mxu0 %v2148
        %v2691 = vpop.f32.mrf.mxu0
        %v2692 = vadd.f32 %v2383, %v2691
        %v2693 = vpop.f32.mrf.mxu0
        %v2694 = vadd.f32 %v2385, %v2693
        %2695 = vmatmul.bf16.gmra.mxu0 %v2151
        %v2696 = vpop.f32.mrf.mxu0
        %v2697 = vadd.f32 %v2388, %v2696
        %v2698 = vpop.f32.mrf.mxu0
        %v2699 = vadd.f32 %v2390, %v2698
        %2700 = vmatmul.bf16.gmra.mxu0 %v2154
        %v2701 = vpop.f32.mrf.mxu0
        %v2702 = vadd.f32 %v2393, %v2701
        %v2703 = vpop.f32.mrf.mxu0
        %v2704 = vadd.f32 %v2395, %v2703
        %2705 = vmatmul.bf16.gmra.mxu0 %v2157
        %v2706 = vpop.f32.mrf.mxu0
        %v2707 = vadd.f32 %v2398, %v2706
        %v2708 = vpop.f32.mrf.mxu0
        %v2709 = vadd.f32 %v2400, %v2708
        %2710 = vmatmul.bf16.gmra.mxu0 %v2160
        %v2711 = vpop.f32.mrf.mxu0
        %v2712 = vadd.f32 %v2403, %v2711
        %v2713 = vpop.f32.mrf.mxu0
        %v2714 = vadd.f32 %v2405, %v2713
        %2715 = vmatmul.bf16.gmra.mxu0 %v2163
        %v2716 = vpop.f32.mrf.mxu0
        %v2717 = vadd.f32 %v2408, %v2716
        %v2718 = vpop.f32.mrf.mxu0
        %v2719 = vadd.f32 %v2410, %v2718
        %2720 = vmatmul.bf16.gmra.mxu0 %v2166
        %v2721 = vpop.f32.mrf.mxu0
        %v2722 = vadd.f32 %v2413, %v2721
        %v2723 = vpop.f32.mrf.mxu0
        %v2724 = vadd.f32 %v2415, %v2723
        %2725 = vmatmul.bf16.gmra.mxu0 %v2169
        %v2726 = vpop.f32.mrf.mxu0
        %v2727 = vadd.f32 %v2418, %v2726
        %v2728 = vpop.f32.mrf.mxu0
        %v2729 = vadd.f32 %v2420, %v2728
        %2730 = vmatmul.bf16.gmra.mxu0 %v2172
        %v2731 = vpop.f32.mrf.mxu0
        %v2732 = vadd.f32 %v2423, %v2731
        %v2733 = vpop.f32.mrf.mxu0
        %v2734 = vadd.f32 %v2425, %v2733
        %2735 = vmatmul.bf16.gmra.mxu0 %v2175
        %v2736 = vpop.f32.mrf.mxu0
        %v2737 = vadd.f32 %v2428, %v2736
        %v2738 = vpop.f32.mrf.mxu0
        %v2739 = vadd.f32 %v2430, %v2738
        %2740 = vmatmul.bf16.gmra.mxu0 %v2178
        %v2741 = vpop.f32.mrf.mxu0
        %v2742 = vadd.f32 %v2433, %v2741
        %v2743 = vpop.f32.mrf.mxu0
        %v2744 = vadd.f32 %v2435, %v2743
        %2745 = vmatmul.bf16.gmra.mxu0 %v2181
        %v2746 = vpop.f32.mrf.mxu0
        %v2747 = vadd.f32 %v2438, %v2746
        %v2748 = vpop.f32.mrf.mxu0
        %v2749 = vadd.f32 %v2440, %v2748
        %2750 = vmatmul.bf16.gmra.mxu0 %v2184
        %v2751 = vpop.f32.mrf.mxu0
        %v2752 = vadd.f32 %v2443, %v2751
        %v2753 = vpop.f32.mrf.mxu0
        %v2754 = vadd.f32 %v2445, %v2753
        %2755 = vmatmul.bf16.gmra.mxu0 %v2187
        %v2756 = vpop.f32.mrf.mxu0
        %v2757 = vadd.f32 %v2448, %v2756
        %v2758 = vpop.f32.mrf.mxu0
        %v2759 = vadd.f32 %v2450, %v2758
        %2760 = vmatmul.bf16.gmra.mxu0 %v2190
        %v2761 = vpop.f32.mrf.mxu0
        %v2762 = vadd.f32 %v2453, %v2761
        %v2763 = vpop.f32.mrf.mxu0
        %v2764 = vadd.f32 %v2455, %v2763
        %2765 = vmatmul.bf16.gmra.mxu0 %v2193
        %v2766 = vpop.f32.mrf.mxu0
        %v2767 = vadd.f32 %v2458, %v2766
        %v2768 = vpop.f32.mrf.mxu0
        %v2769 = vadd.f32 %v2460, %v2768
        %2770 = vmatmul.bf16.gmra.mxu0 %v2196
        %v2771 = vpop.f32.mrf.mxu0
        %v2772 = vadd.f32 %v2463, %v2771
        %v2773 = vpop.f32.mrf.mxu0
        %v2774 = vadd.f32 %v2465, %v2773
        %2775 = vmatmul.bf16.gmra.mxu0 %v2199
        %v2776 = vpop.f32.mrf.mxu0
        %v2777 = vadd.f32 %v2468, %v2776
        %v2778 = vpop.f32.mrf.mxu0
        %v2779 = vadd.f32 %v2470, %v2778
        %2780 = vmatmul.bf16.gmra.mxu0 %v2202
        %v2781 = vpop.f32.mrf.mxu0
        %v2782 = vadd.f32 %v2473, %v2781
        %v2783 = vpop.f32.mrf.mxu0
        %v2784 = vadd.f32 %v2475, %v2783
        %2785 = vmatmul.bf16.gmra.mxu0 %v2205
        %v2786 = vpop.f32.mrf.mxu0
        %v2787 = vadd.f32 %v2478, %v2786
        %v2788 = vpop.f32.mrf.mxu0
        %v2789 = vadd.f32 %v2480, %v2788
        %2790 = vmatmul.bf16.gmra.mxu0 %v2208
        %v2791 = vpop.f32.mrf.mxu0
        %v2792 = vadd.f32 %v2483, %v2791
        %v2793 = vpop.f32.mrf.mxu0
        %v2794 = vadd.f32 %v2485, %v2793
        %2795 = vmatmul.bf16.gmra.mxu0 %v2211
        %v2796 = vpop.f32.mrf.mxu0
        %v2797 = vadd.f32 %v2488, %v2796
        %v2798 = vpop.f32.mrf.mxu0
        %v2799 = vadd.f32 %v2490, %v2798
        %2800 = vmatmul.bf16.gmra.mxu0 %v2214
        %v2801 = vpop.f32.mrf.mxu0
        %v2802 = vadd.f32 %v2493, %v2801
        %v2803 = vpop.f32.mrf.mxu0
        %v2804 = vadd.f32 %v2495, %v2803
        %2805 = vmatmul.bf16.gmra.mxu0 %v2217
        %v2806 = vpop.f32.mrf.mxu0
        %v2807 = vadd.f32 %v2498, %v2806
        %v2808 = vpop.f32.mrf.mxu0
        %v2809 = vadd.f32 %v2500, %v2808
        %2810 = vmatmul.bf16.gmra.mxu0 %v2220
        %v2811 = vpop.f32.mrf.mxu0
        %v2812 = vadd.f32 %v2503, %v2811
        %v2813 = vpop.f32.mrf.mxu0
        %v2814 = vadd.f32 %v2505, %v2813
        %2815 = vmatmul.bf16.gmra.mxu0 %v2223
        %v2816 = vpop.f32.mrf.mxu0
        %v2817 = vadd.f32 %v2508, %v2816
        %v2818 = vpop.f32.mrf.mxu0
        %v2819 = vadd.f32 %v2510, %v2818
        %2820 = vmatmul.bf16.gmra.mxu0 %v2226
        %v2821 = vpop.f32.mrf.mxu0
        %v2822 = vadd.f32 %v2513, %v2821
        %v2823 = vpop.f32.mrf.mxu0
        %v2824 = vadd.f32 %v2515, %v2823
        %2825 = vmatmul.bf16.gmra.mxu0 %v2229
        %v2826 = vpop.f32.mrf.mxu0
        %v2827 = vadd.f32 %v2518, %v2826
        %v2828 = vpop.f32.mrf.mxu0
        %v2829 = vadd.f32 %v2520, %v2828
        %2830 = vmatmul.bf16.gmra.mxu0 %v2232
        %v2831 = vpop.f32.mrf.mxu0
        %v2832 = vadd.f32 %v2523, %v2831
        %v2833 = vpop.f32.mrf.mxu0
        %v2834 = vadd.f32 %v2525, %v2833
        %2835 = vmatmul.bf16.gmra.mxu0 %v2235
        %v2836 = vpop.f32.mrf.mxu0
        %v2837 = vadd.f32 %v2528, %v2836
        %v2838 = vpop.f32.mrf.mxu0
        %v2839 = vadd.f32 %v2530, %v2838
        %2840 = vmatmul.bf16.gmra.mxu0 %v2238
        %v2841 = vpop.f32.mrf.mxu0
        %v2842 = vadd.f32 %v2533, %v2841
        %v2843 = vpop.f32.mrf.mxu0
        %v2844 = vadd.f32 %v2535, %v2843
        %2845 = vmatmul.bf16.gmra.mxu0 %v2241
        %v2846 = vpop.f32.mrf.mxu0
        %v2847 = vadd.f32 %v2538, %v2846
        %v2848 = vpop.f32.mrf.mxu0
        %v2849 = vadd.f32 %v2540, %v2848
        %2850 = vmatmul.bf16.gmra.mxu0 %v2244
        %v2851 = vpop.f32.mrf.mxu0
        %v2852 = vadd.f32 %v2543, %v2851
        %v2853 = vpop.f32.mrf.mxu0
        %v2854 = vadd.f32 %v2545, %v2853
        %2855 = vmatmul.bf16.gmra.mxu0 %v2247
        %v2856 = vpop.f32.mrf.mxu0
        %v2857 = vadd.f32 %v2548, %v2856
        %v2858 = vpop.f32.mrf.mxu0
        %v2859 = vadd.f32 %v2550, %v2858
        %2860 = vmatmul.bf16.gmra.mxu0 %v2250
        %v2861 = vpop.f32.mrf.mxu0
        %v2862 = vadd.f32 %v2553, %v2861
        %v2863 = vpop.f32.mrf.mxu0
        %v2864 = vadd.f32 %v2555, %v2863
        %2865 = vmatmul.bf16.gmra.mxu0 %v2253
        %v2866 = vpop.f32.mrf.mxu0
        %v2867 = vadd.f32 %v2558, %v2866
        %v2868 = vpop.f32.mrf.mxu0
        %v2869 = vadd.f32 %v2560, %v2868
        %2870 = vmatmul.bf16.gmra.mxu0 %v2256
        %v2871 = vpop.f32.mrf.mxu0
        %v2872 = vadd.f32 %v2563, %v2871
        %v2873 = vpop.f32.mrf.mxu0
        %v2874 = vadd.f32 %v2565, %v2873
        %2875 = vdwg.mxu0
        %2876 = vmatpush.bf16.msra.mxu0 %v2027
        %2877 = vmatpush.bf16.msra.mxu0 %v2024
        %2878 = vmatpush.bf16.msra.mxu0 %v2021
        %2879 = vmatpush.bf16.msra.mxu0 %v2018
        %2880 = vmatpush.bf16.msra.mxu0 %v2015
        %2881 = vmatpush.bf16.msra.mxu0 %v2012
        %2882 = vmatpush.bf16.msra.mxu0 %v2009
        %2883 = vmatpush.bf16.msra.mxu0 %v2006
        %2884 = vmatmul.bf16.gmra.mxu0 %v1417
        %v2885 = vpop.f32.mrf.mxu0
        %v2886 = vadd.f32 0.0, %v2885
        %v2887 = vpop.f32.mrf.mxu0
        %v2888 = vadd.f32 0.0, %v2887
        %2889 = vmatmul.bf16.gmra.mxu0 %v1419
        %v2890 = vpop.f32.mrf.mxu0
        %v2891 = vadd.f32 0.0, %v2890
        %v2892 = vpop.f32.mrf.mxu0
        %v2893 = vadd.f32 0.0, %v2892
        %2894 = vmatmul.bf16.gmra.mxu0 %v1421
        %v2895 = vpop.f32.mrf.mxu0
        %v2896 = vadd.f32 0.0, %v2895
        %v2897 = vpop.f32.mrf.mxu0
        %v2898 = vadd.f32 0.0, %v2897
        %2899 = vmatmul.bf16.gmra.mxu0 %v1423
        %v2900 = vpop.f32.mrf.mxu0
        %v2901 = vadd.f32 0.0, %v2900
        %v2902 = vpop.f32.mrf.mxu0
        %v2903 = vadd.f32 0.0, %v2902
        %2904 = vmatmul.bf16.gmra.mxu0 %v1425
        %v2905 = vpop.f32.mrf.mxu0
        %v2906 = vadd.f32 0.0, %v2905
        %v2907 = vpop.f32.mrf.mxu0
        %v2908 = vadd.f32 0.0, %v2907
        %2909 = vmatmul.bf16.gmra.mxu0 %v1427
        %v2910 = vpop.f32.mrf.mxu0
        %v2911 = vadd.f32 0.0, %v2910
        %v2912 = vpop.f32.mrf.mxu0
        %v2913 = vadd.f32 0.0, %v2912
        %2914 = vmatmul.bf16.gmra.mxu0 %v1429
        %v2915 = vpop.f32.mrf.mxu0
        %v2916 = vadd.f32 0.0, %v2915
        %v2917 = vpop.f32.mrf.mxu0
        %v2918 = vadd.f32 0.0, %v2917
        %2919 = vmatmul.bf16.gmra.mxu0 %v1431
        %v2920 = vpop.f32.mrf.mxu0
        %v2921 = vadd.f32 0.0, %v2920
        %v2922 = vpop.f32.mrf.mxu0
        %v2923 = vadd.f32 0.0, %v2922
        %2924 = vmatmul.bf16.gmra.mxu0 %v1433
        %v2925 = vpop.f32.mrf.mxu0
        %v2926 = vadd.f32 0.0, %v2925
        %v2927 = vpop.f32.mrf.mxu0
        %v2928 = vadd.f32 0.0, %v2927
        %2929 = vmatmul.bf16.gmra.mxu0 %v1435
        %v2930 = vpop.f32.mrf.mxu0
        %v2931 = vadd.f32 0.0, %v2930
        %v2932 = vpop.f32.mrf.mxu0
        %v2933 = vadd.f32 0.0, %v2932
        %2934 = vmatmul.bf16.gmra.mxu0 %v1437
        %v2935 = vpop.f32.mrf.mxu0
        %v2936 = vadd.f32 0.0, %v2935
        %v2937 = vpop.f32.mrf.mxu0
        %v2938 = vadd.f32 0.0, %v2937
        %2939 = vmatmul.bf16.gmra.mxu0 %v1439
        %v2940 = vpop.f32.mrf.mxu0
        %v2941 = vadd.f32 0.0, %v2940
        %v2942 = vpop.f32.mrf.mxu0
        %v2943 = vadd.f32 0.0, %v2942
        %2944 = vmatmul.bf16.gmra.mxu0 %v1525
        %v2945 = vpop.f32.mrf.mxu0
        %v2946 = vadd.f32 0.0, %v2945
        %v2947 = vpop.f32.mrf.mxu0
        %v2948 = vadd.f32 0.0, %v2947
        %2949 = vmatmul.bf16.gmra.mxu0 %v1527
        %v2950 = vpop.f32.mrf.mxu0
        %v2951 = vadd.f32 0.0, %v2950
        %v2952 = vpop.f32.mrf.mxu0
        %v2953 = vadd.f32 0.0, %v2952
        %2954 = vmatmul.bf16.gmra.mxu0 %v1529
        %v2955 = vpop.f32.mrf.mxu0
        %v2956 = vadd.f32 0.0, %v2955
        %v2957 = vpop.f32.mrf.mxu0
        %v2958 = vadd.f32 0.0, %v2957
        %2959 = vmatmul.bf16.gmra.mxu0 %v1531
        %v2960 = vpop.f32.mrf.mxu0
        %v2961 = vadd.f32 0.0, %v2960
        %v2962 = vpop.f32.mrf.mxu0
        %v2963 = vadd.f32 0.0, %v2962
        %2964 = vmatmul.bf16.gmra.mxu0 %v1533
        %v2965 = vpop.f32.mrf.mxu0
        %v2966 = vadd.f32 0.0, %v2965
        %v2967 = vpop.f32.mrf.mxu0
        %v2968 = vadd.f32 0.0, %v2967
        %2969 = vmatmul.bf16.gmra.mxu0 %v1535
        %v2970 = vpop.f32.mrf.mxu0
        %v2971 = vadd.f32 0.0, %v2970
        %v2972 = vpop.f32.mrf.mxu0
        %v2973 = vadd.f32 0.0, %v2972
        %2974 = vmatmul.bf16.gmra.mxu0 %v1537
        %v2975 = vpop.f32.mrf.mxu0
        %v2976 = vadd.f32 0.0, %v2975
        %v2977 = vpop.f32.mrf.mxu0
        %v2978 = vadd.f32 0.0, %v2977
        %2979 = vmatmul.bf16.gmra.mxu0 %v1539
        %v2980 = vpop.f32.mrf.mxu0
        %v2981 = vadd.f32 0.0, %v2980
        %v2982 = vpop.f32.mrf.mxu0
        %v2983 = vadd.f32 0.0, %v2982
        %2984 = vmatmul.bf16.gmra.mxu0 %v1541
        %v2985 = vpop.f32.mrf.mxu0
        %v2986 = vadd.f32 0.0, %v2985
        %v2987 = vpop.f32.mrf.mxu0
        %v2988 = vadd.f32 0.0, %v2987
        %2989 = vmatmul.bf16.gmra.mxu0 %v1543
        %v2990 = vpop.f32.mrf.mxu0
        %v2991 = vadd.f32 0.0, %v2990
        %v2992 = vpop.f32.mrf.mxu0
        %v2993 = vadd.f32 0.0, %v2992
        %2994 = vmatmul.bf16.gmra.mxu0 %v1545
        %v2995 = vpop.f32.mrf.mxu0
        %v2996 = vadd.f32 0.0, %v2995
        %v2997 = vpop.f32.mrf.mxu0
        %v2998 = vadd.f32 0.0, %v2997
        %2999 = vmatmul.bf16.gmra.mxu0 %v1547
        %v3000 = vpop.f32.mrf.mxu0
        %v3001 = vadd.f32 0.0, %v3000
        %v3002 = vpop.f32.mrf.mxu0
        %v3003 = vadd.f32 0.0, %v3002
        %3004 = vmatmul.bf16.gmra.mxu0 %v1633
        %v3005 = vpop.f32.mrf.mxu0
        %v3006 = vadd.f32 0.0, %v3005
        %v3007 = vpop.f32.mrf.mxu0
        %v3008 = vadd.f32 0.0, %v3007
        %3009 = vmatmul.bf16.gmra.mxu0 %v1635
        %v3010 = vpop.f32.mrf.mxu0
        %v3011 = vadd.f32 0.0, %v3010
        %v3012 = vpop.f32.mrf.mxu0
        %v3013 = vadd.f32 0.0, %v3012
        %3014 = vmatmul.bf16.gmra.mxu0 %v1637
        %v3015 = vpop.f32.mrf.mxu0
        %v3016 = vadd.f32 0.0, %v3015
        %v3017 = vpop.f32.mrf.mxu0
        %v3018 = vadd.f32 0.0, %v3017
        %3019 = vmatmul.bf16.gmra.mxu0 %v1639
        %v3020 = vpop.f32.mrf.mxu0
        %v3021 = vadd.f32 0.0, %v3020
        %v3022 = vpop.f32.mrf.mxu0
        %v3023 = vadd.f32 0.0, %v3022
        %3024 = vmatmul.bf16.gmra.mxu0 %v1641
        %v3025 = vpop.f32.mrf.mxu0
        %v3026 = vadd.f32 0.0, %v3025
        %v3027 = vpop.f32.mrf.mxu0
        %v3028 = vadd.f32 0.0, %v3027
        %3029 = vmatmul.bf16.gmra.mxu0 %v1643
        %v3030 = vpop.f32.mrf.mxu0
        %v3031 = vadd.f32 0.0, %v3030
        %v3032 = vpop.f32.mrf.mxu0
        %v3033 = vadd.f32 0.0, %v3032
        %3034 = vmatmul.bf16.gmra.mxu0 %v1645
        %v3035 = vpop.f32.mrf.mxu0
        %v3036 = vadd.f32 0.0, %v3035
        %v3037 = vpop.f32.mrf.mxu0
        %v3038 = vadd.f32 0.0, %v3037
        %3039 = vmatmul.bf16.gmra.mxu0 %v1647
        %v3040 = vpop.f32.mrf.mxu0
        %v3041 = vadd.f32 0.0, %v3040
        %v3042 = vpop.f32.mrf.mxu0
        %v3043 = vadd.f32 0.0, %v3042
        %3044 = vmatmul.bf16.gmra.mxu0 %v1649
        %v3045 = vpop.f32.mrf.mxu0
        %v3046 = vadd.f32 0.0, %v3045
        %v3047 = vpop.f32.mrf.mxu0
        %v3048 = vadd.f32 0.0, %v3047
        %3049 = vmatmul.bf16.gmra.mxu0 %v1651
        %v3050 = vpop.f32.mrf.mxu0
        %v3051 = vadd.f32 0.0, %v3050
        %v3052 = vpop.f32.mrf.mxu0
        %v3053 = vadd.f32 0.0, %v3052
        %3054 = vmatmul.bf16.gmra.mxu0 %v1653
        %v3055 = vpop.f32.mrf.mxu0
        %v3056 = vadd.f32 0.0, %v3055
        %v3057 = vpop.f32.mrf.mxu0
        %v3058 = vadd.f32 0.0, %v3057
        %3059 = vmatmul.bf16.gmra.mxu0 %v1655
        %v3060 = vpop.f32.mrf.mxu0
        %v3061 = vadd.f32 0.0, %v3060
        %v3062 = vpop.f32.mrf.mxu0
        %v3063 = vadd.f32 0.0, %v3062
        %3064 = vmatmul.bf16.gmra.mxu0 %v1741
        %v3065 = vpop.f32.mrf.mxu0
        %v3066 = vadd.f32 0.0, %v3065
        %v3067 = vpop.f32.mrf.mxu0
        %v3068 = vadd.f32 0.0, %v3067
        %3069 = vmatmul.bf16.gmra.mxu0 %v1743
        %v3070 = vpop.f32.mrf.mxu0
        %v3071 = vadd.f32 0.0, %v3070
        %v3072 = vpop.f32.mrf.mxu0
        %v3073 = vadd.f32 0.0, %v3072
        %3074 = vmatmul.bf16.gmra.mxu0 %v1745
        %v3075 = vpop.f32.mrf.mxu0
        %v3076 = vadd.f32 0.0, %v3075
        %v3077 = vpop.f32.mrf.mxu0
        %v3078 = vadd.f32 0.0, %v3077
        %3079 = vmatmul.bf16.gmra.mxu0 %v1747
        %v3080 = vpop.f32.mrf.mxu0
        %v3081 = vadd.f32 0.0, %v3080
        %v3082 = vpop.f32.mrf.mxu0
        %v3083 = vadd.f32 0.0, %v3082
        %3084 = vmatmul.bf16.gmra.mxu0 %v1749
        %v3085 = vpop.f32.mrf.mxu0
        %v3086 = vadd.f32 0.0, %v3085
        %v3087 = vpop.f32.mrf.mxu0
        %v3088 = vadd.f32 0.0, %v3087
        %3089 = vmatmul.bf16.gmra.mxu0 %v1751
        %v3090 = vpop.f32.mrf.mxu0
        %v3091 = vadd.f32 0.0, %v3090
        %v3092 = vpop.f32.mrf.mxu0
        %v3093 = vadd.f32 0.0, %v3092
        %3094 = vmatmul.bf16.gmra.mxu0 %v1753
        %v3095 = vpop.f32.mrf.mxu0
        %v3096 = vadd.f32 0.0, %v3095
        %v3097 = vpop.f32.mrf.mxu0
        %v3098 = vadd.f32 0.0, %v3097
        %3099 = vmatmul.bf16.gmra.mxu0 %v1755
        %v3100 = vpop.f32.mrf.mxu0
        %v3101 = vadd.f32 0.0, %v3100
        %v3102 = vpop.f32.mrf.mxu0
        %v3103 = vadd.f32 0.0, %v3102
        %3104 = vmatmul.bf16.gmra.mxu0 %v1757
        %v3105 = vpop.f32.mrf.mxu0
        %v3106 = vadd.f32 0.0, %v3105
        %v3107 = vpop.f32.mrf.mxu0
        %v3108 = vadd.f32 0.0, %v3107
        %3109 = vmatmul.bf16.gmra.mxu0 %v1759
        %v3110 = vpop.f32.mrf.mxu0
        %v3111 = vadd.f32 0.0, %v3110
        %v3112 = vpop.f32.mrf.mxu0
        %v3113 = vadd.f32 0.0, %v3112
        %3114 = vmatmul.bf16.gmra.mxu0 %v1761
        %v3115 = vpop.f32.mrf.mxu0
        %v3116 = vadd.f32 0.0, %v3115
        %v3117 = vpop.f32.mrf.mxu0
        %v3118 = vadd.f32 0.0, %v3117
        %3119 = vmatmul.bf16.gmra.mxu0 %v1763
        %v3120 = vpop.f32.mrf.mxu0
        %v3121 = vadd.f32 0.0, %v3120
        %v3122 = vpop.f32.mrf.mxu0
        %v3123 = vadd.f32 0.0, %v3122
        %3124 = vmatmul.bf16.gmra.mxu0 %v1849
        %v3125 = vpop.f32.mrf.mxu0
        %v3126 = vadd.f32 0.0, %v3125
        %v3127 = vpop.f32.mrf.mxu0
        %v3128 = vadd.f32 0.0, %v3127
        %3129 = vmatmul.bf16.gmra.mxu0 %v1851
        %v3130 = vpop.f32.mrf.mxu0
        %v3131 = vadd.f32 0.0, %v3130
        %v3132 = vpop.f32.mrf.mxu0
        %v3133 = vadd.f32 0.0, %v3132
        %3134 = vmatmul.bf16.gmra.mxu0 %v1853
        %v3135 = vpop.f32.mrf.mxu0
        %v3136 = vadd.f32 0.0, %v3135
        %v3137 = vpop.f32.mrf.mxu0
        %v3138 = vadd.f32 0.0, %v3137
        %3139 = vmatmul.bf16.gmra.mxu0 %v1855
        %v3140 = vpop.f32.mrf.mxu0
        %v3141 = vadd.f32 0.0, %v3140
        %v3142 = vpop.f32.mrf.mxu0
        %v3143 = vadd.f32 0.0, %v3142
        %3144 = vmatmul.bf16.gmra.mxu0 %v1857
        %v3145 = vpop.f32.mrf.mxu0
        %v3146 = vadd.f32 0.0, %v3145
        %v3147 = vpop.f32.mrf.mxu0
        %v3148 = vadd.f32 0.0, %v3147
        %3149 = vmatmul.bf16.gmra.mxu0 %v1859
        %v3150 = vpop.f32.mrf.mxu0
        %v3151 = vadd.f32 0.0, %v3150
        %v3152 = vpop.f32.mrf.mxu0
        %v3153 = vadd.f32 0.0, %v3152
        %3154 = vmatmul.bf16.gmra.mxu0 %v1861
        %v3155 = vpop.f32.mrf.mxu0
        %v3156 = vadd.f32 0.0, %v3155
        %v3157 = vpop.f32.mrf.mxu0
        %v3158 = vadd.f32 0.0, %v3157
        %3159 = vmatmul.bf16.gmra.mxu0 %v1863
        %v3160 = vpop.f32.mrf.mxu0
        %v3161 = vadd.f32 0.0, %v3160
        %v3162 = vpop.f32.mrf.mxu0
        %v3163 = vadd.f32 0.0, %v3162
        %3164 = vmatmul.bf16.gmra.mxu0 %v1865
        %v3165 = vpop.f32.mrf.mxu0
        %v3166 = vadd.f32 0.0, %v3165
        %v3167 = vpop.f32.mrf.mxu0
        %v3168 = vadd.f32 0.0, %v3167
        %3169 = vmatmul.bf16.gmra.mxu0 %v1867
        %v3170 = vpop.f32.mrf.mxu0
        %v3171 = vadd.f32 0.0, %v3170
        %v3172 = vpop.f32.mrf.mxu0
        %v3173 = vadd.f32 0.0, %v3172
        %3174 = vmatmul.bf16.gmra.mxu0 %v1869
        %v3175 = vpop.f32.mrf.mxu0
        %v3176 = vadd.f32 0.0, %v3175
        %v3177 = vpop.f32.mrf.mxu0
        %v3178 = vadd.f32 0.0, %v3177
        %3179 = vmatmul.bf16.gmra.mxu0 %v1871
        %v3180 = vpop.f32.mrf.mxu0
        %v3181 = vadd.f32 0.0, %v3180
        %v3182 = vpop.f32.mrf.mxu0
        %v3183 = vadd.f32 0.0, %v3182
        %3184 = vdwg.mxu0
        %3185 = vmatpush.bf16.msra.mxu0 0
        %3186 = vmatpush.bf16.msra.mxu0 0
        %3187 = vmatpush.bf16.msra.mxu0 0
        %3188 = vmatpush.bf16.msra.mxu0 0
        %3189 = vmatpush.bf16.msra.mxu0 %v2039
        %3190 = vmatpush.bf16.msra.mxu0 %v2036
        %3191 = vmatpush.bf16.msra.mxu0 %v2033
        %3192 = vmatpush.bf16.msra.mxu0 %v2030
        %3193 = vmatmul.bf16.gmra.mxu0 %v2079
        %v3194 = vpop.f32.mrf.mxu0
        %v3195 = vadd.f32 %v2886, %v3194
        %v3196 = vpop.f32.mrf.mxu0
        %v3197 = vadd.f32 %v2888, %v3196
        %3198 = vmatmul.bf16.gmra.mxu0 %v2082
        %v3199 = vpop.f32.mrf.mxu0
        %v3200 = vadd.f32 %v2891, %v3199
        %v3201 = vpop.f32.mrf.mxu0
        %v3202 = vadd.f32 %v2893, %v3201
        %3203 = vmatmul.bf16.gmra.mxu0 %v2085
        %v3204 = vpop.f32.mrf.mxu0
        %v3205 = vadd.f32 %v2896, %v3204
        %v3206 = vpop.f32.mrf.mxu0
        %v3207 = vadd.f32 %v2898, %v3206
        %3208 = vmatmul.bf16.gmra.mxu0 %v2088
        %v3209 = vpop.f32.mrf.mxu0
        %v3210 = vadd.f32 %v2901, %v3209
        %v3211 = vpop.f32.mrf.mxu0
        %v3212 = vadd.f32 %v2903, %v3211
        %3213 = vmatmul.bf16.gmra.mxu0 %v2091
        %v3214 = vpop.f32.mrf.mxu0
        %v3215 = vadd.f32 %v2906, %v3214
        %v3216 = vpop.f32.mrf.mxu0
        %v3217 = vadd.f32 %v2908, %v3216
        %3218 = vmatmul.bf16.gmra.mxu0 %v2094
        %v3219 = vpop.f32.mrf.mxu0
        %v3220 = vadd.f32 %v2911, %v3219
        %v3221 = vpop.f32.mrf.mxu0
        %v3222 = vadd.f32 %v2913, %v3221
        %3223 = vmatmul.bf16.gmra.mxu0 %v2097
        %v3224 = vpop.f32.mrf.mxu0
        %v3225 = vadd.f32 %v2916, %v3224
        %v3226 = vpop.f32.mrf.mxu0
        %v3227 = vadd.f32 %v2918, %v3226
        %3228 = vmatmul.bf16.gmra.mxu0 %v2100
        %v3229 = vpop.f32.mrf.mxu0
        %v3230 = vadd.f32 %v2921, %v3229
        %v3231 = vpop.f32.mrf.mxu0
        %v3232 = vadd.f32 %v2923, %v3231
        %3233 = vmatmul.bf16.gmra.mxu0 %v2103
        %v3234 = vpop.f32.mrf.mxu0
        %v3235 = vadd.f32 %v2926, %v3234
        %v3236 = vpop.f32.mrf.mxu0
        %v3237 = vadd.f32 %v2928, %v3236
        %3238 = vmatmul.bf16.gmra.mxu0 %v2106
        %v3239 = vpop.f32.mrf.mxu0
        %v3240 = vadd.f32 %v2931, %v3239
        %v3241 = vpop.f32.mrf.mxu0
        %v3242 = vadd.f32 %v2933, %v3241
        %3243 = vmatmul.bf16.gmra.mxu0 %v2109
        %v3244 = vpop.f32.mrf.mxu0
        %v3245 = vadd.f32 %v2936, %v3244
        %v3246 = vpop.f32.mrf.mxu0
        %v3247 = vadd.f32 %v2938, %v3246
        %3248 = vmatmul.bf16.gmra.mxu0 %v2112
        %v3249 = vpop.f32.mrf.mxu0
        %v3250 = vadd.f32 %v2941, %v3249
        %v3251 = vpop.f32.mrf.mxu0
        %v3252 = vadd.f32 %v2943, %v3251
        %3253 = vmatmul.bf16.gmra.mxu0 %v2115
        %v3254 = vpop.f32.mrf.mxu0
        %v3255 = vadd.f32 %v2946, %v3254
        %v3256 = vpop.f32.mrf.mxu0
        %v3257 = vadd.f32 %v2948, %v3256
        %3258 = vmatmul.bf16.gmra.mxu0 %v2118
        %v3259 = vpop.f32.mrf.mxu0
        %v3260 = vadd.f32 %v2951, %v3259
        %v3261 = vpop.f32.mrf.mxu0
        %v3262 = vadd.f32 %v2953, %v3261
        %3263 = vmatmul.bf16.gmra.mxu0 %v2121
        %v3264 = vpop.f32.mrf.mxu0
        %v3265 = vadd.f32 %v2956, %v3264
        %v3266 = vpop.f32.mrf.mxu0
        %v3267 = vadd.f32 %v2958, %v3266
        %3268 = vmatmul.bf16.gmra.mxu0 %v2124
        %v3269 = vpop.f32.mrf.mxu0
        %v3270 = vadd.f32 %v2961, %v3269
        %v3271 = vpop.f32.mrf.mxu0
        %v3272 = vadd.f32 %v2963, %v3271
        %3273 = vmatmul.bf16.gmra.mxu0 %v2127
        %v3274 = vpop.f32.mrf.mxu0
        %v3275 = vadd.f32 %v2966, %v3274
        %v3276 = vpop.f32.mrf.mxu0
        %v3277 = vadd.f32 %v2968, %v3276
        %3278 = vmatmul.bf16.gmra.mxu0 %v2130
        %v3279 = vpop.f32.mrf.mxu0
        %v3280 = vadd.f32 %v2971, %v3279
        %v3281 = vpop.f32.mrf.mxu0
        %v3282 = vadd.f32 %v2973, %v3281
        %3283 = vmatmul.bf16.gmra.mxu0 %v2133
        %v3284 = vpop.f32.mrf.mxu0
        %v3285 = vadd.f32 %v2976, %v3284
        %v3286 = vpop.f32.mrf.mxu0
        %v3287 = vadd.f32 %v2978, %v3286
        %3288 = vmatmul.bf16.gmra.mxu0 %v2136
        %v3289 = vpop.f32.mrf.mxu0
        %v3290 = vadd.f32 %v2981, %v3289
        %v3291 = vpop.f32.mrf.mxu0
        %v3292 = vadd.f32 %v2983, %v3291
        %3293 = vmatmul.bf16.gmra.mxu0 %v2139
        %v3294 = vpop.f32.mrf.mxu0
        %v3295 = vadd.f32 %v2986, %v3294
        %v3296 = vpop.f32.mrf.mxu0
        %v3297 = vadd.f32 %v2988, %v3296
        %3298 = vmatmul.bf16.gmra.mxu0 %v2142
        %v3299 = vpop.f32.mrf.mxu0
        %v3300 = vadd.f32 %v2991, %v3299
        %v3301 = vpop.f32.mrf.mxu0
        %v3302 = vadd.f32 %v2993, %v3301
        %3303 = vmatmul.bf16.gmra.mxu0 %v2145
        %v3304 = vpop.f32.mrf.mxu0
        %v3305 = vadd.f32 %v2996, %v3304
        %v3306 = vpop.f32.mrf.mxu0
        %v3307 = vadd.f32 %v2998, %v3306
        %3308 = vmatmul.bf16.gmra.mxu0 %v2148
        %v3309 = vpop.f32.mrf.mxu0
        %v3310 = vadd.f32 %v3001, %v3309
        %v3311 = vpop.f32.mrf.mxu0
        %v3312 = vadd.f32 %v3003, %v3311
        %3313 = vmatmul.bf16.gmra.mxu0 %v2151
        %v3314 = vpop.f32.mrf.mxu0
        %v3315 = vadd.f32 %v3006, %v3314
        %v3316 = vpop.f32.mrf.mxu0
        %v3317 = vadd.f32 %v3008, %v3316
        %3318 = vmatmul.bf16.gmra.mxu0 %v2154
        %v3319 = vpop.f32.mrf.mxu0
        %v3320 = vadd.f32 %v3011, %v3319
        %v3321 = vpop.f32.mrf.mxu0
        %v3322 = vadd.f32 %v3013, %v3321
        %3323 = vmatmul.bf16.gmra.mxu0 %v2157
        %v3324 = vpop.f32.mrf.mxu0
        %v3325 = vadd.f32 %v3016, %v3324
        %v3326 = vpop.f32.mrf.mxu0
        %v3327 = vadd.f32 %v3018, %v3326
        %3328 = vmatmul.bf16.gmra.mxu0 %v2160
        %v3329 = vpop.f32.mrf.mxu0
        %v3330 = vadd.f32 %v3021, %v3329
        %v3331 = vpop.f32.mrf.mxu0
        %v3332 = vadd.f32 %v3023, %v3331
        %3333 = vmatmul.bf16.gmra.mxu0 %v2163
        %v3334 = vpop.f32.mrf.mxu0
        %v3335 = vadd.f32 %v3026, %v3334
        %v3336 = vpop.f32.mrf.mxu0
        %v3337 = vadd.f32 %v3028, %v3336
        %3338 = vmatmul.bf16.gmra.mxu0 %v2166
        %v3339 = vpop.f32.mrf.mxu0
        %v3340 = vadd.f32 %v3031, %v3339
        %v3341 = vpop.f32.mrf.mxu0
        %v3342 = vadd.f32 %v3033, %v3341
        %3343 = vmatmul.bf16.gmra.mxu0 %v2169
        %v3344 = vpop.f32.mrf.mxu0
        %v3345 = vadd.f32 %v3036, %v3344
        %v3346 = vpop.f32.mrf.mxu0
        %v3347 = vadd.f32 %v3038, %v3346
        %3348 = vmatmul.bf16.gmra.mxu0 %v2172
        %v3349 = vpop.f32.mrf.mxu0
        %v3350 = vadd.f32 %v3041, %v3349
        %v3351 = vpop.f32.mrf.mxu0
        %v3352 = vadd.f32 %v3043, %v3351
        %3353 = vmatmul.bf16.gmra.mxu0 %v2175
        %v3354 = vpop.f32.mrf.mxu0
        %v3355 = vadd.f32 %v3046, %v3354
        %v3356 = vpop.f32.mrf.mxu0
        %v3357 = vadd.f32 %v3048, %v3356
        %3358 = vmatmul.bf16.gmra.mxu0 %v2178
        %v3359 = vpop.f32.mrf.mxu0
        %v3360 = vadd.f32 %v3051, %v3359
        %v3361 = vpop.f32.mrf.mxu0
        %v3362 = vadd.f32 %v3053, %v3361
        %3363 = vmatmul.bf16.gmra.mxu0 %v2181
        %v3364 = vpop.f32.mrf.mxu0
        %v3365 = vadd.f32 %v3056, %v3364
        %v3366 = vpop.f32.mrf.mxu0
        %v3367 = vadd.f32 %v3058, %v3366
        %3368 = vmatmul.bf16.gmra.mxu0 %v2184
        %v3369 = vpop.f32.mrf.mxu0
        %v3370 = vadd.f32 %v3061, %v3369
        %v3371 = vpop.f32.mrf.mxu0
        %v3372 = vadd.f32 %v3063, %v3371
        %3373 = vmatmul.bf16.gmra.mxu0 %v2187
        %v3374 = vpop.f32.mrf.mxu0
        %v3375 = vadd.f32 %v3066, %v3374
        %v3376 = vpop.f32.mrf.mxu0
        %v3377 = vadd.f32 %v3068, %v3376
        %3378 = vmatmul.bf16.gmra.mxu0 %v2190
        %v3379 = vpop.f32.mrf.mxu0
        %v3380 = vadd.f32 %v3071, %v3379
        %v3381 = vpop.f32.mrf.mxu0
        %v3382 = vadd.f32 %v3073, %v3381
        %3383 = vmatmul.bf16.gmra.mxu0 %v2193
        %v3384 = vpop.f32.mrf.mxu0
        %v3385 = vadd.f32 %v3076, %v3384
        %v3386 = vpop.f32.mrf.mxu0
        %v3387 = vadd.f32 %v3078, %v3386
        %3388 = vmatmul.bf16.gmra.mxu0 %v2196
        %v3389 = vpop.f32.mrf.mxu0
        %v3390 = vadd.f32 %v3081, %v3389
        %v3391 = vpop.f32.mrf.mxu0
        %v3392 = vadd.f32 %v3083, %v3391
        %3393 = vmatmul.bf16.gmra.mxu0 %v2199
        %v3394 = vpop.f32.mrf.mxu0
        %v3395 = vadd.f32 %v3086, %v3394
        %v3396 = vpop.f32.mrf.mxu0
        %v3397 = vadd.f32 %v3088, %v3396
        %3398 = vmatmul.bf16.gmra.mxu0 %v2202
        %v3399 = vpop.f32.mrf.mxu0
        %v3400 = vadd.f32 %v3091, %v3399
        %v3401 = vpop.f32.mrf.mxu0
        %v3402 = vadd.f32 %v3093, %v3401
        %3403 = vmatmul.bf16.gmra.mxu0 %v2205
        %v3404 = vpop.f32.mrf.mxu0
        %v3405 = vadd.f32 %v3096, %v3404
        %v3406 = vpop.f32.mrf.mxu0
        %v3407 = vadd.f32 %v3098, %v3406
        %3408 = vmatmul.bf16.gmra.mxu0 %v2208
        %v3409 = vpop.f32.mrf.mxu0
        %v3410 = vadd.f32 %v3101, %v3409
        %v3411 = vpop.f32.mrf.mxu0
        %v3412 = vadd.f32 %v3103, %v3411
        %3413 = vmatmul.bf16.gmra.mxu0 %v2211
        %v3414 = vpop.f32.mrf.mxu0
        %v3415 = vadd.f32 %v3106, %v3414
        %v3416 = vpop.f32.mrf.mxu0
        %v3417 = vadd.f32 %v3108, %v3416
        %3418 = vmatmul.bf16.gmra.mxu0 %v2214
        %v3419 = vpop.f32.mrf.mxu0
        %v3420 = vadd.f32 %v3111, %v3419
        %v3421 = vpop.f32.mrf.mxu0
        %v3422 = vadd.f32 %v3113, %v3421
        %3423 = vmatmul.bf16.gmra.mxu0 %v2217
        %v3424 = vpop.f32.mrf.mxu0
        %v3425 = vadd.f32 %v3116, %v3424
        %v3426 = vpop.f32.mrf.mxu0
        %v3427 = vadd.f32 %v3118, %v3426
        %3428 = vmatmul.bf16.gmra.mxu0 %v2220
        %v3429 = vpop.f32.mrf.mxu0
        %v3430 = vadd.f32 %v3121, %v3429
        %v3431 = vpop.f32.mrf.mxu0
        %v3432 = vadd.f32 %v3123, %v3431
        %3433 = vmatmul.bf16.gmra.mxu0 %v2223
        %v3434 = vpop.f32.mrf.mxu0
        %v3435 = vadd.f32 %v3126, %v3434
        %v3436 = vpop.f32.mrf.mxu0
        %v3437 = vadd.f32 %v3128, %v3436
        %3438 = vmatmul.bf16.gmra.mxu0 %v2226
        %v3439 = vpop.f32.mrf.mxu0
        %v3440 = vadd.f32 %v3131, %v3439
        %v3441 = vpop.f32.mrf.mxu0
        %v3442 = vadd.f32 %v3133, %v3441
        %3443 = vmatmul.bf16.gmra.mxu0 %v2229
        %v3444 = vpop.f32.mrf.mxu0
        %v3445 = vadd.f32 %v3136, %v3444
        %v3446 = vpop.f32.mrf.mxu0
        %v3447 = vadd.f32 %v3138, %v3446
        %3448 = vmatmul.bf16.gmra.mxu0 %v2232
        %v3449 = vpop.f32.mrf.mxu0
        %v3450 = vadd.f32 %v3141, %v3449
        %v3451 = vpop.f32.mrf.mxu0
        %v3452 = vadd.f32 %v3143, %v3451
        %3453 = vmatmul.bf16.gmra.mxu0 %v2235
        %v3454 = vpop.f32.mrf.mxu0
        %v3455 = vadd.f32 %v3146, %v3454
        %v3456 = vpop.f32.mrf.mxu0
        %v3457 = vadd.f32 %v3148, %v3456
        %3458 = vmatmul.bf16.gmra.mxu0 %v2238
        %v3459 = vpop.f32.mrf.mxu0
        %v3460 = vadd.f32 %v3151, %v3459
        %v3461 = vpop.f32.mrf.mxu0
        %v3462 = vadd.f32 %v3153, %v3461
        %3463 = vmatmul.bf16.gmra.mxu0 %v2241
        %v3464 = vpop.f32.mrf.mxu0
        %v3465 = vadd.f32 %v3156, %v3464
        %v3466 = vpop.f32.mrf.mxu0
        %v3467 = vadd.f32 %v3158, %v3466
        %3468 = vmatmul.bf16.gmra.mxu0 %v2244
        %v3469 = vpop.f32.mrf.mxu0
        %v3470 = vadd.f32 %v3161, %v3469
        %v3471 = vpop.f32.mrf.mxu0
        %v3472 = vadd.f32 %v3163, %v3471
        %3473 = vmatmul.bf16.gmra.mxu0 %v2247
        %v3474 = vpop.f32.mrf.mxu0
        %v3475 = vadd.f32 %v3166, %v3474
        %v3476 = vpop.f32.mrf.mxu0
        %v3477 = vadd.f32 %v3168, %v3476
        %3478 = vmatmul.bf16.gmra.mxu0 %v2250
        %v3479 = vpop.f32.mrf.mxu0
        %v3480 = vadd.f32 %v3171, %v3479
        %v3481 = vpop.f32.mrf.mxu0
        %v3482 = vadd.f32 %v3173, %v3481
        %3483 = vmatmul.bf16.gmra.mxu0 %v2253
        %v3484 = vpop.f32.mrf.mxu0
        %v3485 = vadd.f32 %v3176, %v3484
        %v3486 = vpop.f32.mrf.mxu0
        %v3487 = vadd.f32 %v3178, %v3486
        %3488 = vmatmul.bf16.gmra.mxu0 %v2256
        %v3489 = vpop.f32.mrf.mxu0
        %v3490 = vadd.f32 %v3181, %v3489
        %v3491 = vpop.f32.mrf.mxu0
        %v3492 = vadd.f32 %v3183, %v3491
        %3493 = vdwg.mxu0
        %3494 = vmatpush.bf16.msra.mxu0 %v2028
        %3495 = vmatpush.bf16.msra.mxu0 %v2025
        %3496 = vmatpush.bf16.msra.mxu0 %v2022
        %3497 = vmatpush.bf16.msra.mxu0 %v2019
        %3498 = vmatpush.bf16.msra.mxu0 %v2016
        %3499 = vmatpush.bf16.msra.mxu0 %v2013
        %3500 = vmatpush.bf16.msra.mxu0 %v2010
        %3501 = vmatpush.bf16.msra.mxu0 %v2007
        %3502 = vmatmul.bf16.gmra.mxu0 %v1417
        %v3503 = vpop.f32.mrf.mxu0
        %v3504 = vadd.f32 0.0, %v3503
        %v3505 = vpop.f32.mrf.mxu0
        %v3506 = vadd.f32 0.0, %v3505
        %3507 = vmatmul.bf16.gmra.mxu0 %v1419
        %v3508 = vpop.f32.mrf.mxu0
        %v3509 = vadd.f32 0.0, %v3508
        %v3510 = vpop.f32.mrf.mxu0
        %v3511 = vadd.f32 0.0, %v3510
        %3512 = vmatmul.bf16.gmra.mxu0 %v1421
        %v3513 = vpop.f32.mrf.mxu0
        %v3514 = vadd.f32 0.0, %v3513
        %v3515 = vpop.f32.mrf.mxu0
        %v3516 = vadd.f32 0.0, %v3515
        %3517 = vmatmul.bf16.gmra.mxu0 %v1423
        %v3518 = vpop.f32.mrf.mxu0
        %v3519 = vadd.f32 0.0, %v3518
        %v3520 = vpop.f32.mrf.mxu0
        %v3521 = vadd.f32 0.0, %v3520
        %3522 = vmatmul.bf16.gmra.mxu0 %v1425
        %v3523 = vpop.f32.mrf.mxu0
        %v3524 = vadd.f32 0.0, %v3523
        %v3525 = vpop.f32.mrf.mxu0
        %v3526 = vadd.f32 0.0, %v3525
        %3527 = vmatmul.bf16.gmra.mxu0 %v1427
        %v3528 = vpop.f32.mrf.mxu0
        %v3529 = vadd.f32 0.0, %v3528
        %v3530 = vpop.f32.mrf.mxu0
        %v3531 = vadd.f32 0.0, %v3530
        %3532 = vmatmul.bf16.gmra.mxu0 %v1429
        %v3533 = vpop.f32.mrf.mxu0
        %v3534 = vadd.f32 0.0, %v3533
        %v3535 = vpop.f32.mrf.mxu0
        %v3536 = vadd.f32 0.0, %v3535
        %3537 = vmatmul.bf16.gmra.mxu0 %v1431
        %v3538 = vpop.f32.mrf.mxu0
        %v3539 = vadd.f32 0.0, %v3538
        %v3540 = vpop.f32.mrf.mxu0
        %v3541 = vadd.f32 0.0, %v3540
        %3542 = vmatmul.bf16.gmra.mxu0 %v1433
        %v3543 = vpop.f32.mrf.mxu0
        %v3544 = vadd.f32 0.0, %v3543
        %v3545 = vpop.f32.mrf.mxu0
        %v3546 = vadd.f32 0.0, %v3545
        %3547 = vmatmul.bf16.gmra.mxu0 %v1435
        %v3548 = vpop.f32.mrf.mxu0
        %v3549 = vadd.f32 0.0, %v3548
        %v3550 = vpop.f32.mrf.mxu0
        %v3551 = vadd.f32 0.0, %v3550
        %3552 = vmatmul.bf16.gmra.mxu0 %v1437
        %v3553 = vpop.f32.mrf.mxu0
        %v3554 = vadd.f32 0.0, %v3553
        %v3555 = vpop.f32.mrf.mxu0
        %v3556 = vadd.f32 0.0, %v3555
        %3557 = vmatmul.bf16.gmra.mxu0 %v1439
        %v3558 = vpop.f32.mrf.mxu0
        %v3559 = vadd.f32 0.0, %v3558
        %v3560 = vpop.f32.mrf.mxu0
        %v3561 = vadd.f32 0.0, %v3560
        %3562 = vmatmul.bf16.gmra.mxu0 %v1525
        %v3563 = vpop.f32.mrf.mxu0
        %v3564 = vadd.f32 0.0, %v3563
        %v3565 = vpop.f32.mrf.mxu0
        %v3566 = vadd.f32 0.0, %v3565
        %3567 = vmatmul.bf16.gmra.mxu0 %v1527
        %v3568 = vpop.f32.mrf.mxu0
        %v3569 = vadd.f32 0.0, %v3568
        %v3570 = vpop.f32.mrf.mxu0
        %v3571 = vadd.f32 0.0, %v3570
        %3572 = vmatmul.bf16.gmra.mxu0 %v1529
        %v3573 = vpop.f32.mrf.mxu0
        %v3574 = vadd.f32 0.0, %v3573
        %v3575 = vpop.f32.mrf.mxu0
        %v3576 = vadd.f32 0.0, %v3575
        %3577 = vmatmul.bf16.gmra.mxu0 %v1531
        %v3578 = vpop.f32.mrf.mxu0
        %v3579 = vadd.f32 0.0, %v3578
        %v3580 = vpop.f32.mrf.mxu0
        %v3581 = vadd.f32 0.0, %v3580
        %3582 = vmatmul.bf16.gmra.mxu0 %v1533
        %v3583 = vpop.f32.mrf.mxu0
        %v3584 = vadd.f32 0.0, %v3583
        %v3585 = vpop.f32.mrf.mxu0
        %v3586 = vadd.f32 0.0, %v3585
        %3587 = vmatmul.bf16.gmra.mxu0 %v1535
        %v3588 = vpop.f32.mrf.mxu0
        %v3589 = vadd.f32 0.0, %v3588
        %v3590 = vpop.f32.mrf.mxu0
        %v3591 = vadd.f32 0.0, %v3590
        %3592 = vmatmul.bf16.gmra.mxu0 %v1537
        %v3593 = vpop.f32.mrf.mxu0
        %v3594 = vadd.f32 0.0, %v3593
        %v3595 = vpop.f32.mrf.mxu0
        %v3596 = vadd.f32 0.0, %v3595
        %3597 = vmatmul.bf16.gmra.mxu0 %v1539
        %v3598 = vpop.f32.mrf.mxu0
        %v3599 = vadd.f32 0.0, %v3598
        %v3600 = vpop.f32.mrf.mxu0
        %v3601 = vadd.f32 0.0, %v3600
        %3602 = vmatmul.bf16.gmra.mxu0 %v1541
        %v3603 = vpop.f32.mrf.mxu0
        %v3604 = vadd.f32 0.0, %v3603
        %v3605 = vpop.f32.mrf.mxu0
        %v3606 = vadd.f32 0.0, %v3605
        %3607 = vmatmul.bf16.gmra.mxu0 %v1543
        %v3608 = vpop.f32.mrf.mxu0
        %v3609 = vadd.f32 0.0, %v3608
        %v3610 = vpop.f32.mrf.mxu0
        %v3611 = vadd.f32 0.0, %v3610
        %3612 = vmatmul.bf16.gmra.mxu0 %v1545
        %v3613 = vpop.f32.mrf.mxu0
        %v3614 = vadd.f32 0.0, %v3613
        %v3615 = vpop.f32.mrf.mxu0
        %v3616 = vadd.f32 0.0, %v3615
        %3617 = vmatmul.bf16.gmra.mxu0 %v1547
        %v3618 = vpop.f32.mrf.mxu0
        %v3619 = vadd.f32 0.0, %v3618
        %v3620 = vpop.f32.mrf.mxu0
        %v3621 = vadd.f32 0.0, %v3620
        %3622 = vmatmul.bf16.gmra.mxu0 %v1633
        %v3623 = vpop.f32.mrf.mxu0
        %v3624 = vpop.f32.mrf.mxu0
        %3625 = vmatmul.bf16.gmra.mxu0 %v1635
        %v3626 = vpop.f32.mrf.mxu0
        %v3627 = vpop.f32.mrf.mxu0
        %3628 = vmatmul.bf16.gmra.mxu0 %v1637
        %v3629 = vpop.f32.mrf.mxu0
        %v3630 = vpop.f32.mrf.mxu0
        %3631 = vmatmul.bf16.gmra.mxu0 %v1639
        %v3632 = vpop.f32.mrf.mxu0
        %v3633 = vpop.f32.mrf.mxu0
        %3634 = vmatmul.bf16.gmra.mxu0 %v1641
        %v3635 = vpop.f32.mrf.mxu0
        %v3636 = vpop.f32.mrf.mxu0
        %3637 = vmatmul.bf16.gmra.mxu0 %v1643
        %v3638 = vpop.f32.mrf.mxu0
        %v3639 = vpop.f32.mrf.mxu0
        %3640 = vmatmul.bf16.gmra.mxu0 %v1645
        %v3641 = vpop.f32.mrf.mxu0
        %v3642 = vpop.f32.mrf.mxu0
        %3643 = vmatmul.bf16.gmra.mxu0 %v1647
        %v3644 = vpop.f32.mrf.mxu0
        %v3645 = vpop.f32.mrf.mxu0
        %3646 = vmatmul.bf16.gmra.mxu0 %v1649
        %v3647 = vpop.f32.mrf.mxu0
        %v3648 = vpop.f32.mrf.mxu0
        %3649 = vmatmul.bf16.gmra.mxu0 %v1651
        %v3650 = vpop.f32.mrf.mxu0
        %v3651 = vpop.f32.mrf.mxu0
        %3652 = vmatmul.bf16.gmra.mxu0 %v1653
        %v3653 = vpop.f32.mrf.mxu0
        %v3654 = vpop.f32.mrf.mxu0
        %3655 = vmatmul.bf16.gmra.mxu0 %v1655
        %v3656 = vpop.f32.mrf.mxu0
        %v3657 = vpop.f32.mrf.mxu0
        %3658 = vmatmul.bf16.gmra.mxu0 %v1741
        %v3659 = vpop.f32.mrf.mxu0
        %v3660 = vpop.f32.mrf.mxu0
        %3661 = vmatmul.bf16.gmra.mxu0 %v1743
        %v3662 = vpop.f32.mrf.mxu0
        %v3663 = vpop.f32.mrf.mxu0
        %3664 = vmatmul.bf16.gmra.mxu0 %v1745
        %v3665 = vpop.f32.mrf.mxu0
        %v3666 = vpop.f32.mrf.mxu0
        %3667 = vmatmul.bf16.gmra.mxu0 %v1747
        %v3668 = vpop.f32.mrf.mxu0
        %v3669 = vpop.f32.mrf.mxu0
        %3670 = vmatmul.bf16.gmra.mxu0 %v1749
        %v3671 = vpop.f32.mrf.mxu0
        %v3672 = vpop.f32.mrf.mxu0
        %3673 = vmatmul.bf16.gmra.mxu0 %v1751
        %v3674 = vpop.f32.mrf.mxu0
        %v3675 = vpop.f32.mrf.mxu0
        %3676 = vmatmul.bf16.gmra.mxu0 %v1753
        %v3677 = vpop.f32.mrf.mxu0
        %v3678 = vpop.f32.mrf.mxu0
        %3679 = vmatmul.bf16.gmra.mxu0 %v1755
        %v3680 = vpop.f32.mrf.mxu0
        %v3681 = vpop.f32.mrf.mxu0
        %3682 = vmatmul.bf16.gmra.mxu0 %v1757
        %v3683 = vpop.f32.mrf.mxu0
        %v3684 = vpop.f32.mrf.mxu0
        %3685 = vmatmul.bf16.gmra.mxu0 %v1759
        %v3686 = vpop.f32.mrf.mxu0
        %v3687 = vpop.f32.mrf.mxu0
        %3688 = vmatmul.bf16.gmra.mxu0 %v1761
        %v3689 = vpop.f32.mrf.mxu0
        %v3690 = vpop.f32.mrf.mxu0
        %3691 = vmatmul.bf16.gmra.mxu0 %v1763
        %v3692 = vpop.f32.mrf.mxu0
        %v3693 = vpop.f32.mrf.mxu0
        %3694 = vmatmul.bf16.gmra.mxu0 %v1849
        %v3695 = vpop.f32.mrf.mxu0
        %v3696 = vpop.f32.mrf.mxu0
        %3697 = vmatmul.bf16.gmra.mxu0 %v1851
        %v3698 = vpop.f32.mrf.mxu0
        %v3699 = vpop.f32.mrf.mxu0
        %3700 = vmatmul.bf16.gmra.mxu0 %v1853
        %v3701 = vpop.f32.mrf.mxu0
        %v3702 = vpop.f32.mrf.mxu0
        %3703 = vmatmul.bf16.gmra.mxu0 %v1855
        %v3704 = vpop.f32.mrf.mxu0
        %v3705 = vpop.f32.mrf.mxu0
        %3706 = vmatmul.bf16.gmra.mxu0 %v1857
        %v3707 = vpop.f32.mrf.mxu0
        %v3708 = vpop.f32.mrf.mxu0
        %3709 = vmatmul.bf16.gmra.mxu0 %v1859
        %v3710 = vpop.f32.mrf.mxu0
        %v3711 = vpop.f32.mrf.mxu0
        %3712 = vmatmul.bf16.gmra.mxu0 %v1861
        %v3713 = vpop.f32.mrf.mxu0
        %v3714 = vpop.f32.mrf.mxu0
        %3715 = vmatmul.bf16.gmra.mxu0 %v1863
        %v3716 = vpop.f32.mrf.mxu0
        %v3717 = vpop.f32.mrf.mxu0
        %3718 = vmatmul.bf16.gmra.mxu0 %v1865
        %v3719 = vpop.f32.mrf.mxu0
        %v3720 = vpop.f32.mrf.mxu0
        %3721 = vmatmul.bf16.gmra.mxu0 %v1867
        %v3722 = vpop.f32.mrf.mxu0
        %v3723 = vpop.f32.mrf.mxu0
        %3724 = vmatmul.bf16.gmra.mxu0 %v1869
        %v3725 = vpop.f32.mrf.mxu0
        %v3726 = vpop.f32.mrf.mxu0
        %3727 = vmatmul.bf16.gmra.mxu0 %v1871
        %v3728 = vpop.f32.mrf.mxu0
        %v3729 = vpop.f32.mrf.mxu0
        %3730 = vdwg.mxu0
        %3731 = vmatpush.bf16.msra.mxu0 0
        %3732 = vmatpush.bf16.msra.mxu0 0
        %3733 = vmatpush.bf16.msra.mxu0 0
        %3734 = vmatpush.bf16.msra.mxu0 0
        %3735 = vmatpush.bf16.msra.mxu0 %v2040
        %3736 = vmatpush.bf16.msra.mxu0 %v2037
        %3737 = vmatpush.bf16.msra.mxu0 %v2034
        %3738 = vmatpush.bf16.msra.mxu0 %v2031
        %3739 = vmatmul.bf16.gmra.mxu0 %v2079
        %v3740 = vpop.f32.mrf.mxu0
        %v3741 = vadd.f32 %v3504, %v3740
        %v3742 = vpop.f32.mrf.mxu0
        %v3743 = vadd.f32 %v3506, %v3742
        %3744 = vmatmul.bf16.gmra.mxu0 %v2082
        %v3745 = vpop.f32.mrf.mxu0
        %v3746 = vadd.f32 %v3509, %v3745
        %v3747 = vpop.f32.mrf.mxu0
        %v3748 = vadd.f32 %v3511, %v3747
        %3749 = vmatmul.bf16.gmra.mxu0 %v2085
        %v3750 = vpop.f32.mrf.mxu0
        %v3751 = vadd.f32 %v3514, %v3750
        %v3752 = vpop.f32.mrf.mxu0
        %v3753 = vadd.f32 %v3516, %v3752
        %3754 = vmatmul.bf16.gmra.mxu0 %v2088
        %v3755 = vpop.f32.mrf.mxu0
        %v3756 = vadd.f32 %v3519, %v3755
        %v3757 = vpop.f32.mrf.mxu0
        %v3758 = vadd.f32 %v3521, %v3757
        %3759 = vmatmul.bf16.gmra.mxu0 %v2091
        %v3760 = vpop.f32.mrf.mxu0
        %v3761 = vadd.f32 %v3524, %v3760
        %v3762 = vpop.f32.mrf.mxu0
        %v3763 = vadd.f32 %v3526, %v3762
        %3764 = vmatmul.bf16.gmra.mxu0 %v2094
        %v3765 = vpop.f32.mrf.mxu0
        %v3766 = vadd.f32 %v3529, %v3765
        %v3767 = vpop.f32.mrf.mxu0
        %v3768 = vadd.f32 %v3531, %v3767
        %3769 = vmatmul.bf16.gmra.mxu0 %v2097
        %v3770 = vpop.f32.mrf.mxu0
        %v3771 = vadd.f32 %v3534, %v3770
        %v3772 = vpop.f32.mrf.mxu0
        %v3773 = vadd.f32 %v3536, %v3772
        %3774 = vmatmul.bf16.gmra.mxu0 %v2100
        %v3775 = vpop.f32.mrf.mxu0
        %v3776 = vadd.f32 %v3539, %v3775
        %v3777 = vpop.f32.mrf.mxu0
        %v3778 = vadd.f32 %v3541, %v3777
        %3779 = vmatmul.bf16.gmra.mxu0 %v2103
        %v3780 = vpop.f32.mrf.mxu0
        %v3781 = vadd.f32 %v3544, %v3780
        %v3782 = vpop.f32.mrf.mxu0
        %v3783 = vadd.f32 %v3546, %v3782
        %3784 = vmatmul.bf16.gmra.mxu0 %v2106
        %v3785 = vpop.f32.mrf.mxu0
        %v3786 = vadd.f32 %v3549, %v3785
        %v3787 = vpop.f32.mrf.mxu0
        %v3788 = vadd.f32 %v3551, %v3787
        %3789 = vmatmul.bf16.gmra.mxu0 %v2109
        %v3790 = vpop.f32.mrf.mxu0
        %v3791 = vadd.f32 %v3554, %v3790
        %v3792 = vpop.f32.mrf.mxu0
        %v3793 = vadd.f32 %v3556, %v3792
        %3794 = vmatmul.bf16.gmra.mxu0 %v2112
        %v3795 = vpop.f32.mrf.mxu0
        %v3796 = vadd.f32 %v3559, %v3795
        %v3797 = vpop.f32.mrf.mxu0
        %v3798 = vadd.f32 %v3561, %v3797
        %3799 = vmatmul.bf16.gmra.mxu0 %v2115
        %v3800 = vpop.f32.mrf.mxu0
        %v3801 = vadd.f32 %v3564, %v3800
        %v3802 = vpop.f32.mrf.mxu0
        %v3803 = vadd.f32 %v3566, %v3802
        %3804 = vmatmul.bf16.gmra.mxu0 %v2118
        %v3805 = vpop.f32.mrf.mxu0
        %v3806 = vadd.f32 %v3569, %v3805
        %v3807 = vpop.f32.mrf.mxu0
        %v3808 = vadd.f32 %v3571, %v3807
        %3809 = vmatmul.bf16.gmra.mxu0 %v2121
        %v3810 = vpop.f32.mrf.mxu0
        %v3811 = vadd.f32 %v3574, %v3810
        %v3812 = vpop.f32.mrf.mxu0
        %v3813 = vadd.f32 %v3576, %v3812
        %3814 = vmatmul.bf16.gmra.mxu0 %v2124
        %v3815 = vpop.f32.mrf.mxu0
        %v3816 = vadd.f32 %v3579, %v3815
        %v3817 = vpop.f32.mrf.mxu0
        %v3818 = vadd.f32 %v3581, %v3817
        %3819 = vmatmul.bf16.gmra.mxu0 %v2127
        %v3820 = vpop.f32.mrf.mxu0
        %v3821 = vadd.f32 %v3584, %v3820
        %v3822 = vpop.f32.mrf.mxu0
        %v3823 = vadd.f32 %v3586, %v3822
        %3824 = vmatmul.bf16.gmra.mxu0 %v2130
        %v3825 = vpop.f32.mrf.mxu0
        %v3826 = vadd.f32 %v3589, %v3825
        %v3827 = vpop.f32.mrf.mxu0
        %v3828 = vadd.f32 %v3591, %v3827
        %3829 = vmatmul.bf16.gmra.mxu0 %v2133
        %v3830 = vpop.f32.mrf.mxu0
        %v3831 = vadd.f32 %v3594, %v3830
        %v3832 = vpop.f32.mrf.mxu0
        %v3833 = vadd.f32 %v3596, %v3832
        %3834 = vmatmul.bf16.gmra.mxu0 %v2136
        %v3835 = vpop.f32.mrf.mxu0
        %v3836 = vadd.f32 %v3599, %v3835
        %v3837 = vpop.f32.mrf.mxu0
        %v3838 = vadd.f32 %v3601, %v3837
        %3839 = vmatmul.bf16.gmra.mxu0 %v2139
        %v3840 = vpop.f32.mrf.mxu0
        %v3841 = vadd.f32 %v3604, %v3840
        %v3842 = vpop.f32.mrf.mxu0
        %v3843 = vadd.f32 %v3606, %v3842
        %3844 = vmatmul.bf16.gmra.mxu0 %v2142
        %v3845 = vpop.f32.mrf.mxu0
        %v3846 = vadd.f32 %v3609, %v3845
        %v3847 = vpop.f32.mrf.mxu0
        %v3848 = vadd.f32 %v3611, %v3847
        %3849 = vmatmul.bf16.gmra.mxu0 %v2145
        %v3850 = vpop.f32.mrf.mxu0
        %v3851 = vadd.f32 %v3614, %v3850
        %v3852 = vpop.f32.mrf.mxu0
        %v3853 = vadd.f32 %v3616, %v3852
        %3854 = vmatmul.bf16.gmra.mxu0 %v2148
        %v3855 = vpop.f32.mrf.mxu0
        %v3856 = vadd.f32 %v3619, %v3855
        %v3857 = vpop.f32.mrf.mxu0
        %v3858 = vadd.f32 %v3621, %v3857
        %3859 = vmatmul.bf16.gmra.mxu0 %v2151
        %v3860 = vpop.f32.mrf.mxu0
        %v3861 = vpop.f32.mrf.mxu0
        %3862 = vmatmul.bf16.gmra.mxu0 %v2154
        %v3863 = vpop.f32.mrf.mxu0
        %v3864 = vpop.f32.mrf.mxu0
        %3865 = vmatmul.bf16.gmra.mxu0 %v2157
        %v3866 = vpop.f32.mrf.mxu0
        %v3867 = vpop.f32.mrf.mxu0
        %3868 = vmatmul.bf16.gmra.mxu0 %v2160
        %v3869 = vpop.f32.mrf.mxu0
        %v3870 = vpop.f32.mrf.mxu0
        %3871 = vmatmul.bf16.gmra.mxu0 %v2163
        %v3872 = vpop.f32.mrf.mxu0
        %v3873 = vpop.f32.mrf.mxu0
        %3874 = vmatmul.bf16.gmra.mxu0 %v2166
        %v3875 = vpop.f32.mrf.mxu0
        %v3876 = vpop.f32.mrf.mxu0
        %3877 = vmatmul.bf16.gmra.mxu0 %v2169
        %v3878 = vpop.f32.mrf.mxu0
        %v3879 = vpop.f32.mrf.mxu0
        %3880 = vmatmul.bf16.gmra.mxu0 %v2172
        %v3881 = vpop.f32.mrf.mxu0
        %v3882 = vpop.f32.mrf.mxu0
        %3883 = vmatmul.bf16.gmra.mxu0 %v2175
        %v3884 = vpop.f32.mrf.mxu0
        %v3885 = vpop.f32.mrf.mxu0
        %3886 = vmatmul.bf16.gmra.mxu0 %v2178
        %v3887 = vpop.f32.mrf.mxu0
        %v3888 = vpop.f32.mrf.mxu0
        %3889 = vmatmul.bf16.gmra.mxu0 %v2181
        %v3890 = vpop.f32.mrf.mxu0
        %v3891 = vpop.f32.mrf.mxu0
        %3892 = vmatmul.bf16.gmra.mxu0 %v2184
        %v3893 = vpop.f32.mrf.mxu0
        %v3894 = vpop.f32.mrf.mxu0
        %3895 = vmatmul.bf16.gmra.mxu0 %v2187
        %v3896 = vpop.f32.mrf.mxu0
        %v3897 = vpop.f32.mrf.mxu0
        %3898 = vmatmul.bf16.gmra.mxu0 %v2190
        %v3899 = vpop.f32.mrf.mxu0
        %v3900 = vpop.f32.mrf.mxu0
        %3901 = vmatmul.bf16.gmra.mxu0 %v2193
        %v3902 = vpop.f32.mrf.mxu0
        %v3903 = vpop.f32.mrf.mxu0
        %3904 = vmatmul.bf16.gmra.mxu0 %v2196
        %v3905 = vpop.f32.mrf.mxu0
        %v3906 = vpop.f32.mrf.mxu0
        %3907 = vmatmul.bf16.gmra.mxu0 %v2199
        %v3908 = vpop.f32.mrf.mxu0
        %v3909 = vpop.f32.mrf.mxu0
        %3910 = vmatmul.bf16.gmra.mxu0 %v2202
        %v3911 = vpop.f32.mrf.mxu0
        %v3912 = vpop.f32.mrf.mxu0
        %3913 = vmatmul.bf16.gmra.mxu0 %v2205
        %v3914 = vpop.f32.mrf.mxu0
        %v3915 = vpop.f32.mrf.mxu0
        %3916 = vmatmul.bf16.gmra.mxu0 %v2208
        %v3917 = vpop.f32.mrf.mxu0
        %v3918 = vpop.f32.mrf.mxu0
        %3919 = vmatmul.bf16.gmra.mxu0 %v2211
        %v3920 = vpop.f32.mrf.mxu0
        %v3921 = vpop.f32.mrf.mxu0
        %3922 = vmatmul.bf16.gmra.mxu0 %v2214
        %v3923 = vpop.f32.mrf.mxu0
        %v3924 = vpop.f32.mrf.mxu0
        %3925 = vmatmul.bf16.gmra.mxu0 %v2217
        %v3926 = vpop.f32.mrf.mxu0
        %v3927 = vpop.f32.mrf.mxu0
        %3928 = vmatmul.bf16.gmra.mxu0 %v2220
        %v3929 = vpop.f32.mrf.mxu0
        %v3930 = vpop.f32.mrf.mxu0
        %3931 = vmatmul.bf16.gmra.mxu0 %v2223
        %v3932 = vpop.f32.mrf.mxu0
        %v3933 = vpop.f32.mrf.mxu0
        %3934 = vmatmul.bf16.gmra.mxu0 %v2226
        %v3935 = vpop.f32.mrf.mxu0
        %v3936 = vpop.f32.mrf.mxu0
        %3937 = vmatmul.bf16.gmra.mxu0 %v2229
        %v3938 = vpop.f32.mrf.mxu0
        %v3939 = vpop.f32.mrf.mxu0
        %3940 = vmatmul.bf16.gmra.mxu0 %v2232
        %v3941 = vpop.f32.mrf.mxu0
        %v3942 = vpop.f32.mrf.mxu0
        %3943 = vmatmul.bf16.gmra.mxu0 %v2235
        %v3944 = vpop.f32.mrf.mxu0
        %v3945 = vpop.f32.mrf.mxu0
        %3946 = vmatmul.bf16.gmra.mxu0 %v2238
        %v3947 = vpop.f32.mrf.mxu0
        %v3948 = vpop.f32.mrf.mxu0
        %3949 = vmatmul.bf16.gmra.mxu0 %v2241
        %v3950 = vpop.f32.mrf.mxu0
        %v3951 = vpop.f32.mrf.mxu0
        %3952 = vmatmul.bf16.gmra.mxu0 %v2244
        %v3953 = vpop.f32.mrf.mxu0
        %v3954 = vpop.f32.mrf.mxu0
        %3955 = vmatmul.bf16.gmra.mxu0 %v2247
        %v3956 = vpop.f32.mrf.mxu0
        %v3957 = vpop.f32.mrf.mxu0
        %3958 = vmatmul.bf16.gmra.mxu0 %v2250
        %v3959 = vpop.f32.mrf.mxu0
        %v3960 = vpop.f32.mrf.mxu0
        %3961 = vmatmul.bf16.gmra.mxu0 %v2253
        %v3962 = vpop.f32.mrf.mxu0
        %v3963 = vpop.f32.mrf.mxu0
        %3964 = vmatmul.bf16.gmra.mxu0 %v2256
        %v3965 = vpop.f32.mrf.mxu0
        %v3966 = vpop.f32.mrf.mxu0
        %3967 = vdwg.mxu0
        %v3968 = vpack.c.bf16 %v3195, %v2577
        %v3969 = vpack.c.bf16 %v3197, %v2579
        %v3970 = vpack.c.bf16 %v3200, %v2582
        %v3971 = vpack.c.bf16 %v3202, %v2584
        %v3972 = vpack.c.bf16 %v3205, %v2587
        %v3973 = vpack.c.bf16 %v3207, %v2589
        %v3974 = vpack.c.bf16 %v3210, %v2592
        %v3975 = vpack.c.bf16 %v3212, %v2594
        %v3976 = vpack.c.bf16 %v3215, %v2597
        %v3977 = vpack.c.bf16 %v3217, %v2599
        %v3978 = vpack.c.bf16 %v3220, %v2602
        %v3979 = vpack.c.bf16 %v3222, %v2604
        %v3980 = vpack.c.bf16 %v3225, %v2607
        %v3981 = vpack.c.bf16 %v3227, %v2609
        %v3982 = vpack.c.bf16 %v3230, %v2612
        %v3983 = vpack.c.bf16 %v3232, %v2614
        %v3984 = vpack.c.bf16 %v3235, %v2617
        %v3985 = vpack.c.bf16 %v3237, %v2619
        %v3986 = vpack.c.bf16 %v3240, %v2622
        %v3987 = vpack.c.bf16 %v3242, %v2624
        %v3988 = vpack.c.bf16 %v3245, %v2627
        %v3989 = vpack.c.bf16 %v3247, %v2629
        %v3990 = vpack.c.bf16 %v3250, %v2632
        %v3991 = vpack.c.bf16 %v3252, %v2634
        %v3992 = vpack.c.bf16 %v3255, %v2637
        %v3993 = vpack.c.bf16 %v3257, %v2639
        %v3994 = vpack.c.bf16 %v3260, %v2642
        %v3995 = vpack.c.bf16 %v3262, %v2644
        %v3996 = vpack.c.bf16 %v3265, %v2647
        %v3997 = vpack.c.bf16 %v3267, %v2649
        %v3998 = vpack.c.bf16 %v3270, %v2652
        %v3999 = vpack.c.bf16 %v3272, %v2654
        %v4000 = vpack.c.bf16 %v3275, %v2657
        %v4001 = vpack.c.bf16 %v3277, %v2659
        %v4002 = vpack.c.bf16 %v3280, %v2662
        %v4003 = vpack.c.bf16 %v3282, %v2664
        %v4004 = vpack.c.bf16 %v3285, %v2667
        %v4005 = vpack.c.bf16 %v3287, %v2669
        %v4006 = vpack.c.bf16 %v3290, %v2672
        %v4007 = vpack.c.bf16 %v3292, %v2674
        %v4008 = vpack.c.bf16 %v3295, %v2677
        %v4009 = vpack.c.bf16 %v3297, %v2679
        %v4010 = vpack.c.bf16 %v3300, %v2682
        %v4011 = vpack.c.bf16 %v3302, %v2684
        %v4012 = vpack.c.bf16 %v3305, %v2687
        %v4013 = vpack.c.bf16 %v3307, %v2689
        %v4014 = vpack.c.bf16 %v3310, %v2692
        %v4015 = vpack.c.bf16 %v3312, %v2694
        %v4016 = vpack.c.bf16 %v3315, %v2697
        %v4017 = vpack.c.bf16 %v3317, %v2699
        %v4018 = vpack.c.bf16 %v3320, %v2702
        %v4019 = vpack.c.bf16 %v3322, %v2704
        %v4020 = vpack.c.bf16 %v3325, %v2707
        %v4021 = vpack.c.bf16 %v3327, %v2709
        %v4022 = vpack.c.bf16 %v3330, %v2712
        %v4023 = vpack.c.bf16 %v3332, %v2714
        %v4024 = vpack.c.bf16 %v3335, %v2717
        %v4025 = vpack.c.bf16 %v3337, %v2719
        %v4026 = vpack.c.bf16 %v3340, %v2722
        %v4027 = vpack.c.bf16 %v3342, %v2724
        %v4028 = vpack.c.bf16 %v3345, %v2727
        %v4029 = vpack.c.bf16 %v3347, %v2729
        %v4030 = vpack.c.bf16 %v3350, %v2732
        %v4031 = vpack.c.bf16 %v3352, %v2734
        %v4032 = vpack.c.bf16 %v3355, %v2737
        %v4033 = vpack.c.bf16 %v3357, %v2739
        %v4034 = vpack.c.bf16 %v3360, %v2742
        %v4035 = vpack.c.bf16 %v3362, %v2744
        %v4036 = vpack.c.bf16 %v3365, %v2747
        %v4037 = vpack.c.bf16 %v3367, %v2749
        %v4038 = vpack.c.bf16 %v3370, %v2752
        %v4039 = vpack.c.bf16 %v3372, %v2754
        %v4040 = vpack.c.bf16 %v3375, %v2757
        %v4041 = vpack.c.bf16 %v3377, %v2759
        %v4042 = vpack.c.bf16 %v3380, %v2762
        %v4043 = vpack.c.bf16 %v3382, %v2764
        %v4044 = vpack.c.bf16 %v3385, %v2767
        %v4045 = vpack.c.bf16 %v3387, %v2769
        %v4046 = vpack.c.bf16 %v3390, %v2772
        %v4047 = vpack.c.bf16 %v3392, %v2774
        %v4048 = vpack.c.bf16 %v3395, %v2777
        %v4049 = vpack.c.bf16 %v3397, %v2779
        %v4050 = vpack.c.bf16 %v3400, %v2782
        %v4051 = vpack.c.bf16 %v3402, %v2784
        %v4052 = vpack.c.bf16 %v3405, %v2787
        %v4053 = vpack.c.bf16 %v3407, %v2789
        %v4054 = vpack.c.bf16 %v3410, %v2792
        %v4055 = vpack.c.bf16 %v3412, %v2794
        %v4056 = vpack.c.bf16 %v3415, %v2797
        %v4057 = vpack.c.bf16 %v3417, %v2799
        %v4058 = vpack.c.bf16 %v3420, %v2802
        %v4059 = vpack.c.bf16 %v3422, %v2804
        %v4060 = vpack.c.bf16 %v3425, %v2807
        %v4061 = vpack.c.bf16 %v3427, %v2809
        %v4062 = vpack.c.bf16 %v3430, %v2812
        %v4063 = vpack.c.bf16 %v3432, %v2814
        %v4064 = vpack.c.bf16 %v3435, %v2817
        %v4065 = vpack.c.bf16 %v3437, %v2819
        %v4066 = vpack.c.bf16 %v3440, %v2822
        %v4067 = vpack.c.bf16 %v3442, %v2824
        %v4068 = vpack.c.bf16 %v3445, %v2827
        %v4069 = vpack.c.bf16 %v3447, %v2829
        %v4070 = vpack.c.bf16 %v3450, %v2832
        %v4071 = vpack.c.bf16 %v3452, %v2834
        %v4072 = vpack.c.bf16 %v3455, %v2837
        %v4073 = vpack.c.bf16 %v3457, %v2839
        %v4074 = vpack.c.bf16 %v3460, %v2842
        %v4075 = vpack.c.bf16 %v3462, %v2844
        %v4076 = vpack.c.bf16 %v3465, %v2847
        %v4077 = vpack.c.bf16 %v3467, %v2849
        %v4078 = vpack.c.bf16 %v3470, %v2852
        %v4079 = vpack.c.bf16 %v3472, %v2854
        %v4080 = vpack.c.bf16 %v3475, %v2857
        %v4081 = vpack.c.bf16 %v3477, %v2859
        %v4082 = vpack.c.bf16 %v3480, %v2862
        %v4083 = vpack.c.bf16 %v3482, %v2864
        %v4084 = vpack.c.bf16 %v3485, %v2867
        %v4085 = vpack.c.bf16 %v3487, %v2869
        %v4086 = vpack.c.bf16 %v3490, %v2872
        %v4087 = vpack.c.bf16 %v3492, %v2874
        %v4111 = vunpack.c.l.b16 %v1010
        %v4112 = vunpack.c.h.b16 %v1010
        %v4113 = vunpack.c.l.b16 %v1011
        %v4114 = vunpack.c.h.b16 %v1011
        %v4115 = vunpack.c.l.b16 %v1012
        %v4116 = vunpack.c.h.b16 %v1012
        %v4117 = vunpack.c.l.b16 %v1013
        %v4118 = vunpack.c.h.b16 %v1013
        %v4119 = vunpack.c.l.b16 %v1014
        %v4120 = vunpack.c.h.b16 %v1014
        %v4121 = vunpack.c.l.b16 %v1015
        %v4122 = vunpack.c.h.b16 %v1015
        %v4123 = vunpack.c.l.b16 %v1016
        %v4124 = vunpack.c.h.b16 %v1016
        %v4125 = vunpack.c.l.b16 %v1017
        %v4126 = vunpack.c.h.b16 %v1017
        %v4127 = vunpack.c.l.b16 %v1018
        %v4128 = vunpack.c.h.b16 %v1018
        %v4129 = vunpack.c.l.b16 %v1019
        %v4130 = vunpack.c.h.b16 %v1019
        %v4131 = vunpack.c.l.b16 %v1020
        %v4132 = vunpack.c.h.b16 %v1020
        %v4133 = vunpack.c.l.b16 %v1021
        %v4134 = vunpack.c.h.b16 %v1021
        %v4135 = vunpack.c.l.b16 %v1022
        %v4136 = vunpack.c.h.b16 %v1022
        %v4137 = vunpack.c.l.b16 %v1023
        %v4138 = vunpack.c.h.b16 %v1023
        %v4139 = vunpack.c.l.b16 %v1024
        %v4140 = vunpack.c.h.b16 %v1024
        %v4141 = vunpack.c.l.b16 %v1025
        %v4142 = vunpack.c.h.b16 %v1025
        %v4143 = vunpack.c.l.b16 %v1026
        %v4144 = vunpack.c.h.b16 %v1026
        %v4145 = vunpack.c.l.b16 %v1027
        %v4146 = vunpack.c.h.b16 %v1027
        %v4147 = vunpack.c.l.b16 %v1028
        %v4148 = vunpack.c.h.b16 %v1028
        %v4149 = vunpack.c.l.b16 %v1029
        %v4150 = vunpack.c.h.b16 %v1029
        %v4151 = vunpack.c.l.b16 %v1030
        %v4152 = vunpack.c.h.b16 %v1030
        %v4153 = vunpack.c.l.b16 %v1031
        %v4154 = vunpack.c.h.b16 %v1031
        %v4155 = vunpack.c.l.b16 %v1032
        %v4156 = vunpack.c.h.b16 %v1032
        %v4157 = vpack.c.b16 %v4113, %v4111
        %v4158 = vpack.c.b16 %v4114, %v4112
        %v4159 = vpack.c.b16 %v4117, %v4115
        %v4160 = vpack.c.b16 %v4118, %v4116
        %v4161 = vpack.c.b16 %v4121, %v4119
        %v4162 = vpack.c.b16 %v4122, %v4120
        %v4163 = vpack.c.b16 %v4125, %v4123
        %v4164 = vpack.c.b16 %v4126, %v4124
        %v4165 = vpack.c.b16 %v4129, %v4127
        %v4166 = vpack.c.b16 %v4130, %v4128
        %v4167 = vpack.c.b16 %v4133, %v4131
        %v4168 = vpack.c.b16 %v4134, %v4132
        %v4169 = vpack.c.b16 %v4137, %v4135
        %v4170 = vpack.c.b16 %v4138, %v4136
        %v4171 = vpack.c.b16 %v4141, %v4139
        %v4172 = vpack.c.b16 %v4142, %v4140
        %v4173 = vpack.c.b16 %v4145, %v4143
        %v4174 = vpack.c.b16 %v4146, %v4144
        %v4175 = vpack.c.b16 %v4149, %v4147
        %v4176 = vpack.c.b16 %v4150, %v4148
        %v4177 = vpack.c.b16 %v4153, %v4151
        %v4178 = vpack.c.b16 %v4154, %v4152
        %v4179 = vpack.c.b16 %v4155, %v4155
        %v4180 = vpack.c.b16 %v4156, %v4156
        %v4217 = vunpack.c.l.b16 %v3968
        %v4218 = vunpack.c.h.b16 %v3968
        %v4219 = vunpack.c.l.b16 %v3969
        %v4220 = vunpack.c.h.b16 %v3969
        %v4221 = vunpack.c.l.b16 %v3970
        %v4222 = vunpack.c.h.b16 %v3970
        %v4223 = vunpack.c.l.b16 %v3971
        %v4224 = vunpack.c.h.b16 %v3971
        %v4225 = vunpack.c.l.b16 %v3972
        %v4226 = vunpack.c.h.b16 %v3972
        %v4227 = vunpack.c.l.b16 %v3973
        %v4228 = vunpack.c.h.b16 %v3973
        %v4229 = vunpack.c.l.b16 %v3974
        %v4230 = vunpack.c.h.b16 %v3974
        %v4231 = vunpack.c.l.b16 %v3975
        %v4232 = vunpack.c.h.b16 %v3975
        %v4233 = vunpack.c.l.b16 %v3976
        %v4234 = vunpack.c.h.b16 %v3976
        %v4235 = vunpack.c.l.b16 %v3977
        %v4236 = vunpack.c.h.b16 %v3977
        %v4237 = vunpack.c.l.b16 %v3978
        %v4238 = vunpack.c.h.b16 %v3978
        %v4239 = vunpack.c.l.b16 %v3979
        %v4240 = vunpack.c.h.b16 %v3979
        %v4241 = vunpack.c.l.b16 %v3980
        %v4242 = vunpack.c.h.b16 %v3980
        %v4243 = vunpack.c.l.b16 %v3981
        %v4244 = vunpack.c.h.b16 %v3981
        %v4245 = vunpack.c.l.b16 %v3982
        %v4246 = vunpack.c.h.b16 %v3982
        %v4247 = vunpack.c.l.b16 %v3983
        %v4248 = vunpack.c.h.b16 %v3983
        %v4249 = vunpack.c.l.b16 %v3984
        %v4250 = vunpack.c.h.b16 %v3984
        %v4251 = vunpack.c.l.b16 %v3985
        %v4252 = vunpack.c.h.b16 %v3985
        %v4253 = vunpack.c.l.b16 %v3986
        %v4254 = vunpack.c.h.b16 %v3986
        %v4255 = vunpack.c.l.b16 %v3987
        %v4256 = vunpack.c.h.b16 %v3987
        %v4257 = vunpack.c.l.b16 %v3988
        %v4258 = vunpack.c.h.b16 %v3988
        %v4259 = vunpack.c.l.b16 %v3989
        %v4260 = vunpack.c.h.b16 %v3989
        %v4261 = vunpack.c.l.b16 %v3990
        %v4262 = vunpack.c.h.b16 %v3990
        %v4263 = vunpack.c.l.b16 %v3991
        %v4264 = vunpack.c.h.b16 %v3991
        %v4265 = vpack.c.b16 %v4219, %v4217
        %v4266 = vpack.c.b16 %v4220, %v4218
        %v4267 = vpack.c.b16 %v4223, %v4221
        %v4268 = vpack.c.b16 %v4224, %v4222
        %v4269 = vpack.c.b16 %v4227, %v4225
        %v4270 = vpack.c.b16 %v4228, %v4226
        %v4271 = vpack.c.b16 %v4231, %v4229
        %v4272 = vpack.c.b16 %v4232, %v4230
        %v4273 = vpack.c.b16 %v4235, %v4233
        %v4274 = vpack.c.b16 %v4236, %v4234
        %v4275 = vpack.c.b16 %v4239, %v4237
        %v4276 = vpack.c.b16 %v4240, %v4238
        %v4277 = vpack.c.b16 %v4243, %v4241
        %v4278 = vpack.c.b16 %v4244, %v4242
        %v4279 = vpack.c.b16 %v4247, %v4245
        %v4280 = vpack.c.b16 %v4248, %v4246
        %v4281 = vpack.c.b16 %v4251, %v4249
        %v4282 = vpack.c.b16 %v4252, %v4250
        %v4283 = vpack.c.b16 %v4255, %v4253
        %v4284 = vpack.c.b16 %v4256, %v4254
        %v4285 = vpack.c.b16 %v4259, %v4257
        %v4286 = vpack.c.b16 %v4260, %v4258
        %v4287 = vpack.c.b16 %v4263, %v4261
        %v4288 = vpack.c.b16 %v4264, %v4262
        %v4314 = vsel %vm2077, %v4158, 0
        %v4317 = vsel %vm2077, %v4160, 0
        %v4320 = vsel %vm2077, %v4162, 0
        %v4323 = vsel %vm2077, %v4164, 0
        %v4326 = vsel %vm2077, %v4166, 0
        %v4329 = vsel %vm2077, %v4168, 0
        %v4332 = vsel %vm2077, %v4170, 0
        %v4335 = vsel %vm2077, %v4172, 0
        %v4338 = vsel %vm2077, %v4174, 0
        %v4341 = vsel %vm2077, %v4176, 0
        %v4344 = vsel %vm2077, %v4178, 0
        %v4347 = vsel %vm2077, %v4180, 0
        %4349 = vmatpush.bf16.msra.mxu0 %v4279
        %4350 = vmatpush.bf16.msra.mxu0 %v4277
        %4351 = vmatpush.bf16.msra.mxu0 %v4275
        %4352 = vmatpush.bf16.msra.mxu0 %v4273
        %4353 = vmatpush.bf16.msra.mxu0 %v4271
        %4354 = vmatpush.bf16.msra.mxu0 %v4269
        %4355 = vmatpush.bf16.msra.mxu0 %v4267
        %4356 = vmatpush.bf16.msra.mxu0 %v4265
        %4357 = vmatmul.bf16.gmra.mxu0 %v4157
        %v4358 = vpop.f32.mrf.mxu0
        %v4359 = vadd.f32 0.0, %v4358
        %v4360 = vpop.f32.mrf.mxu0
        %v4361 = vadd.f32 0.0, %v4360
        %4362 = vmatmul.bf16.gmra.mxu0 %v4159
        %v4363 = vpop.f32.mrf.mxu0
        %v4364 = vadd.f32 0.0, %v4363
        %v4365 = vpop.f32.mrf.mxu0
        %v4366 = vadd.f32 0.0, %v4365
        %4367 = vmatmul.bf16.gmra.mxu0 %v4161
        %v4368 = vpop.f32.mrf.mxu0
        %v4369 = vadd.f32 0.0, %v4368
        %v4370 = vpop.f32.mrf.mxu0
        %v4371 = vadd.f32 0.0, %v4370
        %4372 = vmatmul.bf16.gmra.mxu0 %v4163
        %v4373 = vpop.f32.mrf.mxu0
        %v4374 = vadd.f32 0.0, %v4373
        %v4375 = vpop.f32.mrf.mxu0
        %v4376 = vadd.f32 0.0, %v4375
        %4377 = vmatmul.bf16.gmra.mxu0 %v4165
        %v4378 = vpop.f32.mrf.mxu0
        %v4379 = vadd.f32 0.0, %v4378
        %v4380 = vpop.f32.mrf.mxu0
        %v4381 = vadd.f32 0.0, %v4380
        %4382 = vmatmul.bf16.gmra.mxu0 %v4167
        %v4383 = vpop.f32.mrf.mxu0
        %v4384 = vadd.f32 0.0, %v4383
        %v4385 = vpop.f32.mrf.mxu0
        %v4386 = vadd.f32 0.0, %v4385
        %4387 = vmatmul.bf16.gmra.mxu0 %v4169
        %v4388 = vpop.f32.mrf.mxu0
        %v4389 = vadd.f32 0.0, %v4388
        %v4390 = vpop.f32.mrf.mxu0
        %v4391 = vadd.f32 0.0, %v4390
        %4392 = vmatmul.bf16.gmra.mxu0 %v4171
        %v4393 = vpop.f32.mrf.mxu0
        %v4394 = vadd.f32 0.0, %v4393
        %v4395 = vpop.f32.mrf.mxu0
        %v4396 = vadd.f32 0.0, %v4395
        %4397 = vmatmul.bf16.gmra.mxu0 %v4173
        %v4398 = vpop.f32.mrf.mxu0
        %v4399 = vadd.f32 0.0, %v4398
        %v4400 = vpop.f32.mrf.mxu0
        %v4401 = vadd.f32 0.0, %v4400
        %4402 = vmatmul.bf16.gmra.mxu0 %v4175
        %v4403 = vpop.f32.mrf.mxu0
        %v4404 = vadd.f32 0.0, %v4403
        %v4405 = vpop.f32.mrf.mxu0
        %v4406 = vadd.f32 0.0, %v4405
        %4407 = vmatmul.bf16.gmra.mxu0 %v4177
        %v4408 = vpop.f32.mrf.mxu0
        %v4409 = vadd.f32 0.0, %v4408
        %v4410 = vpop.f32.mrf.mxu0
        %v4411 = vadd.f32 0.0, %v4410
        %4412 = vmatmul.bf16.gmra.mxu0 %v4179
        %v4413 = vpop.f32.mrf.mxu0
        %v4414 = vadd.f32 0.0, %v4413
        %v4415 = vpop.f32.mrf.mxu0
        %4416 = vdwg.mxu0
        %4417 = vmatpush.bf16.msra.mxu0 0
        %4418 = vmatpush.bf16.msra.mxu0 0
        %4419 = vmatpush.bf16.msra.mxu0 0
        %4420 = vmatpush.bf16.msra.mxu0 0
        %4421 = vmatpush.bf16.msra.mxu0 %v4287
        %4422 = vmatpush.bf16.msra.mxu0 %v4285
        %4423 = vmatpush.bf16.msra.mxu0 %v4283
        %4424 = vmatpush.bf16.msra.mxu0 %v4281
        %4425 = vmatmul.bf16.gmra.mxu0 %v4314
        %v4426 = vpop.f32.mrf.mxu0
        %v4427 = vadd.f32 %v4359, %v4426
        %v4428 = vpop.f32.mrf.mxu0
        %v4429 = vadd.f32 %v4361, %v4428
        %4430 = vmatmul.bf16.gmra.mxu0 %v4317
        %v4431 = vpop.f32.mrf.mxu0
        %v4432 = vadd.f32 %v4364, %v4431
        %v4433 = vpop.f32.mrf.mxu0
        %v4434 = vadd.f32 %v4366, %v4433
        %4435 = vmatmul.bf16.gmra.mxu0 %v4320
        %v4436 = vpop.f32.mrf.mxu0
        %v4437 = vadd.f32 %v4369, %v4436
        %v4438 = vpop.f32.mrf.mxu0
        %v4439 = vadd.f32 %v4371, %v4438
        %4440 = vmatmul.bf16.gmra.mxu0 %v4323
        %v4441 = vpop.f32.mrf.mxu0
        %v4442 = vadd.f32 %v4374, %v4441
        %v4443 = vpop.f32.mrf.mxu0
        %v4444 = vadd.f32 %v4376, %v4443
        %4445 = vmatmul.bf16.gmra.mxu0 %v4326
        %v4446 = vpop.f32.mrf.mxu0
        %v4447 = vadd.f32 %v4379, %v4446
        %v4448 = vpop.f32.mrf.mxu0
        %v4449 = vadd.f32 %v4381, %v4448
        %4450 = vmatmul.bf16.gmra.mxu0 %v4329
        %v4451 = vpop.f32.mrf.mxu0
        %v4452 = vadd.f32 %v4384, %v4451
        %v4453 = vpop.f32.mrf.mxu0
        %v4454 = vadd.f32 %v4386, %v4453
        %4455 = vmatmul.bf16.gmra.mxu0 %v4332
        %v4456 = vpop.f32.mrf.mxu0
        %v4457 = vadd.f32 %v4389, %v4456
        %v4458 = vpop.f32.mrf.mxu0
        %v4459 = vadd.f32 %v4391, %v4458
        %4460 = vmatmul.bf16.gmra.mxu0 %v4335
        %v4461 = vpop.f32.mrf.mxu0
        %v4462 = vadd.f32 %v4394, %v4461
        %v4463 = vpop.f32.mrf.mxu0
        %v4464 = vadd.f32 %v4396, %v4463
        %4465 = vmatmul.bf16.gmra.mxu0 %v4338
        %v4466 = vpop.f32.mrf.mxu0
        %v4467 = vadd.f32 %v4399, %v4466
        %v4468 = vpop.f32.mrf.mxu0
        %v4469 = vadd.f32 %v4401, %v4468
        %4470 = vmatmul.bf16.gmra.mxu0 %v4341
        %v4471 = vpop.f32.mrf.mxu0
        %v4472 = vadd.f32 %v4404, %v4471
        %v4473 = vpop.f32.mrf.mxu0
        %v4474 = vadd.f32 %v4406, %v4473
        %4475 = vmatmul.bf16.gmra.mxu0 %v4344
        %v4476 = vpop.f32.mrf.mxu0
        %v4477 = vadd.f32 %v4409, %v4476
        %v4478 = vpop.f32.mrf.mxu0
        %v4479 = vadd.f32 %v4411, %v4478
        %4480 = vmatmul.bf16.gmra.mxu0 %v4347
        %v4481 = vpop.f32.mrf.mxu0
        %v4482 = vadd.f32 %v4414, %v4481
        %v4483 = vpop.f32.mrf.mxu0
        %4484 = vdwg.mxu0
        %4485 = vmatpush.bf16.msra.mxu0 %v4280
        %4486 = vmatpush.bf16.msra.mxu0 %v4278
        %4487 = vmatpush.bf16.msra.mxu0 %v4276
        %4488 = vmatpush.bf16.msra.mxu0 %v4274
        %4489 = vmatpush.bf16.msra.mxu0 %v4272
        %4490 = vmatpush.bf16.msra.mxu0 %v4270
        %4491 = vmatpush.bf16.msra.mxu0 %v4268
        %4492 = vmatpush.bf16.msra.mxu0 %v4266
        %4493 = vmatmul.bf16.gmra.mxu0 %v4157
        %v4494 = vpop.f32.mrf.mxu0
        %v4495 = vadd.f32 0.0, %v4494
        %v4496 = vpop.f32.mrf.mxu0
        %v4497 = vadd.f32 0.0, %v4496
        %4498 = vmatmul.bf16.gmra.mxu0 %v4159
        %v4499 = vpop.f32.mrf.mxu0
        %v4500 = vadd.f32 0.0, %v4499
        %v4501 = vpop.f32.mrf.mxu0
        %v4502 = vadd.f32 0.0, %v4501
        %4503 = vmatmul.bf16.gmra.mxu0 %v4161
        %v4504 = vpop.f32.mrf.mxu0
        %v4505 = vadd.f32 0.0, %v4504
        %v4506 = vpop.f32.mrf.mxu0
        %v4507 = vadd.f32 0.0, %v4506
        %4508 = vmatmul.bf16.gmra.mxu0 %v4163
        %v4509 = vpop.f32.mrf.mxu0
        %v4510 = vadd.f32 0.0, %v4509
        %v4511 = vpop.f32.mrf.mxu0
        %v4512 = vadd.f32 0.0, %v4511
        %4513 = vmatmul.bf16.gmra.mxu0 %v4165
        %v4514 = vpop.f32.mrf.mxu0
        %v4515 = vadd.f32 0.0, %v4514
        %v4516 = vpop.f32.mrf.mxu0
        %v4517 = vadd.f32 0.0, %v4516
        %4518 = vmatmul.bf16.gmra.mxu0 %v4167
        %v4519 = vpop.f32.mrf.mxu0
        %v4520 = vadd.f32 0.0, %v4519
        %v4521 = vpop.f32.mrf.mxu0
        %v4522 = vadd.f32 0.0, %v4521
        %4523 = vmatmul.bf16.gmra.mxu0 %v4169
        %v4524 = vpop.f32.mrf.mxu0
        %v4525 = vadd.f32 0.0, %v4524
        %v4526 = vpop.f32.mrf.mxu0
        %v4527 = vadd.f32 0.0, %v4526
        %4528 = vmatmul.bf16.gmra.mxu0 %v4171
        %v4529 = vpop.f32.mrf.mxu0
        %v4530 = vadd.f32 0.0, %v4529
        %v4531 = vpop.f32.mrf.mxu0
        %v4532 = vadd.f32 0.0, %v4531
        %4533 = vmatmul.bf16.gmra.mxu0 %v4173
        %v4534 = vpop.f32.mrf.mxu0
        %v4535 = vadd.f32 0.0, %v4534
        %v4536 = vpop.f32.mrf.mxu0
        %v4537 = vadd.f32 0.0, %v4536
        %4538 = vmatmul.bf16.gmra.mxu0 %v4175
        %v4539 = vpop.f32.mrf.mxu0
        %v4540 = vadd.f32 0.0, %v4539
        %v4541 = vpop.f32.mrf.mxu0
        %v4542 = vadd.f32 0.0, %v4541
        %4543 = vmatmul.bf16.gmra.mxu0 %v4177
        %v4544 = vpop.f32.mrf.mxu0
        %v4545 = vadd.f32 0.0, %v4544
        %v4546 = vpop.f32.mrf.mxu0
        %v4547 = vadd.f32 0.0, %v4546
        %4548 = vmatmul.bf16.gmra.mxu0 %v4179
        %v4549 = vpop.f32.mrf.mxu0
        %v4550 = vadd.f32 0.0, %v4549
        %v4551 = vpop.f32.mrf.mxu0
        %4552 = vdwg.mxu0
        %4553 = vmatpush.bf16.msra.mxu0 0
        %4554 = vmatpush.bf16.msra.mxu0 0
        %4555 = vmatpush.bf16.msra.mxu0 0
        %4556 = vmatpush.bf16.msra.mxu0 0
        %4557 = vmatpush.bf16.msra.mxu0 %v4288
        %4558 = vmatpush.bf16.msra.mxu0 %v4286
        %4559 = vmatpush.bf16.msra.mxu0 %v4284
        %4560 = vmatpush.bf16.msra.mxu0 %v4282
        %4561 = vmatmul.bf16.gmra.mxu0 %v4314
        %v4562 = vpop.f32.mrf.mxu0
        %v4563 = vadd.f32 %v4495, %v4562
        %v4564 = vpop.f32.mrf.mxu0
        %v4565 = vadd.f32 %v4497, %v4564
        %4566 = vmatmul.bf16.gmra.mxu0 %v4317
        %v4567 = vpop.f32.mrf.mxu0
        %v4568 = vadd.f32 %v4500, %v4567
        %v4569 = vpop.f32.mrf.mxu0
        %v4570 = vadd.f32 %v4502, %v4569
        %4571 = vmatmul.bf16.gmra.mxu0 %v4320
        %v4572 = vpop.f32.mrf.mxu0
        %v4573 = vadd.f32 %v4505, %v4572
        %v4574 = vpop.f32.mrf.mxu0
        %v4575 = vadd.f32 %v4507, %v4574
        %4576 = vmatmul.bf16.gmra.mxu0 %v4323
        %v4577 = vpop.f32.mrf.mxu0
        %v4578 = vadd.f32 %v4510, %v4577
        %v4579 = vpop.f32.mrf.mxu0
        %v4580 = vadd.f32 %v4512, %v4579
        %4581 = vmatmul.bf16.gmra.mxu0 %v4326
        %v4582 = vpop.f32.mrf.mxu0
        %v4583 = vadd.f32 %v4515, %v4582
        %v4584 = vpop.f32.mrf.mxu0
        %v4585 = vadd.f32 %v4517, %v4584
        %4586 = vmatmul.bf16.gmra.mxu0 %v4329
        %v4587 = vpop.f32.mrf.mxu0
        %v4588 = vadd.f32 %v4520, %v4587
        %v4589 = vpop.f32.mrf.mxu0
        %v4590 = vadd.f32 %v4522, %v4589
        %4591 = vmatmul.bf16.gmra.mxu0 %v4332
        %v4592 = vpop.f32.mrf.mxu0
        %v4593 = vadd.f32 %v4525, %v4592
        %v4594 = vpop.f32.mrf.mxu0
        %v4595 = vadd.f32 %v4527, %v4594
        %4596 = vmatmul.bf16.gmra.mxu0 %v4335
        %v4597 = vpop.f32.mrf.mxu0
        %v4598 = vadd.f32 %v4530, %v4597
        %v4599 = vpop.f32.mrf.mxu0
        %v4600 = vadd.f32 %v4532, %v4599
        %4601 = vmatmul.bf16.gmra.mxu0 %v4338
        %v4602 = vpop.f32.mrf.mxu0
        %v4603 = vadd.f32 %v4535, %v4602
        %v4604 = vpop.f32.mrf.mxu0
        %v4605 = vadd.f32 %v4537, %v4604
        %4606 = vmatmul.bf16.gmra.mxu0 %v4341
        %v4607 = vpop.f32.mrf.mxu0
        %v4608 = vadd.f32 %v4540, %v4607
        %v4609 = vpop.f32.mrf.mxu0
        %v4610 = vadd.f32 %v4542, %v4609
        %4611 = vmatmul.bf16.gmra.mxu0 %v4344
        %v4612 = vpop.f32.mrf.mxu0
        %v4613 = vadd.f32 %v4545, %v4612
        %v4614 = vpop.f32.mrf.mxu0
        %v4615 = vadd.f32 %v4547, %v4614
        %4616 = vmatmul.bf16.gmra.mxu0 %v4347
        %v4617 = vpop.f32.mrf.mxu0
        %v4618 = vadd.f32 %v4550, %v4617
        %v4619 = vpop.f32.mrf.mxu0
        %4620 = vdwg.mxu0
        %v4645 = vunpack.c.l.b16 %v3992
        %v4646 = vunpack.c.h.b16 %v3992
        %v4647 = vunpack.c.l.b16 %v3993
        %v4648 = vunpack.c.h.b16 %v3993
        %v4649 = vunpack.c.l.b16 %v3994
        %v4650 = vunpack.c.h.b16 %v3994
        %v4651 = vunpack.c.l.b16 %v3995
        %v4652 = vunpack.c.h.b16 %v3995
        %v4653 = vunpack.c.l.b16 %v3996
        %v4654 = vunpack.c.h.b16 %v3996
        %v4655 = vunpack.c.l.b16 %v3997
        %v4656 = vunpack.c.h.b16 %v3997
        %v4657 = vunpack.c.l.b16 %v3998
        %v4658 = vunpack.c.h.b16 %v3998
        %v4659 = vunpack.c.l.b16 %v3999
        %v4660 = vunpack.c.h.b16 %v3999
        %v4661 = vunpack.c.l.b16 %v4000
        %v4662 = vunpack.c.h.b16 %v4000
        %v4663 = vunpack.c.l.b16 %v4001
        %v4664 = vunpack.c.h.b16 %v4001
        %v4665 = vunpack.c.l.b16 %v4002
        %v4666 = vunpack.c.h.b16 %v4002
        %v4667 = vunpack.c.l.b16 %v4003
        %v4668 = vunpack.c.h.b16 %v4003
        %v4669 = vunpack.c.l.b16 %v4004
        %v4670 = vunpack.c.h.b16 %v4004
        %v4671 = vunpack.c.l.b16 %v4005
        %v4672 = vunpack.c.h.b16 %v4005
        %v4673 = vunpack.c.l.b16 %v4006
        %v4674 = vunpack.c.h.b16 %v4006
        %v4675 = vunpack.c.l.b16 %v4007
        %v4676 = vunpack.c.h.b16 %v4007
        %v4677 = vunpack.c.l.b16 %v4008
        %v4678 = vunpack.c.h.b16 %v4008
        %v4679 = vunpack.c.l.b16 %v4009
        %v4680 = vunpack.c.h.b16 %v4009
        %v4681 = vunpack.c.l.b16 %v4010
        %v4682 = vunpack.c.h.b16 %v4010
        %v4683 = vunpack.c.l.b16 %v4011
        %v4684 = vunpack.c.h.b16 %v4011
        %v4685 = vunpack.c.l.b16 %v4012
        %v4686 = vunpack.c.h.b16 %v4012
        %v4687 = vunpack.c.l.b16 %v4013
        %v4688 = vunpack.c.h.b16 %v4013
        %v4689 = vunpack.c.l.b16 %v4014
        %v4690 = vunpack.c.h.b16 %v4014
        %v4691 = vunpack.c.l.b16 %v4015
        %v4692 = vunpack.c.h.b16 %v4015
        %v4693 = vpack.c.b16 %v4647, %v4645
        %v4694 = vpack.c.b16 %v4648, %v4646
        %v4695 = vpack.c.b16 %v4651, %v4649
        %v4696 = vpack.c.b16 %v4652, %v4650
        %v4697 = vpack.c.b16 %v4655, %v4653
        %v4698 = vpack.c.b16 %v4656, %v4654
        %v4699 = vpack.c.b16 %v4659, %v4657
        %v4700 = vpack.c.b16 %v4660, %v4658
        %v4701 = vpack.c.b16 %v4663, %v4661
        %v4702 = vpack.c.b16 %v4664, %v4662
        %v4703 = vpack.c.b16 %v4667, %v4665
        %v4704 = vpack.c.b16 %v4668, %v4666
        %v4705 = vpack.c.b16 %v4671, %v4669
        %v4706 = vpack.c.b16 %v4672, %v4670
        %v4707 = vpack.c.b16 %v4675, %v4673
        %v4708 = vpack.c.b16 %v4676, %v4674
        %v4709 = vpack.c.b16 %v4679, %v4677
        %v4710 = vpack.c.b16 %v4680, %v4678
        %v4711 = vpack.c.b16 %v4683, %v4681
        %v4712 = vpack.c.b16 %v4684, %v4682
        %v4713 = vpack.c.b16 %v4687, %v4685
        %v4714 = vpack.c.b16 %v4688, %v4686
        %v4715 = vpack.c.b16 %v4691, %v4689
        %v4716 = vpack.c.b16 %v4692, %v4690
        %4741 = vmatpush.bf16.msra.mxu0 %v4707
        %4742 = vmatpush.bf16.msra.mxu0 %v4705
        %4743 = vmatpush.bf16.msra.mxu0 %v4703
        %4744 = vmatpush.bf16.msra.mxu0 %v4701
        %4745 = vmatpush.bf16.msra.mxu0 %v4699
        %4746 = vmatpush.bf16.msra.mxu0 %v4697
        %4747 = vmatpush.bf16.msra.mxu0 %v4695
        %4748 = vmatpush.bf16.msra.mxu0 %v4693
        %4749 = vmatmul.bf16.gmra.mxu0 %v4157
        %v4750 = vpop.f32.mrf.mxu0
        %v4751 = vadd.f32 0.0, %v4750
        %v4752 = vpop.f32.mrf.mxu0
        %v4753 = vadd.f32 0.0, %v4752
        %4754 = vmatmul.bf16.gmra.mxu0 %v4159
        %v4755 = vpop.f32.mrf.mxu0
        %v4756 = vadd.f32 0.0, %v4755
        %v4757 = vpop.f32.mrf.mxu0
        %v4758 = vadd.f32 0.0, %v4757
        %4759 = vmatmul.bf16.gmra.mxu0 %v4161
        %v4760 = vpop.f32.mrf.mxu0
        %v4761 = vadd.f32 0.0, %v4760
        %v4762 = vpop.f32.mrf.mxu0
        %v4763 = vadd.f32 0.0, %v4762
        %4764 = vmatmul.bf16.gmra.mxu0 %v4163
        %v4765 = vpop.f32.mrf.mxu0
        %v4766 = vadd.f32 0.0, %v4765
        %v4767 = vpop.f32.mrf.mxu0
        %v4768 = vadd.f32 0.0, %v4767
        %4769 = vmatmul.bf16.gmra.mxu0 %v4165
        %v4770 = vpop.f32.mrf.mxu0
        %v4771 = vadd.f32 0.0, %v4770
        %v4772 = vpop.f32.mrf.mxu0
        %v4773 = vadd.f32 0.0, %v4772
        %4774 = vmatmul.bf16.gmra.mxu0 %v4167
        %v4775 = vpop.f32.mrf.mxu0
        %v4776 = vadd.f32 0.0, %v4775
        %v4777 = vpop.f32.mrf.mxu0
        %v4778 = vadd.f32 0.0, %v4777
        %4779 = vmatmul.bf16.gmra.mxu0 %v4169
        %v4780 = vpop.f32.mrf.mxu0
        %v4781 = vadd.f32 0.0, %v4780
        %v4782 = vpop.f32.mrf.mxu0
        %v4783 = vadd.f32 0.0, %v4782
        %4784 = vmatmul.bf16.gmra.mxu0 %v4171
        %v4785 = vpop.f32.mrf.mxu0
        %v4786 = vadd.f32 0.0, %v4785
        %v4787 = vpop.f32.mrf.mxu0
        %v4788 = vadd.f32 0.0, %v4787
        %4789 = vmatmul.bf16.gmra.mxu0 %v4173
        %v4790 = vpop.f32.mrf.mxu0
        %v4791 = vadd.f32 0.0, %v4790
        %v4792 = vpop.f32.mrf.mxu0
        %v4793 = vadd.f32 0.0, %v4792
        %4794 = vmatmul.bf16.gmra.mxu0 %v4175
        %v4795 = vpop.f32.mrf.mxu0
        %v4796 = vadd.f32 0.0, %v4795
        %v4797 = vpop.f32.mrf.mxu0
        %v4798 = vadd.f32 0.0, %v4797
        %4799 = vmatmul.bf16.gmra.mxu0 %v4177
        %v4800 = vpop.f32.mrf.mxu0
        %v4801 = vadd.f32 0.0, %v4800
        %v4802 = vpop.f32.mrf.mxu0
        %v4803 = vadd.f32 0.0, %v4802
        %4804 = vmatmul.bf16.gmra.mxu0 %v4179
        %v4805 = vpop.f32.mrf.mxu0
        %v4806 = vadd.f32 0.0, %v4805
        %v4807 = vpop.f32.mrf.mxu0
        %4808 = vdwg.mxu0
        %4809 = vmatpush.bf16.msra.mxu0 0
        %4810 = vmatpush.bf16.msra.mxu0 0
        %4811 = vmatpush.bf16.msra.mxu0 0
        %4812 = vmatpush.bf16.msra.mxu0 0
        %4813 = vmatpush.bf16.msra.mxu0 %v4715
        %4814 = vmatpush.bf16.msra.mxu0 %v4713
        %4815 = vmatpush.bf16.msra.mxu0 %v4711
        %4816 = vmatpush.bf16.msra.mxu0 %v4709
        %4817 = vmatmul.bf16.gmra.mxu0 %v4314
        %v4818 = vpop.f32.mrf.mxu0
        %v4819 = vadd.f32 %v4751, %v4818
        %v4820 = vpop.f32.mrf.mxu0
        %v4821 = vadd.f32 %v4753, %v4820
        %4822 = vmatmul.bf16.gmra.mxu0 %v4317
        %v4823 = vpop.f32.mrf.mxu0
        %v4824 = vadd.f32 %v4756, %v4823
        %v4825 = vpop.f32.mrf.mxu0
        %v4826 = vadd.f32 %v4758, %v4825
        %4827 = vmatmul.bf16.gmra.mxu0 %v4320
        %v4828 = vpop.f32.mrf.mxu0
        %v4829 = vadd.f32 %v4761, %v4828
        %v4830 = vpop.f32.mrf.mxu0
        %v4831 = vadd.f32 %v4763, %v4830
        %4832 = vmatmul.bf16.gmra.mxu0 %v4323
        %v4833 = vpop.f32.mrf.mxu0
        %v4834 = vadd.f32 %v4766, %v4833
        %v4835 = vpop.f32.mrf.mxu0
        %v4836 = vadd.f32 %v4768, %v4835
        %4837 = vmatmul.bf16.gmra.mxu0 %v4326
        %v4838 = vpop.f32.mrf.mxu0
        %v4839 = vadd.f32 %v4771, %v4838
        %v4840 = vpop.f32.mrf.mxu0
        %v4841 = vadd.f32 %v4773, %v4840
        %4842 = vmatmul.bf16.gmra.mxu0 %v4329
        %v4843 = vpop.f32.mrf.mxu0
        %v4844 = vadd.f32 %v4776, %v4843
        %v4845 = vpop.f32.mrf.mxu0
        %v4846 = vadd.f32 %v4778, %v4845
        %4847 = vmatmul.bf16.gmra.mxu0 %v4332
        %v4848 = vpop.f32.mrf.mxu0
        %v4849 = vadd.f32 %v4781, %v4848
        %v4850 = vpop.f32.mrf.mxu0
        %v4851 = vadd.f32 %v4783, %v4850
        %4852 = vmatmul.bf16.gmra.mxu0 %v4335
        %v4853 = vpop.f32.mrf.mxu0
        %v4854 = vadd.f32 %v4786, %v4853
        %v4855 = vpop.f32.mrf.mxu0
        %v4856 = vadd.f32 %v4788, %v4855
        %4857 = vmatmul.bf16.gmra.mxu0 %v4338
        %v4858 = vpop.f32.mrf.mxu0
        %v4859 = vadd.f32 %v4791, %v4858
        %v4860 = vpop.f32.mrf.mxu0
        %v4861 = vadd.f32 %v4793, %v4860
        %4862 = vmatmul.bf16.gmra.mxu0 %v4341
        %v4863 = vpop.f32.mrf.mxu0
        %v4864 = vadd.f32 %v4796, %v4863
        %v4865 = vpop.f32.mrf.mxu0
        %v4866 = vadd.f32 %v4798, %v4865
        %4867 = vmatmul.bf16.gmra.mxu0 %v4344
        %v4868 = vpop.f32.mrf.mxu0
        %v4869 = vadd.f32 %v4801, %v4868
        %v4870 = vpop.f32.mrf.mxu0
        %v4871 = vadd.f32 %v4803, %v4870
        %4872 = vmatmul.bf16.gmra.mxu0 %v4347
        %v4873 = vpop.f32.mrf.mxu0
        %v4874 = vadd.f32 %v4806, %v4873
        %v4875 = vpop.f32.mrf.mxu0
        %4876 = vdwg.mxu0
        %4877 = vmatpush.bf16.msra.mxu0 %v4708
        %4878 = vmatpush.bf16.msra.mxu0 %v4706
        %4879 = vmatpush.bf16.msra.mxu0 %v4704
        %4880 = vmatpush.bf16.msra.mxu0 %v4702
        %4881 = vmatpush.bf16.msra.mxu0 %v4700
        %4882 = vmatpush.bf16.msra.mxu0 %v4698
        %4883 = vmatpush.bf16.msra.mxu0 %v4696
        %4884 = vmatpush.bf16.msra.mxu0 %v4694
        %4885 = vmatmul.bf16.gmra.mxu0 %v4157
        %v4886 = vpop.f32.mrf.mxu0
        %v4887 = vadd.f32 0.0, %v4886
        %v4888 = vpop.f32.mrf.mxu0
        %v4889 = vadd.f32 0.0, %v4888
        %4890 = vmatmul.bf16.gmra.mxu0 %v4159
        %v4891 = vpop.f32.mrf.mxu0
        %v4892 = vadd.f32 0.0, %v4891
        %v4893 = vpop.f32.mrf.mxu0
        %v4894 = vadd.f32 0.0, %v4893
        %4895 = vmatmul.bf16.gmra.mxu0 %v4161
        %v4896 = vpop.f32.mrf.mxu0
        %v4897 = vadd.f32 0.0, %v4896
        %v4898 = vpop.f32.mrf.mxu0
        %v4899 = vadd.f32 0.0, %v4898
        %4900 = vmatmul.bf16.gmra.mxu0 %v4163
        %v4901 = vpop.f32.mrf.mxu0
        %v4902 = vadd.f32 0.0, %v4901
        %v4903 = vpop.f32.mrf.mxu0
        %v4904 = vadd.f32 0.0, %v4903
        %4905 = vmatmul.bf16.gmra.mxu0 %v4165
        %v4906 = vpop.f32.mrf.mxu0
        %v4907 = vadd.f32 0.0, %v4906
        %v4908 = vpop.f32.mrf.mxu0
        %v4909 = vadd.f32 0.0, %v4908
        %4910 = vmatmul.bf16.gmra.mxu0 %v4167
        %v4911 = vpop.f32.mrf.mxu0
        %v4912 = vadd.f32 0.0, %v4911
        %v4913 = vpop.f32.mrf.mxu0
        %v4914 = vadd.f32 0.0, %v4913
        %4915 = vmatmul.bf16.gmra.mxu0 %v4169
        %v4916 = vpop.f32.mrf.mxu0
        %v4917 = vadd.f32 0.0, %v4916
        %v4918 = vpop.f32.mrf.mxu0
        %v4919 = vadd.f32 0.0, %v4918
        %4920 = vmatmul.bf16.gmra.mxu0 %v4171
        %v4921 = vpop.f32.mrf.mxu0
        %v4922 = vadd.f32 0.0, %v4921
        %v4923 = vpop.f32.mrf.mxu0
        %v4924 = vadd.f32 0.0, %v4923
        %4925 = vmatmul.bf16.gmra.mxu0 %v4173
        %v4926 = vpop.f32.mrf.mxu0
        %v4927 = vadd.f32 0.0, %v4926
        %v4928 = vpop.f32.mrf.mxu0
        %v4929 = vadd.f32 0.0, %v4928
        %4930 = vmatmul.bf16.gmra.mxu0 %v4175
        %v4931 = vpop.f32.mrf.mxu0
        %v4932 = vadd.f32 0.0, %v4931
        %v4933 = vpop.f32.mrf.mxu0
        %v4934 = vadd.f32 0.0, %v4933
        %4935 = vmatmul.bf16.gmra.mxu0 %v4177
        %v4936 = vpop.f32.mrf.mxu0
        %v4937 = vadd.f32 0.0, %v4936
        %v4938 = vpop.f32.mrf.mxu0
        %v4939 = vadd.f32 0.0, %v4938
        %4940 = vmatmul.bf16.gmra.mxu0 %v4179
        %v4941 = vpop.f32.mrf.mxu0
        %v4942 = vadd.f32 0.0, %v4941
        %v4943 = vpop.f32.mrf.mxu0
        %4944 = vdwg.mxu0
        %4945 = vmatpush.bf16.msra.mxu0 0
        %4946 = vmatpush.bf16.msra.mxu0 0
        %4947 = vmatpush.bf16.msra.mxu0 0
        %4948 = vmatpush.bf16.msra.mxu0 0
        %4949 = vmatpush.bf16.msra.mxu0 %v4716
        %4950 = vmatpush.bf16.msra.mxu0 %v4714
        %4951 = vmatpush.bf16.msra.mxu0 %v4712
        %4952 = vmatpush.bf16.msra.mxu0 %v4710
        %4953 = vmatmul.bf16.gmra.mxu0 %v4314
        %v4954 = vpop.f32.mrf.mxu0
        %v4955 = vadd.f32 %v4887, %v4954
        %v4956 = vpop.f32.mrf.mxu0
        %v4957 = vadd.f32 %v4889, %v4956
        %4958 = vmatmul.bf16.gmra.mxu0 %v4317
        %v4959 = vpop.f32.mrf.mxu0
        %v4960 = vadd.f32 %v4892, %v4959
        %v4961 = vpop.f32.mrf.mxu0
        %v4962 = vadd.f32 %v4894, %v4961
        %4963 = vmatmul.bf16.gmra.mxu0 %v4320
        %v4964 = vpop.f32.mrf.mxu0
        %v4965 = vadd.f32 %v4897, %v4964
        %v4966 = vpop.f32.mrf.mxu0
        %v4967 = vadd.f32 %v4899, %v4966
        %4968 = vmatmul.bf16.gmra.mxu0 %v4323
        %v4969 = vpop.f32.mrf.mxu0
        %v4970 = vadd.f32 %v4902, %v4969
        %v4971 = vpop.f32.mrf.mxu0
        %v4972 = vadd.f32 %v4904, %v4971
        %4973 = vmatmul.bf16.gmra.mxu0 %v4326
        %v4974 = vpop.f32.mrf.mxu0
        %v4975 = vadd.f32 %v4907, %v4974
        %v4976 = vpop.f32.mrf.mxu0
        %v4977 = vadd.f32 %v4909, %v4976
        %4978 = vmatmul.bf16.gmra.mxu0 %v4329
        %v4979 = vpop.f32.mrf.mxu0
        %v4980 = vadd.f32 %v4912, %v4979
        %v4981 = vpop.f32.mrf.mxu0
        %v4982 = vadd.f32 %v4914, %v4981
        %4983 = vmatmul.bf16.gmra.mxu0 %v4332
        %v4984 = vpop.f32.mrf.mxu0
        %v4985 = vadd.f32 %v4917, %v4984
        %v4986 = vpop.f32.mrf.mxu0
        %v4987 = vadd.f32 %v4919, %v4986
        %4988 = vmatmul.bf16.gmra.mxu0 %v4335
        %v4989 = vpop.f32.mrf.mxu0
        %v4990 = vadd.f32 %v4922, %v4989
        %v4991 = vpop.f32.mrf.mxu0
        %v4992 = vadd.f32 %v4924, %v4991
        %4993 = vmatmul.bf16.gmra.mxu0 %v4338
        %v4994 = vpop.f32.mrf.mxu0
        %v4995 = vadd.f32 %v4927, %v4994
        %v4996 = vpop.f32.mrf.mxu0
        %v4997 = vadd.f32 %v4929, %v4996
        %4998 = vmatmul.bf16.gmra.mxu0 %v4341
        %v4999 = vpop.f32.mrf.mxu0
        %v5000 = vadd.f32 %v4932, %v4999
        %v5001 = vpop.f32.mrf.mxu0
        %v5002 = vadd.f32 %v4934, %v5001
        %5003 = vmatmul.bf16.gmra.mxu0 %v4344
        %v5004 = vpop.f32.mrf.mxu0
        %v5005 = vadd.f32 %v4937, %v5004
        %v5006 = vpop.f32.mrf.mxu0
        %v5007 = vadd.f32 %v4939, %v5006
        %5008 = vmatmul.bf16.gmra.mxu0 %v4347
        %v5009 = vpop.f32.mrf.mxu0
        %v5010 = vadd.f32 %v4942, %v5009
        %v5011 = vpop.f32.mrf.mxu0
        %5012 = vdwg.mxu0
        %v5037 = vunpack.c.l.b16 %v4016
        %v5038 = vunpack.c.h.b16 %v4016
        %v5039 = vunpack.c.l.b16 %v4017
        %v5040 = vunpack.c.h.b16 %v4017
        %v5041 = vunpack.c.l.b16 %v4018
        %v5042 = vunpack.c.h.b16 %v4018
        %v5043 = vunpack.c.l.b16 %v4019
        %v5044 = vunpack.c.h.b16 %v4019
        %v5045 = vunpack.c.l.b16 %v4020
        %v5046 = vunpack.c.h.b16 %v4020
        %v5047 = vunpack.c.l.b16 %v4021
        %v5048 = vunpack.c.h.b16 %v4021
        %v5049 = vunpack.c.l.b16 %v4022
        %v5050 = vunpack.c.h.b16 %v4022
        %v5051 = vunpack.c.l.b16 %v4023
        %v5052 = vunpack.c.h.b16 %v4023
        %v5053 = vunpack.c.l.b16 %v4024
        %v5054 = vunpack.c.h.b16 %v4024
        %v5055 = vunpack.c.l.b16 %v4025
        %v5056 = vunpack.c.h.b16 %v4025
        %v5057 = vunpack.c.l.b16 %v4026
        %v5058 = vunpack.c.h.b16 %v4026
        %v5059 = vunpack.c.l.b16 %v4027
        %v5060 = vunpack.c.h.b16 %v4027
        %v5061 = vunpack.c.l.b16 %v4028
        %v5062 = vunpack.c.h.b16 %v4028
        %v5063 = vunpack.c.l.b16 %v4029
        %v5064 = vunpack.c.h.b16 %v4029
        %v5065 = vunpack.c.l.b16 %v4030
        %v5066 = vunpack.c.h.b16 %v4030
        %v5067 = vunpack.c.l.b16 %v4031
        %v5068 = vunpack.c.h.b16 %v4031
        %v5069 = vunpack.c.l.b16 %v4032
        %v5070 = vunpack.c.h.b16 %v4032
        %v5071 = vunpack.c.l.b16 %v4033
        %v5072 = vunpack.c.h.b16 %v4033
        %v5073 = vunpack.c.l.b16 %v4034
        %v5074 = vunpack.c.h.b16 %v4034
        %v5075 = vunpack.c.l.b16 %v4035
        %v5076 = vunpack.c.h.b16 %v4035
        %v5077 = vunpack.c.l.b16 %v4036
        %v5078 = vunpack.c.h.b16 %v4036
        %v5079 = vunpack.c.l.b16 %v4037
        %v5080 = vunpack.c.h.b16 %v4037
        %v5081 = vunpack.c.l.b16 %v4038
        %v5082 = vunpack.c.h.b16 %v4038
        %v5083 = vunpack.c.l.b16 %v4039
        %v5084 = vunpack.c.h.b16 %v4039
        %v5085 = vpack.c.b16 %v5039, %v5037
        %v5086 = vpack.c.b16 %v5040, %v5038
        %v5087 = vpack.c.b16 %v5043, %v5041
        %v5088 = vpack.c.b16 %v5044, %v5042
        %v5089 = vpack.c.b16 %v5047, %v5045
        %v5090 = vpack.c.b16 %v5048, %v5046
        %v5091 = vpack.c.b16 %v5051, %v5049
        %v5092 = vpack.c.b16 %v5052, %v5050
        %v5093 = vpack.c.b16 %v5055, %v5053
        %v5094 = vpack.c.b16 %v5056, %v5054
        %v5095 = vpack.c.b16 %v5059, %v5057
        %v5096 = vpack.c.b16 %v5060, %v5058
        %v5097 = vpack.c.b16 %v5063, %v5061
        %v5098 = vpack.c.b16 %v5064, %v5062
        %v5099 = vpack.c.b16 %v5067, %v5065
        %v5100 = vpack.c.b16 %v5068, %v5066
        %v5101 = vpack.c.b16 %v5071, %v5069
        %v5102 = vpack.c.b16 %v5072, %v5070
        %v5103 = vpack.c.b16 %v5075, %v5073
        %v5104 = vpack.c.b16 %v5076, %v5074
        %v5105 = vpack.c.b16 %v5079, %v5077
        %v5106 = vpack.c.b16 %v5080, %v5078
        %v5107 = vpack.c.b16 %v5083, %v5081
        %v5108 = vpack.c.b16 %v5084, %v5082
        %5133 = vmatpush.bf16.msra.mxu0 %v5099
        %5134 = vmatpush.bf16.msra.mxu0 %v5097
        %5135 = vmatpush.bf16.msra.mxu0 %v5095
        %5136 = vmatpush.bf16.msra.mxu0 %v5093
        %5137 = vmatpush.bf16.msra.mxu0 %v5091
        %5138 = vmatpush.bf16.msra.mxu0 %v5089
        %5139 = vmatpush.bf16.msra.mxu0 %v5087
        %5140 = vmatpush.bf16.msra.mxu0 %v5085
        %5141 = vmatmul.bf16.gmra.mxu0 %v4157
        %v5142 = vpop.f32.mrf.mxu0
        %v5143 = vadd.f32 0.0, %v5142
        %v5144 = vpop.f32.mrf.mxu0
        %v5145 = vadd.f32 0.0, %v5144
        %5146 = vmatmul.bf16.gmra.mxu0 %v4159
        %v5147 = vpop.f32.mrf.mxu0
        %v5148 = vadd.f32 0.0, %v5147
        %v5149 = vpop.f32.mrf.mxu0
        %v5150 = vadd.f32 0.0, %v5149
        %5151 = vmatmul.bf16.gmra.mxu0 %v4161
        %v5152 = vpop.f32.mrf.mxu0
        %v5153 = vadd.f32 0.0, %v5152
        %v5154 = vpop.f32.mrf.mxu0
        %v5155 = vadd.f32 0.0, %v5154
        %5156 = vmatmul.bf16.gmra.mxu0 %v4163
        %v5157 = vpop.f32.mrf.mxu0
        %v5158 = vadd.f32 0.0, %v5157
        %v5159 = vpop.f32.mrf.mxu0
        %v5160 = vadd.f32 0.0, %v5159
        %5161 = vmatmul.bf16.gmra.mxu0 %v4165
        %v5162 = vpop.f32.mrf.mxu0
        %v5163 = vadd.f32 0.0, %v5162
        %v5164 = vpop.f32.mrf.mxu0
        %v5165 = vadd.f32 0.0, %v5164
        %5166 = vmatmul.bf16.gmra.mxu0 %v4167
        %v5167 = vpop.f32.mrf.mxu0
        %v5168 = vadd.f32 0.0, %v5167
        %v5169 = vpop.f32.mrf.mxu0
        %v5170 = vadd.f32 0.0, %v5169
        %5171 = vmatmul.bf16.gmra.mxu0 %v4169
        %v5172 = vpop.f32.mrf.mxu0
        %v5173 = vadd.f32 0.0, %v5172
        %v5174 = vpop.f32.mrf.mxu0
        %v5175 = vadd.f32 0.0, %v5174
        %5176 = vmatmul.bf16.gmra.mxu0 %v4171
        %v5177 = vpop.f32.mrf.mxu0
        %v5178 = vadd.f32 0.0, %v5177
        %v5179 = vpop.f32.mrf.mxu0
        %v5180 = vadd.f32 0.0, %v5179
        %5181 = vmatmul.bf16.gmra.mxu0 %v4173
        %v5182 = vpop.f32.mrf.mxu0
        %v5183 = vadd.f32 0.0, %v5182
        %v5184 = vpop.f32.mrf.mxu0
        %v5185 = vadd.f32 0.0, %v5184
        %5186 = vmatmul.bf16.gmra.mxu0 %v4175
        %v5187 = vpop.f32.mrf.mxu0
        %v5188 = vadd.f32 0.0, %v5187
        %v5189 = vpop.f32.mrf.mxu0
        %v5190 = vadd.f32 0.0, %v5189
        %5191 = vmatmul.bf16.gmra.mxu0 %v4177
        %v5192 = vpop.f32.mrf.mxu0
        %v5193 = vadd.f32 0.0, %v5192
        %v5194 = vpop.f32.mrf.mxu0
        %v5195 = vadd.f32 0.0, %v5194
        %5196 = vmatmul.bf16.gmra.mxu0 %v4179
        %v5197 = vpop.f32.mrf.mxu0
        %v5198 = vadd.f32 0.0, %v5197
        %v5199 = vpop.f32.mrf.mxu0
        %5200 = vdwg.mxu0
        %5201 = vmatpush.bf16.msra.mxu0 0
        %5202 = vmatpush.bf16.msra.mxu0 0
        %5203 = vmatpush.bf16.msra.mxu0 0
        %5204 = vmatpush.bf16.msra.mxu0 0
        %5205 = vmatpush.bf16.msra.mxu0 %v5107
        %5206 = vmatpush.bf16.msra.mxu0 %v5105
        %5207 = vmatpush.bf16.msra.mxu0 %v5103
        %5208 = vmatpush.bf16.msra.mxu0 %v5101
        %5209 = vmatmul.bf16.gmra.mxu0 %v4314
        %v5210 = vpop.f32.mrf.mxu0
        %v5211 = vadd.f32 %v5143, %v5210
        %v5212 = vpop.f32.mrf.mxu0
        %v5213 = vadd.f32 %v5145, %v5212
        %5214 = vmatmul.bf16.gmra.mxu0 %v4317
        %v5215 = vpop.f32.mrf.mxu0
        %v5216 = vadd.f32 %v5148, %v5215
        %v5217 = vpop.f32.mrf.mxu0
        %v5218 = vadd.f32 %v5150, %v5217
        %5219 = vmatmul.bf16.gmra.mxu0 %v4320
        %v5220 = vpop.f32.mrf.mxu0
        %v5221 = vadd.f32 %v5153, %v5220
        %v5222 = vpop.f32.mrf.mxu0
        %v5223 = vadd.f32 %v5155, %v5222
        %5224 = vmatmul.bf16.gmra.mxu0 %v4323
        %v5225 = vpop.f32.mrf.mxu0
        %v5226 = vadd.f32 %v5158, %v5225
        %v5227 = vpop.f32.mrf.mxu0
        %v5228 = vadd.f32 %v5160, %v5227
        %5229 = vmatmul.bf16.gmra.mxu0 %v4326
        %v5230 = vpop.f32.mrf.mxu0
        %v5231 = vadd.f32 %v5163, %v5230
        %v5232 = vpop.f32.mrf.mxu0
        %v5233 = vadd.f32 %v5165, %v5232
        %5234 = vmatmul.bf16.gmra.mxu0 %v4329
        %v5235 = vpop.f32.mrf.mxu0
        %v5236 = vadd.f32 %v5168, %v5235
        %v5237 = vpop.f32.mrf.mxu0
        %v5238 = vadd.f32 %v5170, %v5237
        %5239 = vmatmul.bf16.gmra.mxu0 %v4332
        %v5240 = vpop.f32.mrf.mxu0
        %v5241 = vadd.f32 %v5173, %v5240
        %v5242 = vpop.f32.mrf.mxu0
        %v5243 = vadd.f32 %v5175, %v5242
        %5244 = vmatmul.bf16.gmra.mxu0 %v4335
        %v5245 = vpop.f32.mrf.mxu0
        %v5246 = vadd.f32 %v5178, %v5245
        %v5247 = vpop.f32.mrf.mxu0
        %v5248 = vadd.f32 %v5180, %v5247
        %5249 = vmatmul.bf16.gmra.mxu0 %v4338
        %v5250 = vpop.f32.mrf.mxu0
        %v5251 = vadd.f32 %v5183, %v5250
        %v5252 = vpop.f32.mrf.mxu0
        %v5253 = vadd.f32 %v5185, %v5252
        %5254 = vmatmul.bf16.gmra.mxu0 %v4341
        %v5255 = vpop.f32.mrf.mxu0
        %v5256 = vadd.f32 %v5188, %v5255
        %v5257 = vpop.f32.mrf.mxu0
        %v5258 = vadd.f32 %v5190, %v5257
        %5259 = vmatmul.bf16.gmra.mxu0 %v4344
        %v5260 = vpop.f32.mrf.mxu0
        %v5261 = vadd.f32 %v5193, %v5260
        %v5262 = vpop.f32.mrf.mxu0
        %v5263 = vadd.f32 %v5195, %v5262
        %5264 = vmatmul.bf16.gmra.mxu0 %v4347
        %v5265 = vpop.f32.mrf.mxu0
        %v5266 = vadd.f32 %v5198, %v5265
        %v5267 = vpop.f32.mrf.mxu0
        %5268 = vdwg.mxu0
        %5269 = vmatpush.bf16.msra.mxu0 %v5100
        %5270 = vmatpush.bf16.msra.mxu0 %v5098
        %5271 = vmatpush.bf16.msra.mxu0 %v5096
        %5272 = vmatpush.bf16.msra.mxu0 %v5094
        %5273 = vmatpush.bf16.msra.mxu0 %v5092
        %5274 = vmatpush.bf16.msra.mxu0 %v5090
        %5275 = vmatpush.bf16.msra.mxu0 %v5088
        %5276 = vmatpush.bf16.msra.mxu0 %v5086
        %5277 = vmatmul.bf16.gmra.mxu0 %v4157
        %v5278 = vpop.f32.mrf.mxu0
        %v5279 = vadd.f32 0.0, %v5278
        %v5280 = vpop.f32.mrf.mxu0
        %v5281 = vadd.f32 0.0, %v5280
        %5282 = vmatmul.bf16.gmra.mxu0 %v4159
        %v5283 = vpop.f32.mrf.mxu0
        %v5284 = vadd.f32 0.0, %v5283
        %v5285 = vpop.f32.mrf.mxu0
        %v5286 = vadd.f32 0.0, %v5285
        %5287 = vmatmul.bf16.gmra.mxu0 %v4161
        %v5288 = vpop.f32.mrf.mxu0
        %v5289 = vadd.f32 0.0, %v5288
        %v5290 = vpop.f32.mrf.mxu0
        %v5291 = vadd.f32 0.0, %v5290
        %5292 = vmatmul.bf16.gmra.mxu0 %v4163
        %v5293 = vpop.f32.mrf.mxu0
        %v5294 = vadd.f32 0.0, %v5293
        %v5295 = vpop.f32.mrf.mxu0
        %v5296 = vadd.f32 0.0, %v5295
        %5297 = vmatmul.bf16.gmra.mxu0 %v4165
        %v5298 = vpop.f32.mrf.mxu0
        %v5299 = vadd.f32 0.0, %v5298
        %v5300 = vpop.f32.mrf.mxu0
        %v5301 = vadd.f32 0.0, %v5300
        %5302 = vmatmul.bf16.gmra.mxu0 %v4167
        %v5303 = vpop.f32.mrf.mxu0
        %v5304 = vadd.f32 0.0, %v5303
        %v5305 = vpop.f32.mrf.mxu0
        %v5306 = vadd.f32 0.0, %v5305
        %5307 = vmatmul.bf16.gmra.mxu0 %v4169
        %v5308 = vpop.f32.mrf.mxu0
        %v5309 = vadd.f32 0.0, %v5308
        %v5310 = vpop.f32.mrf.mxu0
        %v5311 = vadd.f32 0.0, %v5310
        %5312 = vmatmul.bf16.gmra.mxu0 %v4171
        %v5313 = vpop.f32.mrf.mxu0
        %v5314 = vadd.f32 0.0, %v5313
        %v5315 = vpop.f32.mrf.mxu0
        %v5316 = vadd.f32 0.0, %v5315
        %5317 = vmatmul.bf16.gmra.mxu0 %v4173
        %v5318 = vpop.f32.mrf.mxu0
        %v5319 = vadd.f32 0.0, %v5318
        %v5320 = vpop.f32.mrf.mxu0
        %v5321 = vadd.f32 0.0, %v5320
        %5322 = vmatmul.bf16.gmra.mxu0 %v4175
        %v5323 = vpop.f32.mrf.mxu0
        %v5324 = vadd.f32 0.0, %v5323
        %v5325 = vpop.f32.mrf.mxu0
        %v5326 = vadd.f32 0.0, %v5325
        %5327 = vmatmul.bf16.gmra.mxu0 %v4177
        %v5328 = vpop.f32.mrf.mxu0
        %v5329 = vadd.f32 0.0, %v5328
        %v5330 = vpop.f32.mrf.mxu0
        %v5331 = vadd.f32 0.0, %v5330
        %5332 = vmatmul.bf16.gmra.mxu0 %v4179
        %v5333 = vpop.f32.mrf.mxu0
        %v5334 = vadd.f32 0.0, %v5333
        %v5335 = vpop.f32.mrf.mxu0
        %5336 = vdwg.mxu0
        %5337 = vmatpush.bf16.msra.mxu0 0
        %5338 = vmatpush.bf16.msra.mxu0 0
        %5339 = vmatpush.bf16.msra.mxu0 0
        %5340 = vmatpush.bf16.msra.mxu0 0
        %5341 = vmatpush.bf16.msra.mxu0 %v5108
        %5342 = vmatpush.bf16.msra.mxu0 %v5106
        %5343 = vmatpush.bf16.msra.mxu0 %v5104
        %5344 = vmatpush.bf16.msra.mxu0 %v5102
        %5345 = vmatmul.bf16.gmra.mxu0 %v4314
        %v5346 = vpop.f32.mrf.mxu0
        %v5347 = vadd.f32 %v5279, %v5346
        %v5348 = vpop.f32.mrf.mxu0
        %v5349 = vadd.f32 %v5281, %v5348
        %5350 = vmatmul.bf16.gmra.mxu0 %v4317
        %v5351 = vpop.f32.mrf.mxu0
        %v5352 = vadd.f32 %v5284, %v5351
        %v5353 = vpop.f32.mrf.mxu0
        %v5354 = vadd.f32 %v5286, %v5353
        %5355 = vmatmul.bf16.gmra.mxu0 %v4320
        %v5356 = vpop.f32.mrf.mxu0
        %v5357 = vadd.f32 %v5289, %v5356
        %v5358 = vpop.f32.mrf.mxu0
        %v5359 = vadd.f32 %v5291, %v5358
        %5360 = vmatmul.bf16.gmra.mxu0 %v4323
        %v5361 = vpop.f32.mrf.mxu0
        %v5362 = vadd.f32 %v5294, %v5361
        %v5363 = vpop.f32.mrf.mxu0
        %v5364 = vadd.f32 %v5296, %v5363
        %5365 = vmatmul.bf16.gmra.mxu0 %v4326
        %v5366 = vpop.f32.mrf.mxu0
        %v5367 = vadd.f32 %v5299, %v5366
        %v5368 = vpop.f32.mrf.mxu0
        %v5369 = vadd.f32 %v5301, %v5368
        %5370 = vmatmul.bf16.gmra.mxu0 %v4329
        %v5371 = vpop.f32.mrf.mxu0
        %v5372 = vadd.f32 %v5304, %v5371
        %v5373 = vpop.f32.mrf.mxu0
        %v5374 = vadd.f32 %v5306, %v5373
        %5375 = vmatmul.bf16.gmra.mxu0 %v4332
        %v5376 = vpop.f32.mrf.mxu0
        %v5377 = vadd.f32 %v5309, %v5376
        %v5378 = vpop.f32.mrf.mxu0
        %v5379 = vadd.f32 %v5311, %v5378
        %5380 = vmatmul.bf16.gmra.mxu0 %v4335
        %v5381 = vpop.f32.mrf.mxu0
        %v5382 = vadd.f32 %v5314, %v5381
        %v5383 = vpop.f32.mrf.mxu0
        %v5384 = vadd.f32 %v5316, %v5383
        %5385 = vmatmul.bf16.gmra.mxu0 %v4338
        %v5386 = vpop.f32.mrf.mxu0
        %v5387 = vadd.f32 %v5319, %v5386
        %v5388 = vpop.f32.mrf.mxu0
        %v5389 = vadd.f32 %v5321, %v5388
        %5390 = vmatmul.bf16.gmra.mxu0 %v4341
        %v5391 = vpop.f32.mrf.mxu0
        %v5392 = vadd.f32 %v5324, %v5391
        %v5393 = vpop.f32.mrf.mxu0
        %v5394 = vadd.f32 %v5326, %v5393
        %5395 = vmatmul.bf16.gmra.mxu0 %v4344
        %v5396 = vpop.f32.mrf.mxu0
        %v5397 = vadd.f32 %v5329, %v5396
        %v5398 = vpop.f32.mrf.mxu0
        %v5399 = vadd.f32 %v5331, %v5398
        %5400 = vmatmul.bf16.gmra.mxu0 %v4347
        %v5401 = vpop.f32.mrf.mxu0
        %v5402 = vadd.f32 %v5334, %v5401
        %v5403 = vpop.f32.mrf.mxu0
        %5404 = vdwg.mxu0
        %v5429 = vunpack.c.l.b16 %v4040
        %v5430 = vunpack.c.h.b16 %v4040
        %v5431 = vunpack.c.l.b16 %v4041
        %v5432 = vunpack.c.h.b16 %v4041
        %v5433 = vunpack.c.l.b16 %v4042
        %v5434 = vunpack.c.h.b16 %v4042
        %v5435 = vunpack.c.l.b16 %v4043
        %v5436 = vunpack.c.h.b16 %v4043
        %v5437 = vunpack.c.l.b16 %v4044
        %v5438 = vunpack.c.h.b16 %v4044
        %v5439 = vunpack.c.l.b16 %v4045
        %v5440 = vunpack.c.h.b16 %v4045
        %v5441 = vunpack.c.l.b16 %v4046
        %v5442 = vunpack.c.h.b16 %v4046
        %v5443 = vunpack.c.l.b16 %v4047
        %v5444 = vunpack.c.h.b16 %v4047
        %v5445 = vunpack.c.l.b16 %v4048
        %v5446 = vunpack.c.h.b16 %v4048
        %v5447 = vunpack.c.l.b16 %v4049
        %v5448 = vunpack.c.h.b16 %v4049
        %v5449 = vunpack.c.l.b16 %v4050
        %v5450 = vunpack.c.h.b16 %v4050
        %v5451 = vunpack.c.l.b16 %v4051
        %v5452 = vunpack.c.h.b16 %v4051
        %v5453 = vunpack.c.l.b16 %v4052
        %v5454 = vunpack.c.h.b16 %v4052
        %v5455 = vunpack.c.l.b16 %v4053
        %v5456 = vunpack.c.h.b16 %v4053
        %v5457 = vunpack.c.l.b16 %v4054
        %v5458 = vunpack.c.h.b16 %v4054
        %v5459 = vunpack.c.l.b16 %v4055
        %v5460 = vunpack.c.h.b16 %v4055
        %v5461 = vunpack.c.l.b16 %v4056
        %v5462 = vunpack.c.h.b16 %v4056
        %v5463 = vunpack.c.l.b16 %v4057
        %v5464 = vunpack.c.h.b16 %v4057
        %v5465 = vunpack.c.l.b16 %v4058
        %v5466 = vunpack.c.h.b16 %v4058
        %v5467 = vunpack.c.l.b16 %v4059
        %v5468 = vunpack.c.h.b16 %v4059
        %v5469 = vunpack.c.l.b16 %v4060
        %v5470 = vunpack.c.h.b16 %v4060
        %v5471 = vunpack.c.l.b16 %v4061
        %v5472 = vunpack.c.h.b16 %v4061
        %v5473 = vunpack.c.l.b16 %v4062
        %v5474 = vunpack.c.h.b16 %v4062
        %v5475 = vunpack.c.l.b16 %v4063
        %v5476 = vunpack.c.h.b16 %v4063
        %v5477 = vpack.c.b16 %v5431, %v5429
        %v5478 = vpack.c.b16 %v5432, %v5430
        %v5479 = vpack.c.b16 %v5435, %v5433
        %v5480 = vpack.c.b16 %v5436, %v5434
        %v5481 = vpack.c.b16 %v5439, %v5437
        %v5482 = vpack.c.b16 %v5440, %v5438
        %v5483 = vpack.c.b16 %v5443, %v5441
        %v5484 = vpack.c.b16 %v5444, %v5442
        %v5485 = vpack.c.b16 %v5447, %v5445
        %v5486 = vpack.c.b16 %v5448, %v5446
        %v5487 = vpack.c.b16 %v5451, %v5449
        %v5488 = vpack.c.b16 %v5452, %v5450
        %v5489 = vpack.c.b16 %v5455, %v5453
        %v5490 = vpack.c.b16 %v5456, %v5454
        %v5491 = vpack.c.b16 %v5459, %v5457
        %v5492 = vpack.c.b16 %v5460, %v5458
        %v5493 = vpack.c.b16 %v5463, %v5461
        %v5494 = vpack.c.b16 %v5464, %v5462
        %v5495 = vpack.c.b16 %v5467, %v5465
        %v5496 = vpack.c.b16 %v5468, %v5466
        %v5497 = vpack.c.b16 %v5471, %v5469
        %v5498 = vpack.c.b16 %v5472, %v5470
        %v5499 = vpack.c.b16 %v5475, %v5473
        %v5500 = vpack.c.b16 %v5476, %v5474
        %5525 = vmatpush.bf16.msra.mxu0 %v5491
        %5526 = vmatpush.bf16.msra.mxu0 %v5489
        %5527 = vmatpush.bf16.msra.mxu0 %v5487
        %5528 = vmatpush.bf16.msra.mxu0 %v5485
        %5529 = vmatpush.bf16.msra.mxu0 %v5483
        %5530 = vmatpush.bf16.msra.mxu0 %v5481
        %5531 = vmatpush.bf16.msra.mxu0 %v5479
        %5532 = vmatpush.bf16.msra.mxu0 %v5477
        %5533 = vmatmul.bf16.gmra.mxu0 %v4157
        %v5534 = vpop.f32.mrf.mxu0
        %v5535 = vadd.f32 0.0, %v5534
        %v5536 = vpop.f32.mrf.mxu0
        %v5537 = vadd.f32 0.0, %v5536
        %5538 = vmatmul.bf16.gmra.mxu0 %v4159
        %v5539 = vpop.f32.mrf.mxu0
        %v5540 = vadd.f32 0.0, %v5539
        %v5541 = vpop.f32.mrf.mxu0
        %v5542 = vadd.f32 0.0, %v5541
        %5543 = vmatmul.bf16.gmra.mxu0 %v4161
        %v5544 = vpop.f32.mrf.mxu0
        %v5545 = vadd.f32 0.0, %v5544
        %v5546 = vpop.f32.mrf.mxu0
        %v5547 = vadd.f32 0.0, %v5546
        %5548 = vmatmul.bf16.gmra.mxu0 %v4163
        %v5549 = vpop.f32.mrf.mxu0
        %v5550 = vadd.f32 0.0, %v5549
        %v5551 = vpop.f32.mrf.mxu0
        %v5552 = vadd.f32 0.0, %v5551
        %5553 = vmatmul.bf16.gmra.mxu0 %v4165
        %v5554 = vpop.f32.mrf.mxu0
        %v5555 = vadd.f32 0.0, %v5554
        %v5556 = vpop.f32.mrf.mxu0
        %v5557 = vadd.f32 0.0, %v5556
        %5558 = vmatmul.bf16.gmra.mxu0 %v4167
        %v5559 = vpop.f32.mrf.mxu0
        %v5560 = vadd.f32 0.0, %v5559
        %v5561 = vpop.f32.mrf.mxu0
        %v5562 = vadd.f32 0.0, %v5561
        %5563 = vmatmul.bf16.gmra.mxu0 %v4169
        %v5564 = vpop.f32.mrf.mxu0
        %v5565 = vadd.f32 0.0, %v5564
        %v5566 = vpop.f32.mrf.mxu0
        %v5567 = vadd.f32 0.0, %v5566
        %5568 = vmatmul.bf16.gmra.mxu0 %v4171
        %v5569 = vpop.f32.mrf.mxu0
        %v5570 = vadd.f32 0.0, %v5569
        %v5571 = vpop.f32.mrf.mxu0
        %v5572 = vadd.f32 0.0, %v5571
        %5573 = vmatmul.bf16.gmra.mxu0 %v4173
        %v5574 = vpop.f32.mrf.mxu0
        %v5575 = vadd.f32 0.0, %v5574
        %v5576 = vpop.f32.mrf.mxu0
        %v5577 = vadd.f32 0.0, %v5576
        %5578 = vmatmul.bf16.gmra.mxu0 %v4175
        %v5579 = vpop.f32.mrf.mxu0
        %v5580 = vadd.f32 0.0, %v5579
        %v5581 = vpop.f32.mrf.mxu0
        %v5582 = vadd.f32 0.0, %v5581
        %5583 = vmatmul.bf16.gmra.mxu0 %v4177
        %v5584 = vpop.f32.mrf.mxu0
        %v5585 = vadd.f32 0.0, %v5584
        %v5586 = vpop.f32.mrf.mxu0
        %v5587 = vadd.f32 0.0, %v5586
        %5588 = vmatmul.bf16.gmra.mxu0 %v4179
        %v5589 = vpop.f32.mrf.mxu0
        %v5590 = vadd.f32 0.0, %v5589
        %v5591 = vpop.f32.mrf.mxu0
        %5592 = vdwg.mxu0
        %5593 = vmatpush.bf16.msra.mxu0 0
        %5594 = vmatpush.bf16.msra.mxu0 0
        %5595 = vmatpush.bf16.msra.mxu0 0
        %5596 = vmatpush.bf16.msra.mxu0 0
        %5597 = vmatpush.bf16.msra.mxu0 %v5499
        %5598 = vmatpush.bf16.msra.mxu0 %v5497
        %5599 = vmatpush.bf16.msra.mxu0 %v5495
        %5600 = vmatpush.bf16.msra.mxu0 %v5493
        %5601 = vmatmul.bf16.gmra.mxu0 %v4314
        %v5602 = vpop.f32.mrf.mxu0
        %v5603 = vadd.f32 %v5535, %v5602
        %v5604 = vpop.f32.mrf.mxu0
        %v5605 = vadd.f32 %v5537, %v5604
        %5606 = vmatmul.bf16.gmra.mxu0 %v4317
        %v5607 = vpop.f32.mrf.mxu0
        %v5608 = vadd.f32 %v5540, %v5607
        %v5609 = vpop.f32.mrf.mxu0
        %v5610 = vadd.f32 %v5542, %v5609
        %5611 = vmatmul.bf16.gmra.mxu0 %v4320
        %v5612 = vpop.f32.mrf.mxu0
        %v5613 = vadd.f32 %v5545, %v5612
        %v5614 = vpop.f32.mrf.mxu0
        %v5615 = vadd.f32 %v5547, %v5614
        %5616 = vmatmul.bf16.gmra.mxu0 %v4323
        %v5617 = vpop.f32.mrf.mxu0
        %v5618 = vadd.f32 %v5550, %v5617
        %v5619 = vpop.f32.mrf.mxu0
        %v5620 = vadd.f32 %v5552, %v5619
        %5621 = vmatmul.bf16.gmra.mxu0 %v4326
        %v5622 = vpop.f32.mrf.mxu0
        %v5623 = vadd.f32 %v5555, %v5622
        %v5624 = vpop.f32.mrf.mxu0
        %v5625 = vadd.f32 %v5557, %v5624
        %5626 = vmatmul.bf16.gmra.mxu0 %v4329
        %v5627 = vpop.f32.mrf.mxu0
        %v5628 = vadd.f32 %v5560, %v5627
        %v5629 = vpop.f32.mrf.mxu0
        %v5630 = vadd.f32 %v5562, %v5629
        %5631 = vmatmul.bf16.gmra.mxu0 %v4332
        %v5632 = vpop.f32.mrf.mxu0
        %v5633 = vadd.f32 %v5565, %v5632
        %v5634 = vpop.f32.mrf.mxu0
        %v5635 = vadd.f32 %v5567, %v5634
        %5636 = vmatmul.bf16.gmra.mxu0 %v4335
        %v5637 = vpop.f32.mrf.mxu0
        %v5638 = vadd.f32 %v5570, %v5637
        %v5639 = vpop.f32.mrf.mxu0
        %v5640 = vadd.f32 %v5572, %v5639
        %5641 = vmatmul.bf16.gmra.mxu0 %v4338
        %v5642 = vpop.f32.mrf.mxu0
        %v5643 = vadd.f32 %v5575, %v5642
        %v5644 = vpop.f32.mrf.mxu0
        %v5645 = vadd.f32 %v5577, %v5644
        %5646 = vmatmul.bf16.gmra.mxu0 %v4341
        %v5647 = vpop.f32.mrf.mxu0
        %v5648 = vadd.f32 %v5580, %v5647
        %v5649 = vpop.f32.mrf.mxu0
        %v5650 = vadd.f32 %v5582, %v5649
        %5651 = vmatmul.bf16.gmra.mxu0 %v4344
        %v5652 = vpop.f32.mrf.mxu0
        %v5653 = vadd.f32 %v5585, %v5652
        %v5654 = vpop.f32.mrf.mxu0
        %v5655 = vadd.f32 %v5587, %v5654
        %5656 = vmatmul.bf16.gmra.mxu0 %v4347
        %v5657 = vpop.f32.mrf.mxu0
        %v5658 = vadd.f32 %v5590, %v5657
        %v5659 = vpop.f32.mrf.mxu0
        %5660 = vdwg.mxu0
        %5661 = vmatpush.bf16.msra.mxu0 %v5492
        %5662 = vmatpush.bf16.msra.mxu0 %v5490
        %5663 = vmatpush.bf16.msra.mxu0 %v5488
        %5664 = vmatpush.bf16.msra.mxu0 %v5486
        %5665 = vmatpush.bf16.msra.mxu0 %v5484
        %5666 = vmatpush.bf16.msra.mxu0 %v5482
        %5667 = vmatpush.bf16.msra.mxu0 %v5480
        %5668 = vmatpush.bf16.msra.mxu0 %v5478
        %5669 = vmatmul.bf16.gmra.mxu0 %v4157
        %v5670 = vpop.f32.mrf.mxu0
        %v5671 = vadd.f32 0.0, %v5670
        %v5672 = vpop.f32.mrf.mxu0
        %v5673 = vadd.f32 0.0, %v5672
        %5674 = vmatmul.bf16.gmra.mxu0 %v4159
        %v5675 = vpop.f32.mrf.mxu0
        %v5676 = vadd.f32 0.0, %v5675
        %v5677 = vpop.f32.mrf.mxu0
        %v5678 = vadd.f32 0.0, %v5677
        %5679 = vmatmul.bf16.gmra.mxu0 %v4161
        %v5680 = vpop.f32.mrf.mxu0
        %v5681 = vadd.f32 0.0, %v5680
        %v5682 = vpop.f32.mrf.mxu0
        %v5683 = vadd.f32 0.0, %v5682
        %5684 = vmatmul.bf16.gmra.mxu0 %v4163
        %v5685 = vpop.f32.mrf.mxu0
        %v5686 = vadd.f32 0.0, %v5685
        %v5687 = vpop.f32.mrf.mxu0
        %v5688 = vadd.f32 0.0, %v5687
        %5689 = vmatmul.bf16.gmra.mxu0 %v4165
        %v5690 = vpop.f32.mrf.mxu0
        %v5691 = vadd.f32 0.0, %v5690
        %v5692 = vpop.f32.mrf.mxu0
        %v5693 = vadd.f32 0.0, %v5692
        %5694 = vmatmul.bf16.gmra.mxu0 %v4167
        %v5695 = vpop.f32.mrf.mxu0
        %v5696 = vadd.f32 0.0, %v5695
        %v5697 = vpop.f32.mrf.mxu0
        %v5698 = vadd.f32 0.0, %v5697
        %5699 = vmatmul.bf16.gmra.mxu0 %v4169
        %v5700 = vpop.f32.mrf.mxu0
        %v5701 = vadd.f32 0.0, %v5700
        %v5702 = vpop.f32.mrf.mxu0
        %v5703 = vadd.f32 0.0, %v5702
        %5704 = vmatmul.bf16.gmra.mxu0 %v4171
        %v5705 = vpop.f32.mrf.mxu0
        %v5706 = vadd.f32 0.0, %v5705
        %v5707 = vpop.f32.mrf.mxu0
        %v5708 = vadd.f32 0.0, %v5707
        %5709 = vmatmul.bf16.gmra.mxu0 %v4173
        %v5710 = vpop.f32.mrf.mxu0
        %v5711 = vadd.f32 0.0, %v5710
        %v5712 = vpop.f32.mrf.mxu0
        %v5713 = vadd.f32 0.0, %v5712
        %5714 = vmatmul.bf16.gmra.mxu0 %v4175
        %v5715 = vpop.f32.mrf.mxu0
        %v5716 = vadd.f32 0.0, %v5715
        %v5717 = vpop.f32.mrf.mxu0
        %v5718 = vadd.f32 0.0, %v5717
        %5719 = vmatmul.bf16.gmra.mxu0 %v4177
        %v5720 = vpop.f32.mrf.mxu0
        %v5721 = vadd.f32 0.0, %v5720
        %v5722 = vpop.f32.mrf.mxu0
        %v5723 = vadd.f32 0.0, %v5722
        %5724 = vmatmul.bf16.gmra.mxu0 %v4179
        %v5725 = vpop.f32.mrf.mxu0
        %v5726 = vadd.f32 0.0, %v5725
        %v5727 = vpop.f32.mrf.mxu0
        %5728 = vdwg.mxu0
        %5729 = vmatpush.bf16.msra.mxu0 0
        %5730 = vmatpush.bf16.msra.mxu0 0
        %5731 = vmatpush.bf16.msra.mxu0 0
        %5732 = vmatpush.bf16.msra.mxu0 0
        %5733 = vmatpush.bf16.msra.mxu0 %v5500
        %5734 = vmatpush.bf16.msra.mxu0 %v5498
        %5735 = vmatpush.bf16.msra.mxu0 %v5496
        %5736 = vmatpush.bf16.msra.mxu0 %v5494
        %5737 = vmatmul.bf16.gmra.mxu0 %v4314
        %v5738 = vpop.f32.mrf.mxu0
        %v5739 = vadd.f32 %v5671, %v5738
        %v5740 = vpop.f32.mrf.mxu0
        %v5741 = vadd.f32 %v5673, %v5740
        %5742 = vmatmul.bf16.gmra.mxu0 %v4317
        %v5743 = vpop.f32.mrf.mxu0
        %v5744 = vadd.f32 %v5676, %v5743
        %v5745 = vpop.f32.mrf.mxu0
        %v5746 = vadd.f32 %v5678, %v5745
        %5747 = vmatmul.bf16.gmra.mxu0 %v4320
        %v5748 = vpop.f32.mrf.mxu0
        %v5749 = vadd.f32 %v5681, %v5748
        %v5750 = vpop.f32.mrf.mxu0
        %v5751 = vadd.f32 %v5683, %v5750
        %5752 = vmatmul.bf16.gmra.mxu0 %v4323
        %v5753 = vpop.f32.mrf.mxu0
        %v5754 = vadd.f32 %v5686, %v5753
        %v5755 = vpop.f32.mrf.mxu0
        %v5756 = vadd.f32 %v5688, %v5755
        %5757 = vmatmul.bf16.gmra.mxu0 %v4326
        %v5758 = vpop.f32.mrf.mxu0
        %v5759 = vadd.f32 %v5691, %v5758
        %v5760 = vpop.f32.mrf.mxu0
        %v5761 = vadd.f32 %v5693, %v5760
        %5762 = vmatmul.bf16.gmra.mxu0 %v4329
        %v5763 = vpop.f32.mrf.mxu0
        %v5764 = vadd.f32 %v5696, %v5763
        %v5765 = vpop.f32.mrf.mxu0
        %v5766 = vadd.f32 %v5698, %v5765
        %5767 = vmatmul.bf16.gmra.mxu0 %v4332
        %v5768 = vpop.f32.mrf.mxu0
        %v5769 = vadd.f32 %v5701, %v5768
        %v5770 = vpop.f32.mrf.mxu0
        %v5771 = vadd.f32 %v5703, %v5770
        %5772 = vmatmul.bf16.gmra.mxu0 %v4335
        %v5773 = vpop.f32.mrf.mxu0
        %v5774 = vadd.f32 %v5706, %v5773
        %v5775 = vpop.f32.mrf.mxu0
        %v5776 = vadd.f32 %v5708, %v5775
        %5777 = vmatmul.bf16.gmra.mxu0 %v4338
        %v5778 = vpop.f32.mrf.mxu0
        %v5779 = vadd.f32 %v5711, %v5778
        %v5780 = vpop.f32.mrf.mxu0
        %v5781 = vadd.f32 %v5713, %v5780
        %5782 = vmatmul.bf16.gmra.mxu0 %v4341
        %v5783 = vpop.f32.mrf.mxu0
        %v5784 = vadd.f32 %v5716, %v5783
        %v5785 = vpop.f32.mrf.mxu0
        %v5786 = vadd.f32 %v5718, %v5785
        %5787 = vmatmul.bf16.gmra.mxu0 %v4344
        %v5788 = vpop.f32.mrf.mxu0
        %v5789 = vadd.f32 %v5721, %v5788
        %v5790 = vpop.f32.mrf.mxu0
        %v5791 = vadd.f32 %v5723, %v5790
        %5792 = vmatmul.bf16.gmra.mxu0 %v4347
        %v5793 = vpop.f32.mrf.mxu0
        %v5794 = vadd.f32 %v5726, %v5793
        %v5795 = vpop.f32.mrf.mxu0
        %5796 = vdwg.mxu0
        %v5821 = vunpack.c.l.b16 %v4064
        %v5822 = vunpack.c.h.b16 %v4064
        %v5823 = vunpack.c.l.b16 %v4065
        %v5824 = vunpack.c.h.b16 %v4065
        %v5825 = vunpack.c.l.b16 %v4066
        %v5826 = vunpack.c.h.b16 %v4066
        %v5827 = vunpack.c.l.b16 %v4067
        %v5828 = vunpack.c.h.b16 %v4067
        %v5829 = vunpack.c.l.b16 %v4068
        %v5830 = vunpack.c.h.b16 %v4068
        %v5831 = vunpack.c.l.b16 %v4069
        %v5832 = vunpack.c.h.b16 %v4069
        %v5833 = vunpack.c.l.b16 %v4070
        %v5834 = vunpack.c.h.b16 %v4070
        %v5835 = vunpack.c.l.b16 %v4071
        %v5836 = vunpack.c.h.b16 %v4071
        %v5837 = vunpack.c.l.b16 %v4072
        %v5838 = vunpack.c.h.b16 %v4072
        %v5839 = vunpack.c.l.b16 %v4073
        %v5840 = vunpack.c.h.b16 %v4073
        %v5841 = vunpack.c.l.b16 %v4074
        %v5842 = vunpack.c.h.b16 %v4074
        %v5843 = vunpack.c.l.b16 %v4075
        %v5844 = vunpack.c.h.b16 %v4075
        %v5845 = vunpack.c.l.b16 %v4076
        %v5846 = vunpack.c.h.b16 %v4076
        %v5847 = vunpack.c.l.b16 %v4077
        %v5848 = vunpack.c.h.b16 %v4077
        %v5849 = vunpack.c.l.b16 %v4078
        %v5850 = vunpack.c.h.b16 %v4078
        %v5851 = vunpack.c.l.b16 %v4079
        %v5852 = vunpack.c.h.b16 %v4079
        %v5853 = vunpack.c.l.b16 %v4080
        %v5854 = vunpack.c.h.b16 %v4080
        %v5855 = vunpack.c.l.b16 %v4081
        %v5856 = vunpack.c.h.b16 %v4081
        %v5857 = vunpack.c.l.b16 %v4082
        %v5858 = vunpack.c.h.b16 %v4082
        %v5859 = vunpack.c.l.b16 %v4083
        %v5860 = vunpack.c.h.b16 %v4083
        %v5861 = vunpack.c.l.b16 %v4084
        %v5862 = vunpack.c.h.b16 %v4084
        %v5863 = vunpack.c.l.b16 %v4085
        %v5864 = vunpack.c.h.b16 %v4085
        %v5865 = vunpack.c.l.b16 %v4086
        %v5866 = vunpack.c.h.b16 %v4086
        %v5867 = vunpack.c.l.b16 %v4087
        %v5868 = vunpack.c.h.b16 %v4087
        %v5869 = vpack.c.b16 %v5823, %v5821
        %v5870 = vpack.c.b16 %v5824, %v5822
        %v5871 = vpack.c.b16 %v5827, %v5825
        %v5872 = vpack.c.b16 %v5828, %v5826
        %v5873 = vpack.c.b16 %v5831, %v5829
        %v5874 = vpack.c.b16 %v5832, %v5830
        %v5875 = vpack.c.b16 %v5835, %v5833
        %v5876 = vpack.c.b16 %v5836, %v5834
        %v5877 = vpack.c.b16 %v5839, %v5837
        %v5878 = vpack.c.b16 %v5840, %v5838
        %v5879 = vpack.c.b16 %v5843, %v5841
        %v5880 = vpack.c.b16 %v5844, %v5842
        %v5881 = vpack.c.b16 %v5847, %v5845
        %v5882 = vpack.c.b16 %v5848, %v5846
        %v5883 = vpack.c.b16 %v5851, %v5849
        %v5884 = vpack.c.b16 %v5852, %v5850
        %v5885 = vpack.c.b16 %v5855, %v5853
        %v5886 = vpack.c.b16 %v5856, %v5854
        %v5887 = vpack.c.b16 %v5859, %v5857
        %v5888 = vpack.c.b16 %v5860, %v5858
        %v5889 = vpack.c.b16 %v5863, %v5861
        %v5890 = vpack.c.b16 %v5864, %v5862
        %v5891 = vpack.c.b16 %v5867, %v5865
        %v5892 = vpack.c.b16 %v5868, %v5866
        %5917 = vmatpush.bf16.msra.mxu0 %v5883
        %5918 = vmatpush.bf16.msra.mxu0 %v5881
        %5919 = vmatpush.bf16.msra.mxu0 %v5879
        %5920 = vmatpush.bf16.msra.mxu0 %v5877
        %5921 = vmatpush.bf16.msra.mxu0 %v5875
        %5922 = vmatpush.bf16.msra.mxu0 %v5873
        %5923 = vmatpush.bf16.msra.mxu0 %v5871
        %5924 = vmatpush.bf16.msra.mxu0 %v5869
        %5925 = vmatmul.bf16.gmra.mxu0 %v4157
        %v5926 = vpop.f32.mrf.mxu0
        %v5927 = vadd.f32 0.0, %v5926
        %v5928 = vpop.f32.mrf.mxu0
        %v5929 = vadd.f32 0.0, %v5928
        %5930 = vmatmul.bf16.gmra.mxu0 %v4159
        %v5931 = vpop.f32.mrf.mxu0
        %v5932 = vadd.f32 0.0, %v5931
        %v5933 = vpop.f32.mrf.mxu0
        %v5934 = vadd.f32 0.0, %v5933
        %5935 = vmatmul.bf16.gmra.mxu0 %v4161
        %v5936 = vpop.f32.mrf.mxu0
        %v5937 = vadd.f32 0.0, %v5936
        %v5938 = vpop.f32.mrf.mxu0
        %v5939 = vadd.f32 0.0, %v5938
        %5940 = vmatmul.bf16.gmra.mxu0 %v4163
        %v5941 = vpop.f32.mrf.mxu0
        %v5942 = vadd.f32 0.0, %v5941
        %v5943 = vpop.f32.mrf.mxu0
        %v5944 = vadd.f32 0.0, %v5943
        %5945 = vmatmul.bf16.gmra.mxu0 %v4165
        %v5946 = vpop.f32.mrf.mxu0
        %v5947 = vadd.f32 0.0, %v5946
        %v5948 = vpop.f32.mrf.mxu0
        %v5949 = vadd.f32 0.0, %v5948
        %5950 = vmatmul.bf16.gmra.mxu0 %v4167
        %v5951 = vpop.f32.mrf.mxu0
        %v5952 = vadd.f32 0.0, %v5951
        %v5953 = vpop.f32.mrf.mxu0
        %v5954 = vadd.f32 0.0, %v5953
        %5955 = vmatmul.bf16.gmra.mxu0 %v4169
        %v5956 = vpop.f32.mrf.mxu0
        %v5957 = vadd.f32 0.0, %v5956
        %v5958 = vpop.f32.mrf.mxu0
        %v5959 = vadd.f32 0.0, %v5958
        %5960 = vmatmul.bf16.gmra.mxu0 %v4171
        %v5961 = vpop.f32.mrf.mxu0
        %v5962 = vadd.f32 0.0, %v5961
        %v5963 = vpop.f32.mrf.mxu0
        %v5964 = vadd.f32 0.0, %v5963
        %5965 = vmatmul.bf16.gmra.mxu0 %v4173
        %v5966 = vpop.f32.mrf.mxu0
        %v5967 = vadd.f32 0.0, %v5966
        %v5968 = vpop.f32.mrf.mxu0
        %v5969 = vadd.f32 0.0, %v5968
        %5970 = vmatmul.bf16.gmra.mxu0 %v4175
        %v5971 = vpop.f32.mrf.mxu0
        %v5972 = vadd.f32 0.0, %v5971
        %v5973 = vpop.f32.mrf.mxu0
        %v5974 = vadd.f32 0.0, %v5973
        %5975 = vmatmul.bf16.gmra.mxu0 %v4177
        %v5976 = vpop.f32.mrf.mxu0
        %v5977 = vadd.f32 0.0, %v5976
        %v5978 = vpop.f32.mrf.mxu0
        %v5979 = vadd.f32 0.0, %v5978
        %5980 = vmatmul.bf16.gmra.mxu0 %v4179
        %v5981 = vpop.f32.mrf.mxu0
        %v5982 = vadd.f32 0.0, %v5981
        %v5983 = vpop.f32.mrf.mxu0
        %5984 = vdwg.mxu0
        %5985 = vmatpush.bf16.msra.mxu0 0
        %5986 = vmatpush.bf16.msra.mxu0 0
        %5987 = vmatpush.bf16.msra.mxu0 0
        %5988 = vmatpush.bf16.msra.mxu0 0
        %5989 = vmatpush.bf16.msra.mxu0 %v5891
        %5990 = vmatpush.bf16.msra.mxu0 %v5889
        %5991 = vmatpush.bf16.msra.mxu0 %v5887
        %5992 = vmatpush.bf16.msra.mxu0 %v5885
        %5993 = vmatmul.bf16.gmra.mxu0 %v4314
        %v5994 = vpop.f32.mrf.mxu0
        %v5995 = vadd.f32 %v5927, %v5994
        %v5996 = vpop.f32.mrf.mxu0
        %v5997 = vadd.f32 %v5929, %v5996
        %5998 = vmatmul.bf16.gmra.mxu0 %v4317
        %v5999 = vpop.f32.mrf.mxu0
        %v6000 = vadd.f32 %v5932, %v5999
        %v6001 = vpop.f32.mrf.mxu0
        %v6002 = vadd.f32 %v5934, %v6001
        %6003 = vmatmul.bf16.gmra.mxu0 %v4320
        %v6004 = vpop.f32.mrf.mxu0
        %v6005 = vadd.f32 %v5937, %v6004
        %v6006 = vpop.f32.mrf.mxu0
        %v6007 = vadd.f32 %v5939, %v6006
        %6008 = vmatmul.bf16.gmra.mxu0 %v4323
        %v6009 = vpop.f32.mrf.mxu0
        %v6010 = vadd.f32 %v5942, %v6009
        %v6011 = vpop.f32.mrf.mxu0
        %v6012 = vadd.f32 %v5944, %v6011
        %6013 = vmatmul.bf16.gmra.mxu0 %v4326
        %v6014 = vpop.f32.mrf.mxu0
        %v6015 = vadd.f32 %v5947, %v6014
        %v6016 = vpop.f32.mrf.mxu0
        %v6017 = vadd.f32 %v5949, %v6016
        %6018 = vmatmul.bf16.gmra.mxu0 %v4329
        %v6019 = vpop.f32.mrf.mxu0
        %v6020 = vadd.f32 %v5952, %v6019
        %v6021 = vpop.f32.mrf.mxu0
        %v6022 = vadd.f32 %v5954, %v6021
        %6023 = vmatmul.bf16.gmra.mxu0 %v4332
        %v6024 = vpop.f32.mrf.mxu0
        %v6025 = vadd.f32 %v5957, %v6024
        %v6026 = vpop.f32.mrf.mxu0
        %v6027 = vadd.f32 %v5959, %v6026
        %6028 = vmatmul.bf16.gmra.mxu0 %v4335
        %v6029 = vpop.f32.mrf.mxu0
        %v6030 = vadd.f32 %v5962, %v6029
        %v6031 = vpop.f32.mrf.mxu0
        %v6032 = vadd.f32 %v5964, %v6031
        %6033 = vmatmul.bf16.gmra.mxu0 %v4338
        %v6034 = vpop.f32.mrf.mxu0
        %v6035 = vadd.f32 %v5967, %v6034
        %v6036 = vpop.f32.mrf.mxu0
        %v6037 = vadd.f32 %v5969, %v6036
        %6038 = vmatmul.bf16.gmra.mxu0 %v4341
        %v6039 = vpop.f32.mrf.mxu0
        %v6040 = vadd.f32 %v5972, %v6039
        %v6041 = vpop.f32.mrf.mxu0
        %v6042 = vadd.f32 %v5974, %v6041
        %6043 = vmatmul.bf16.gmra.mxu0 %v4344
        %v6044 = vpop.f32.mrf.mxu0
        %v6045 = vadd.f32 %v5977, %v6044
        %v6046 = vpop.f32.mrf.mxu0
        %v6047 = vadd.f32 %v5979, %v6046
        %6048 = vmatmul.bf16.gmra.mxu0 %v4347
        %v6049 = vpop.f32.mrf.mxu0
        %v6050 = vadd.f32 %v5982, %v6049
        %v6051 = vpop.f32.mrf.mxu0
        %6052 = vdwg.mxu0
        %6053 = vmatpush.bf16.msra.mxu0 %v5884
        %6054 = vmatpush.bf16.msra.mxu0 %v5882
        %6055 = vmatpush.bf16.msra.mxu0 %v5880
        %6056 = vmatpush.bf16.msra.mxu0 %v5878
        %6057 = vmatpush.bf16.msra.mxu0 %v5876
        %6058 = vmatpush.bf16.msra.mxu0 %v5874
        %6059 = vmatpush.bf16.msra.mxu0 %v5872
        %6060 = vmatpush.bf16.msra.mxu0 %v5870
        %6061 = vmatmul.bf16.gmra.mxu0 %v4157
        %v6062 = vpop.f32.mrf.mxu0
        %v6063 = vadd.f32 0.0, %v6062
        %v6064 = vpop.f32.mrf.mxu0
        %v6065 = vadd.f32 0.0, %v6064
        %6066 = vmatmul.bf16.gmra.mxu0 %v4159
        %v6067 = vpop.f32.mrf.mxu0
        %v6068 = vadd.f32 0.0, %v6067
        %v6069 = vpop.f32.mrf.mxu0
        %v6070 = vadd.f32 0.0, %v6069
        %6071 = vmatmul.bf16.gmra.mxu0 %v4161
        %v6072 = vpop.f32.mrf.mxu0
        %v6073 = vadd.f32 0.0, %v6072
        %v6074 = vpop.f32.mrf.mxu0
        %v6075 = vadd.f32 0.0, %v6074
        %6076 = vmatmul.bf16.gmra.mxu0 %v4163
        %v6077 = vpop.f32.mrf.mxu0
        %v6078 = vadd.f32 0.0, %v6077
        %v6079 = vpop.f32.mrf.mxu0
        %v6080 = vadd.f32 0.0, %v6079
        %6081 = vmatmul.bf16.gmra.mxu0 %v4165
        %v6082 = vpop.f32.mrf.mxu0
        %v6083 = vadd.f32 0.0, %v6082
        %v6084 = vpop.f32.mrf.mxu0
        %v6085 = vadd.f32 0.0, %v6084
        %6086 = vmatmul.bf16.gmra.mxu0 %v4167
        %v6087 = vpop.f32.mrf.mxu0
        %v6088 = vadd.f32 0.0, %v6087
        %v6089 = vpop.f32.mrf.mxu0
        %v6090 = vadd.f32 0.0, %v6089
        %6091 = vmatmul.bf16.gmra.mxu0 %v4169
        %v6092 = vpop.f32.mrf.mxu0
        %v6093 = vadd.f32 0.0, %v6092
        %v6094 = vpop.f32.mrf.mxu0
        %v6095 = vadd.f32 0.0, %v6094
        %6096 = vmatmul.bf16.gmra.mxu0 %v4171
        %v6097 = vpop.f32.mrf.mxu0
        %v6098 = vadd.f32 0.0, %v6097
        %v6099 = vpop.f32.mrf.mxu0
        %v6100 = vadd.f32 0.0, %v6099
        %6101 = vmatmul.bf16.gmra.mxu0 %v4173
        %v6102 = vpop.f32.mrf.mxu0
        %v6103 = vadd.f32 0.0, %v6102
        %v6104 = vpop.f32.mrf.mxu0
        %v6105 = vadd.f32 0.0, %v6104
        %6106 = vmatmul.bf16.gmra.mxu0 %v4175
        %v6107 = vpop.f32.mrf.mxu0
        %v6108 = vadd.f32 0.0, %v6107
        %v6109 = vpop.f32.mrf.mxu0
        %v6110 = vadd.f32 0.0, %v6109
        %6111 = vmatmul.bf16.gmra.mxu0 %v4177
        %v6112 = vpop.f32.mrf.mxu0
        %v6113 = vadd.f32 0.0, %v6112
        %v6114 = vpop.f32.mrf.mxu0
        %v6115 = vadd.f32 0.0, %v6114
        %6116 = vmatmul.bf16.gmra.mxu0 %v4179
        %v6117 = vpop.f32.mrf.mxu0
        %v6118 = vadd.f32 0.0, %v6117
        %v6119 = vpop.f32.mrf.mxu0
        %6120 = vdwg.mxu0
        %6121 = vmatpush.bf16.msra.mxu0 0
        %6122 = vmatpush.bf16.msra.mxu0 0
        %6123 = vmatpush.bf16.msra.mxu0 0
        %6124 = vmatpush.bf16.msra.mxu0 0
        %6125 = vmatpush.bf16.msra.mxu0 %v5892
        %6126 = vmatpush.bf16.msra.mxu0 %v5890
        %6127 = vmatpush.bf16.msra.mxu0 %v5888
        %6128 = vmatpush.bf16.msra.mxu0 %v5886
        %6129 = vmatmul.bf16.gmra.mxu0 %v4314
        %v6130 = vpop.f32.mrf.mxu0
        %v6131 = vadd.f32 %v6063, %v6130
        %v6132 = vpop.f32.mrf.mxu0
        %v6133 = vadd.f32 %v6065, %v6132
        %6134 = vmatmul.bf16.gmra.mxu0 %v4317
        %v6135 = vpop.f32.mrf.mxu0
        %v6136 = vadd.f32 %v6068, %v6135
        %v6137 = vpop.f32.mrf.mxu0
        %v6138 = vadd.f32 %v6070, %v6137
        %6139 = vmatmul.bf16.gmra.mxu0 %v4320
        %v6140 = vpop.f32.mrf.mxu0
        %v6141 = vadd.f32 %v6073, %v6140
        %v6142 = vpop.f32.mrf.mxu0
        %v6143 = vadd.f32 %v6075, %v6142
        %6144 = vmatmul.bf16.gmra.mxu0 %v4323
        %v6145 = vpop.f32.mrf.mxu0
        %v6146 = vadd.f32 %v6078, %v6145
        %v6147 = vpop.f32.mrf.mxu0
        %v6148 = vadd.f32 %v6080, %v6147
        %6149 = vmatmul.bf16.gmra.mxu0 %v4326
        %v6150 = vpop.f32.mrf.mxu0
        %v6151 = vadd.f32 %v6083, %v6150
        %v6152 = vpop.f32.mrf.mxu0
        %v6153 = vadd.f32 %v6085, %v6152
        %6154 = vmatmul.bf16.gmra.mxu0 %v4329
        %v6155 = vpop.f32.mrf.mxu0
        %v6156 = vadd.f32 %v6088, %v6155
        %v6157 = vpop.f32.mrf.mxu0
        %v6158 = vadd.f32 %v6090, %v6157
        %6159 = vmatmul.bf16.gmra.mxu0 %v4332
        %v6160 = vpop.f32.mrf.mxu0
        %v6161 = vadd.f32 %v6093, %v6160
        %v6162 = vpop.f32.mrf.mxu0
        %v6163 = vadd.f32 %v6095, %v6162
        %6164 = vmatmul.bf16.gmra.mxu0 %v4335
        %v6165 = vpop.f32.mrf.mxu0
        %v6166 = vadd.f32 %v6098, %v6165
        %v6167 = vpop.f32.mrf.mxu0
        %v6168 = vadd.f32 %v6100, %v6167
        %6169 = vmatmul.bf16.gmra.mxu0 %v4338
        %v6170 = vpop.f32.mrf.mxu0
        %v6171 = vadd.f32 %v6103, %v6170
        %v6172 = vpop.f32.mrf.mxu0
        %v6173 = vadd.f32 %v6105, %v6172
        %6174 = vmatmul.bf16.gmra.mxu0 %v4341
        %v6175 = vpop.f32.mrf.mxu0
        %v6176 = vadd.f32 %v6108, %v6175
        %v6177 = vpop.f32.mrf.mxu0
        %v6178 = vadd.f32 %v6110, %v6177
        %6179 = vmatmul.bf16.gmra.mxu0 %v4344
        %v6180 = vpop.f32.mrf.mxu0
        %v6181 = vadd.f32 %v6113, %v6180
        %v6182 = vpop.f32.mrf.mxu0
        %v6183 = vadd.f32 %v6115, %v6182
        %6184 = vmatmul.bf16.gmra.mxu0 %v4347
        %v6185 = vpop.f32.mrf.mxu0
        %v6186 = vadd.f32 %v6118, %v6185
        %v6187 = vpop.f32.mrf.mxu0
        %6188 = vdwg.mxu0
        %v6189 = vmul.f32 %v4427, %v4427
        %v6190 = vmul.f32 %v4563, %v4563
        %v6191 = vmul.f32 %v4429, %v4429
        %v6192 = vmul.f32 %v4565, %v4565
        %v6193 = vmul.f32 %v4432, %v4432
        %v6194 = vmul.f32 %v4568, %v4568
        %v6195 = vmul.f32 %v4434, %v4434
        %v6196 = vmul.f32 %v4570, %v4570
        %v6197 = vmul.f32 %v4437, %v4437
        %v6198 = vmul.f32 %v4573, %v4573
        %v6199 = vmul.f32 %v4439, %v4439
        %v6200 = vmul.f32 %v4575, %v4575
        %v6201 = vmul.f32 %v4442, %v4442
        %v6202 = vmul.f32 %v4578, %v4578
        %v6203 = vmul.f32 %v4444, %v4444
        %v6204 = vmul.f32 %v4580, %v4580
        %v6205 = vmul.f32 %v4447, %v4447
        %v6206 = vmul.f32 %v4583, %v4583
        %v6207 = vmul.f32 %v4449, %v4449
        %v6208 = vmul.f32 %v4585, %v4585
        %v6209 = vmul.f32 %v4452, %v4452
        %v6210 = vmul.f32 %v4588, %v4588
        %v6211 = vmul.f32 %v4454, %v4454
        %v6212 = vmul.f32 %v4590, %v4590
        %v6213 = vmul.f32 %v4457, %v4457
        %v6214 = vmul.f32 %v4593, %v4593
        %v6215 = vmul.f32 %v4459, %v4459
        %v6216 = vmul.f32 %v4595, %v4595
        %v6217 = vmul.f32 %v4462, %v4462
        %v6218 = vmul.f32 %v4598, %v4598
        %v6219 = vmul.f32 %v4464, %v4464
        %v6220 = vmul.f32 %v4600, %v4600
        %v6221 = vmul.f32 %v4467, %v4467
        %v6222 = vmul.f32 %v4603, %v4603
        %v6223 = vmul.f32 %v4469, %v4469
        %v6224 = vmul.f32 %v4605, %v4605
        %v6225 = vmul.f32 %v4472, %v4472
        %v6226 = vmul.f32 %v4608, %v4608
        %v6227 = vmul.f32 %v4474, %v4474
        %v6228 = vmul.f32 %v4610, %v4610
        %v6229 = vmul.f32 %v4477, %v4477
        %v6230 = vmul.f32 %v4613, %v4613
        %v6231 = vmul.f32 %v4479, %v4479
        %v6232 = vmul.f32 %v4615, %v4615
        %v6233 = vmul.f32 %v4482, %v4482
        %v6234 = vmul.f32 %v4618, %v4618
        %v6235 = vsub.f32 %v5211, %v6189
        %v6236 = vsub.f32 %v5347, %v6190
        %v6237 = vsub.f32 %v5213, %v6191
        %v6238 = vsub.f32 %v5349, %v6192
        %v6239 = vsub.f32 %v5216, %v6193
        %v6240 = vsub.f32 %v5352, %v6194
        %v6241 = vsub.f32 %v5218, %v6195
        %v6242 = vsub.f32 %v5354, %v6196
        %v6243 = vsub.f32 %v5221, %v6197
        %v6244 = vsub.f32 %v5357, %v6198
        %v6245 = vsub.f32 %v5223, %v6199
        %v6246 = vsub.f32 %v5359, %v6200
        %v6247 = vsub.f32 %v5226, %v6201
        %v6248 = vsub.f32 %v5362, %v6202
        %v6249 = vsub.f32 %v5228, %v6203
        %v6250 = vsub.f32 %v5364, %v6204
        %v6251 = vsub.f32 %v5231, %v6205
        %v6252 = vsub.f32 %v5367, %v6206
        %v6253 = vsub.f32 %v5233, %v6207
        %v6254 = vsub.f32 %v5369, %v6208
        %v6255 = vsub.f32 %v5236, %v6209
        %v6256 = vsub.f32 %v5372, %v6210
        %v6257 = vsub.f32 %v5238, %v6211
        %v6258 = vsub.f32 %v5374, %v6212
        %v6259 = vsub.f32 %v5241, %v6213
        %v6260 = vsub.f32 %v5377, %v6214
        %v6261 = vsub.f32 %v5243, %v6215
        %v6262 = vsub.f32 %v5379, %v6216
        %v6263 = vsub.f32 %v5246, %v6217
        %v6264 = vsub.f32 %v5382, %v6218
        %v6265 = vsub.f32 %v5248, %v6219
        %v6266 = vsub.f32 %v5384, %v6220
        %v6267 = vsub.f32 %v5251, %v6221
        %v6268 = vsub.f32 %v5387, %v6222
        %v6269 = vsub.f32 %v5253, %v6223
        %v6270 = vsub.f32 %v5389, %v6224
        %v6271 = vsub.f32 %v5256, %v6225
        %v6272 = vsub.f32 %v5392, %v6226
        %v6273 = vsub.f32 %v5258, %v6227
        %v6274 = vsub.f32 %v5394, %v6228
        %v6275 = vsub.f32 %v5261, %v6229
        %v6276 = vsub.f32 %v5397, %v6230
        %v6277 = vsub.f32 %v5263, %v6231
        %v6278 = vsub.f32 %v5399, %v6232
        %v6279 = vsub.f32 %v5266, %v6233
        %v6280 = vsub.f32 %v5402, %v6234
        %v6281 = vmul.f32 %v4819, %v4819
        %v6282 = vmul.f32 %v4955, %v4955
        %v6283 = vmul.f32 %v4821, %v4821
        %v6284 = vmul.f32 %v4957, %v4957
        %v6285 = vmul.f32 %v4824, %v4824
        %v6286 = vmul.f32 %v4960, %v4960
        %v6287 = vmul.f32 %v4826, %v4826
        %v6288 = vmul.f32 %v4962, %v4962
        %v6289 = vmul.f32 %v4829, %v4829
        %v6290 = vmul.f32 %v4965, %v4965
        %v6291 = vmul.f32 %v4831, %v4831
        %v6292 = vmul.f32 %v4967, %v4967
        %v6293 = vmul.f32 %v4834, %v4834
        %v6294 = vmul.f32 %v4970, %v4970
        %v6295 = vmul.f32 %v4836, %v4836
        %v6296 = vmul.f32 %v4972, %v4972
        %v6297 = vmul.f32 %v4839, %v4839
        %v6298 = vmul.f32 %v4975, %v4975
        %v6299 = vmul.f32 %v4841, %v4841
        %v6300 = vmul.f32 %v4977, %v4977
        %v6301 = vmul.f32 %v4844, %v4844
        %v6302 = vmul.f32 %v4980, %v4980
        %v6303 = vmul.f32 %v4846, %v4846
        %v6304 = vmul.f32 %v4982, %v4982
        %v6305 = vmul.f32 %v4849, %v4849
        %v6306 = vmul.f32 %v4985, %v4985
        %v6307 = vmul.f32 %v4851, %v4851
        %v6308 = vmul.f32 %v4987, %v4987
        %v6309 = vmul.f32 %v4854, %v4854
        %v6310 = vmul.f32 %v4990, %v4990
        %v6311 = vmul.f32 %v4856, %v4856
        %v6312 = vmul.f32 %v4992, %v4992
        %v6313 = vmul.f32 %v4859, %v4859
        %v6314 = vmul.f32 %v4995, %v4995
        %v6315 = vmul.f32 %v4861, %v4861
        %v6316 = vmul.f32 %v4997, %v4997
        %v6317 = vmul.f32 %v4864, %v4864
        %v6318 = vmul.f32 %v5000, %v5000
        %v6319 = vmul.f32 %v4866, %v4866
        %v6320 = vmul.f32 %v5002, %v5002
        %v6321 = vmul.f32 %v4869, %v4869
        %v6322 = vmul.f32 %v5005, %v5005
        %v6323 = vmul.f32 %v4871, %v4871
        %v6324 = vmul.f32 %v5007, %v5007
        %v6325 = vmul.f32 %v4874, %v4874
        %v6326 = vmul.f32 %v5010, %v5010
        %v6327 = vsub.f32 %v5603, %v6281
        %v6328 = vsub.f32 %v5739, %v6282
        %v6329 = vsub.f32 %v5605, %v6283
        %v6330 = vsub.f32 %v5741, %v6284
        %v6331 = vsub.f32 %v5608, %v6285
        %v6332 = vsub.f32 %v5744, %v6286
        %v6333 = vsub.f32 %v5610, %v6287
        %v6334 = vsub.f32 %v5746, %v6288
        %v6335 = vsub.f32 %v5613, %v6289
        %v6336 = vsub.f32 %v5749, %v6290
        %v6337 = vsub.f32 %v5615, %v6291
        %v6338 = vsub.f32 %v5751, %v6292
        %v6339 = vsub.f32 %v5618, %v6293
        %v6340 = vsub.f32 %v5754, %v6294
        %v6341 = vsub.f32 %v5620, %v6295
        %v6342 = vsub.f32 %v5756, %v6296
        %v6343 = vsub.f32 %v5623, %v6297
        %v6344 = vsub.f32 %v5759, %v6298
        %v6345 = vsub.f32 %v5625, %v6299
        %v6346 = vsub.f32 %v5761, %v6300
        %v6347 = vsub.f32 %v5628, %v6301
        %v6348 = vsub.f32 %v5764, %v6302
        %v6349 = vsub.f32 %v5630, %v6303
        %v6350 = vsub.f32 %v5766, %v6304
        %v6351 = vsub.f32 %v5633, %v6305
        %v6352 = vsub.f32 %v5769, %v6306
        %v6353 = vsub.f32 %v5635, %v6307
        %v6354 = vsub.f32 %v5771, %v6308
        %v6355 = vsub.f32 %v5638, %v6309
        %v6356 = vsub.f32 %v5774, %v6310
        %v6357 = vsub.f32 %v5640, %v6311
        %v6358 = vsub.f32 %v5776, %v6312
        %v6359 = vsub.f32 %v5643, %v6313
        %v6360 = vsub.f32 %v5779, %v6314
        %v6361 = vsub.f32 %v5645, %v6315
        %v6362 = vsub.f32 %v5781, %v6316
        %v6363 = vsub.f32 %v5648, %v6317
        %v6364 = vsub.f32 %v5784, %v6318
        %v6365 = vsub.f32 %v5650, %v6319
        %v6366 = vsub.f32 %v5786, %v6320
        %v6367 = vsub.f32 %v5653, %v6321
        %v6368 = vsub.f32 %v5789, %v6322
        %v6369 = vsub.f32 %v5655, %v6323
        %v6370 = vsub.f32 %v5791, %v6324
        %v6371 = vsub.f32 %v5658, %v6325
        %v6372 = vsub.f32 %v5794, %v6326
        %v6373 = vmul.f32 %v4427, %v4819
        %v6374 = vmul.f32 %v4563, %v4955
        %v6375 = vmul.f32 %v4429, %v4821
        %v6376 = vmul.f32 %v4565, %v4957
        %v6377 = vmul.f32 %v4432, %v4824
        %v6378 = vmul.f32 %v4568, %v4960
        %v6379 = vmul.f32 %v4434, %v4826
        %v6380 = vmul.f32 %v4570, %v4962
        %v6381 = vmul.f32 %v4437, %v4829
        %v6382 = vmul.f32 %v4573, %v4965
        %v6383 = vmul.f32 %v4439, %v4831
        %v6384 = vmul.f32 %v4575, %v4967
        %v6385 = vmul.f32 %v4442, %v4834
        %v6386 = vmul.f32 %v4578, %v4970
        %v6387 = vmul.f32 %v4444, %v4836
        %v6388 = vmul.f32 %v4580, %v4972
        %v6389 = vmul.f32 %v4447, %v4839
        %v6390 = vmul.f32 %v4583, %v4975
        %v6391 = vmul.f32 %v4449, %v4841
        %v6392 = vmul.f32 %v4585, %v4977
        %v6393 = vmul.f32 %v4452, %v4844
        %v6394 = vmul.f32 %v4588, %v4980
        %v6395 = vmul.f32 %v4454, %v4846
        %v6396 = vmul.f32 %v4590, %v4982
        %v6397 = vmul.f32 %v4457, %v4849
        %v6398 = vmul.f32 %v4593, %v4985
        %v6399 = vmul.f32 %v4459, %v4851
        %v6400 = vmul.f32 %v4595, %v4987
        %v6401 = vmul.f32 %v4462, %v4854
        %v6402 = vmul.f32 %v4598, %v4990
        %v6403 = vmul.f32 %v4464, %v4856
        %v6404 = vmul.f32 %v4600, %v4992
        %v6405 = vmul.f32 %v4467, %v4859
        %v6406 = vmul.f32 %v4603, %v4995
        %v6407 = vmul.f32 %v4469, %v4861
        %v6408 = vmul.f32 %v4605, %v4997
        %v6409 = vmul.f32 %v4472, %v4864
        %v6410 = vmul.f32 %v4608, %v5000
        %v6411 = vmul.f32 %v4474, %v4866
        %v6412 = vmul.f32 %v4610, %v5002
        %v6413 = vmul.f32 %v4477, %v4869
        %v6414 = vmul.f32 %v4613, %v5005
        %v6415 = vmul.f32 %v4479, %v4871
        %v6416 = vmul.f32 %v4615, %v5007
        %v6417 = vmul.f32 %v4482, %v4874
        %v6418 = vmul.f32 %v4618, %v5010
        %v6419 = vsub.f32 %v5995, %v6373
        %v6420 = vsub.f32 %v6131, %v6374
        %v6421 = vsub.f32 %v5997, %v6375
        %v6422 = vsub.f32 %v6133, %v6376
        %v6423 = vsub.f32 %v6000, %v6377
        %v6424 = vsub.f32 %v6136, %v6378
        %v6425 = vsub.f32 %v6002, %v6379
        %v6426 = vsub.f32 %v6138, %v6380
        %v6427 = vsub.f32 %v6005, %v6381
        %v6428 = vsub.f32 %v6141, %v6382
        %v6429 = vsub.f32 %v6007, %v6383
        %v6430 = vsub.f32 %v6143, %v6384
        %v6431 = vsub.f32 %v6010, %v6385
        %v6432 = vsub.f32 %v6146, %v6386
        %v6433 = vsub.f32 %v6012, %v6387
        %v6434 = vsub.f32 %v6148, %v6388
        %v6435 = vsub.f32 %v6015, %v6389
        %v6436 = vsub.f32 %v6151, %v6390
        %v6437 = vsub.f32 %v6017, %v6391
        %v6438 = vsub.f32 %v6153, %v6392
        %v6439 = vsub.f32 %v6020, %v6393
        %v6440 = vsub.f32 %v6156, %v6394
        %v6441 = vsub.f32 %v6022, %v6395
        %v6442 = vsub.f32 %v6158, %v6396
        %v6443 = vsub.f32 %v6025, %v6397
        %v6444 = vsub.f32 %v6161, %v6398
        %v6445 = vsub.f32 %v6027, %v6399
        %v6446 = vsub.f32 %v6163, %v6400
        %v6447 = vsub.f32 %v6030, %v6401
        %v6448 = vsub.f32 %v6166, %v6402
        %v6449 = vsub.f32 %v6032, %v6403
        %v6450 = vsub.f32 %v6168, %v6404
        %v6451 = vsub.f32 %v6035, %v6405
        %v6452 = vsub.f32 %v6171, %v6406
        %v6453 = vsub.f32 %v6037, %v6407
        %v6454 = vsub.f32 %v6173, %v6408
        %v6455 = vsub.f32 %v6040, %v6409
        %v6456 = vsub.f32 %v6176, %v6410
        %v6457 = vsub.f32 %v6042, %v6411
        %v6458 = vsub.f32 %v6178, %v6412
        %v6459 = vsub.f32 %v6045, %v6413
        %v6460 = vsub.f32 %v6181, %v6414
        %v6461 = vsub.f32 %v6047, %v6415
        %v6462 = vsub.f32 %v6183, %v6416
        %v6463 = vsub.f32 %v6050, %v6417
        %v6464 = vsub.f32 %v6186, %v6418
        %v6465 = vmul.f32 %v6419, 2.0
        %v6466 = vmul.f32 %v6420, 2.0
        %v6467 = vmul.f32 %v6421, 2.0
        %v6468 = vmul.f32 %v6422, 2.0
        %v6469 = vmul.f32 %v6423, 2.0
        %v6470 = vmul.f32 %v6424, 2.0
        %v6471 = vmul.f32 %v6425, 2.0
        %v6472 = vmul.f32 %v6426, 2.0
        %v6473 = vmul.f32 %v6427, 2.0
        %v6474 = vmul.f32 %v6428, 2.0
        %v6475 = vmul.f32 %v6429, 2.0
        %v6476 = vmul.f32 %v6430, 2.0
        %v6477 = vmul.f32 %v6431, 2.0
        %v6478 = vmul.f32 %v6432, 2.0
        %v6479 = vmul.f32 %v6433, 2.0
        %v6480 = vmul.f32 %v6434, 2.0
        %v6481 = vmul.f32 %v6435, 2.0
        %v6482 = vmul.f32 %v6436, 2.0
        %v6483 = vmul.f32 %v6437, 2.0
        %v6484 = vmul.f32 %v6438, 2.0
        %v6485 = vmul.f32 %v6439, 2.0
        %v6486 = vmul.f32 %v6440, 2.0
        %v6487 = vmul.f32 %v6441, 2.0
        %v6488 = vmul.f32 %v6442, 2.0
        %v6489 = vmul.f32 %v6443, 2.0
        %v6490 = vmul.f32 %v6444, 2.0
        %v6491 = vmul.f32 %v6445, 2.0
        %v6492 = vmul.f32 %v6446, 2.0
        %v6493 = vmul.f32 %v6447, 2.0
        %v6494 = vmul.f32 %v6448, 2.0
        %v6495 = vmul.f32 %v6449, 2.0
        %v6496 = vmul.f32 %v6450, 2.0
        %v6497 = vmul.f32 %v6451, 2.0
        %v6498 = vmul.f32 %v6452, 2.0
        %v6499 = vmul.f32 %v6453, 2.0
        %v6500 = vmul.f32 %v6454, 2.0
        %v6501 = vmul.f32 %v6455, 2.0
        %v6502 = vmul.f32 %v6456, 2.0
        %v6503 = vmul.f32 %v6457, 2.0
        %v6504 = vmul.f32 %v6458, 2.0
        %v6505 = vmul.f32 %v6459, 2.0
        %v6506 = vmul.f32 %v6460, 2.0
        %v6507 = vmul.f32 %v6461, 2.0
        %v6508 = vmul.f32 %v6462, 2.0
        %v6509 = vmul.f32 %v6463, 2.0
        %v6510 = vmul.f32 %v6464, 2.0
        %v6511 = vadd.f32 %v6465, 0.0009
        %v6512 = vadd.f32 %v6466, 0.0009
        %v6513 = vadd.f32 %v6467, 0.0009
        %v6514 = vadd.f32 %v6468, 0.0009
        %v6515 = vadd.f32 %v6469, 0.0009
        %v6516 = vadd.f32 %v6470, 0.0009
        %v6517 = vadd.f32 %v6471, 0.0009
        %v6518 = vadd.f32 %v6472, 0.0009
        %v6519 = vadd.f32 %v6473, 0.0009
        %v6520 = vadd.f32 %v6474, 0.0009
        %v6521 = vadd.f32 %v6475, 0.0009
        %v6522 = vadd.f32 %v6476, 0.0009
        %v6523 = vadd.f32 %v6477, 0.0009
        %v6524 = vadd.f32 %v6478, 0.0009
        %v6525 = vadd.f32 %v6479, 0.0009
        %v6526 = vadd.f32 %v6480, 0.0009
        %v6527 = vadd.f32 %v6481, 0.0009
        %v6528 = vadd.f32 %v6482, 0.0009
        %v6529 = vadd.f32 %v6483, 0.0009
        %v6530 = vadd.f32 %v6484, 0.0009
        %v6531 = vadd.f32 %v6485, 0.0009
        %v6532 = vadd.f32 %v6486, 0.0009
        %v6533 = vadd.f32 %v6487, 0.0009
        %v6534 = vadd.f32 %v6488, 0.0009
        %v6535 = vadd.f32 %v6489, 0.0009
        %v6536 = vadd.f32 %v6490, 0.0009
        %v6537 = vadd.f32 %v6491, 0.0009
        %v6538 = vadd.f32 %v6492, 0.0009
        %v6539 = vadd.f32 %v6493, 0.0009
        %v6540 = vadd.f32 %v6494, 0.0009
        %v6541 = vadd.f32 %v6495, 0.0009
        %v6542 = vadd.f32 %v6496, 0.0009
        %v6543 = vadd.f32 %v6497, 0.0009
        %v6544 = vadd.f32 %v6498, 0.0009
        %v6545 = vadd.f32 %v6499, 0.0009
        %v6546 = vadd.f32 %v6500, 0.0009
        %v6547 = vadd.f32 %v6501, 0.0009
        %v6548 = vadd.f32 %v6502, 0.0009
        %v6549 = vadd.f32 %v6503, 0.0009
        %v6550 = vadd.f32 %v6504, 0.0009
        %v6551 = vadd.f32 %v6505, 0.0009
        %v6552 = vadd.f32 %v6506, 0.0009
        %v6553 = vadd.f32 %v6507, 0.0009
        %v6554 = vadd.f32 %v6508, 0.0009
        %v6555 = vadd.f32 %v6509, 0.0009
        %v6556 = vadd.f32 %v6510, 0.0009
        %v6557 = vadd.f32 %v6235, %v6327
        %v6558 = vadd.f32 %v6236, %v6328
        %v6559 = vadd.f32 %v6237, %v6329
        %v6560 = vadd.f32 %v6238, %v6330
        %v6561 = vadd.f32 %v6239, %v6331
        %v6562 = vadd.f32 %v6240, %v6332
        %v6563 = vadd.f32 %v6241, %v6333
        %v6564 = vadd.f32 %v6242, %v6334
        %v6565 = vadd.f32 %v6243, %v6335
        %v6566 = vadd.f32 %v6244, %v6336
        %v6567 = vadd.f32 %v6245, %v6337
        %v6568 = vadd.f32 %v6246, %v6338
        %v6569 = vadd.f32 %v6247, %v6339
        %v6570 = vadd.f32 %v6248, %v6340
        %v6571 = vadd.f32 %v6249, %v6341
        %v6572 = vadd.f32 %v6250, %v6342
        %v6573 = vadd.f32 %v6251, %v6343
        %v6574 = vadd.f32 %v6252, %v6344
        %v6575 = vadd.f32 %v6253, %v6345
        %v6576 = vadd.f32 %v6254, %v6346
        %v6577 = vadd.f32 %v6255, %v6347
        %v6578 = vadd.f32 %v6256, %v6348
        %v6579 = vadd.f32 %v6257, %v6349
        %v6580 = vadd.f32 %v6258, %v6350
        %v6581 = vadd.f32 %v6259, %v6351
        %v6582 = vadd.f32 %v6260, %v6352
        %v6583 = vadd.f32 %v6261, %v6353
        %v6584 = vadd.f32 %v6262, %v6354
        %v6585 = vadd.f32 %v6263, %v6355
        %v6586 = vadd.f32 %v6264, %v6356
        %v6587 = vadd.f32 %v6265, %v6357
        %v6588 = vadd.f32 %v6266, %v6358
        %v6589 = vadd.f32 %v6267, %v6359
        %v6590 = vadd.f32 %v6268, %v6360
        %v6591 = vadd.f32 %v6269, %v6361
        %v6592 = vadd.f32 %v6270, %v6362
        %v6593 = vadd.f32 %v6271, %v6363
        %v6594 = vadd.f32 %v6272, %v6364
        %v6595 = vadd.f32 %v6273, %v6365
        %v6596 = vadd.f32 %v6274, %v6366
        %v6597 = vadd.f32 %v6275, %v6367
        %v6598 = vadd.f32 %v6276, %v6368
        %v6599 = vadd.f32 %v6277, %v6369
        %v6600 = vadd.f32 %v6278, %v6370
        %v6601 = vadd.f32 %v6279, %v6371
        %v6602 = vadd.f32 %v6280, %v6372
        %v6603 = vadd.f32 %v6557, 0.0009
        %v6604 = vadd.f32 %v6558, 0.0009
        %v6605 = vadd.f32 %v6559, 0.0009
        %v6606 = vadd.f32 %v6560, 0.0009
        %v6607 = vadd.f32 %v6561, 0.0009
        %v6608 = vadd.f32 %v6562, 0.0009
        %v6609 = vadd.f32 %v6563, 0.0009
        %v6610 = vadd.f32 %v6564, 0.0009
        %v6611 = vadd.f32 %v6565, 0.0009
        %v6612 = vadd.f32 %v6566, 0.0009
        %v6613 = vadd.f32 %v6567, 0.0009
        %v6614 = vadd.f32 %v6568, 0.0009
        %v6615 = vadd.f32 %v6569, 0.0009
        %v6616 = vadd.f32 %v6570, 0.0009
        %v6617 = vadd.f32 %v6571, 0.0009
        %v6618 = vadd.f32 %v6572, 0.0009
        %v6619 = vadd.f32 %v6573, 0.0009
        %v6620 = vadd.f32 %v6574, 0.0009
        %v6621 = vadd.f32 %v6575, 0.0009
        %v6622 = vadd.f32 %v6576, 0.0009
        %v6623 = vadd.f32 %v6577, 0.0009
        %v6624 = vadd.f32 %v6578, 0.0009
        %v6625 = vadd.f32 %v6579, 0.0009
        %v6626 = vadd.f32 %v6580, 0.0009
        %v6627 = vadd.f32 %v6581, 0.0009
        %v6628 = vadd.f32 %v6582, 0.0009
        %v6629 = vadd.f32 %v6583, 0.0009
        %v6630 = vadd.f32 %v6584, 0.0009
        %v6631 = vadd.f32 %v6585, 0.0009
        %v6632 = vadd.f32 %v6586, 0.0009
        %v6633 = vadd.f32 %v6587, 0.0009
        %v6634 = vadd.f32 %v6588, 0.0009
        %v6635 = vadd.f32 %v6589, 0.0009
        %v6636 = vadd.f32 %v6590, 0.0009
        %v6637 = vadd.f32 %v6591, 0.0009
        %v6638 = vadd.f32 %v6592, 0.0009
        %v6639 = vadd.f32 %v6593, 0.0009
        %v6640 = vadd.f32 %v6594, 0.0009
        %v6641 = vadd.f32 %v6595, 0.0009
        %v6642 = vadd.f32 %v6596, 0.0009
        %v6643 = vadd.f32 %v6597, 0.0009
        %v6644 = vadd.f32 %v6598, 0.0009
        %v6645 = vadd.f32 %v6599, 0.0009
        %v6646 = vadd.f32 %v6600, 0.0009
        %v6647 = vadd.f32 %v6601, 0.0009
        %v6648 = vadd.f32 %v6602, 0.0009
        %v6649 = vrcp.pop %v6603
        %v6650 = vrcp.pop %v6604
        %v6651 = vrcp.pop %v6605
        %v6652 = vrcp.pop %v6606
        %v6653 = vrcp.pop %v6607
        %v6654 = vrcp.pop %v6608
        %v6655 = vrcp.pop %v6609
        %v6656 = vrcp.pop %v6610
        %v6657 = vrcp.pop %v6611
        %v6658 = vrcp.pop %v6612
        %v6659 = vrcp.pop %v6613
        %v6660 = vrcp.pop %v6614
        %v6661 = vrcp.pop %v6615
        %v6662 = vrcp.pop %v6616
        %v6663 = vrcp.pop %v6617
        %v6664 = vrcp.pop %v6618
        %v6665 = vrcp.pop %v6619
        %v6666 = vrcp.pop %v6620
        %v6667 = vrcp.pop %v6621
        %v6668 = vrcp.pop %v6622
        %v6669 = vrcp.pop %v6623
        %v6670 = vrcp.pop %v6624
        %v6671 = vrcp.pop %v6625
        %v6672 = vrcp.pop %v6626
        %v6673 = vrcp.pop %v6627
        %v6674 = vrcp.pop %v6628
        %v6675 = vrcp.pop %v6629
        %v6676 = vrcp.pop %v6630
        %v6677 = vrcp.pop %v6631
        %v6678 = vrcp.pop %v6632
        %v6679 = vrcp.pop %v6633
        %v6680 = vrcp.pop %v6634
        %v6681 = vrcp.pop %v6635
        %v6682 = vrcp.pop %v6636
        %v6683 = vrcp.pop %v6637
        %v6684 = vrcp.pop %v6638
        %v6685 = vrcp.pop %v6639
        %v6686 = vrcp.pop %v6640
        %v6687 = vrcp.pop %v6641
        %v6688 = vrcp.pop %v6642
        %v6689 = vrcp.pop %v6643
        %v6690 = vrcp.pop %v6644
        %v6691 = vrcp.pop %v6645
        %v6692 = vrcp.pop %v6646
        %v6693 = vrcp.pop %v6647
        %v6694 = vrcp.pop %v6648
        %v6695 = vmul.f32 %v6511, %v6649
        %v6696 = vmul.f32 %v6512, %v6650
        %v6697 = vmul.f32 %v6513, %v6651
        %v6698 = vmul.f32 %v6514, %v6652
        %v6699 = vmul.f32 %v6515, %v6653
        %v6700 = vmul.f32 %v6516, %v6654
        %v6701 = vmul.f32 %v6517, %v6655
        %v6702 = vmul.f32 %v6518, %v6656
        %v6703 = vmul.f32 %v6519, %v6657
        %v6704 = vmul.f32 %v6520, %v6658
        %v6705 = vmul.f32 %v6521, %v6659
        %v6706 = vmul.f32 %v6522, %v6660
        %v6707 = vmul.f32 %v6523, %v6661
        %v6708 = vmul.f32 %v6524, %v6662
        %v6709 = vmul.f32 %v6525, %v6663
        %v6710 = vmul.f32 %v6526, %v6664
        %v6711 = vmul.f32 %v6527, %v6665
        %v6712 = vmul.f32 %v6528, %v6666
        %v6713 = vmul.f32 %v6529, %v6667
        %v6714 = vmul.f32 %v6530, %v6668
        %v6715 = vmul.f32 %v6531, %v6669
        %v6716 = vmul.f32 %v6532, %v6670
        %v6717 = vmul.f32 %v6533, %v6671
        %v6718 = vmul.f32 %v6534, %v6672
        %v6719 = vmul.f32 %v6535, %v6673
        %v6720 = vmul.f32 %v6536, %v6674
        %v6721 = vmul.f32 %v6537, %v6675
        %v6722 = vmul.f32 %v6538, %v6676
        %v6723 = vmul.f32 %v6539, %v6677
        %v6724 = vmul.f32 %v6540, %v6678
        %v6725 = vmul.f32 %v6541, %v6679
        %v6726 = vmul.f32 %v6542, %v6680
        %v6727 = vmul.f32 %v6543, %v6681
        %v6728 = vmul.f32 %v6544, %v6682
        %v6729 = vmul.f32 %v6545, %v6683
        %v6730 = vmul.f32 %v6546, %v6684
        %v6731 = vmul.f32 %v6547, %v6685
        %v6732 = vmul.f32 %v6548, %v6686
        %v6733 = vmul.f32 %v6549, %v6687
        %v6734 = vmul.f32 %v6550, %v6688
        %v6735 = vmul.f32 %v6551, %v6689
        %v6736 = vmul.f32 %v6552, %v6690
        %v6737 = vmul.f32 %v6553, %v6691
        %v6738 = vmul.f32 %v6554, %v6692
        %v6739 = vmul.f32 %v6555, %v6693
        %v6740 = vmul.f32 %v6556, %v6694
        %vm6741 = vcmask 441344
        %v6742 = vsel %vm6741, %v6696, 0.0
        %v6743 = vadd.f32 %v6695, %v6742
        %v6744 = vadd.f32 %v6743, %v6697
        %v6745 = vsel %vm6741, %v6698, 0.0
        %v6746 = vadd.f32 %v6744, %v6745
        %v6747 = vadd.f32 %v6746, %v6699
        %v6748 = vsel %vm6741, %v6700, 0.0
        %v6749 = vadd.f32 %v6747, %v6748
        %v6750 = vadd.f32 %v6749, %v6701
        %v6751 = vsel %vm6741, %v6702, 0.0
        %v6752 = vadd.f32 %v6750, %v6751
        %v6753 = vadd.f32 %v6752, %v6703
        %v6754 = vsel %vm6741, %v6704, 0.0
        %v6755 = vadd.f32 %v6753, %v6754
        %v6756 = vadd.f32 %v6755, %v6705
        %v6757 = vsel %vm6741, %v6706, 0.0
        %v6758 = vadd.f32 %v6756, %v6757
        %v6759 = vadd.f32 %v6758, %v6707
        %v6760 = vsel %vm6741, %v6708, 0.0
        %v6761 = vadd.f32 %v6759, %v6760
        %v6762 = vadd.f32 %v6761, %v6709
        %v6763 = vsel %vm6741, %v6710, 0.0
        %v6764 = vadd.f32 %v6762, %v6763
        %v6765 = vadd.f32 %v6764, %v6711
        %v6766 = vsel %vm6741, %v6712, 0.0
        %v6767 = vadd.f32 %v6765, %v6766
        %v6768 = vadd.f32 %v6767, %v6713
        %v6769 = vsel %vm6741, %v6714, 0.0
        %v6770 = vadd.f32 %v6768, %v6769
        %v6771 = vadd.f32 %v6770, %v6715
        %v6772 = vsel %vm6741, %v6716, 0.0
        %v6773 = vadd.f32 %v6771, %v6772
        %v6774 = vadd.f32 %v6773, %v6717
        %v6775 = vsel %vm6741, %v6718, 0.0
        %v6776 = vadd.f32 %v6774, %v6775
        %v6777 = vadd.f32 %v6776, %v6719
        %v6778 = vsel %vm6741, %v6720, 0.0
        %v6779 = vadd.f32 %v6777, %v6778
        %v6780 = vadd.f32 %v6779, %v6721
        %v6781 = vsel %vm6741, %v6722, 0.0
        %v6782 = vadd.f32 %v6780, %v6781
        %v6783 = vadd.f32 %v6782, %v6723
        %v6784 = vsel %vm6741, %v6724, 0.0
        %v6785 = vadd.f32 %v6783, %v6784
        %v6786 = vadd.f32 %v6785, %v6725
        %v6787 = vsel %vm6741, %v6726, 0.0
        %v6788 = vadd.f32 %v6786, %v6787
        %v6789 = vadd.f32 %v6788, %v6727
        %v6790 = vsel %vm6741, %v6728, 0.0
        %v6791 = vadd.f32 %v6789, %v6790
        %v6792 = vadd.f32 %v6791, %v6729
        %v6793 = vsel %vm6741, %v6730, 0.0
        %v6794 = vadd.f32 %v6792, %v6793
        %v6795 = vadd.f32 %v6794, %v6731
        %v6796 = vsel %vm6741, %v6732, 0.0
        %v6797 = vadd.f32 %v6795, %v6796
        %v6798 = vadd.f32 %v6797, %v6733
        %v6799 = vsel %vm6741, %v6734, 0.0
        %v6800 = vadd.f32 %v6798, %v6799
        %v6801 = vadd.f32 %v6800, %v6735
        %v6802 = vsel %vm6741, %v6736, 0.0
        %v6803 = vadd.f32 %v6801, %v6802
        %v6804 = vadd.f32 %v6803, %v6737
        %v6805 = vsel %vm6741, %v6738, 0.0
        %v6806 = vadd.f32 %v6804, %v6805
        %vm6807 = vcmask 1045504
        %v6808 = vsel %vm6807, %v6739, 0.0
        %v6809 = vadd.f32 %v6806, %v6808
        %vm6810 = vcmask 439296
        %v6811 = vsel %vm6810, %v6740, 0.0
        %v6812 = vadd.f32 %v6809, %v6811
        %6813 = vadd.xlane.f32.xlu0 %v6812
        %v6814 = vpop.xlane.xlu0 %6813
        %v6815 = vrot.slane %v6814, 4
        %v6816 = vadd.f32 %v6814, %v6815
        %v6817 = vrot.slane %v6816, 2
        %v6818 = vadd.f32 %v6816, %v6817
        %v6819 = vrot.slane %v6818, 1
        %v6820 = vadd.f32 %v6818, %v6819
        %s6821 = vtos %v6820
        %v6822 = vrcp.pop 33124.0
        %v6823 = vmul.f32 33124.0, %v6822
        %v6824 = vsub.f32 1.0, %v6823
        %v6825 = vmul.f32 %v6822, %v6824
        %v6826 = vadd.f32 %v6822, %v6825
        %vm6827 = vweird.f32 %v6822
        %v6828 = vsel %vm6827, %v6822, %v6826
        %s6829 = vtos %v6828
        %s6830 = smul.f32 %s6821, %s6829
        %s6831 = smax.f32 %s6830, 0.0
        %vm6832 = vcmp.eq.s32.totalorder %v1009, 0
        %v6833 = vstv %s6831
        %v6834 = vsel %vm6832, %v6833, 0.0
        %v6835 = vld [vmem:[#allocation21] sm:$0xff]
        %v6836 = vld [vmem:[#allocation21 + $0x8] sm:$0xff]
        %v6837 = vld [vmem:[#allocation21 + $0x10] sm:$0xff]
        %v6838 = vld [vmem:[#allocation21 + $0x18] sm:$0xff]
        %v6839 = vld [vmem:[#allocation21 + $0x20] sm:$0xff]
        %v6840 = vld [vmem:[#allocation21 + $0x28] sm:$0xff]
        %v6841 = vld [vmem:[#allocation21 + $0x30] sm:$0xff]
        %v6842 = vld [vmem:[#allocation21 + $0x38] sm:$0xff]
        %v6843 = vld [vmem:[#allocation21 + $0x40] sm:$0xff]
        %v6844 = vld [vmem:[#allocation21 + $0x48] sm:$0xff]
        %v6845 = vld [vmem:[#allocation21 + $0x50] sm:$0xff]
        %v6846 = vld [vmem:[#allocation21 + $0x58] sm:$0xff]
        %v6847 = vpack.c.bf16 %v3741, %v3195
        %v6848 = vpack.c.bf16 %v3743, %v3197
        %v6849 = vpack.c.bf16 %v3746, %v3200
        %v6850 = vpack.c.bf16 %v3748, %v3202
        %v6851 = vpack.c.bf16 %v3751, %v3205
        %v6852 = vpack.c.bf16 %v3753, %v3207
        %v6853 = vpack.c.bf16 %v3756, %v3210
        %v6854 = vpack.c.bf16 %v3758, %v3212
        %v6855 = vpack.c.bf16 %v3761, %v3215
        %v6856 = vpack.c.bf16 %v3763, %v3217
        %v6857 = vpack.c.bf16 %v3766, %v3220
        %v6858 = vpack.c.bf16 %v3768, %v3222
        %v6859 = vpack.c.bf16 %v3771, %v3225
        %v6860 = vpack.c.bf16 %v3773, %v3227
        %v6861 = vpack.c.bf16 %v3776, %v3230
        %v6862 = vpack.c.bf16 %v3778, %v3232
        %v6863 = vpack.c.bf16 %v3781, %v3235
        %v6864 = vpack.c.bf16 %v3783, %v3237
        %v6865 = vpack.c.bf16 %v3786, %v3240
        %v6866 = vpack.c.bf16 %v3788, %v3242
        %v6867 = vpack.c.bf16 %v3791, %v3245
        %v6868 = vpack.c.bf16 %v3793, %v3247
        %v6869 = vpack.c.bf16 %v3796, %v3250
        %v6870 = vpack.c.bf16 %v3798, %v3252
        %v6871 = vpack.c.bf16 %v3801, %v3255
        %v6872 = vpack.c.bf16 %v3803, %v3257
        %v6873 = vpack.c.bf16 %v3806, %v3260
        %v6874 = vpack.c.bf16 %v3808, %v3262
        %v6875 = vpack.c.bf16 %v3811, %v3265
        %v6876 = vpack.c.bf16 %v3813, %v3267
        %v6877 = vpack.c.bf16 %v3816, %v3270
        %v6878 = vpack.c.bf16 %v3818, %v3272
        %v6879 = vpack.c.bf16 %v3821, %v3275
        %v6880 = vpack.c.bf16 %v3823, %v3277
        %v6881 = vpack.c.bf16 %v3826, %v3280
        %v6882 = vpack.c.bf16 %v3828, %v3282
        %v6883 = vpack.c.bf16 %v3831, %v3285
        %v6884 = vpack.c.bf16 %v3833, %v3287
        %v6885 = vpack.c.bf16 %v3836, %v3290
        %v6886 = vpack.c.bf16 %v3838, %v3292
        %v6887 = vpack.c.bf16 %v3841, %v3295
        %v6888 = vpack.c.bf16 %v3843, %v3297
        %v6889 = vpack.c.bf16 %v3846, %v3300
        %v6890 = vpack.c.bf16 %v3848, %v3302
        %v6891 = vpack.c.bf16 %v3851, %v3305
        %v6892 = vpack.c.bf16 %v3853, %v3307
        %v6893 = vpack.c.bf16 %v3856, %v3310
        %v6894 = vpack.c.bf16 %v3858, %v3312
        %v6907 = vunpack.c.l.b16 %v6835
        %v6908 = vunpack.c.h.b16 %v6835
        %v6909 = vunpack.c.l.b16 %v6836
        %v6910 = vunpack.c.h.b16 %v6836
        %v6911 = vunpack.c.l.b16 %v6837
        %v6912 = vunpack.c.h.b16 %v6837
        %v6913 = vunpack.c.l.b16 %v6838
        %v6914 = vunpack.c.h.b16 %v6838
        %v6915 = vunpack.c.l.b16 %v6839
        %v6916 = vunpack.c.h.b16 %v6839
        %v6917 = vunpack.c.l.b16 %v6840
        %v6918 = vunpack.c.h.b16 %v6840
        %v6919 = vunpack.c.l.b16 %v6841
        %v6920 = vunpack.c.h.b16 %v6841
        %v6921 = vunpack.c.l.b16 %v6842
        %v6922 = vunpack.c.h.b16 %v6842
        %v6923 = vunpack.c.l.b16 %v6843
        %v6924 = vunpack.c.h.b16 %v6843
        %v6925 = vunpack.c.l.b16 %v6844
        %v6926 = vunpack.c.h.b16 %v6844
        %v6927 = vunpack.c.l.b16 %v6845
        %v6928 = vunpack.c.h.b16 %v6845
        %v6929 = vunpack.c.l.b16 %v6846
        %v6930 = vunpack.c.h.b16 %v6846
        %v6931 = vpack.c.b16 %v6909, %v6907
        %v6932 = vpack.c.b16 %v6910, %v6908
        %v6933 = vpack.c.b16 %v6913, %v6911
        %v6934 = vpack.c.b16 %v6914, %v6912
        %v6935 = vpack.c.b16 %v6917, %v6915
        %v6936 = vpack.c.b16 %v6918, %v6916
        %v6937 = vpack.c.b16 %v6921, %v6919
        %v6938 = vpack.c.b16 %v6922, %v6920
        %v6939 = vpack.c.b16 %v6925, %v6923
        %v6940 = vpack.c.b16 %v6926, %v6924
        %v6941 = vpack.c.b16 %v6929, %v6927
        %v6942 = vpack.c.b16 %v6930, %v6928
        %v6973 = vunpack.c.l.b16 %v6847
        %v6974 = vunpack.c.h.b16 %v6847
        %v6975 = vunpack.c.l.b16 %v6848
        %v6976 = vunpack.c.h.b16 %v6848
        %v6977 = vunpack.c.l.b16 %v6849
        %v6978 = vunpack.c.h.b16 %v6849
        %v6979 = vunpack.c.l.b16 %v6850
        %v6980 = vunpack.c.h.b16 %v6850
        %v6981 = vunpack.c.l.b16 %v6851
        %v6982 = vunpack.c.h.b16 %v6851
        %v6983 = vunpack.c.l.b16 %v6852
        %v6984 = vunpack.c.h.b16 %v6852
        %v6985 = vunpack.c.l.b16 %v6853
        %v6986 = vunpack.c.h.b16 %v6853
        %v6987 = vunpack.c.l.b16 %v6854
        %v6988 = vunpack.c.h.b16 %v6854
        %v6989 = vunpack.c.l.b16 %v6855
        %v6990 = vunpack.c.h.b16 %v6855
        %v6991 = vunpack.c.l.b16 %v6856
        %v6992 = vunpack.c.h.b16 %v6856
        %v6993 = vunpack.c.l.b16 %v6857
        %v6994 = vunpack.c.h.b16 %v6857
        %v6995 = vunpack.c.l.b16 %v6858
        %v6996 = vunpack.c.h.b16 %v6858
        %v6997 = vunpack.c.l.b16 %v6859
        %v6998 = vunpack.c.h.b16 %v6859
        %v6999 = vunpack.c.l.b16 %v6860
        %v7000 = vunpack.c.h.b16 %v6860
        %v7001 = vunpack.c.l.b16 %v6861
        %v7002 = vunpack.c.h.b16 %v6861
        %v7003 = vunpack.c.l.b16 %v6862
        %v7004 = vunpack.c.h.b16 %v6862
        %v7005 = vunpack.c.l.b16 %v6863
        %v7006 = vunpack.c.h.b16 %v6863
        %v7007 = vunpack.c.l.b16 %v6864
        %v7008 = vunpack.c.h.b16 %v6864
        %v7009 = vunpack.c.l.b16 %v6865
        %v7010 = vunpack.c.h.b16 %v6865
        %v7011 = vunpack.c.l.b16 %v6866
        %v7012 = vunpack.c.h.b16 %v6866
        %v7013 = vunpack.c.l.b16 %v6867
        %v7014 = vunpack.c.h.b16 %v6867
        %v7015 = vunpack.c.l.b16 %v6868
        %v7016 = vunpack.c.h.b16 %v6868
        %v7017 = vunpack.c.l.b16 %v6869
        %v7018 = vunpack.c.h.b16 %v6869
        %v7019 = vunpack.c.l.b16 %v6870
        %v7020 = vunpack.c.h.b16 %v6870
        %v7021 = vpack.c.b16 %v6975, %v6973
        %v7022 = vpack.c.b16 %v6976, %v6974
        %v7023 = vpack.c.b16 %v6979, %v6977
        %v7024 = vpack.c.b16 %v6980, %v6978
        %v7025 = vpack.c.b16 %v6983, %v6981
        %v7026 = vpack.c.b16 %v6984, %v6982
        %v7027 = vpack.c.b16 %v6987, %v6985
        %v7028 = vpack.c.b16 %v6988, %v6986
        %v7029 = vpack.c.b16 %v6991, %v6989
        %v7030 = vpack.c.b16 %v6992, %v6990
        %v7031 = vpack.c.b16 %v6995, %v6993
        %v7032 = vpack.c.b16 %v6996, %v6994
        %v7033 = vpack.c.b16 %v6999, %v6997
        %v7034 = vpack.c.b16 %v7000, %v6998
        %v7035 = vpack.c.b16 %v7003, %v7001
        %v7036 = vpack.c.b16 %v7004, %v7002
        %v7037 = vpack.c.b16 %v7007, %v7005
        %v7038 = vpack.c.b16 %v7008, %v7006
        %v7039 = vpack.c.b16 %v7011, %v7009
        %v7040 = vpack.c.b16 %v7012, %v7010
        %v7041 = vpack.c.b16 %v7015, %v7013
        %v7042 = vpack.c.b16 %v7016, %v7014
        %v7043 = vpack.c.b16 %v7019, %v7017
        %v7044 = vpack.c.b16 %v7020, %v7018
        %7045 = vrot.lane.b32.xlu0 %v7021, 74
        %v7046 = vpop.permute.xlu0 %7045
        %7047 = vrot.lane.b32.xlu0 %v7022, 74
        %v7048 = vpop.permute.xlu0 %7047
        %7049 = vrot.lane.b32.xlu0 %v7023, 74
        %v7050 = vpop.permute.xlu0 %7049
        %7051 = vrot.lane.b32.xlu0 %v7024, 74
        %v7052 = vpop.permute.xlu0 %7051
        %7053 = vrot.lane.b32.xlu0 %v7025, 74
        %v7054 = vpop.permute.xlu0 %7053
        %7055 = vrot.lane.b32.xlu0 %v7026, 74
        %v7056 = vpop.permute.xlu0 %7055
        %7057 = vrot.lane.b32.xlu0 %v7027, 74
        %v7058 = vpop.permute.xlu0 %7057
        %7059 = vrot.lane.b32.xlu0 %v7028, 74
        %v7060 = vpop.permute.xlu0 %7059
        %7061 = vrot.lane.b32.xlu0 %v7029, 74
        %v7062 = vpop.permute.xlu0 %7061
        %7063 = vrot.lane.b32.xlu0 %v7030, 74
        %v7064 = vpop.permute.xlu0 %7063
        %7065 = vrot.lane.b32.xlu0 %v7031, 74
        %v7066 = vpop.permute.xlu0 %7065
        %7067 = vrot.lane.b32.xlu0 %v7032, 74
        %v7068 = vpop.permute.xlu0 %7067
        %7069 = vrot.lane.b32.xlu0 %v7033, 74
        %v7070 = vpop.permute.xlu0 %7069
        %7071 = vrot.lane.b32.xlu0 %v7034, 74
        %v7072 = vpop.permute.xlu0 %7071
        %7073 = vrot.lane.b32.xlu0 %v7035, 74
        %v7074 = vpop.permute.xlu0 %7073
        %7075 = vrot.lane.b32.xlu0 %v7036, 74
        %v7076 = vpop.permute.xlu0 %7075
        %7077 = vrot.lane.b32.xlu0 %v7037, 74
        %v7078 = vpop.permute.xlu0 %7077
        %7079 = vrot.lane.b32.xlu0 %v7038, 74
        %v7080 = vpop.permute.xlu0 %7079
        %7081 = vrot.lane.b32.xlu0 %v7039, 74
        %v7082 = vpop.permute.xlu0 %7081
        %7083 = vrot.lane.b32.xlu0 %v7040, 74
        %v7084 = vpop.permute.xlu0 %7083
        %7085 = vrot.lane.b32.xlu0 %v7041, 74
        %v7086 = vpop.permute.xlu0 %7085
        %7087 = vrot.lane.b32.xlu0 %v7042, 74
        %v7088 = vpop.permute.xlu0 %7087
        %7089 = vrot.lane.b32.xlu0 %v7043, 74
        %v7090 = vpop.permute.xlu0 %7089
        %7091 = vrot.lane.b32.xlu0 %v7044, 74
        %v7092 = vpop.permute.xlu0 %7091
        %vm7093 = vcmask 605184
        %v7094 = vsel %vm7093, %v7046, %v7048
        %v7095 = vsel %vm7093, %v7050, %v7052
        %v7096 = vsel %vm7093, %v7054, %v7056
        %v7097 = vsel %vm7093, %v7058, %v7060
        %v7098 = vsel %vm7093, %v7062, %v7064
        %v7099 = vsel %vm7093, %v7066, %v7068
        %v7100 = vsel %vm7093, %v7070, %v7072
        %v7101 = vsel %vm7093, %v7074, %v7076
        %v7102 = vsel %vm7093, %v7078, %v7080
        %v7103 = vsel %vm7093, %v7082, %v7084
        %v7104 = vsel %vm7093, %v7086, %v7088
        %v7105 = vsel %vm7093, %v7090, %v7092
        %v7119 = vsel %vm2077, %v6932, 0
        %v7122 = vsel %vm2077, %v6934, 0
        %v7125 = vsel %vm2077, %v6936, 0
        %v7128 = vsel %vm2077, %v6938, 0
        %v7131 = vsel %vm2077, %v6940, 0
        %v7134 = vsel %vm2077, %v6942, 0
        %7136 = vmatpush.bf16.msra.mxu0 %v7101
        %7137 = vmatpush.bf16.msra.mxu0 %v7100
        %7138 = vmatpush.bf16.msra.mxu0 %v7099
        %7139 = vmatpush.bf16.msra.mxu0 %v7098
        %7140 = vmatpush.bf16.msra.mxu0 %v7097
        %7141 = vmatpush.bf16.msra.mxu0 %v7096
        %7142 = vmatpush.bf16.msra.mxu0 %v7095
        %7143 = vmatpush.bf16.msra.mxu0 %v7094
        %7144 = vmatmul.bf16.gmra.mxu0 %v6931
        %v7145 = vpop.f32.mrf.mxu0
        %v7146 = vadd.f32 0.0, %v7145
        %v7147 = vpop.f32.mrf.mxu0
        %v7148 = vadd.f32 0.0, %v7147
        %7149 = vmatmul.bf16.gmra.mxu0 %v6933
        %v7150 = vpop.f32.mrf.mxu0
        %v7151 = vadd.f32 0.0, %v7150
        %v7152 = vpop.f32.mrf.mxu0
        %v7153 = vadd.f32 0.0, %v7152
        %7154 = vmatmul.bf16.gmra.mxu0 %v6935
        %v7155 = vpop.f32.mrf.mxu0
        %v7156 = vadd.f32 0.0, %v7155
        %v7157 = vpop.f32.mrf.mxu0
        %v7158 = vadd.f32 0.0, %v7157
        %7159 = vmatmul.bf16.gmra.mxu0 %v6937
        %v7160 = vpop.f32.mrf.mxu0
        %v7161 = vadd.f32 0.0, %v7160
        %v7162 = vpop.f32.mrf.mxu0
        %v7163 = vadd.f32 0.0, %v7162
        %7164 = vmatmul.bf16.gmra.mxu0 %v6939
        %v7165 = vpop.f32.mrf.mxu0
        %v7166 = vadd.f32 0.0, %v7165
        %v7167 = vpop.f32.mrf.mxu0
        %v7168 = vadd.f32 0.0, %v7167
        %7169 = vmatmul.bf16.gmra.mxu0 %v6941
        %v7170 = vpop.f32.mrf.mxu0
        %v7171 = vadd.f32 0.0, %v7170
        %v7172 = vpop.f32.mrf.mxu0
        %v7173 = vadd.f32 0.0, %v7172
        %7174 = vdwg.mxu0
        %7175 = vmatpush.bf16.msra.mxu0 0
        %7176 = vmatpush.bf16.msra.mxu0 0
        %7177 = vmatpush.bf16.msra.mxu0 0
        %7178 = vmatpush.bf16.msra.mxu0 0
        %7179 = vmatpush.bf16.msra.mxu0 %v7105
        %7180 = vmatpush.bf16.msra.mxu0 %v7104
        %7181 = vmatpush.bf16.msra.mxu0 %v7103
        %7182 = vmatpush.bf16.msra.mxu0 %v7102
        %7183 = vmatmul.bf16.gmra.mxu0 %v7119
        %v7184 = vpop.f32.mrf.mxu0
        %v7185 = vadd.f32 %v7146, %v7184
        %v7186 = vpop.f32.mrf.mxu0
        %v7187 = vadd.f32 %v7148, %v7186
        %7188 = vmatmul.bf16.gmra.mxu0 %v7122
        %v7189 = vpop.f32.mrf.mxu0
        %v7190 = vadd.f32 %v7151, %v7189
        %v7191 = vpop.f32.mrf.mxu0
        %v7192 = vadd.f32 %v7153, %v7191
        %7193 = vmatmul.bf16.gmra.mxu0 %v7125
        %v7194 = vpop.f32.mrf.mxu0
        %v7195 = vadd.f32 %v7156, %v7194
        %v7196 = vpop.f32.mrf.mxu0
        %v7197 = vadd.f32 %v7158, %v7196
        %7198 = vmatmul.bf16.gmra.mxu0 %v7128
        %v7199 = vpop.f32.mrf.mxu0
        %v7200 = vadd.f32 %v7161, %v7199
        %v7201 = vpop.f32.mrf.mxu0
        %v7202 = vadd.f32 %v7163, %v7201
        %7203 = vmatmul.bf16.gmra.mxu0 %v7131
        %v7204 = vpop.f32.mrf.mxu0
        %v7205 = vadd.f32 %v7166, %v7204
        %v7206 = vpop.f32.mrf.mxu0
        %v7207 = vadd.f32 %v7168, %v7206
        %7208 = vmatmul.bf16.gmra.mxu0 %v7134
        %v7209 = vpop.f32.mrf.mxu0
        %v7210 = vadd.f32 %v7171, %v7209
        %v7211 = vpop.f32.mrf.mxu0
        %v7212 = vadd.f32 %v7173, %v7211
        %7213 = vdwg.mxu0
        %v7238 = vunpack.c.l.b16 %v6871
        %v7239 = vunpack.c.h.b16 %v6871
        %v7240 = vunpack.c.l.b16 %v6872
        %v7241 = vunpack.c.h.b16 %v6872
        %v7242 = vunpack.c.l.b16 %v6873
        %v7243 = vunpack.c.h.b16 %v6873
        %v7244 = vunpack.c.l.b16 %v6874
        %v7245 = vunpack.c.h.b16 %v6874
        %v7246 = vunpack.c.l.b16 %v6875
        %v7247 = vunpack.c.h.b16 %v6875
        %v7248 = vunpack.c.l.b16 %v6876
        %v7249 = vunpack.c.h.b16 %v6876
        %v7250 = vunpack.c.l.b16 %v6877
        %v7251 = vunpack.c.h.b16 %v6877
        %v7252 = vunpack.c.l.b16 %v6878
        %v7253 = vunpack.c.h.b16 %v6878
        %v7254 = vunpack.c.l.b16 %v6879
        %v7255 = vunpack.c.h.b16 %v6879
        %v7256 = vunpack.c.l.b16 %v6880
        %v7257 = vunpack.c.h.b16 %v6880
        %v7258 = vunpack.c.l.b16 %v6881
        %v7259 = vunpack.c.h.b16 %v6881
        %v7260 = vunpack.c.l.b16 %v6882
        %v7261 = vunpack.c.h.b16 %v6882
        %v7262 = vunpack.c.l.b16 %v6883
        %v7263 = vunpack.c.h.b16 %v6883
        %v7264 = vunpack.c.l.b16 %v6884
        %v7265 = vunpack.c.h.b16 %v6884
        %v7266 = vunpack.c.l.b16 %v6885
        %v7267 = vunpack.c.h.b16 %v6885
        %v7268 = vunpack.c.l.b16 %v6886
        %v7269 = vunpack.c.h.b16 %v6886
        %v7270 = vunpack.c.l.b16 %v6887
        %v7271 = vunpack.c.h.b16 %v6887
        %v7272 = vunpack.c.l.b16 %v6888
        %v7273 = vunpack.c.h.b16 %v6888
        %v7274 = vunpack.c.l.b16 %v6889
        %v7275 = vunpack.c.h.b16 %v6889
        %v7276 = vunpack.c.l.b16 %v6890
        %v7277 = vunpack.c.h.b16 %v6890
        %v7278 = vunpack.c.l.b16 %v6891
        %v7279 = vunpack.c.h.b16 %v6891
        %v7280 = vunpack.c.l.b16 %v6892
        %v7281 = vunpack.c.h.b16 %v6892
        %v7282 = vunpack.c.l.b16 %v6893
        %v7283 = vunpack.c.h.b16 %v6893
        %v7284 = vunpack.c.l.b16 %v6894
        %v7285 = vunpack.c.h.b16 %v6894
        %v7286 = vpack.c.b16 %v7240, %v7238
        %v7287 = vpack.c.b16 %v7241, %v7239
        %v7288 = vpack.c.b16 %v7244, %v7242
        %v7289 = vpack.c.b16 %v7245, %v7243
        %v7290 = vpack.c.b16 %v7248, %v7246
        %v7291 = vpack.c.b16 %v7249, %v7247
        %v7292 = vpack.c.b16 %v7252, %v7250
        %v7293 = vpack.c.b16 %v7253, %v7251
        %v7294 = vpack.c.b16 %v7256, %v7254
        %v7295 = vpack.c.b16 %v7257, %v7255
        %v7296 = vpack.c.b16 %v7260, %v7258
        %v7297 = vpack.c.b16 %v7261, %v7259
        %v7298 = vpack.c.b16 %v7264, %v7262
        %v7299 = vpack.c.b16 %v7265, %v7263
        %v7300 = vpack.c.b16 %v7268, %v7266
        %v7301 = vpack.c.b16 %v7269, %v7267
        %v7302 = vpack.c.b16 %v7272, %v7270
        %v7303 = vpack.c.b16 %v7273, %v7271
        %v7304 = vpack.c.b16 %v7276, %v7274
        %v7305 = vpack.c.b16 %v7277, %v7275
        %v7306 = vpack.c.b16 %v7280, %v7278
        %v7307 = vpack.c.b16 %v7281, %v7279
        %v7308 = vpack.c.b16 %v7284, %v7282
        %v7309 = vpack.c.b16 %v7285, %v7283
        %7310 = vrot.lane.b32.xlu0 %v7286, 74
        %v7311 = vpop.permute.xlu0 %7310
        %7312 = vrot.lane.b32.xlu0 %v7287, 74
        %v7313 = vpop.permute.xlu0 %7312
        %7314 = vrot.lane.b32.xlu0 %v7288, 74
        %v7315 = vpop.permute.xlu0 %7314
        %7316 = vrot.lane.b32.xlu0 %v7289, 74
        %v7317 = vpop.permute.xlu0 %7316
        %7318 = vrot.lane.b32.xlu0 %v7290, 74
        %v7319 = vpop.permute.xlu0 %7318
        %7320 = vrot.lane.b32.xlu0 %v7291, 74
        %v7321 = vpop.permute.xlu0 %7320
        %7322 = vrot.lane.b32.xlu0 %v7292, 74
        %v7323 = vpop.permute.xlu0 %7322
        %7324 = vrot.lane.b32.xlu0 %v7293, 74
        %v7325 = vpop.permute.xlu0 %7324
        %7326 = vrot.lane.b32.xlu0 %v7294, 74
        %v7327 = vpop.permute.xlu0 %7326
        %7328 = vrot.lane.b32.xlu0 %v7295, 74
        %v7329 = vpop.permute.xlu0 %7328
        %7330 = vrot.lane.b32.xlu0 %v7296, 74
        %v7331 = vpop.permute.xlu0 %7330
        %7332 = vrot.lane.b32.xlu0 %v7297, 74
        %v7333 = vpop.permute.xlu0 %7332
        %7334 = vrot.lane.b32.xlu0 %v7298, 74
        %v7335 = vpop.permute.xlu0 %7334
        %7336 = vrot.lane.b32.xlu0 %v7299, 74
        %v7337 = vpop.permute.xlu0 %7336
        %7338 = vrot.lane.b32.xlu0 %v7300, 74
        %v7339 = vpop.permute.xlu0 %7338
        %7340 = vrot.lane.b32.xlu0 %v7301, 74
        %v7341 = vpop.permute.xlu0 %7340
        %7342 = vrot.lane.b32.xlu0 %v7302, 74
        %v7343 = vpop.permute.xlu0 %7342
        %7344 = vrot.lane.b32.xlu0 %v7303, 74
        %v7345 = vpop.permute.xlu0 %7344
        %7346 = vrot.lane.b32.xlu0 %v7304, 74
        %v7347 = vpop.permute.xlu0 %7346
        %7348 = vrot.lane.b32.xlu0 %v7305, 74
        %v7349 = vpop.permute.xlu0 %7348
        %7350 = vrot.lane.b32.xlu0 %v7306, 74
        %v7351 = vpop.permute.xlu0 %7350
        %7352 = vrot.lane.b32.xlu0 %v7307, 74
        %v7353 = vpop.permute.xlu0 %7352
        %7354 = vrot.lane.b32.xlu0 %v7308, 74
        %v7355 = vpop.permute.xlu0 %7354
        %7356 = vrot.lane.b32.xlu0 %v7309, 74
        %v7357 = vpop.permute.xlu0 %7356
        %v7358 = vsel %vm7093, %v7311, %v7313
        %v7359 = vsel %vm7093, %v7315, %v7317
        %v7360 = vsel %vm7093, %v7319, %v7321
        %v7361 = vsel %vm7093, %v7323, %v7325
        %v7362 = vsel %vm7093, %v7327, %v7329
        %v7363 = vsel %vm7093, %v7331, %v7333
        %v7364 = vsel %vm7093, %v7335, %v7337
        %v7365 = vsel %vm7093, %v7339, %v7341
        %v7366 = vsel %vm7093, %v7343, %v7345
        %v7367 = vsel %vm7093, %v7347, %v7349
        %v7368 = vsel %vm7093, %v7351, %v7353
        %v7369 = vsel %vm7093, %v7355, %v7357
        %7382 = vmatpush.bf16.msra.mxu0 %v7365
        %7383 = vmatpush.bf16.msra.mxu0 %v7364
        %7384 = vmatpush.bf16.msra.mxu0 %v7363
        %7385 = vmatpush.bf16.msra.mxu0 %v7362
        %7386 = vmatpush.bf16.msra.mxu0 %v7361
        %7387 = vmatpush.bf16.msra.mxu0 %v7360
        %7388 = vmatpush.bf16.msra.mxu0 %v7359
        %7389 = vmatpush.bf16.msra.mxu0 %v7358
        %7390 = vmatmul.bf16.gmra.mxu0 %v6931
        %v7391 = vpop.f32.mrf.mxu0
        %v7392 = vadd.f32 0.0, %v7391
        %v7393 = vpop.f32.mrf.mxu0
        %v7394 = vadd.f32 0.0, %v7393
        %7395 = vmatmul.bf16.gmra.mxu0 %v6933
        %v7396 = vpop.f32.mrf.mxu0
        %v7397 = vadd.f32 0.0, %v7396
        %v7398 = vpop.f32.mrf.mxu0
        %v7399 = vadd.f32 0.0, %v7398
        %7400 = vmatmul.bf16.gmra.mxu0 %v6935
        %v7401 = vpop.f32.mrf.mxu0
        %v7402 = vadd.f32 0.0, %v7401
        %v7403 = vpop.f32.mrf.mxu0
        %v7404 = vadd.f32 0.0, %v7403
        %7405 = vmatmul.bf16.gmra.mxu0 %v6937
        %v7406 = vpop.f32.mrf.mxu0
        %v7407 = vadd.f32 0.0, %v7406
        %v7408 = vpop.f32.mrf.mxu0
        %v7409 = vadd.f32 0.0, %v7408
        %7410 = vmatmul.bf16.gmra.mxu0 %v6939
        %v7411 = vpop.f32.mrf.mxu0
        %v7412 = vadd.f32 0.0, %v7411
        %v7413 = vpop.f32.mrf.mxu0
        %v7414 = vadd.f32 0.0, %v7413
        %7415 = vmatmul.bf16.gmra.mxu0 %v6941
        %v7416 = vpop.f32.mrf.mxu0
        %v7417 = vadd.f32 0.0, %v7416
        %v7418 = vpop.f32.mrf.mxu0
        %v7419 = vadd.f32 0.0, %v7418
        %7420 = vdwg.mxu0
        %7421 = vmatpush.bf16.msra.mxu0 0
        %7422 = vmatpush.bf16.msra.mxu0 0
        %7423 = vmatpush.bf16.msra.mxu0 0
        %7424 = vmatpush.bf16.msra.mxu0 0
        %7425 = vmatpush.bf16.msra.mxu0 %v7369
        %7426 = vmatpush.bf16.msra.mxu0 %v7368
        %7427 = vmatpush.bf16.msra.mxu0 %v7367
        %7428 = vmatpush.bf16.msra.mxu0 %v7366
        %7429 = vmatmul.bf16.gmra.mxu0 %v7119
        %v7430 = vpop.f32.mrf.mxu0
        %v7431 = vadd.f32 %v7392, %v7430
        %v7432 = vpop.f32.mrf.mxu0
        %v7433 = vadd.f32 %v7394, %v7432
        %7434 = vmatmul.bf16.gmra.mxu0 %v7122
        %v7435 = vpop.f32.mrf.mxu0
        %v7436 = vadd.f32 %v7397, %v7435
        %v7437 = vpop.f32.mrf.mxu0
        %v7438 = vadd.f32 %v7399, %v7437
        %7439 = vmatmul.bf16.gmra.mxu0 %v7125
        %v7440 = vpop.f32.mrf.mxu0
        %v7441 = vadd.f32 %v7402, %v7440
        %v7442 = vpop.f32.mrf.mxu0
        %v7443 = vadd.f32 %v7404, %v7442
        %7444 = vmatmul.bf16.gmra.mxu0 %v7128
        %v7445 = vpop.f32.mrf.mxu0
        %v7446 = vadd.f32 %v7407, %v7445
        %v7447 = vpop.f32.mrf.mxu0
        %v7448 = vadd.f32 %v7409, %v7447
        %7449 = vmatmul.bf16.gmra.mxu0 %v7131
        %v7450 = vpop.f32.mrf.mxu0
        %v7451 = vadd.f32 %v7412, %v7450
        %v7452 = vpop.f32.mrf.mxu0
        %v7453 = vadd.f32 %v7414, %v7452
        %7454 = vmatmul.bf16.gmra.mxu0 %v7134
        %v7455 = vpop.f32.mrf.mxu0
        %v7456 = vadd.f32 %v7417, %v7455
        %v7457 = vpop.f32.mrf.mxu0
        %v7458 = vadd.f32 %v7419, %v7457
        %7459 = vdwg.mxu0
        %v7460 = vld [vmem:[#allocation7] sm:$0xf]
        %v7461 = vld [vmem:[#allocation7 + $0x4] sm:$0xf]
        %v7462 = vld [vmem:[#allocation7 + $0x8] sm:$0xf]
        %v7463 = vld [vmem:[#allocation7 + $0xc] sm:$0xf]
        %v7464 = vld [vmem:[#allocation7 + $0x10] sm:$0xf]
        %v7465 = vld [vmem:[#allocation7 + $0x14] sm:$0xf]
        %v7466 = vld [vmem:[#allocation7 + $0x18] sm:$0xf]
        %v7467 = vld [vmem:[#allocation7 + $0x1c] sm:$0xf]
        %v7468 = vld [vmem:[#allocation7 + $0x20] sm:$0xf]
        %v7469 = vld [vmem:[#allocation7 + $0x24] sm:$0xf]
        %v7470 = vld [vmem:[#allocation7 + $0x28] sm:$0x7]
        %v7471 = vld [vmem:[#allocation15] sm:$0xff]
        %v7472 = vld [vmem:[#allocation15 + $0x8] sm:$0xff]
        %v7473 = vld [vmem:[#allocation15 + $0x10] sm:$0xff]
        %v7474 = vld [vmem:[#allocation15 + $0x18] sm:$0xff]
        %v7475 = vld [vmem:[#allocation15 + $0x20] sm:$0xff]
        %v7476 = vld [vmem:[#allocation15 + $0x28] sm:$0xff]
        %v7477 = vld [vmem:[#allocation15 + $0x30] sm:$0xff]
        %v7478 = vld [vmem:[#allocation15 + $0x38] sm:$0xff]
        %v7479 = vld [vmem:[#allocation15 + $0x40] sm:$0xff]
        %v7480 = vld [vmem:[#allocation15 + $0x48] sm:$0xff]
        %v7481 = vld [vmem:[#allocation15 + $0x50] sm:$0xff]
        %v7482 = vld [vmem:[#allocation15 + $0x58] sm:$0xff]
        %v7483 = vpack.c.bf16 %v7185, %v7185
        %v7484 = vpack.c.bf16 %v7187, %v7187
        %v7485 = vpack.c.bf16 %v7190, %v7190
        %v7486 = vpack.c.bf16 %v7192, %v7192
        %v7487 = vpack.c.bf16 %v7195, %v7195
        %v7488 = vpack.c.bf16 %v7197, %v7197
        %v7489 = vpack.c.bf16 %v7200, %v7200
        %v7490 = vpack.c.bf16 %v7202, %v7202
        %v7491 = vpack.c.bf16 %v7205, %v7205
        %v7492 = vpack.c.bf16 %v7207, %v7207
        %v7493 = vpack.c.bf16 %v7210, %v7210
        %v7494 = vpack.c.bf16 %v7212, %v7212
        %v7495 = vpack.c.bf16 %v7431, %v7431
        %v7496 = vpack.c.bf16 %v7433, %v7433
        %v7497 = vpack.c.bf16 %v7436, %v7436
        %v7498 = vpack.c.bf16 %v7438, %v7438
        %v7499 = vpack.c.bf16 %v7441, %v7441
        %v7500 = vpack.c.bf16 %v7443, %v7443
        %v7501 = vpack.c.bf16 %v7446, %v7446
        %v7502 = vpack.c.bf16 %v7448, %v7448
        %v7503 = vpack.c.bf16 %v7451, %v7451
        %v7504 = vpack.c.bf16 %v7453, %v7453
        %v7505 = vpack.c.bf16 %v7456, %v7456
        %v7506 = vpack.c.bf16 %v7458, %v7458
        %v7507 = vmul.f32 %v7185, %v7185
        %v7508 = vmul.f32 %v7187, %v7187
        %v7509 = vmul.f32 %v7190, %v7190
        %v7510 = vmul.f32 %v7192, %v7192
        %v7511 = vmul.f32 %v7195, %v7195
        %v7512 = vmul.f32 %v7197, %v7197
        %v7513 = vmul.f32 %v7200, %v7200
        %v7514 = vmul.f32 %v7202, %v7202
        %v7515 = vmul.f32 %v7205, %v7205
        %v7516 = vmul.f32 %v7207, %v7207
        %v7517 = vmul.f32 %v7210, %v7210
        %v7518 = vmul.f32 %v7212, %v7212
        %v7519 = vpack.c.bf16 %v7507, %v7507
        %v7520 = vpack.c.bf16 %v7508, %v7508
        %v7521 = vpack.c.bf16 %v7509, %v7509
        %v7522 = vpack.c.bf16 %v7510, %v7510
        %v7523 = vpack.c.bf16 %v7511, %v7511
        %v7524 = vpack.c.bf16 %v7512, %v7512
        %v7525 = vpack.c.bf16 %v7513, %v7513
        %v7526 = vpack.c.bf16 %v7514, %v7514
        %v7527 = vpack.c.bf16 %v7515, %v7515
        %v7528 = vpack.c.bf16 %v7516, %v7516
        %v7529 = vpack.c.bf16 %v7517, %v7517
        %v7530 = vpack.c.bf16 %v7518, %v7518
        %v7531 = vmul.f32 %v7431, %v7431
        %v7532 = vmul.f32 %v7433, %v7433
        %v7533 = vmul.f32 %v7436, %v7436
        %v7534 = vmul.f32 %v7438, %v7438
        %v7535 = vmul.f32 %v7441, %v7441
        %v7536 = vmul.f32 %v7443, %v7443
        %v7537 = vmul.f32 %v7446, %v7446
        %v7538 = vmul.f32 %v7448, %v7448
        %v7539 = vmul.f32 %v7451, %v7451
        %v7540 = vmul.f32 %v7453, %v7453
        %v7541 = vmul.f32 %v7456, %v7456
        %v7542 = vmul.f32 %v7458, %v7458
        %v7543 = vpack.c.bf16 %v7531, %v7531
        %v7544 = vpack.c.bf16 %v7532, %v7532
        %v7545 = vpack.c.bf16 %v7533, %v7533
        %v7546 = vpack.c.bf16 %v7534, %v7534
        %v7547 = vpack.c.bf16 %v7535, %v7535
        %v7548 = vpack.c.bf16 %v7536, %v7536
        %v7549 = vpack.c.bf16 %v7537, %v7537
        %v7550 = vpack.c.bf16 %v7538, %v7538
        %v7551 = vpack.c.bf16 %v7539, %v7539
        %v7552 = vpack.c.bf16 %v7540, %v7540
        %v7553 = vpack.c.bf16 %v7541, %v7541
        %v7554 = vpack.c.bf16 %v7542, %v7542
        %v7555 = vmul.f32 %v7185, %v7431
        %v7556 = vmul.f32 %v7187, %v7433
        %v7557 = vmul.f32 %v7190, %v7436
        %v7558 = vmul.f32 %v7192, %v7438
        %v7559 = vmul.f32 %v7195, %v7441
        %v7560 = vmul.f32 %v7197, %v7443
        %v7561 = vmul.f32 %v7200, %v7446
        %v7562 = vmul.f32 %v7202, %v7448
        %v7563 = vmul.f32 %v7205, %v7451
        %v7564 = vmul.f32 %v7207, %v7453
        %v7565 = vmul.f32 %v7210, %v7456
        %v7566 = vmul.f32 %v7212, %v7458
        %v7567 = vpack.c.bf16 %v7555, %v7555
        %v7568 = vpack.c.bf16 %v7556, %v7556
        %v7569 = vpack.c.bf16 %v7557, %v7557
        %v7570 = vpack.c.bf16 %v7558, %v7558
        %v7571 = vpack.c.bf16 %v7559, %v7559
        %v7572 = vpack.c.bf16 %v7560, %v7560
        %v7573 = vpack.c.bf16 %v7561, %v7561
        %v7574 = vpack.c.bf16 %v7562, %v7562
        %v7575 = vpack.c.bf16 %v7563, %v7563
        %v7576 = vpack.c.bf16 %v7564, %v7564
        %v7577 = vpack.c.bf16 %v7565, %v7565
        %v7578 = vpack.c.bf16 %v7566, %v7566
        %v7591 = vunpack.c.l.b16 %v7483
        %v7592 = vunpack.c.l.b16 %v7484
        %v7593 = vunpack.c.l.b16 %v7485
        %v7594 = vunpack.c.l.b16 %v7486
        %v7595 = vunpack.c.l.b16 %v7487
        %v7596 = vunpack.c.l.b16 %v7488
        %v7597 = vunpack.c.l.b16 %v7489
        %v7598 = vunpack.c.l.b16 %v7490
        %v7599 = vunpack.c.l.b16 %v7491
        %v7600 = vunpack.c.l.b16 %v7492
        %v7601 = vunpack.c.l.b16 %v7493
        %v7602 = vunpack.c.l.b16 %v7494
        %v7603 = vpack.c.b16 %v7592, %v7591
        %v7604 = vpack.c.b16 %v7594, %v7593
        %v7605 = vpack.c.b16 %v7596, %v7595
        %v7606 = vpack.c.b16 %v7598, %v7597
        %v7607 = vpack.c.b16 %v7600, %v7599
        %v7608 = vpack.c.b16 %v7602, %v7601
        %v7621 = vunpack.c.l.b16 %v7495
        %v7622 = vunpack.c.l.b16 %v7496
        %v7623 = vunpack.c.l.b16 %v7497
        %v7624 = vunpack.c.l.b16 %v7498
        %v7625 = vunpack.c.l.b16 %v7499
        %v7626 = vunpack.c.l.b16 %v7500
        %v7627 = vunpack.c.l.b16 %v7501
        %v7628 = vunpack.c.l.b16 %v7502
        %v7629 = vunpack.c.l.b16 %v7503
        %v7630 = vunpack.c.l.b16 %v7504
        %v7631 = vunpack.c.l.b16 %v7505
        %v7632 = vunpack.c.l.b16 %v7506
        %v7633 = vpack.c.b16 %v7622, %v7621
        %v7634 = vpack.c.b16 %v7624, %v7623
        %v7635 = vpack.c.b16 %v7626, %v7625
        %v7636 = vpack.c.b16 %v7628, %v7627
        %v7637 = vpack.c.b16 %v7630, %v7629
        %v7638 = vpack.c.b16 %v7632, %v7631
        %v7651 = vunpack.c.l.b16 %v7519
        %v7652 = vunpack.c.l.b16 %v7520
        %v7653 = vunpack.c.l.b16 %v7521
        %v7654 = vunpack.c.l.b16 %v7522
        %v7655 = vunpack.c.l.b16 %v7523
        %v7656 = vunpack.c.l.b16 %v7524
        %v7657 = vunpack.c.l.b16 %v7525
        %v7658 = vunpack.c.l.b16 %v7526
        %v7659 = vunpack.c.l.b16 %v7527
        %v7660 = vunpack.c.l.b16 %v7528
        %v7661 = vunpack.c.l.b16 %v7529
        %v7662 = vunpack.c.l.b16 %v7530
        %v7663 = vpack.c.b16 %v7652, %v7651
        %v7664 = vpack.c.b16 %v7654, %v7653
        %v7665 = vpack.c.b16 %v7656, %v7655
        %v7666 = vpack.c.b16 %v7658, %v7657
        %v7667 = vpack.c.b16 %v7660, %v7659
        %v7668 = vpack.c.b16 %v7662, %v7661
        %v7681 = vunpack.c.l.b16 %v7543
        %v7682 = vunpack.c.l.b16 %v7544
        %v7683 = vunpack.c.l.b16 %v7545
        %v7684 = vunpack.c.l.b16 %v7546
        %v7685 = vunpack.c.l.b16 %v7547
        %v7686 = vunpack.c.l.b16 %v7548
        %v7687 = vunpack.c.l.b16 %v7549
        %v7688 = vunpack.c.l.b16 %v7550
        %v7689 = vunpack.c.l.b16 %v7551
        %v7690 = vunpack.c.l.b16 %v7552
        %v7691 = vunpack.c.l.b16 %v7553
        %v7692 = vunpack.c.l.b16 %v7554
        %v7693 = vpack.c.b16 %v7682, %v7681
        %v7694 = vpack.c.b16 %v7684, %v7683
        %v7695 = vpack.c.b16 %v7686, %v7685
        %v7696 = vpack.c.b16 %v7688, %v7687
        %v7697 = vpack.c.b16 %v7690, %v7689
        %v7698 = vpack.c.b16 %v7692, %v7691
        %v7711 = vunpack.c.l.b16 %v7567
        %v7712 = vunpack.c.l.b16 %v7568
        %v7713 = vunpack.c.l.b16 %v7569
        %v7714 = vunpack.c.l.b16 %v7570
        %v7715 = vunpack.c.l.b16 %v7571
        %v7716 = vunpack.c.l.b16 %v7572
        %v7717 = vunpack.c.l.b16 %v7573
        %v7718 = vunpack.c.l.b16 %v7574
        %v7719 = vunpack.c.l.b16 %v7575
        %v7720 = vunpack.c.l.b16 %v7576
        %v7721 = vunpack.c.l.b16 %v7577
        %v7722 = vunpack.c.l.b16 %v7578
        %v7723 = vpack.c.b16 %v7712, %v7711
        %v7724 = vpack.c.b16 %v7714, %v7713
        %v7725 = vpack.c.b16 %v7716, %v7715
        %v7726 = vpack.c.b16 %v7718, %v7717
        %v7727 = vpack.c.b16 %v7720, %v7719
        %v7728 = vpack.c.b16 %v7722, %v7721
        %v7741 = vunpack.c.l.b16 %v7471
        %v7742 = vunpack.c.h.b16 %v7471
        %v7743 = vunpack.c.l.b16 %v7472
        %v7744 = vunpack.c.h.b16 %v7472
        %v7745 = vunpack.c.l.b16 %v7473
        %v7746 = vunpack.c.h.b16 %v7473
        %v7747 = vunpack.c.l.b16 %v7474
        %v7748 = vunpack.c.h.b16 %v7474
        %v7749 = vunpack.c.l.b16 %v7475
        %v7750 = vunpack.c.h.b16 %v7475
        %v7751 = vunpack.c.l.b16 %v7476
        %v7752 = vunpack.c.h.b16 %v7476
        %v7753 = vunpack.c.l.b16 %v7477
        %v7754 = vunpack.c.h.b16 %v7477
        %v7755 = vunpack.c.l.b16 %v7478
        %v7756 = vunpack.c.h.b16 %v7478
        %v7757 = vunpack.c.l.b16 %v7479
        %v7758 = vunpack.c.h.b16 %v7479
        %v7759 = vunpack.c.l.b16 %v7480
        %v7760 = vunpack.c.h.b16 %v7480
        %v7761 = vunpack.c.l.b16 %v7481
        %v7762 = vunpack.c.h.b16 %v7481
        %v7763 = vunpack.c.l.b16 %v7482
        %v7764 = vunpack.c.h.b16 %v7482
        %v7765 = vpack.c.b16 %v7743, %v7741
        %v7766 = vpack.c.b16 %v7744, %v7742
        %v7767 = vpack.c.b16 %v7747, %v7745
        %v7768 = vpack.c.b16 %v7748, %v7746
        %v7769 = vpack.c.b16 %v7751, %v7749
        %v7770 = vpack.c.b16 %v7752, %v7750
        %v7771 = vpack.c.b16 %v7755, %v7753
        %v7772 = vpack.c.b16 %v7756, %v7754
        %v7773 = vpack.c.b16 %v7759, %v7757
        %v7774 = vpack.c.b16 %v7760, %v7758
        %v7775 = vpack.c.b16 %v7763, %v7761
        %v7776 = vpack.c.b16 %v7764, %v7762
        %vm7789 = vcmask 785408
        %v7791 = vsel %vm7789, %v7603, 0
        %v7794 = vsel %vm7789, %v7604, 0
        %v7797 = vsel %vm7789, %v7605, 0
        %v7800 = vsel %vm7789, %v7606, 0
        %v7803 = vsel %vm7789, %v7607, 0
        %v7806 = vsel %vm7789, %v7608, 0
        %v7809 = vsel %vm7789, %v7633, 0
        %v7812 = vsel %vm7789, %v7634, 0
        %v7815 = vsel %vm7789, %v7635, 0
        %v7818 = vsel %vm7789, %v7636, 0
        %v7821 = vsel %vm7789, %v7637, 0
        %v7824 = vsel %vm7789, %v7638, 0
        %v7827 = vsel %vm7789, %v7663, 0
        %v7830 = vsel %vm7789, %v7664, 0
        %v7833 = vsel %vm7789, %v7665, 0
        %v7836 = vsel %vm7789, %v7666, 0
        %v7839 = vsel %vm7789, %v7667, 0
        %v7842 = vsel %vm7789, %v7668, 0
        %v7845 = vsel %vm7789, %v7693, 0
        %v7848 = vsel %vm7789, %v7694, 0
        %v7851 = vsel %vm7789, %v7695, 0
        %v7854 = vsel %vm7789, %v7696, 0
        %v7857 = vsel %vm7789, %v7697, 0
        %v7860 = vsel %vm7789, %v7698, 0
        %v7863 = vsel %vm7789, %v7723, 0
        %v7866 = vsel %vm7789, %v7724, 0
        %v7869 = vsel %vm7789, %v7725, 0
        %v7872 = vsel %vm7789, %v7726, 0
        %v7875 = vsel %vm7789, %v7727, 0
        %v7878 = vsel %vm7789, %v7728, 0
        %7880 = vmatpush.bf16.msra.mxu0 0
        %7881 = vmatpush.bf16.msra.mxu0 0
        %7882 = vmatpush.bf16.msra.mxu0 %v7775
        %7883 = vmatpush.bf16.msra.mxu0 %v7773
        %7884 = vmatpush.bf16.msra.mxu0 %v7771
        %7885 = vmatpush.bf16.msra.mxu0 %v7769
        %7886 = vmatpush.bf16.msra.mxu0 %v7767
        %7887 = vmatpush.bf16.msra.mxu0 %v7765
        %7888 = vmatmul.bf16.gmra.mxu0 %v7791
        %v7889 = vpop.f32.mrf.mxu0
        %v7890 = vadd.f32 0.0, %v7889
        %v7891 = vpop.f32.mrf.mxu0
        %v7892 = vadd.f32 0.0, %v7891
        %7893 = vmatmul.bf16.gmra.mxu0 %v7794
        %v7894 = vpop.f32.mrf.mxu0
        %v7895 = vadd.f32 0.0, %v7894
        %v7896 = vpop.f32.mrf.mxu0
        %v7897 = vadd.f32 0.0, %v7896
        %7898 = vmatmul.bf16.gmra.mxu0 %v7797
        %v7899 = vpop.f32.mrf.mxu0
        %v7900 = vadd.f32 0.0, %v7899
        %v7901 = vpop.f32.mrf.mxu0
        %v7902 = vadd.f32 0.0, %v7901
        %7903 = vmatmul.bf16.gmra.mxu0 %v7800
        %v7904 = vpop.f32.mrf.mxu0
        %v7905 = vadd.f32 0.0, %v7904
        %v7906 = vpop.f32.mrf.mxu0
        %v7907 = vadd.f32 0.0, %v7906
        %7908 = vmatmul.bf16.gmra.mxu0 %v7803
        %v7909 = vpop.f32.mrf.mxu0
        %v7910 = vadd.f32 0.0, %v7909
        %v7911 = vpop.f32.mrf.mxu0
        %v7912 = vadd.f32 0.0, %v7911
        %7913 = vmatmul.bf16.gmra.mxu0 %v7806
        %v7914 = vpop.f32.mrf.mxu0
        %v7915 = vadd.f32 0.0, %v7914
        %v7916 = vpop.f32.mrf.mxu0
        %v7917 = vadd.f32 0.0, %v7916
        %7918 = vmatmul.bf16.gmra.mxu0 %v7809
        %v7919 = vpop.f32.mrf.mxu0
        %v7920 = vadd.f32 0.0, %v7919
        %v7921 = vpop.f32.mrf.mxu0
        %v7922 = vadd.f32 0.0, %v7921
        %7923 = vmatmul.bf16.gmra.mxu0 %v7812
        %v7924 = vpop.f32.mrf.mxu0
        %v7925 = vadd.f32 0.0, %v7924
        %v7926 = vpop.f32.mrf.mxu0
        %v7927 = vadd.f32 0.0, %v7926
        %7928 = vmatmul.bf16.gmra.mxu0 %v7815
        %v7929 = vpop.f32.mrf.mxu0
        %v7930 = vadd.f32 0.0, %v7929
        %v7931 = vpop.f32.mrf.mxu0
        %v7932 = vadd.f32 0.0, %v7931
        %7933 = vmatmul.bf16.gmra.mxu0 %v7818
        %v7934 = vpop.f32.mrf.mxu0
        %v7935 = vadd.f32 0.0, %v7934
        %v7936 = vpop.f32.mrf.mxu0
        %v7937 = vadd.f32 0.0, %v7936
        %7938 = vmatmul.bf16.gmra.mxu0 %v7821
        %v7939 = vpop.f32.mrf.mxu0
        %v7940 = vadd.f32 0.0, %v7939
        %v7941 = vpop.f32.mrf.mxu0
        %v7942 = vadd.f32 0.0, %v7941
        %7943 = vmatmul.bf16.gmra.mxu0 %v7824
        %v7944 = vpop.f32.mrf.mxu0
        %v7945 = vadd.f32 0.0, %v7944
        %v7946 = vpop.f32.mrf.mxu0
        %v7947 = vadd.f32 0.0, %v7946
        %7948 = vmatmul.bf16.gmra.mxu0 %v7827
        %v7949 = vpop.f32.mrf.mxu0
        %v7950 = vadd.f32 0.0, %v7949
        %v7951 = vpop.f32.mrf.mxu0
        %v7952 = vadd.f32 0.0, %v7951
        %7953 = vmatmul.bf16.gmra.mxu0 %v7830
        %v7954 = vpop.f32.mrf.mxu0
        %v7955 = vadd.f32 0.0, %v7954
        %v7956 = vpop.f32.mrf.mxu0
        %v7957 = vadd.f32 0.0, %v7956
        %7958 = vmatmul.bf16.gmra.mxu0 %v7833
        %v7959 = vpop.f32.mrf.mxu0
        %v7960 = vadd.f32 0.0, %v7959
        %v7961 = vpop.f32.mrf.mxu0
        %v7962 = vadd.f32 0.0, %v7961
        %7963 = vmatmul.bf16.gmra.mxu0 %v7836
        %v7964 = vpop.f32.mrf.mxu0
        %v7965 = vadd.f32 0.0, %v7964
        %v7966 = vpop.f32.mrf.mxu0
        %v7967 = vadd.f32 0.0, %v7966
        %7968 = vmatmul.bf16.gmra.mxu0 %v7839
        %v7969 = vpop.f32.mrf.mxu0
        %v7970 = vadd.f32 0.0, %v7969
        %v7971 = vpop.f32.mrf.mxu0
        %v7972 = vadd.f32 0.0, %v7971
        %7973 = vmatmul.bf16.gmra.mxu0 %v7842
        %v7974 = vpop.f32.mrf.mxu0
        %v7975 = vadd.f32 0.0, %v7974
        %v7976 = vpop.f32.mrf.mxu0
        %v7977 = vadd.f32 0.0, %v7976
        %7978 = vmatmul.bf16.gmra.mxu0 %v7845
        %v7979 = vpop.f32.mrf.mxu0
        %v7980 = vadd.f32 0.0, %v7979
        %v7981 = vpop.f32.mrf.mxu0
        %v7982 = vadd.f32 0.0, %v7981
        %7983 = vmatmul.bf16.gmra.mxu0 %v7848
        %v7984 = vpop.f32.mrf.mxu0
        %v7985 = vadd.f32 0.0, %v7984
        %v7986 = vpop.f32.mrf.mxu0
        %v7987 = vadd.f32 0.0, %v7986
        %7988 = vmatmul.bf16.gmra.mxu0 %v7851
        %v7989 = vpop.f32.mrf.mxu0
        %v7990 = vadd.f32 0.0, %v7989
        %v7991 = vpop.f32.mrf.mxu0
        %v7992 = vadd.f32 0.0, %v7991
        %7993 = vmatmul.bf16.gmra.mxu0 %v7854
        %v7994 = vpop.f32.mrf.mxu0
        %v7995 = vadd.f32 0.0, %v7994
        %v7996 = vpop.f32.mrf.mxu0
        %v7997 = vadd.f32 0.0, %v7996
        %7998 = vmatmul.bf16.gmra.mxu0 %v7857
        %v7999 = vpop.f32.mrf.mxu0
        %v8000 = vadd.f32 0.0, %v7999
        %v8001 = vpop.f32.mrf.mxu0
        %v8002 = vadd.f32 0.0, %v8001
        %8003 = vmatmul.bf16.gmra.mxu0 %v7860
        %v8004 = vpop.f32.mrf.mxu0
        %v8005 = vadd.f32 0.0, %v8004
        %v8006 = vpop.f32.mrf.mxu0
        %v8007 = vadd.f32 0.0, %v8006
        %8008 = vmatmul.bf16.gmra.mxu0 %v7863
        %v8009 = vpop.f32.mrf.mxu0
        %v8010 = vadd.f32 0.0, %v8009
        %v8011 = vpop.f32.mrf.mxu0
        %v8012 = vadd.f32 0.0, %v8011
        %8013 = vmatmul.bf16.gmra.mxu0 %v7866
        %v8014 = vpop.f32.mrf.mxu0
        %v8015 = vadd.f32 0.0, %v8014
        %v8016 = vpop.f32.mrf.mxu0
        %v8017 = vadd.f32 0.0, %v8016
        %8018 = vmatmul.bf16.gmra.mxu0 %v7869
        %v8019 = vpop.f32.mrf.mxu0
        %v8020 = vadd.f32 0.0, %v8019
        %v8021 = vpop.f32.mrf.mxu0
        %v8022 = vadd.f32 0.0, %v8021
        %8023 = vmatmul.bf16.gmra.mxu0 %v7872
        %v8024 = vpop.f32.mrf.mxu0
        %v8025 = vadd.f32 0.0, %v8024
        %v8026 = vpop.f32.mrf.mxu0
        %v8027 = vadd.f32 0.0, %v8026
        %8028 = vmatmul.bf16.gmra.mxu0 %v7875
        %v8029 = vpop.f32.mrf.mxu0
        %v8030 = vadd.f32 0.0, %v8029
        %v8031 = vpop.f32.mrf.mxu0
        %v8032 = vadd.f32 0.0, %v8031
        %8033 = vmatmul.bf16.gmra.mxu0 %v7878
        %v8034 = vpop.f32.mrf.mxu0
        %v8035 = vadd.f32 0.0, %v8034
        %v8036 = vpop.f32.mrf.mxu0
        %v8037 = vadd.f32 0.0, %v8036
        %8038 = vdwg.mxu0
        %8039 = vmatpush.bf16.msra.mxu0 0
        %8040 = vmatpush.bf16.msra.mxu0 0
        %8041 = vmatpush.bf16.msra.mxu0 %v7776
        %8042 = vmatpush.bf16.msra.mxu0 %v7774
        %8043 = vmatpush.bf16.msra.mxu0 %v7772
        %8044 = vmatpush.bf16.msra.mxu0 %v7770
        %8045 = vmatpush.bf16.msra.mxu0 %v7768
        %8046 = vmatpush.bf16.msra.mxu0 %v7766
        %8047 = vmatmul.bf16.gmra.mxu0 %v7791
        %v8048 = vpop.f32.mrf.mxu0
        %v8049 = vadd.f32 0.0, %v8048
        %v8050 = vpop.f32.mrf.mxu0
        %v8051 = vadd.f32 0.0, %v8050
        %8052 = vmatmul.bf16.gmra.mxu0 %v7794
        %v8053 = vpop.f32.mrf.mxu0
        %v8054 = vadd.f32 0.0, %v8053
        %v8055 = vpop.f32.mrf.mxu0
        %v8056 = vadd.f32 0.0, %v8055
        %8057 = vmatmul.bf16.gmra.mxu0 %v7797
        %v8058 = vpop.f32.mrf.mxu0
        %v8059 = vadd.f32 0.0, %v8058
        %v8060 = vpop.f32.mrf.mxu0
        %v8061 = vadd.f32 0.0, %v8060
        %8062 = vmatmul.bf16.gmra.mxu0 %v7800
        %v8063 = vpop.f32.mrf.mxu0
        %v8064 = vadd.f32 0.0, %v8063
        %v8065 = vpop.f32.mrf.mxu0
        %v8066 = vadd.f32 0.0, %v8065
        %8067 = vmatmul.bf16.gmra.mxu0 %v7803
        %v8068 = vpop.f32.mrf.mxu0
        %v8069 = vadd.f32 0.0, %v8068
        %v8070 = vpop.f32.mrf.mxu0
        %v8071 = vadd.f32 0.0, %v8070
        %8072 = vmatmul.bf16.gmra.mxu0 %v7806
        %v8073 = vpop.f32.mrf.mxu0
        %v8074 = vadd.f32 0.0, %v8073
        %v8075 = vpop.f32.mrf.mxu0
        %v8076 = vadd.f32 0.0, %v8075
        %8077 = vmatmul.bf16.gmra.mxu0 %v7809
        %v8078 = vpop.f32.mrf.mxu0
        %v8079 = vadd.f32 0.0, %v8078
        %v8080 = vpop.f32.mrf.mxu0
        %v8081 = vadd.f32 0.0, %v8080
        %8082 = vmatmul.bf16.gmra.mxu0 %v7812
        %v8083 = vpop.f32.mrf.mxu0
        %v8084 = vadd.f32 0.0, %v8083
        %v8085 = vpop.f32.mrf.mxu0
        %v8086 = vadd.f32 0.0, %v8085
        %8087 = vmatmul.bf16.gmra.mxu0 %v7815
        %v8088 = vpop.f32.mrf.mxu0
        %v8089 = vadd.f32 0.0, %v8088
        %v8090 = vpop.f32.mrf.mxu0
        %v8091 = vadd.f32 0.0, %v8090
        %8092 = vmatmul.bf16.gmra.mxu0 %v7818
        %v8093 = vpop.f32.mrf.mxu0
        %v8094 = vadd.f32 0.0, %v8093
        %v8095 = vpop.f32.mrf.mxu0
        %v8096 = vadd.f32 0.0, %v8095
        %8097 = vmatmul.bf16.gmra.mxu0 %v7821
        %v8098 = vpop.f32.mrf.mxu0
        %v8099 = vadd.f32 0.0, %v8098
        %v8100 = vpop.f32.mrf.mxu0
        %v8101 = vadd.f32 0.0, %v8100
        %8102 = vmatmul.bf16.gmra.mxu0 %v7824
        %v8103 = vpop.f32.mrf.mxu0
        %v8104 = vadd.f32 0.0, %v8103
        %v8105 = vpop.f32.mrf.mxu0
        %v8106 = vadd.f32 0.0, %v8105
        %8107 = vmatmul.bf16.gmra.mxu0 %v7827
        %v8108 = vpop.f32.mrf.mxu0
        %v8109 = vpop.f32.mrf.mxu0
        %8110 = vmatmul.bf16.gmra.mxu0 %v7830
        %v8111 = vpop.f32.mrf.mxu0
        %v8112 = vpop.f32.mrf.mxu0
        %8113 = vmatmul.bf16.gmra.mxu0 %v7833
        %v8114 = vpop.f32.mrf.mxu0
        %v8115 = vpop.f32.mrf.mxu0
        %8116 = vmatmul.bf16.gmra.mxu0 %v7836
        %v8117 = vpop.f32.mrf.mxu0
        %v8118 = vpop.f32.mrf.mxu0
        %8119 = vmatmul.bf16.gmra.mxu0 %v7839
        %v8120 = vpop.f32.mrf.mxu0
        %v8121 = vpop.f32.mrf.mxu0
        %8122 = vmatmul.bf16.gmra.mxu0 %v7842
        %v8123 = vpop.f32.mrf.mxu0
        %v8124 = vpop.f32.mrf.mxu0
        %8125 = vmatmul.bf16.gmra.mxu0 %v7845
        %v8126 = vpop.f32.mrf.mxu0
        %v8127 = vpop.f32.mrf.mxu0
        %8128 = vmatmul.bf16.gmra.mxu0 %v7848
        %v8129 = vpop.f32.mrf.mxu0
        %v8130 = vpop.f32.mrf.mxu0
        %8131 = vmatmul.bf16.gmra.mxu0 %v7851
        %v8132 = vpop.f32.mrf.mxu0
        %v8133 = vpop.f32.mrf.mxu0
        %8134 = vmatmul.bf16.gmra.mxu0 %v7854
        %v8135 = vpop.f32.mrf.mxu0
        %v8136 = vpop.f32.mrf.mxu0
        %8137 = vmatmul.bf16.gmra.mxu0 %v7857
        %v8138 = vpop.f32.mrf.mxu0
        %v8139 = vpop.f32.mrf.mxu0
        %8140 = vmatmul.bf16.gmra.mxu0 %v7860
        %v8141 = vpop.f32.mrf.mxu0
        %v8142 = vpop.f32.mrf.mxu0
        %8143 = vmatmul.bf16.gmra.mxu0 %v7863
        %v8144 = vpop.f32.mrf.mxu0
        %v8145 = vpop.f32.mrf.mxu0
        %8146 = vmatmul.bf16.gmra.mxu0 %v7866
        %v8147 = vpop.f32.mrf.mxu0
        %v8148 = vpop.f32.mrf.mxu0
        %8149 = vmatmul.bf16.gmra.mxu0 %v7869
        %v8150 = vpop.f32.mrf.mxu0
        %v8151 = vpop.f32.mrf.mxu0
        %8152 = vmatmul.bf16.gmra.mxu0 %v7872
        %v8153 = vpop.f32.mrf.mxu0
        %v8154 = vpop.f32.mrf.mxu0
        %8155 = vmatmul.bf16.gmra.mxu0 %v7875
        %v8156 = vpop.f32.mrf.mxu0
        %v8157 = vpop.f32.mrf.mxu0
        %8158 = vmatmul.bf16.gmra.mxu0 %v7878
        %v8159 = vpop.f32.mrf.mxu0
        %v8160 = vpop.f32.mrf.mxu0
        %8161 = vdwg.mxu0
        %v8162 = vpack.c.bf16 %v7890, %v7890
        %v8163 = vpack.c.bf16 %v7892, %v7892
        %v8164 = vpack.c.bf16 %v7895, %v7895
        %v8165 = vpack.c.bf16 %v7897, %v7897
        %v8166 = vpack.c.bf16 %v7900, %v7900
        %v8167 = vpack.c.bf16 %v7902, %v7902
        %v8168 = vpack.c.bf16 %v7905, %v7905
        %v8169 = vpack.c.bf16 %v7907, %v7907
        %v8170 = vpack.c.bf16 %v7910, %v7910
        %v8171 = vpack.c.bf16 %v7912, %v7912
        %v8172 = vpack.c.bf16 %v7915, %v7915
        %v8173 = vpack.c.bf16 %v7917, %v7917
        %v8174 = vpack.c.bf16 %v7920, %v7920
        %v8175 = vpack.c.bf16 %v7922, %v7922
        %v8176 = vpack.c.bf16 %v7925, %v7925
        %v8177 = vpack.c.bf16 %v7927, %v7927
        %v8178 = vpack.c.bf16 %v7930, %v7930
        %v8179 = vpack.c.bf16 %v7932, %v7932
        %v8180 = vpack.c.bf16 %v7935, %v7935
        %v8181 = vpack.c.bf16 %v7937, %v7937
        %v8182 = vpack.c.bf16 %v7940, %v7940
        %v8183 = vpack.c.bf16 %v7942, %v7942
        %v8184 = vpack.c.bf16 %v7945, %v7945
        %v8185 = vpack.c.bf16 %v7947, %v7947
        %v8186 = vpack.c.bf16 %v7950, %v7950
        %v8187 = vpack.c.bf16 %v7952, %v7952
        %v8188 = vpack.c.bf16 %v7955, %v7955
        %v8189 = vpack.c.bf16 %v7957, %v7957
        %v8190 = vpack.c.bf16 %v7960, %v7960
        %v8191 = vpack.c.bf16 %v7962, %v7962
        %v8192 = vpack.c.bf16 %v7965, %v7965
        %v8193 = vpack.c.bf16 %v7967, %v7967
        %v8194 = vpack.c.bf16 %v7970, %v7970
        %v8195 = vpack.c.bf16 %v7972, %v7972
        %v8196 = vpack.c.bf16 %v7975, %v7975
        %v8197 = vpack.c.bf16 %v7977, %v7977
        %v8198 = vpack.c.bf16 %v7980, %v7980
        %v8199 = vpack.c.bf16 %v7982, %v7982
        %v8200 = vpack.c.bf16 %v7985, %v7985
        %v8201 = vpack.c.bf16 %v7987, %v7987
        %v8202 = vpack.c.bf16 %v7990, %v7990
        %v8203 = vpack.c.bf16 %v7992, %v7992
        %v8204 = vpack.c.bf16 %v7995, %v7995
        %v8205 = vpack.c.bf16 %v7997, %v7997
        %v8206 = vpack.c.bf16 %v8000, %v8000
        %v8207 = vpack.c.bf16 %v8002, %v8002
        %v8208 = vpack.c.bf16 %v8005, %v8005
        %v8209 = vpack.c.bf16 %v8007, %v8007
        %v8210 = vpack.c.bf16 %v8010, %v8010
        %v8211 = vpack.c.bf16 %v8012, %v8012
        %v8212 = vpack.c.bf16 %v8015, %v8015
        %v8213 = vpack.c.bf16 %v8017, %v8017
        %v8214 = vpack.c.bf16 %v8020, %v8020
        %v8215 = vpack.c.bf16 %v8022, %v8022
        %v8216 = vpack.c.bf16 %v8025, %v8025
        %v8217 = vpack.c.bf16 %v8027, %v8027
        %v8218 = vpack.c.bf16 %v8030, %v8030
        %v8219 = vpack.c.bf16 %v8032, %v8032
        %v8220 = vpack.c.bf16 %v8035, %v8035
        %v8221 = vpack.c.bf16 %v8037, %v8037
        %v8233 = vunpack.c.l.b16 %v7460
        %v8234 = vunpack.c.l.b16 %v7461
        %v8235 = vunpack.c.l.b16 %v7462
        %v8236 = vunpack.c.l.b16 %v7463
        %v8237 = vunpack.c.l.b16 %v7464
        %v8238 = vunpack.c.l.b16 %v7465
        %v8239 = vunpack.c.l.b16 %v7466
        %v8240 = vunpack.c.l.b16 %v7467
        %v8241 = vunpack.c.l.b16 %v7468
        %v8242 = vunpack.c.l.b16 %v7469
        %v8243 = vunpack.c.l.b16 %v7470
        %v8244 = vpack.c.b16 %v8234, %v8233
        %v8245 = vpack.c.b16 %v8236, %v8235
        %v8246 = vpack.c.b16 %v8238, %v8237
        %v8247 = vpack.c.b16 %v8240, %v8239
        %v8248 = vpack.c.b16 %v8242, %v8241
        %v8249 = vpack.c.b16 %v8243, %v8243
        %v8262 = vunpack.c.l.b16 %v8162
        %v8263 = vunpack.c.l.b16 %v8163
        %v8264 = vunpack.c.l.b16 %v8164
        %v8265 = vunpack.c.l.b16 %v8165
        %v8266 = vunpack.c.l.b16 %v8166
        %v8267 = vunpack.c.l.b16 %v8167
        %v8268 = vunpack.c.l.b16 %v8168
        %v8269 = vunpack.c.l.b16 %v8169
        %v8270 = vunpack.c.l.b16 %v8170
        %v8271 = vunpack.c.l.b16 %v8171
        %v8272 = vunpack.c.l.b16 %v8172
        %v8273 = vunpack.c.l.b16 %v8173
        %v8274 = vpack.c.b16 %v8263, %v8262
        %v8275 = vpack.c.b16 %v8265, %v8264
        %v8276 = vpack.c.b16 %v8267, %v8266
        %v8277 = vpack.c.b16 %v8269, %v8268
        %v8278 = vpack.c.b16 %v8271, %v8270
        %v8279 = vpack.c.b16 %v8273, %v8272
        %v8287 = vsel %vm7789, %v8244, 0
        %v8290 = vsel %vm7789, %v8245, 0
        %v8293 = vsel %vm7789, %v8246, 0
        %v8296 = vsel %vm7789, %v8247, 0
        %v8299 = vsel %vm7789, %v8248, 0
        %v8302 = vsel %vm7789, %v8249, 0
        %8304 = vmatpush.bf16.msra.mxu0 0
        %8305 = vmatpush.bf16.msra.mxu0 0
        %8306 = vmatpush.bf16.msra.mxu0 %v8279
        %8307 = vmatpush.bf16.msra.mxu0 %v8278
        %8308 = vmatpush.bf16.msra.mxu0 %v8277
        %8309 = vmatpush.bf16.msra.mxu0 %v8276
        %8310 = vmatpush.bf16.msra.mxu0 %v8275
        %8311 = vmatpush.bf16.msra.mxu0 %v8274
        %8312 = vmatmul.bf16.gmra.mxu0 %v8287
        %v8313 = vpop.f32.mrf.mxu0
        %v8314 = vadd.f32 0.0, %v8313
        %v8315 = vpop.f32.mrf.mxu0
        %v8316 = vadd.f32 0.0, %v8315
        %8317 = vmatmul.bf16.gmra.mxu0 %v8290
        %v8318 = vpop.f32.mrf.mxu0
        %v8319 = vadd.f32 0.0, %v8318
        %v8320 = vpop.f32.mrf.mxu0
        %v8321 = vadd.f32 0.0, %v8320
        %8322 = vmatmul.bf16.gmra.mxu0 %v8293
        %v8323 = vpop.f32.mrf.mxu0
        %v8324 = vadd.f32 0.0, %v8323
        %v8325 = vpop.f32.mrf.mxu0
        %v8326 = vadd.f32 0.0, %v8325
        %8327 = vmatmul.bf16.gmra.mxu0 %v8296
        %v8328 = vpop.f32.mrf.mxu0
        %v8329 = vadd.f32 0.0, %v8328
        %v8330 = vpop.f32.mrf.mxu0
        %v8331 = vadd.f32 0.0, %v8330
        %8332 = vmatmul.bf16.gmra.mxu0 %v8299
        %v8333 = vpop.f32.mrf.mxu0
        %v8334 = vadd.f32 0.0, %v8333
        %v8335 = vpop.f32.mrf.mxu0
        %v8336 = vadd.f32 0.0, %v8335
        %8337 = vmatmul.bf16.gmra.mxu0 %v8302
        %v8338 = vpop.f32.mrf.mxu0
        %v8339 = vadd.f32 0.0, %v8338
        %v8340 = vpop.f32.mrf.mxu0
        %8341 = vdwg.mxu0
        %v8354 = vunpack.c.l.b16 %v8174
        %v8355 = vunpack.c.l.b16 %v8175
        %v8356 = vunpack.c.l.b16 %v8176
        %v8357 = vunpack.c.l.b16 %v8177
        %v8358 = vunpack.c.l.b16 %v8178
        %v8359 = vunpack.c.l.b16 %v8179
        %v8360 = vunpack.c.l.b16 %v8180
        %v8361 = vunpack.c.l.b16 %v8181
        %v8362 = vunpack.c.l.b16 %v8182
        %v8363 = vunpack.c.l.b16 %v8183
        %v8364 = vunpack.c.l.b16 %v8184
        %v8365 = vunpack.c.l.b16 %v8185
        %v8366 = vpack.c.b16 %v8355, %v8354
        %v8367 = vpack.c.b16 %v8357, %v8356
        %v8368 = vpack.c.b16 %v8359, %v8358
        %v8369 = vpack.c.b16 %v8361, %v8360
        %v8370 = vpack.c.b16 %v8363, %v8362
        %v8371 = vpack.c.b16 %v8365, %v8364
        %8378 = vmatpush.bf16.msra.mxu0 0
        %8379 = vmatpush.bf16.msra.mxu0 0
        %8380 = vmatpush.bf16.msra.mxu0 %v8371
        %8381 = vmatpush.bf16.msra.mxu0 %v8370
        %8382 = vmatpush.bf16.msra.mxu0 %v8369
        %8383 = vmatpush.bf16.msra.mxu0 %v8368
        %8384 = vmatpush.bf16.msra.mxu0 %v8367
        %8385 = vmatpush.bf16.msra.mxu0 %v8366
        %8386 = vmatmul.bf16.gmra.mxu0 %v8287
        %v8387 = vpop.f32.mrf.mxu0
        %v8388 = vadd.f32 0.0, %v8387
        %v8389 = vpop.f32.mrf.mxu0
        %v8390 = vadd.f32 0.0, %v8389
        %8391 = vmatmul.bf16.gmra.mxu0 %v8290
        %v8392 = vpop.f32.mrf.mxu0
        %v8393 = vadd.f32 0.0, %v8392
        %v8394 = vpop.f32.mrf.mxu0
        %v8395 = vadd.f32 0.0, %v8394
        %8396 = vmatmul.bf16.gmra.mxu0 %v8293
        %v8397 = vpop.f32.mrf.mxu0
        %v8398 = vadd.f32 0.0, %v8397
        %v8399 = vpop.f32.mrf.mxu0
        %v8400 = vadd.f32 0.0, %v8399
        %8401 = vmatmul.bf16.gmra.mxu0 %v8296
        %v8402 = vpop.f32.mrf.mxu0
        %v8403 = vadd.f32 0.0, %v8402
        %v8404 = vpop.f32.mrf.mxu0
        %v8405 = vadd.f32 0.0, %v8404
        %8406 = vmatmul.bf16.gmra.mxu0 %v8299
        %v8407 = vpop.f32.mrf.mxu0
        %v8408 = vadd.f32 0.0, %v8407
        %v8409 = vpop.f32.mrf.mxu0
        %v8410 = vadd.f32 0.0, %v8409
        %8411 = vmatmul.bf16.gmra.mxu0 %v8302
        %v8412 = vpop.f32.mrf.mxu0
        %v8413 = vadd.f32 0.0, %v8412
        %v8414 = vpop.f32.mrf.mxu0
        %8415 = vdwg.mxu0
        %v8428 = vunpack.c.l.b16 %v8186
        %v8429 = vunpack.c.l.b16 %v8187
        %v8430 = vunpack.c.l.b16 %v8188
        %v8431 = vunpack.c.l.b16 %v8189
        %v8432 = vunpack.c.l.b16 %v8190
        %v8433 = vunpack.c.l.b16 %v8191
        %v8434 = vunpack.c.l.b16 %v8192
        %v8435 = vunpack.c.l.b16 %v8193
        %v8436 = vunpack.c.l.b16 %v8194
        %v8437 = vunpack.c.l.b16 %v8195
        %v8438 = vunpack.c.l.b16 %v8196
        %v8439 = vunpack.c.l.b16 %v8197
        %v8440 = vpack.c.b16 %v8429, %v8428
        %v8441 = vpack.c.b16 %v8431, %v8430
        %v8442 = vpack.c.b16 %v8433, %v8432
        %v8443 = vpack.c.b16 %v8435, %v8434
        %v8444 = vpack.c.b16 %v8437, %v8436
        %v8445 = vpack.c.b16 %v8439, %v8438
        %8452 = vmatpush.bf16.msra.mxu0 0
        %8453 = vmatpush.bf16.msra.mxu0 0
        %8454 = vmatpush.bf16.msra.mxu0 %v8445
        %8455 = vmatpush.bf16.msra.mxu0 %v8444
        %8456 = vmatpush.bf16.msra.mxu0 %v8443
        %8457 = vmatpush.bf16.msra.mxu0 %v8442
        %8458 = vmatpush.bf16.msra.mxu0 %v8441
        %8459 = vmatpush.bf16.msra.mxu0 %v8440
        %8460 = vmatmul.bf16.gmra.mxu0 %v8287
        %v8461 = vpop.f32.mrf.mxu0
        %v8462 = vadd.f32 0.0, %v8461
        %v8463 = vpop.f32.mrf.mxu0
        %v8464 = vadd.f32 0.0, %v8463
        %8465 = vmatmul.bf16.gmra.mxu0 %v8290
        %v8466 = vpop.f32.mrf.mxu0
        %v8467 = vadd.f32 0.0, %v8466
        %v8468 = vpop.f32.mrf.mxu0
        %v8469 = vadd.f32 0.0, %v8468
        %8470 = vmatmul.bf16.gmra.mxu0 %v8293
        %v8471 = vpop.f32.mrf.mxu0
        %v8472 = vadd.f32 0.0, %v8471
        %v8473 = vpop.f32.mrf.mxu0
        %v8474 = vadd.f32 0.0, %v8473
        %8475 = vmatmul.bf16.gmra.mxu0 %v8296
        %v8476 = vpop.f32.mrf.mxu0
        %v8477 = vadd.f32 0.0, %v8476
        %v8478 = vpop.f32.mrf.mxu0
        %v8479 = vadd.f32 0.0, %v8478
        %8480 = vmatmul.bf16.gmra.mxu0 %v8299
        %v8481 = vpop.f32.mrf.mxu0
        %v8482 = vadd.f32 0.0, %v8481
        %v8483 = vpop.f32.mrf.mxu0
        %v8484 = vadd.f32 0.0, %v8483
        %8485 = vmatmul.bf16.gmra.mxu0 %v8302
        %v8486 = vpop.f32.mrf.mxu0
        %v8487 = vadd.f32 0.0, %v8486
        %v8488 = vpop.f32.mrf.mxu0
        %8489 = vdwg.mxu0
        %v8502 = vunpack.c.l.b16 %v8198
        %v8503 = vunpack.c.l.b16 %v8199
        %v8504 = vunpack.c.l.b16 %v8200
        %v8505 = vunpack.c.l.b16 %v8201
        %v8506 = vunpack.c.l.b16 %v8202
        %v8507 = vunpack.c.l.b16 %v8203
        %v8508 = vunpack.c.l.b16 %v8204
        %v8509 = vunpack.c.l.b16 %v8205
        %v8510 = vunpack.c.l.b16 %v8206
        %v8511 = vunpack.c.l.b16 %v8207
        %v8512 = vunpack.c.l.b16 %v8208
        %v8513 = vunpack.c.l.b16 %v8209
        %v8514 = vpack.c.b16 %v8503, %v8502
        %v8515 = vpack.c.b16 %v8505, %v8504
        %v8516 = vpack.c.b16 %v8507, %v8506
        %v8517 = vpack.c.b16 %v8509, %v8508
        %v8518 = vpack.c.b16 %v8511, %v8510
        %v8519 = vpack.c.b16 %v8513, %v8512
        %8526 = vmatpush.bf16.msra.mxu0 0
        %8527 = vmatpush.bf16.msra.mxu0 0
        %8528 = vmatpush.bf16.msra.mxu0 %v8519
        %8529 = vmatpush.bf16.msra.mxu0 %v8518
        %8530 = vmatpush.bf16.msra.mxu0 %v8517
        %8531 = vmatpush.bf16.msra.mxu0 %v8516
        %8532 = vmatpush.bf16.msra.mxu0 %v8515
        %8533 = vmatpush.bf16.msra.mxu0 %v8514
        %8534 = vmatmul.bf16.gmra.mxu0 %v8287
        %v8535 = vpop.f32.mrf.mxu0
        %v8536 = vadd.f32 0.0, %v8535
        %v8537 = vpop.f32.mrf.mxu0
        %v8538 = vadd.f32 0.0, %v8537
        %8539 = vmatmul.bf16.gmra.mxu0 %v8290
        %v8540 = vpop.f32.mrf.mxu0
        %v8541 = vadd.f32 0.0, %v8540
        %v8542 = vpop.f32.mrf.mxu0
        %v8543 = vadd.f32 0.0, %v8542
        %8544 = vmatmul.bf16.gmra.mxu0 %v8293
        %v8545 = vpop.f32.mrf.mxu0
        %v8546 = vadd.f32 0.0, %v8545
        %v8547 = vpop.f32.mrf.mxu0
        %v8548 = vadd.f32 0.0, %v8547
        %8549 = vmatmul.bf16.gmra.mxu0 %v8296
        %v8550 = vpop.f32.mrf.mxu0
        %v8551 = vadd.f32 0.0, %v8550
        %v8552 = vpop.f32.mrf.mxu0
        %v8553 = vadd.f32 0.0, %v8552
        %8554 = vmatmul.bf16.gmra.mxu0 %v8299
        %v8555 = vpop.f32.mrf.mxu0
        %v8556 = vadd.f32 0.0, %v8555
        %v8557 = vpop.f32.mrf.mxu0
        %v8558 = vadd.f32 0.0, %v8557
        %8559 = vmatmul.bf16.gmra.mxu0 %v8302
        %v8560 = vpop.f32.mrf.mxu0
        %v8561 = vadd.f32 0.0, %v8560
        %v8562 = vpop.f32.mrf.mxu0
        %8563 = vdwg.mxu0
        %v8576 = vunpack.c.l.b16 %v8210
        %v8577 = vunpack.c.l.b16 %v8211
        %v8578 = vunpack.c.l.b16 %v8212
        %v8579 = vunpack.c.l.b16 %v8213
        %v8580 = vunpack.c.l.b16 %v8214
        %v8581 = vunpack.c.l.b16 %v8215
        %v8582 = vunpack.c.l.b16 %v8216
        %v8583 = vunpack.c.l.b16 %v8217
        %v8584 = vunpack.c.l.b16 %v8218
        %v8585 = vunpack.c.l.b16 %v8219
        %v8586 = vunpack.c.l.b16 %v8220
        %v8587 = vunpack.c.l.b16 %v8221
        %v8588 = vpack.c.b16 %v8577, %v8576
        %v8589 = vpack.c.b16 %v8579, %v8578
        %v8590 = vpack.c.b16 %v8581, %v8580
        %v8591 = vpack.c.b16 %v8583, %v8582
        %v8592 = vpack.c.b16 %v8585, %v8584
        %v8593 = vpack.c.b16 %v8587, %v8586
        %8600 = vmatpush.bf16.msra.mxu0 0
        %8601 = vmatpush.bf16.msra.mxu0 0
        %8602 = vmatpush.bf16.msra.mxu0 %v8593
        %8603 = vmatpush.bf16.msra.mxu0 %v8592
        %8604 = vmatpush.bf16.msra.mxu0 %v8591
        %8605 = vmatpush.bf16.msra.mxu0 %v8590
        %8606 = vmatpush.bf16.msra.mxu0 %v8589
        %8607 = vmatpush.bf16.msra.mxu0 %v8588
        %8608 = vmatmul.bf16.gmra.mxu0 %v8287
        %v8609 = vpop.f32.mrf.mxu0
        %v8610 = vadd.f32 0.0, %v8609
        %v8611 = vpop.f32.mrf.mxu0
        %v8612 = vadd.f32 0.0, %v8611
        %8613 = vmatmul.bf16.gmra.mxu0 %v8290
        %v8614 = vpop.f32.mrf.mxu0
        %v8615 = vadd.f32 0.0, %v8614
        %v8616 = vpop.f32.mrf.mxu0
        %v8617 = vadd.f32 0.0, %v8616
        %8618 = vmatmul.bf16.gmra.mxu0 %v8293
        %v8619 = vpop.f32.mrf.mxu0
        %v8620 = vadd.f32 0.0, %v8619
        %v8621 = vpop.f32.mrf.mxu0
        %v8622 = vadd.f32 0.0, %v8621
        %8623 = vmatmul.bf16.gmra.mxu0 %v8296
        %v8624 = vpop.f32.mrf.mxu0
        %v8625 = vadd.f32 0.0, %v8624
        %v8626 = vpop.f32.mrf.mxu0
        %v8627 = vadd.f32 0.0, %v8626
        %8628 = vmatmul.bf16.gmra.mxu0 %v8299
        %v8629 = vpop.f32.mrf.mxu0
        %v8630 = vadd.f32 0.0, %v8629
        %v8631 = vpop.f32.mrf.mxu0
        %v8632 = vadd.f32 0.0, %v8631
        %8633 = vmatmul.bf16.gmra.mxu0 %v8302
        %v8634 = vpop.f32.mrf.mxu0
        %v8635 = vadd.f32 0.0, %v8634
        %v8636 = vpop.f32.mrf.mxu0
        %8637 = vdwg.mxu0
        %v8638 = vmul.f32 %v8314, %v8314
        %v8639 = vmul.f32 %v8316, %v8316
        %v8640 = vmul.f32 %v8319, %v8319
        %v8641 = vmul.f32 %v8321, %v8321
        %v8642 = vmul.f32 %v8324, %v8324
        %v8643 = vmul.f32 %v8326, %v8326
        %v8644 = vmul.f32 %v8329, %v8329
        %v8645 = vmul.f32 %v8331, %v8331
        %v8646 = vmul.f32 %v8334, %v8334
        %v8647 = vmul.f32 %v8336, %v8336
        %v8648 = vmul.f32 %v8339, %v8339
        %v8649 = vsub.f32 %v8462, %v8638
        %v8650 = vsub.f32 %v8464, %v8639
        %v8651 = vsub.f32 %v8467, %v8640
        %v8652 = vsub.f32 %v8469, %v8641
        %v8653 = vsub.f32 %v8472, %v8642
        %v8654 = vsub.f32 %v8474, %v8643
        %v8655 = vsub.f32 %v8477, %v8644
        %v8656 = vsub.f32 %v8479, %v8645
        %v8657 = vsub.f32 %v8482, %v8646
        %v8658 = vsub.f32 %v8484, %v8647
        %v8659 = vsub.f32 %v8487, %v8648
        %v8660 = vmul.f32 %v8388, %v8388
        %v8661 = vmul.f32 %v8390, %v8390
        %v8662 = vmul.f32 %v8393, %v8393
        %v8663 = vmul.f32 %v8395, %v8395
        %v8664 = vmul.f32 %v8398, %v8398
        %v8665 = vmul.f32 %v8400, %v8400
        %v8666 = vmul.f32 %v8403, %v8403
        %v8667 = vmul.f32 %v8405, %v8405
        %v8668 = vmul.f32 %v8408, %v8408
        %v8669 = vmul.f32 %v8410, %v8410
        %v8670 = vmul.f32 %v8413, %v8413
        %v8671 = vsub.f32 %v8536, %v8660
        %v8672 = vsub.f32 %v8538, %v8661
        %v8673 = vsub.f32 %v8541, %v8662
        %v8674 = vsub.f32 %v8543, %v8663
        %v8675 = vsub.f32 %v8546, %v8664
        %v8676 = vsub.f32 %v8548, %v8665
        %v8677 = vsub.f32 %v8551, %v8666
        %v8678 = vsub.f32 %v8553, %v8667
        %v8679 = vsub.f32 %v8556, %v8668
        %v8680 = vsub.f32 %v8558, %v8669
        %v8681 = vsub.f32 %v8561, %v8670
        %v8682 = vmul.f32 %v8314, %v8388
        %v8683 = vmul.f32 %v8316, %v8390
        %v8684 = vmul.f32 %v8319, %v8393
        %v8685 = vmul.f32 %v8321, %v8395
        %v8686 = vmul.f32 %v8324, %v8398
        %v8687 = vmul.f32 %v8326, %v8400
        %v8688 = vmul.f32 %v8329, %v8403
        %v8689 = vmul.f32 %v8331, %v8405
        %v8690 = vmul.f32 %v8334, %v8408
        %v8691 = vmul.f32 %v8336, %v8410
        %v8692 = vmul.f32 %v8339, %v8413
        %v8693 = vsub.f32 %v8610, %v8682
        %v8694 = vsub.f32 %v8612, %v8683
        %v8695 = vsub.f32 %v8615, %v8684
        %v8696 = vsub.f32 %v8617, %v8685
        %v8697 = vsub.f32 %v8620, %v8686
        %v8698 = vsub.f32 %v8622, %v8687
        %v8699 = vsub.f32 %v8625, %v8688
        %v8700 = vsub.f32 %v8627, %v8689
        %v8701 = vsub.f32 %v8630, %v8690
        %v8702 = vsub.f32 %v8632, %v8691
        %v8703 = vsub.f32 %v8635, %v8692
        %v8704 = vmul.f32 %v8693, 2.0
        %v8705 = vmul.f32 %v8694, 2.0
        %v8706 = vmul.f32 %v8695, 2.0
        %v8707 = vmul.f32 %v8696, 2.0
        %v8708 = vmul.f32 %v8697, 2.0
        %v8709 = vmul.f32 %v8698, 2.0
        %v8710 = vmul.f32 %v8699, 2.0
        %v8711 = vmul.f32 %v8700, 2.0
        %v8712 = vmul.f32 %v8701, 2.0
        %v8713 = vmul.f32 %v8702, 2.0
        %v8714 = vmul.f32 %v8703, 2.0
        %v8715 = vadd.f32 %v8704, 0.0009
        %v8716 = vadd.f32 %v8705, 0.0009
        %v8717 = vadd.f32 %v8706, 0.0009
        %v8718 = vadd.f32 %v8707, 0.0009
        %v8719 = vadd.f32 %v8708, 0.0009
        %v8720 = vadd.f32 %v8709, 0.0009
        %v8721 = vadd.f32 %v8710, 0.0009
        %v8722 = vadd.f32 %v8711, 0.0009
        %v8723 = vadd.f32 %v8712, 0.0009
        %v8724 = vadd.f32 %v8713, 0.0009
        %v8725 = vadd.f32 %v8714, 0.0009
        %v8726 = vadd.f32 %v8649, %v8671
        %v8727 = vadd.f32 %v8650, %v8672
        %v8728 = vadd.f32 %v8651, %v8673
        %v8729 = vadd.f32 %v8652, %v8674
        %v8730 = vadd.f32 %v8653, %v8675
        %v8731 = vadd.f32 %v8654, %v8676
        %v8732 = vadd.f32 %v8655, %v8677
        %v8733 = vadd.f32 %v8656, %v8678
        %v8734 = vadd.f32 %v8657, %v8679
        %v8735 = vadd.f32 %v8658, %v8680
        %v8736 = vadd.f32 %v8659, %v8681
        %v8737 = vadd.f32 %v8726, 0.0009
        %v8738 = vadd.f32 %v8727, 0.0009
        %v8739 = vadd.f32 %v8728, 0.0009
        %v8740 = vadd.f32 %v8729, 0.0009
        %v8741 = vadd.f32 %v8730, 0.0009
        %v8742 = vadd.f32 %v8731, 0.0009
        %v8743 = vadd.f32 %v8732, 0.0009
        %v8744 = vadd.f32 %v8733, 0.0009
        %v8745 = vadd.f32 %v8734, 0.0009
        %v8746 = vadd.f32 %v8735, 0.0009
        %v8747 = vadd.f32 %v8736, 0.0009
        %v8748 = vrcp.pop %v8737
        %v8749 = vrcp.pop %v8738
        %v8750 = vrcp.pop %v8739
        %v8751 = vrcp.pop %v8740
        %v8752 = vrcp.pop %v8741
        %v8753 = vrcp.pop %v8742
        %v8754 = vrcp.pop %v8743
        %v8755 = vrcp.pop %v8744
        %v8756 = vrcp.pop %v8745
        %v8757 = vrcp.pop %v8746
        %v8758 = vrcp.pop %v8747
        %v8759 = vmul.f32 %v8715, %v8748
        %v8760 = vmul.f32 %v8716, %v8749
        %v8761 = vmul.f32 %v8717, %v8750
        %v8762 = vmul.f32 %v8718, %v8751
        %v8763 = vmul.f32 %v8719, %v8752
        %v8764 = vmul.f32 %v8720, %v8753
        %v8765 = vmul.f32 %v8721, %v8754
        %v8766 = vmul.f32 %v8722, %v8755
        %v8767 = vmul.f32 %v8723, %v8756
        %v8768 = vmul.f32 %v8724, %v8757
        %v8769 = vmul.f32 %v8725, %v8758
        %vm8770 = vcmask 703488
        %v8771 = vsel %vm8770, %v8759, 0.0
        %v8772 = vsel %vm8770, %v8760, 0.0
        %v8773 = vadd.f32 %v8771, %v8772
        %v8774 = vsel %vm8770, %v8761, 0.0
        %v8775 = vadd.f32 %v8773, %v8774
        %v8776 = vsel %vm8770, %v8762, 0.0
        %v8777 = vadd.f32 %v8775, %v8776
        %v8778 = vsel %vm8770, %v8763, 0.0
        %v8779 = vadd.f32 %v8777, %v8778
        %v8780 = vsel %vm8770, %v8764, 0.0
        %v8781 = vadd.f32 %v8779, %v8780
        %v8782 = vsel %vm8770, %v8765, 0.0
        %v8783 = vadd.f32 %v8781, %v8782
        %v8784 = vsel %vm8770, %v8766, 0.0
        %v8785 = vadd.f32 %v8783, %v8784
        %v8786 = vsel %vm8770, %v8767, 0.0
        %v8787 = vadd.f32 %v8785, %v8786
        %v8788 = vsel %vm8770, %v8768, 0.0
        %v8789 = vadd.f32 %v8787, %v8788
        %vm8790 = vcmask 701440
        %v8791 = vsel %vm8790, %v8769, 0.0
        %v8792 = vadd.f32 %v8789, %v8791
        %8793 = vadd.xlane.f32.xlu0 %v8792
        %v8794 = vpop.xlane.xlu0 %8793
        %v8795 = vrot.slane %v8794, 4
        %v8796 = vadd.f32 %v8794, %v8795
        %v8797 = vrot.slane %v8796, 2
        %v8798 = vadd.f32 %v8796, %v8797
        %v8799 = vrot.slane %v8798, 1
        %v8800 = vadd.f32 %v8798, %v8799
        %s8801 = vtos %v8800
        %v8802 = vrcp.pop 7396.0
        %v8803 = vmul.f32 7396.0, %v8802
        %v8804 = vsub.f32 1.0, %v8803
        %v8805 = vmul.f32 %v8802, %v8804
        %v8806 = vadd.f32 %v8802, %v8805
        %vm8807 = vweird.f32 %v8802
        %v8808 = vsel %vm8807, %v8802, %v8806
        %s8809 = vtos %v8808
        %s8810 = smul.f32 %s8801, %s8809
        %s8811 = smax.f32 %s8810, 0.0
        %vm8812 = vcmp.eq.s32.totalorder %v1009, 1
        %v8813 = vstv %s8811
        %v8814 = vsel %vm8812, %v8813, %v6834
        %v8815 = vld [vmem:[#allocation22] sm:$0xf]
        %v8816 = vld [vmem:[#allocation22 + $0x4] sm:$0xf]
        %v8817 = vld [vmem:[#allocation22 + $0x8] sm:$0xf]
        %v8818 = vld [vmem:[#allocation22 + $0xc] sm:$0xf]
        %v8819 = vld [vmem:[#allocation22 + $0x10] sm:$0xf]
        %v8820 = vld [vmem:[#allocation22 + $0x14] sm:$0xf]
        %v8821 = vpack.c.bf16 %v8049, %v7890
        %v8822 = vpack.c.bf16 %v8051, %v7892
        %v8823 = vpack.c.bf16 %v8054, %v7895
        %v8824 = vpack.c.bf16 %v8056, %v7897
        %v8825 = vpack.c.bf16 %v8059, %v7900
        %v8826 = vpack.c.bf16 %v8061, %v7902
        %v8827 = vpack.c.bf16 %v8064, %v7905
        %v8828 = vpack.c.bf16 %v8066, %v7907
        %v8829 = vpack.c.bf16 %v8069, %v7910
        %v8830 = vpack.c.bf16 %v8071, %v7912
        %v8831 = vpack.c.bf16 %v8074, %v7915
        %v8832 = vpack.c.bf16 %v8076, %v7917
        %v8833 = vpack.c.bf16 %v8079, %v7920
        %v8834 = vpack.c.bf16 %v8081, %v7922
        %v8835 = vpack.c.bf16 %v8084, %v7925
        %v8836 = vpack.c.bf16 %v8086, %v7927
        %v8837 = vpack.c.bf16 %v8089, %v7930
        %v8838 = vpack.c.bf16 %v8091, %v7932
        %v8839 = vpack.c.bf16 %v8094, %v7935
        %v8840 = vpack.c.bf16 %v8096, %v7937
        %v8841 = vpack.c.bf16 %v8099, %v7940
        %v8842 = vpack.c.bf16 %v8101, %v7942
        %v8843 = vpack.c.bf16 %v8104, %v7945
        %v8844 = vpack.c.bf16 %v8106, %v7947
        %v8851 = vunpack.c.l.b16 %v8815
        %v8852 = vunpack.c.l.b16 %v8816
        %v8853 = vunpack.c.l.b16 %v8817
        %v8854 = vunpack.c.l.b16 %v8818
        %v8855 = vunpack.c.l.b16 %v8819
        %v8856 = vunpack.c.l.b16 %v8820
        %v8857 = vpack.c.b16 %v8852, %v8851
        %v8858 = vpack.c.b16 %v8854, %v8853
        %v8859 = vpack.c.b16 %v8856, %v8855
        %v8872 = vunpack.c.l.b16 %v8821
        %v8873 = vunpack.c.h.b16 %v8821
        %v8874 = vunpack.c.l.b16 %v8822
        %v8875 = vunpack.c.h.b16 %v8822
        %v8876 = vunpack.c.l.b16 %v8823
        %v8877 = vunpack.c.h.b16 %v8823
        %v8878 = vunpack.c.l.b16 %v8824
        %v8879 = vunpack.c.h.b16 %v8824
        %v8880 = vunpack.c.l.b16 %v8825
        %v8881 = vunpack.c.h.b16 %v8825
        %v8882 = vunpack.c.l.b16 %v8826
        %v8883 = vunpack.c.h.b16 %v8826
        %v8884 = vunpack.c.l.b16 %v8827
        %v8885 = vunpack.c.h.b16 %v8827
        %v8886 = vunpack.c.l.b16 %v8828
        %v8887 = vunpack.c.h.b16 %v8828
        %v8888 = vunpack.c.l.b16 %v8829
        %v8889 = vunpack.c.h.b16 %v8829
        %v8890 = vunpack.c.l.b16 %v8830
        %v8891 = vunpack.c.h.b16 %v8830
        %v8892 = vunpack.c.l.b16 %v8831
        %v8893 = vunpack.c.h.b16 %v8831
        %v8894 = vunpack.c.l.b16 %v8832
        %v8895 = vunpack.c.h.b16 %v8832
        %v8896 = vpack.c.b16 %v8874, %v8872
        %v8897 = vpack.c.b16 %v8875, %v8873
        %v8898 = vpack.c.b16 %v8878, %v8876
        %v8899 = vpack.c.b16 %v8879, %v8877
        %v8900 = vpack.c.b16 %v8882, %v8880
        %v8901 = vpack.c.b16 %v8883, %v8881
        %v8902 = vpack.c.b16 %v8886, %v8884
        %v8903 = vpack.c.b16 %v8887, %v8885
        %v8904 = vpack.c.b16 %v8890, %v8888
        %v8905 = vpack.c.b16 %v8891, %v8889
        %v8906 = vpack.c.b16 %v8894, %v8892
        %v8907 = vpack.c.b16 %v8895, %v8893
        %8908 = vrot.lane.b32.xlu0 %v8896, 42
        %v8909 = vpop.permute.xlu0 %8908
        %8910 = vrot.lane.b32.xlu0 %v8897, 42
        %v8911 = vpop.permute.xlu0 %8910
        %8912 = vrot.lane.b32.xlu0 %v8898, 42
        %v8913 = vpop.permute.xlu0 %8912
        %8914 = vrot.lane.b32.xlu0 %v8899, 42
        %v8915 = vpop.permute.xlu0 %8914
        %8916 = vrot.lane.b32.xlu0 %v8900, 42
        %v8917 = vpop.permute.xlu0 %8916
        %8918 = vrot.lane.b32.xlu0 %v8901, 42
        %v8919 = vpop.permute.xlu0 %8918
        %8920 = vrot.lane.b32.xlu0 %v8902, 42
        %v8921 = vpop.permute.xlu0 %8920
        %8922 = vrot.lane.b32.xlu0 %v8903, 42
        %v8923 = vpop.permute.xlu0 %8922
        %8924 = vrot.lane.b32.xlu0 %v8904, 42
        %v8925 = vpop.permute.xlu0 %8924
        %8926 = vrot.lane.b32.xlu0 %v8905, 42
        %v8927 = vpop.permute.xlu0 %8926
        %8928 = vrot.lane.b32.xlu0 %v8906, 42
        %v8929 = vpop.permute.xlu0 %8928
        %8930 = vrot.lane.b32.xlu0 %v8907, 42
        %v8931 = vpop.permute.xlu0 %8930
        %vm8932 = vcmask 343040
        %v8933 = vsel %vm8932, %v8909, %v8911
        %v8934 = vsel %vm8932, %v8913, %v8915
        %v8935 = vsel %vm8932, %v8917, %v8919
        %v8936 = vsel %vm8932, %v8921, %v8923
        %v8937 = vsel %vm8932, %v8925, %v8927
        %v8938 = vsel %vm8932, %v8929, %v8931
        %v8946 = vsel %vm7789, %v8857, 0
        %v8949 = vsel %vm7789, %v8858, 0
        %v8952 = vsel %vm7789, %v8859, 0
        %8954 = vmatpush.bf16.msra.mxu0 0
        %8955 = vmatpush.bf16.msra.mxu0 0
        %8956 = vmatpush.bf16.msra.mxu0 %v8938
        %8957 = vmatpush.bf16.msra.mxu0 %v8937
        %8958 = vmatpush.bf16.msra.mxu0 %v8936
        %8959 = vmatpush.bf16.msra.mxu0 %v8935
        %8960 = vmatpush.bf16.msra.mxu0 %v8934
        %8961 = vmatpush.bf16.msra.mxu0 %v8933
        %8962 = vmatmul.bf16.gmra.mxu0 %v8946
        %v8963 = vpop.f32.mrf.mxu0
        %v8964 = vadd.f32 0.0, %v8963
        %v8965 = vpop.f32.mrf.mxu0
        %v8966 = vadd.f32 0.0, %v8965
        %8967 = vmatmul.bf16.gmra.mxu0 %v8949
        %v8968 = vpop.f32.mrf.mxu0
        %v8969 = vadd.f32 0.0, %v8968
        %v8970 = vpop.f32.mrf.mxu0
        %v8971 = vadd.f32 0.0, %v8970
        %8972 = vmatmul.bf16.gmra.mxu0 %v8952
        %v8973 = vpop.f32.mrf.mxu0
        %v8974 = vadd.f32 0.0, %v8973
        %v8975 = vpop.f32.mrf.mxu0
        %v8976 = vadd.f32 0.0, %v8975
        %8977 = vdwg.mxu0
        %v8990 = vunpack.c.l.b16 %v8833
        %v8991 = vunpack.c.h.b16 %v8833
        %v8992 = vunpack.c.l.b16 %v8834
        %v8993 = vunpack.c.h.b16 %v8834
        %v8994 = vunpack.c.l.b16 %v8835
        %v8995 = vunpack.c.h.b16 %v8835
        %v8996 = vunpack.c.l.b16 %v8836
        %v8997 = vunpack.c.h.b16 %v8836
        %v8998 = vunpack.c.l.b16 %v8837
        %v8999 = vunpack.c.h.b16 %v8837
        %v9000 = vunpack.c.l.b16 %v8838
        %v9001 = vunpack.c.h.b16 %v8838
        %v9002 = vunpack.c.l.b16 %v8839
        %v9003 = vunpack.c.h.b16 %v8839
        %v9004 = vunpack.c.l.b16 %v8840
        %v9005 = vunpack.c.h.b16 %v8840
        %v9006 = vunpack.c.l.b16 %v8841
        %v9007 = vunpack.c.h.b16 %v8841
        %v9008 = vunpack.c.l.b16 %v8842
        %v9009 = vunpack.c.h.b16 %v8842
        %v9010 = vunpack.c.l.b16 %v8843
        %v9011 = vunpack.c.h.b16 %v8843
        %v9012 = vunpack.c.l.b16 %v8844
        %v9013 = vunpack.c.h.b16 %v8844
        %v9014 = vpack.c.b16 %v8992, %v8990
        %v9015 = vpack.c.b16 %v8993, %v8991
        %v9016 = vpack.c.b16 %v8996, %v8994
        %v9017 = vpack.c.b16 %v8997, %v8995
        %v9018 = vpack.c.b16 %v9000, %v8998
        %v9019 = vpack.c.b16 %v9001, %v8999
        %v9020 = vpack.c.b16 %v9004, %v9002
        %v9021 = vpack.c.b16 %v9005, %v9003
        %v9022 = vpack.c.b16 %v9008, %v9006
        %v9023 = vpack.c.b16 %v9009, %v9007
        %v9024 = vpack.c.b16 %v9012, %v9010
        %v9025 = vpack.c.b16 %v9013, %v9011
        %9026 = vrot.lane.b32.xlu0 %v9014, 42
        %v9027 = vpop.permute.xlu0 %9026
        %9028 = vrot.lane.b32.xlu0 %v9015, 42
        %v9029 = vpop.permute.xlu0 %9028
        %9030 = vrot.lane.b32.xlu0 %v9016, 42
        %v9031 = vpop.permute.xlu0 %9030
        %9032 = vrot.lane.b32.xlu0 %v9017, 42
        %v9033 = vpop.permute.xlu0 %9032
        %9034 = vrot.lane.b32.xlu0 %v9018, 42
        %v9035 = vpop.permute.xlu0 %9034
        %9036 = vrot.lane.b32.xlu0 %v9019, 42
        %v9037 = vpop.permute.xlu0 %9036
        %9038 = vrot.lane.b32.xlu0 %v9020, 42
        %v9039 = vpop.permute.xlu0 %9038
        %9040 = vrot.lane.b32.xlu0 %v9021, 42
        %v9041 = vpop.permute.xlu0 %9040
        %9042 = vrot.lane.b32.xlu0 %v9022, 42
        %v9043 = vpop.permute.xlu0 %9042
        %9044 = vrot.lane.b32.xlu0 %v9023, 42
        %v9045 = vpop.permute.xlu0 %9044
        %9046 = vrot.lane.b32.xlu0 %v9024, 42
        %v9047 = vpop.permute.xlu0 %9046
        %9048 = vrot.lane.b32.xlu0 %v9025, 42
        %v9049 = vpop.permute.xlu0 %9048
        %v9050 = vsel %vm8932, %v9027, %v9029
        %v9051 = vsel %vm8932, %v9031, %v9033
        %v9052 = vsel %vm8932, %v9035, %v9037
        %v9053 = vsel %vm8932, %v9039, %v9041
        %v9054 = vsel %vm8932, %v9043, %v9045
        %v9055 = vsel %vm8932, %v9047, %v9049
        %9062 = vmatpush.bf16.msra.mxu0 0
        %9063 = vmatpush.bf16.msra.mxu0 0
        %9064 = vmatpush.bf16.msra.mxu0 %v9055
        %9065 = vmatpush.bf16.msra.mxu0 %v9054
        %9066 = vmatpush.bf16.msra.mxu0 %v9053
        %9067 = vmatpush.bf16.msra.mxu0 %v9052
        %9068 = vmatpush.bf16.msra.mxu0 %v9051
        %9069 = vmatpush.bf16.msra.mxu0 %v9050
        %9070 = vmatmul.bf16.gmra.mxu0 %v8946
        %v9071 = vpop.f32.mrf.mxu0
        %v9072 = vadd.f32 0.0, %v9071
        %v9073 = vpop.f32.mrf.mxu0
        %v9074 = vadd.f32 0.0, %v9073
        %9075 = vmatmul.bf16.gmra.mxu0 %v8949
        %v9076 = vpop.f32.mrf.mxu0
        %v9077 = vadd.f32 0.0, %v9076
        %v9078 = vpop.f32.mrf.mxu0
        %v9079 = vadd.f32 0.0, %v9078
        %9080 = vmatmul.bf16.gmra.mxu0 %v8952
        %v9081 = vpop.f32.mrf.mxu0
        %v9082 = vadd.f32 0.0, %v9081
        %v9083 = vpop.f32.mrf.mxu0
        %v9084 = vadd.f32 0.0, %v9083
        %9085 = vdwg.mxu0
        %v9086 = vld [vmem:[#allocation9] sm:$0xf]
        %v9087 = vld [vmem:[#allocation9 + $0x4] sm:$0xf]
        %v9088 = vld [vmem:[#allocation9 + $0x8] sm:$0xf]
        %v9089 = vld [vmem:[#allocation9 + $0xc] sm:$0xf]
        %v9090 = vld [vmem:[#allocation9 + $0x10] sm:$0x7]
        %v9091 = vld [vmem:[#allocation16] sm:$0xf]
        %v9092 = vld [vmem:[#allocation16 + $0x4] sm:$0xf]
        %v9093 = vld [vmem:[#allocation16 + $0x8] sm:$0xf]
        %v9094 = vld [vmem:[#allocation16 + $0xc] sm:$0xf]
        %v9095 = vld [vmem:[#allocation16 + $0x10] sm:$0xf]
        %v9096 = vld [vmem:[#allocation16 + $0x14] sm:$0xf]
        %v9097 = vpack.c.bf16 %v8964, %v8964
        %v9098 = vpack.c.bf16 %v8966, %v8966
        %v9099 = vpack.c.bf16 %v8969, %v8969
        %v9100 = vpack.c.bf16 %v8971, %v8971
        %v9101 = vpack.c.bf16 %v8974, %v8974
        %v9102 = vpack.c.bf16 %v8976, %v8976
        %v9103 = vpack.c.bf16 %v9072, %v9072
        %v9104 = vpack.c.bf16 %v9074, %v9074
        %v9105 = vpack.c.bf16 %v9077, %v9077
        %v9106 = vpack.c.bf16 %v9079, %v9079
        %v9107 = vpack.c.bf16 %v9082, %v9082
        %v9108 = vpack.c.bf16 %v9084, %v9084
        %v9109 = vmul.f32 %v8964, %v8964
        %v9110 = vmul.f32 %v8966, %v8966
        %v9111 = vmul.f32 %v8969, %v8969
        %v9112 = vmul.f32 %v8971, %v8971
        %v9113 = vmul.f32 %v8974, %v8974
        %v9114 = vmul.f32 %v8976, %v8976
        %v9115 = vpack.c.bf16 %v9109, %v9109
        %v9116 = vpack.c.bf16 %v9110, %v9110
        %v9117 = vpack.c.bf16 %v9111, %v9111
        %v9118 = vpack.c.bf16 %v9112, %v9112
        %v9119 = vpack.c.bf16 %v9113, %v9113
        %v9120 = vpack.c.bf16 %v9114, %v9114
        %v9121 = vmul.f32 %v9072, %v9072
        %v9122 = vmul.f32 %v9074, %v9074
        %v9123 = vmul.f32 %v9077, %v9077
        %v9124 = vmul.f32 %v9079, %v9079
        %v9125 = vmul.f32 %v9082, %v9082
        %v9126 = vmul.f32 %v9084, %v9084
        %v9127 = vpack.c.bf16 %v9121, %v9121
        %v9128 = vpack.c.bf16 %v9122, %v9122
        %v9129 = vpack.c.bf16 %v9123, %v9123
        %v9130 = vpack.c.bf16 %v9124, %v9124
        %v9131 = vpack.c.bf16 %v9125, %v9125
        %v9132 = vpack.c.bf16 %v9126, %v9126
        %v9133 = vmul.f32 %v8964, %v9072
        %v9134 = vmul.f32 %v8966, %v9074
        %v9135 = vmul.f32 %v8969, %v9077
        %v9136 = vmul.f32 %v8971, %v9079
        %v9137 = vmul.f32 %v8974, %v9082
        %v9138 = vmul.f32 %v8976, %v9084
        %v9139 = vpack.c.bf16 %v9133, %v9133
        %v9140 = vpack.c.bf16 %v9134, %v9134
        %v9141 = vpack.c.bf16 %v9135, %v9135
        %v9142 = vpack.c.bf16 %v9136, %v9136
        %v9143 = vpack.c.bf16 %v9137, %v9137
        %v9144 = vpack.c.bf16 %v9138, %v9138
        %v9151 = vunpack.c.l.b16 %v9097
        %v9152 = vunpack.c.l.b16 %v9098
        %v9153 = vunpack.c.l.b16 %v9099
        %v9154 = vunpack.c.l.b16 %v9100
        %v9155 = vunpack.c.l.b16 %v9101
        %v9156 = vunpack.c.l.b16 %v9102
        %v9157 = vpack.c.b16 %v9152, %v9151
        %v9158 = vpack.c.b16 %v9154, %v9153
        %v9159 = vpack.c.b16 %v9156, %v9155
        %v9166 = vunpack.c.l.b16 %v9103
        %v9167 = vunpack.c.l.b16 %v9104
        %v9168 = vunpack.c.l.b16 %v9105
        %v9169 = vunpack.c.l.b16 %v9106
        %v9170 = vunpack.c.l.b16 %v9107
        %v9171 = vunpack.c.l.b16 %v9108
        %v9172 = vpack.c.b16 %v9167, %v9166
        %v9173 = vpack.c.b16 %v9169, %v9168
        %v9174 = vpack.c.b16 %v9171, %v9170
        %v9181 = vunpack.c.l.b16 %v9115
        %v9182 = vunpack.c.l.b16 %v9116
        %v9183 = vunpack.c.l.b16 %v9117
        %v9184 = vunpack.c.l.b16 %v9118
        %v9185 = vunpack.c.l.b16 %v9119
        %v9186 = vunpack.c.l.b16 %v9120
        %v9187 = vpack.c.b16 %v9182, %v9181
        %v9188 = vpack.c.b16 %v9184, %v9183
        %v9189 = vpack.c.b16 %v9186, %v9185
        %v9196 = vunpack.c.l.b16 %v9127
        %v9197 = vunpack.c.l.b16 %v9128
        %v9198 = vunpack.c.l.b16 %v9129
        %v9199 = vunpack.c.l.b16 %v9130
        %v9200 = vunpack.c.l.b16 %v9131
        %v9201 = vunpack.c.l.b16 %v9132
        %v9202 = vpack.c.b16 %v9197, %v9196
        %v9203 = vpack.c.b16 %v9199, %v9198
        %v9204 = vpack.c.b16 %v9201, %v9200
        %v9211 = vunpack.c.l.b16 %v9139
        %v9212 = vunpack.c.l.b16 %v9140
        %v9213 = vunpack.c.l.b16 %v9141
        %v9214 = vunpack.c.l.b16 %v9142
        %v9215 = vunpack.c.l.b16 %v9143
        %v9216 = vunpack.c.l.b16 %v9144
        %v9217 = vpack.c.b16 %v9212, %v9211
        %v9218 = vpack.c.b16 %v9214, %v9213
        %v9219 = vpack.c.b16 %v9216, %v9215
        %v9226 = vunpack.c.l.b16 %v9091
        %v9227 = vunpack.c.l.b16 %v9092
        %v9228 = vunpack.c.l.b16 %v9093
        %v9229 = vunpack.c.l.b16 %v9094
        %v9230 = vunpack.c.l.b16 %v9095
        %v9231 = vunpack.c.l.b16 %v9096
        %v9232 = vpack.c.b16 %v9227, %v9226
        %v9233 = vpack.c.b16 %v9229, %v9228
        %v9234 = vpack.c.b16 %v9231, %v9230
        %vm9238 = vcmask 392192
        %v9240 = vsel %vm9238, %v9157, 0
        %v9243 = vsel %vm9238, %v9158, 0
        %v9246 = vsel %vm9238, %v9159, 0
        %v9249 = vsel %vm9238, %v9172, 0
        %v9252 = vsel %vm9238, %v9173, 0
        %v9255 = vsel %vm9238, %v9174, 0
        %v9258 = vsel %vm9238, %v9187, 0
        %v9261 = vsel %vm9238, %v9188, 0
        %v9264 = vsel %vm9238, %v9189, 0
        %v9267 = vsel %vm9238, %v9202, 0
        %v9270 = vsel %vm9238, %v9203, 0
        %v9273 = vsel %vm9238, %v9204, 0
        %v9276 = vsel %vm9238, %v9217, 0
        %v9279 = vsel %vm9238, %v9218, 0
        %v9282 = vsel %vm9238, %v9219, 0
        %9284 = vmatpush.bf16.msra.mxu0 0
        %9285 = vmatpush.bf16.msra.mxu0 0
        %9286 = vmatpush.bf16.msra.mxu0 0
        %9287 = vmatpush.bf16.msra.mxu0 0
        %9288 = vmatpush.bf16.msra.mxu0 0
        %9289 = vmatpush.bf16.msra.mxu0 %v9234
        %9290 = vmatpush.bf16.msra.mxu0 %v9233
        %9291 = vmatpush.bf16.msra.mxu0 %v9232
        %9292 = vmatmul.bf16.gmra.mxu0 %v9240
        %v9293 = vpop.f32.mrf.mxu0
        %v9294 = vadd.f32 0.0, %v9293
        %v9295 = vpop.f32.mrf.mxu0
        %v9296 = vadd.f32 0.0, %v9295
        %9297 = vmatmul.bf16.gmra.mxu0 %v9243
        %v9298 = vpop.f32.mrf.mxu0
        %v9299 = vadd.f32 0.0, %v9298
        %v9300 = vpop.f32.mrf.mxu0
        %v9301 = vadd.f32 0.0, %v9300
        %9302 = vmatmul.bf16.gmra.mxu0 %v9246
        %v9303 = vpop.f32.mrf.mxu0
        %v9304 = vadd.f32 0.0, %v9303
        %v9305 = vpop.f32.mrf.mxu0
        %v9306 = vadd.f32 0.0, %v9305
        %9307 = vmatmul.bf16.gmra.mxu0 %v9249
        %v9308 = vpop.f32.mrf.mxu0
        %v9309 = vadd.f32 0.0, %v9308
        %v9310 = vpop.f32.mrf.mxu0
        %v9311 = vadd.f32 0.0, %v9310
        %9312 = vmatmul.bf16.gmra.mxu0 %v9252
        %v9313 = vpop.f32.mrf.mxu0
        %v9314 = vadd.f32 0.0, %v9313
        %v9315 = vpop.f32.mrf.mxu0
        %v9316 = vadd.f32 0.0, %v9315
        %9317 = vmatmul.bf16.gmra.mxu0 %v9255
        %v9318 = vpop.f32.mrf.mxu0
        %v9319 = vadd.f32 0.0, %v9318
        %v9320 = vpop.f32.mrf.mxu0
        %v9321 = vadd.f32 0.0, %v9320
        %9322 = vmatmul.bf16.gmra.mxu0 %v9258
        %v9323 = vpop.f32.mrf.mxu0
        %v9324 = vadd.f32 0.0, %v9323
        %v9325 = vpop.f32.mrf.mxu0
        %v9326 = vadd.f32 0.0, %v9325
        %9327 = vmatmul.bf16.gmra.mxu0 %v9261
        %v9328 = vpop.f32.mrf.mxu0
        %v9329 = vadd.f32 0.0, %v9328
        %v9330 = vpop.f32.mrf.mxu0
        %v9331 = vadd.f32 0.0, %v9330
        %9332 = vmatmul.bf16.gmra.mxu0 %v9264
        %v9333 = vpop.f32.mrf.mxu0
        %v9334 = vadd.f32 0.0, %v9333
        %v9335 = vpop.f32.mrf.mxu0
        %v9336 = vadd.f32 0.0, %v9335
        %9337 = vmatmul.bf16.gmra.mxu0 %v9267
        %v9338 = vpop.f32.mrf.mxu0
        %v9339 = vadd.f32 0.0, %v9338
        %v9340 = vpop.f32.mrf.mxu0
        %v9341 = vadd.f32 0.0, %v9340
        %9342 = vmatmul.bf16.gmra.mxu0 %v9270
        %v9343 = vpop.f32.mrf.mxu0
        %v9344 = vadd.f32 0.0, %v9343
        %v9345 = vpop.f32.mrf.mxu0
        %v9346 = vadd.f32 0.0, %v9345
        %9347 = vmatmul.bf16.gmra.mxu0 %v9273
        %v9348 = vpop.f32.mrf.mxu0
        %v9349 = vadd.f32 0.0, %v9348
        %v9350 = vpop.f32.mrf.mxu0
        %v9351 = vadd.f32 0.0, %v9350
        %9352 = vmatmul.bf16.gmra.mxu0 %v9276
        %v9353 = vpop.f32.mrf.mxu0
        %v9354 = vadd.f32 0.0, %v9353
        %v9355 = vpop.f32.mrf.mxu0
        %v9356 = vadd.f32 0.0, %v9355
        %9357 = vmatmul.bf16.gmra.mxu0 %v9279
        %v9358 = vpop.f32.mrf.mxu0
        %v9359 = vadd.f32 0.0, %v9358
        %v9360 = vpop.f32.mrf.mxu0
        %v9361 = vadd.f32 0.0, %v9360
        %9362 = vmatmul.bf16.gmra.mxu0 %v9282
        %v9363 = vpop.f32.mrf.mxu0
        %v9364 = vadd.f32 0.0, %v9363
        %v9365 = vpop.f32.mrf.mxu0
        %v9366 = vadd.f32 0.0, %v9365
        %9367 = vdwg.mxu0
        %v9368 = vpack.c.bf16 %v9294, %v9294
        %v9369 = vpack.c.bf16 %v9296, %v9296
        %v9370 = vpack.c.bf16 %v9299, %v9299
        %v9371 = vpack.c.bf16 %v9301, %v9301
        %v9372 = vpack.c.bf16 %v9304, %v9304
        %v9373 = vpack.c.bf16 %v9306, %v9306
        %v9374 = vpack.c.bf16 %v9309, %v9309
        %v9375 = vpack.c.bf16 %v9311, %v9311
        %v9376 = vpack.c.bf16 %v9314, %v9314
        %v9377 = vpack.c.bf16 %v9316, %v9316
        %v9378 = vpack.c.bf16 %v9319, %v9319
        %v9379 = vpack.c.bf16 %v9321, %v9321
        %v9380 = vpack.c.bf16 %v9324, %v9324
        %v9381 = vpack.c.bf16 %v9326, %v9326
        %v9382 = vpack.c.bf16 %v9329, %v9329
        %v9383 = vpack.c.bf16 %v9331, %v9331
        %v9384 = vpack.c.bf16 %v9334, %v9334
        %v9385 = vpack.c.bf16 %v9336, %v9336
        %v9386 = vpack.c.bf16 %v9339, %v9339
        %v9387 = vpack.c.bf16 %v9341, %v9341
        %v9388 = vpack.c.bf16 %v9344, %v9344
        %v9389 = vpack.c.bf16 %v9346, %v9346
        %v9390 = vpack.c.bf16 %v9349, %v9349
        %v9391 = vpack.c.bf16 %v9351, %v9351
        %v9392 = vpack.c.bf16 %v9354, %v9354
        %v9393 = vpack.c.bf16 %v9356, %v9356
        %v9394 = vpack.c.bf16 %v9359, %v9359
        %v9395 = vpack.c.bf16 %v9361, %v9361
        %v9396 = vpack.c.bf16 %v9364, %v9364
        %v9397 = vpack.c.bf16 %v9366, %v9366
        %v9403 = vunpack.c.l.b16 %v9086
        %v9404 = vunpack.c.l.b16 %v9087
        %v9405 = vunpack.c.l.b16 %v9088
        %v9406 = vunpack.c.l.b16 %v9089
        %v9407 = vunpack.c.l.b16 %v9090
        %v9408 = vpack.c.b16 %v9404, %v9403
        %v9409 = vpack.c.b16 %v9406, %v9405
        %v9410 = vpack.c.b16 %v9407, %v9407
        %v9417 = vunpack.c.l.b16 %v9368
        %v9418 = vunpack.c.l.b16 %v9369
        %v9419 = vunpack.c.l.b16 %v9370
        %v9420 = vunpack.c.l.b16 %v9371
        %v9421 = vunpack.c.l.b16 %v9372
        %v9422 = vunpack.c.l.b16 %v9373
        %v9423 = vpack.c.b16 %v9418, %v9417
        %v9424 = vpack.c.b16 %v9420, %v9419
        %v9425 = vpack.c.b16 %v9422, %v9421
        %v9430 = vsel %vm9238, %v9408, 0
        %v9433 = vsel %vm9238, %v9409, 0
        %v9436 = vsel %vm9238, %v9410, 0
        %9438 = vmatpush.bf16.msra.mxu0 0
        %9439 = vmatpush.bf16.msra.mxu0 0
        %9440 = vmatpush.bf16.msra.mxu0 0
        %9441 = vmatpush.bf16.msra.mxu0 0
        %9442 = vmatpush.bf16.msra.mxu0 0
        %9443 = vmatpush.bf16.msra.mxu0 %v9425
        %9444 = vmatpush.bf16.msra.mxu0 %v9424
        %9445 = vmatpush.bf16.msra.mxu0 %v9423
        %9446 = vmatmul.bf16.gmra.mxu0 %v9430
        %v9447 = vpop.f32.mrf.mxu0
        %v9448 = vadd.f32 0.0, %v9447
        %v9449 = vpop.f32.mrf.mxu0
        %v9450 = vadd.f32 0.0, %v9449
        %9451 = vmatmul.bf16.gmra.mxu0 %v9433
        %v9452 = vpop.f32.mrf.mxu0
        %v9453 = vadd.f32 0.0, %v9452
        %v9454 = vpop.f32.mrf.mxu0
        %v9455 = vadd.f32 0.0, %v9454
        %9456 = vmatmul.bf16.gmra.mxu0 %v9436
        %v9457 = vpop.f32.mrf.mxu0
        %v9458 = vadd.f32 0.0, %v9457
        %v9459 = vpop.f32.mrf.mxu0
        %9460 = vdwg.mxu0
        %v9467 = vunpack.c.l.b16 %v9374
        %v9468 = vunpack.c.l.b16 %v9375
        %v9469 = vunpack.c.l.b16 %v9376
        %v9470 = vunpack.c.l.b16 %v9377
        %v9471 = vunpack.c.l.b16 %v9378
        %v9472 = vunpack.c.l.b16 %v9379
        %v9473 = vpack.c.b16 %v9468, %v9467
        %v9474 = vpack.c.b16 %v9470, %v9469
        %v9475 = vpack.c.b16 %v9472, %v9471
        %9479 = vmatpush.bf16.msra.mxu0 0
        %9480 = vmatpush.bf16.msra.mxu0 0
        %9481 = vmatpush.bf16.msra.mxu0 0
        %9482 = vmatpush.bf16.msra.mxu0 0
        %9483 = vmatpush.bf16.msra.mxu0 0
        %9484 = vmatpush.bf16.msra.mxu0 %v9475
        %9485 = vmatpush.bf16.msra.mxu0 %v9474
        %9486 = vmatpush.bf16.msra.mxu0 %v9473
        %9487 = vmatmul.bf16.gmra.mxu0 %v9430
        %v9488 = vpop.f32.mrf.mxu0
        %v9489 = vadd.f32 0.0, %v9488
        %v9490 = vpop.f32.mrf.mxu0
        %v9491 = vadd.f32 0.0, %v9490
        %9492 = vmatmul.bf16.gmra.mxu0 %v9433
        %v9493 = vpop.f32.mrf.mxu0
        %v9494 = vadd.f32 0.0, %v9493
        %v9495 = vpop.f32.mrf.mxu0
        %v9496 = vadd.f32 0.0, %v9495
        %9497 = vmatmul.bf16.gmra.mxu0 %v9436
        %v9498 = vpop.f32.mrf.mxu0
        %v9499 = vadd.f32 0.0, %v9498
        %v9500 = vpop.f32.mrf.mxu0
        %9501 = vdwg.mxu0
        %v9508 = vunpack.c.l.b16 %v9380
        %v9509 = vunpack.c.l.b16 %v9381
        %v9510 = vunpack.c.l.b16 %v9382
        %v9511 = vunpack.c.l.b16 %v9383
        %v9512 = vunpack.c.l.b16 %v9384
        %v9513 = vunpack.c.l.b16 %v9385
        %v9514 = vpack.c.b16 %v9509, %v9508
        %v9515 = vpack.c.b16 %v9511, %v9510
        %v9516 = vpack.c.b16 %v9513, %v9512
        %9520 = vmatpush.bf16.msra.mxu0 0
        %9521 = vmatpush.bf16.msra.mxu0 0
        %9522 = vmatpush.bf16.msra.mxu0 0
        %9523 = vmatpush.bf16.msra.mxu0 0
        %9524 = vmatpush.bf16.msra.mxu0 0
        %9525 = vmatpush.bf16.msra.mxu0 %v9516
        %9526 = vmatpush.bf16.msra.mxu0 %v9515
        %9527 = vmatpush.bf16.msra.mxu0 %v9514
        %9528 = vmatmul.bf16.gmra.mxu0 %v9430
        %v9529 = vpop.f32.mrf.mxu0
        %v9530 = vadd.f32 0.0, %v9529
        %v9531 = vpop.f32.mrf.mxu0
        %v9532 = vadd.f32 0.0, %v9531
        %9533 = vmatmul.bf16.gmra.mxu0 %v9433
        %v9534 = vpop.f32.mrf.mxu0
        %v9535 = vadd.f32 0.0, %v9534
        %v9536 = vpop.f32.mrf.mxu0
        %v9537 = vadd.f32 0.0, %v9536
        %9538 = vmatmul.bf16.gmra.mxu0 %v9436
        %v9539 = vpop.f32.mrf.mxu0
        %v9540 = vadd.f32 0.0, %v9539
        %v9541 = vpop.f32.mrf.mxu0
        %9542 = vdwg.mxu0
        %v9549 = vunpack.c.l.b16 %v9386
        %v9550 = vunpack.c.l.b16 %v9387
        %v9551 = vunpack.c.l.b16 %v9388
        %v9552 = vunpack.c.l.b16 %v9389
        %v9553 = vunpack.c.l.b16 %v9390
        %v9554 = vunpack.c.l.b16 %v9391
        %v9555 = vpack.c.b16 %v9550, %v9549
        %v9556 = vpack.c.b16 %v9552, %v9551
        %v9557 = vpack.c.b16 %v9554, %v9553
        %9561 = vmatpush.bf16.msra.mxu0 0
        %9562 = vmatpush.bf16.msra.mxu0 0
        %9563 = vmatpush.bf16.msra.mxu0 0
        %9564 = vmatpush.bf16.msra.mxu0 0
        %9565 = vmatpush.bf16.msra.mxu0 0
        %9566 = vmatpush.bf16.msra.mxu0 %v9557
        %9567 = vmatpush.bf16.msra.mxu0 %v9556
        %9568 = vmatpush.bf16.msra.mxu0 %v9555
        %9569 = vmatmul.bf16.gmra.mxu0 %v9430
        %v9570 = vpop.f32.mrf.mxu0
        %v9571 = vadd.f32 0.0, %v9570
        %v9572 = vpop.f32.mrf.mxu0
        %v9573 = vadd.f32 0.0, %v9572
        %9574 = vmatmul.bf16.gmra.mxu0 %v9433
        %v9575 = vpop.f32.mrf.mxu0
        %v9576 = vadd.f32 0.0, %v9575
        %v9577 = vpop.f32.mrf.mxu0
        %v9578 = vadd.f32 0.0, %v9577
        %9579 = vmatmul.bf16.gmra.mxu0 %v9436
        %v9580 = vpop.f32.mrf.mxu0
        %v9581 = vadd.f32 0.0, %v9580
        %v9582 = vpop.f32.mrf.mxu0
        %9583 = vdwg.mxu0
        %v9590 = vunpack.c.l.b16 %v9392
        %v9591 = vunpack.c.l.b16 %v9393
        %v9592 = vunpack.c.l.b16 %v9394
        %v9593 = vunpack.c.l.b16 %v9395
        %v9594 = vunpack.c.l.b16 %v9396
        %v9595 = vunpack.c.l.b16 %v9397
        %v9596 = vpack.c.b16 %v9591, %v9590
        %v9597 = vpack.c.b16 %v9593, %v9592
        %v9598 = vpack.c.b16 %v9595, %v9594
        %9602 = vmatpush.bf16.msra.mxu0 0
        %9603 = vmatpush.bf16.msra.mxu0 0
        %9604 = vmatpush.bf16.msra.mxu0 0
        %9605 = vmatpush.bf16.msra.mxu0 0
        %9606 = vmatpush.bf16.msra.mxu0 0
        %9607 = vmatpush.bf16.msra.mxu0 %v9598
        %9608 = vmatpush.bf16.msra.mxu0 %v9597
        %9609 = vmatpush.bf16.msra.mxu0 %v9596
        %9610 = vmatmul.bf16.gmra.mxu0 %v9430
        %v9611 = vpop.f32.mrf.mxu0
        %v9612 = vadd.f32 0.0, %v9611
        %v9613 = vpop.f32.mrf.mxu0
        %v9614 = vadd.f32 0.0, %v9613
        %9615 = vmatmul.bf16.gmra.mxu0 %v9433
        %v9616 = vpop.f32.mrf.mxu0
        %v9617 = vadd.f32 0.0, %v9616
        %v9618 = vpop.f32.mrf.mxu0
        %v9619 = vadd.f32 0.0, %v9618
        %9620 = vmatmul.bf16.gmra.mxu0 %v9436
        %v9621 = vpop.f32.mrf.mxu0
        %v9622 = vadd.f32 0.0, %v9621
        %v9623 = vpop.f32.mrf.mxu0
        %9624 = vdwg.mxu0
        %v9625 = vmul.f32 %v9448, %v9448
        %v9626 = vmul.f32 %v9450, %v9450
        %v9627 = vmul.f32 %v9453, %v9453
        %v9628 = vmul.f32 %v9455, %v9455
        %v9629 = vmul.f32 %v9458, %v9458
        %v9630 = vsub.f32 %v9530, %v9625
        %v9631 = vsub.f32 %v9532, %v9626
        %v9632 = vsub.f32 %v9535, %v9627
        %v9633 = vsub.f32 %v9537, %v9628
        %v9634 = vsub.f32 %v9540, %v9629
        %v9635 = vmul.f32 %v9489, %v9489
        %v9636 = vmul.f32 %v9491, %v9491
        %v9637 = vmul.f32 %v9494, %v9494
        %v9638 = vmul.f32 %v9496, %v9496
        %v9639 = vmul.f32 %v9499, %v9499
        %v9640 = vsub.f32 %v9571, %v9635
        %v9641 = vsub.f32 %v9573, %v9636
        %v9642 = vsub.f32 %v9576, %v9637
        %v9643 = vsub.f32 %v9578, %v9638
        %v9644 = vsub.f32 %v9581, %v9639
        %v9645 = vmul.f32 %v9448, %v9489
        %v9646 = vmul.f32 %v9450, %v9491
        %v9647 = vmul.f32 %v9453, %v9494
        %v9648 = vmul.f32 %v9455, %v9496
        %v9649 = vmul.f32 %v9458, %v9499
        %v9650 = vsub.f32 %v9612, %v9645
        %v9651 = vsub.f32 %v9614, %v9646
        %v9652 = vsub.f32 %v9617, %v9647
        %v9653 = vsub.f32 %v9619, %v9648
        %v9654 = vsub.f32 %v9622, %v9649
        %v9655 = vmul.f32 %v9650, 2.0
        %v9656 = vmul.f32 %v9651, 2.0
        %v9657 = vmul.f32 %v9652, 2.0
        %v9658 = vmul.f32 %v9653, 2.0
        %v9659 = vmul.f32 %v9654, 2.0
        %v9660 = vadd.f32 %v9655, 0.0009
        %v9661 = vadd.f32 %v9656, 0.0009
        %v9662 = vadd.f32 %v9657, 0.0009
        %v9663 = vadd.f32 %v9658, 0.0009
        %v9664 = vadd.f32 %v9659, 0.0009
        %v9665 = vadd.f32 %v9630, %v9640
        %v9666 = vadd.f32 %v9631, %v9641
        %v9667 = vadd.f32 %v9632, %v9642
        %v9668 = vadd.f32 %v9633, %v9643
        %v9669 = vadd.f32 %v9634, %v9644
        %v9670 = vadd.f32 %v9665, 0.0009
        %v9671 = vadd.f32 %v9666, 0.0009
        %v9672 = vadd.f32 %v9667, 0.0009
        %v9673 = vadd.f32 %v9668, 0.0009
        %v9674 = vadd.f32 %v9669, 0.0009
        %v9675 = vrcp.pop %v9670
        %v9676 = vrcp.pop %v9671
        %v9677 = vrcp.pop %v9672
        %v9678 = vrcp.pop %v9673
        %v9679 = vrcp.pop %v9674
        %v9680 = vmul.f32 %v9660, %v9675
        %v9681 = vmul.f32 %v9661, %v9676
        %v9682 = vmul.f32 %v9662, %v9677
        %v9683 = vmul.f32 %v9663, %v9678
        %v9684 = vmul.f32 %v9664, %v9679
        %vm9685 = vcmask 310272
        %v9686 = vsel %vm9685, %v9680, 0.0
        %v9687 = vsel %vm9685, %v9681, 0.0
        %v9688 = vadd.f32 %v9686, %v9687
        %v9689 = vsel %vm9685, %v9682, 0.0
        %v9690 = vadd.f32 %v9688, %v9689
        %v9691 = vsel %vm9685, %v9683, 0.0
        %v9692 = vadd.f32 %v9690, %v9691
        %vm9693 = vcmask 308224
        %v9694 = vsel %vm9693, %v9684, 0.0
        %v9695 = vadd.f32 %v9692, %v9694
        %9696 = vadd.xlane.f32.xlu0 %v9695
        %v9697 = vpop.xlane.xlu0 %9696
        %v9698 = vrot.slane %v9697, 4
        %v9699 = vadd.f32 %v9697, %v9698
        %v9700 = vrot.slane %v9699, 2
        %v9701 = vadd.f32 %v9699, %v9700
        %v9702 = vrot.slane %v9701, 1
        %v9703 = vadd.f32 %v9701, %v9702
        %s9704 = vtos %v9703
        %v9705 = vrcp.pop 1444.0
        %v9706 = vmul.f32 1444.0, %v9705
        %v9707 = vsub.f32 1.0, %v9706
        %v9708 = vmul.f32 %v9705, %v9707
        %v9709 = vadd.f32 %v9705, %v9708
        %vm9710 = vweird.f32 %v9705
        %v9711 = vsel %vm9710, %v9705, %v9709
        %s9712 = vtos %v9711
        %s9713 = smul.f32 %s9704, %s9712
        %s9714 = smax.f32 %s9713, 0.0
        %vm9715 = vcmp.eq.s32.totalorder %v1009, 2
        %v9716 = vstv %s9714
        %v9717 = vsel %vm9715, %v9716, %v8814
        %v9718 = vld [vmem:[#allocation24] sm:$0xf]
        %v9719 = vld [vmem:[#allocation24 + $0x4] sm:$0xf]
        %v9720 = vld [vmem:[#allocation24 + $0x8] sm:$0xf]
        %v9724 = vunpack.c.l.b16 %v9718
        %v9725 = vunpack.c.l.b16 %v9719
        %v9726 = vunpack.c.l.b16 %v9720
        %v9727 = vpack.c.b16 %v9725, %v9724
        %v9728 = vpack.c.b16 %v9726, %v9726
        %9729 = vrot.lane.b32.xlu0 %v9423, 90
        %v9730 = vpop.permute.xlu0 %9729
        %9731 = vrot.lane.b32.xlu0 %v9424, 90
        %v9732 = vpop.permute.xlu0 %9731
        %9733 = vrot.lane.b32.xlu0 %v9425, 90
        %v9734 = vpop.permute.xlu0 %9733
        %v9739 = vsel %vm9238, %v9727, 0
        %v9742 = vsel %vm9238, %v9728, 0
        %9744 = vmatpush.bf16.msra.mxu0 0
        %9745 = vmatpush.bf16.msra.mxu0 0
        %9746 = vmatpush.bf16.msra.mxu0 0
        %9747 = vmatpush.bf16.msra.mxu0 0
        %9748 = vmatpush.bf16.msra.mxu0 0
        %9749 = vmatpush.bf16.msra.mxu0 %v9734
        %9750 = vmatpush.bf16.msra.mxu0 %v9732
        %9751 = vmatpush.bf16.msra.mxu0 %v9730
        %9752 = vmatmul.bf16.gmra.mxu0 %v9739
        %v9753 = vpop.f32.mrf.mxu0
        %v9754 = vadd.f32 0.0, %v9753
        %v9755 = vpop.f32.mrf.mxu0
        %v9756 = vadd.f32 0.0, %v9755
        %9757 = vmatmul.bf16.gmra.mxu0 %v9742
        %v9758 = vpop.f32.mrf.mxu0
        %v9759 = vadd.f32 0.0, %v9758
        %v9760 = vpop.f32.mrf.mxu0
        %9761 = vdwg.mxu0
        %9762 = vrot.lane.b32.xlu0 %v9473, 90
        %v9763 = vpop.permute.xlu0 %9762
        %9764 = vrot.lane.b32.xlu0 %v9474, 90
        %v9765 = vpop.permute.xlu0 %9764
        %9766 = vrot.lane.b32.xlu0 %v9475, 90
        %v9767 = vpop.permute.xlu0 %9766
        %9771 = vmatpush.bf16.msra.mxu0 0
        %9772 = vmatpush.bf16.msra.mxu0 0
        %9773 = vmatpush.bf16.msra.mxu0 0
        %9774 = vmatpush.bf16.msra.mxu0 0
        %9775 = vmatpush.bf16.msra.mxu0 0
        %9776 = vmatpush.bf16.msra.mxu0 %v9767
        %9777 = vmatpush.bf16.msra.mxu0 %v9765
        %9778 = vmatpush.bf16.msra.mxu0 %v9763
        %9779 = vmatmul.bf16.gmra.mxu0 %v9739
        %v9780 = vpop.f32.mrf.mxu0
        %v9781 = vadd.f32 0.0, %v9780
        %v9782 = vpop.f32.mrf.mxu0
        %v9783 = vadd.f32 0.0, %v9782
        %9784 = vmatmul.bf16.gmra.mxu0 %v9742
        %v9785 = vpop.f32.mrf.mxu0
        %v9786 = vadd.f32 0.0, %v9785
        %v9787 = vpop.f32.mrf.mxu0
        %9788 = vdwg.mxu0
        %v9789 = vld [vmem:[#allocation10] sm:$0xf]
        %v9790 = vld [vmem:[#allocation10 + $0x4] sm:$0x7]
        %v9791 = vld [vmem:[#allocation18] sm:$0xf]
        %v9792 = vld [vmem:[#allocation18 + $0x4] sm:$0xf]
        %v9793 = vld [vmem:[#allocation18 + $0x8] sm:$0xf]
        %v9794 = vpack.c.bf16 %v9754, %v9754
        %v9795 = vpack.c.bf16 %v9756, %v9756
        %v9796 = vpack.c.bf16 %v9759, %v9759
        %v9797 = vpack.c.bf16 %v9781, %v9781
        %v9798 = vpack.c.bf16 %v9783, %v9783
        %v9799 = vpack.c.bf16 %v9786, %v9786
        %v9800 = vmul.f32 %v9754, %v9754
        %v9801 = vmul.f32 %v9756, %v9756
        %v9802 = vmul.f32 %v9759, %v9759
        %v9803 = vpack.c.bf16 %v9800, %v9800
        %v9804 = vpack.c.bf16 %v9801, %v9801
        %v9805 = vpack.c.bf16 %v9802, %v9802
        %v9806 = vmul.f32 %v9781, %v9781
        %v9807 = vmul.f32 %v9783, %v9783
        %v9808 = vmul.f32 %v9786, %v9786
        %v9809 = vpack.c.bf16 %v9806, %v9806
        %v9810 = vpack.c.bf16 %v9807, %v9807
        %v9811 = vpack.c.bf16 %v9808, %v9808
        %v9812 = vmul.f32 %v9754, %v9781
        %v9813 = vmul.f32 %v9756, %v9783
        %v9814 = vmul.f32 %v9759, %v9786
        %v9815 = vpack.c.bf16 %v9812, %v9812
        %v9816 = vpack.c.bf16 %v9813, %v9813
        %v9817 = vpack.c.bf16 %v9814, %v9814
        %v9821 = vunpack.c.l.b16 %v9794
        %v9822 = vunpack.c.l.b16 %v9795
        %v9823 = vunpack.c.l.b16 %v9796
        %v9824 = vpack.c.b16 %v9822, %v9821
        %v9825 = vpack.c.b16 %v9823, %v9823
        %v9829 = vunpack.c.l.b16 %v9797
        %v9830 = vunpack.c.l.b16 %v9798
        %v9831 = vunpack.c.l.b16 %v9799
        %v9832 = vpack.c.b16 %v9829, %v9829
        %v9833 = vpack.c.b16 %v9831, %v9830
        %v9837 = vunpack.c.l.b16 %v9803
        %v9838 = vunpack.c.l.b16 %v9804
        %v9839 = vunpack.c.l.b16 %v9805
        %v9840 = vpack.c.b16 %v9838, %v9837
        %v9841 = vpack.c.b16 %v9839, %v9839
        %v9845 = vunpack.c.l.b16 %v9809
        %v9846 = vunpack.c.l.b16 %v9810
        %v9847 = vunpack.c.l.b16 %v9811
        %v9848 = vpack.c.b16 %v9845, %v9845
        %v9849 = vpack.c.b16 %v9847, %v9846
        %v9853 = vunpack.c.l.b16 %v9815
        %v9854 = vunpack.c.l.b16 %v9816
        %v9855 = vunpack.c.l.b16 %v9817
        %v9856 = vpack.c.b16 %v9854, %v9853
        %v9857 = vpack.c.b16 %v9855, %v9855
        %vm9858 = vcmask 1043456
        %v9861 = vsel %vm9858, %v9825, %v9832
        %v9864 = vsel %vm9858, %v9841, %v9848
        %v9868 = vunpack.c.l.b16 %v9791
        %v9869 = vunpack.c.l.b16 %v9792
        %v9870 = vunpack.c.l.b16 %v9793
        %v9871 = vpack.c.b16 %v9869, %v9868
        %v9872 = vpack.c.b16 %v9870, %v9870
        %vm9874 = vcmask 195584
        %v9876 = vsel %vm9874, %v9824, 0
        %v9878 = vsel %vm9874, %v9861, 0
        %v9881 = vsel %vm9874, %v9833, 0
        %v9884 = vsel %vm9874, %v9840, 0
        %v9886 = vsel %vm9874, %v9864, 0
        %v9889 = vsel %vm9874, %v9849, 0
        %v9892 = vsel %vm9874, %v9856, 0
        %v9895 = vsel %vm9874, %v9857, 0
        %v9898 = vsel %vm9858, %v9872, 0
        %9900 = vmatpush.bf16.msra.mxu0 0
        %9901 = vmatpush.bf16.msra.mxu0 0
        %9902 = vmatpush.bf16.msra.mxu0 0
        %9903 = vmatpush.bf16.msra.mxu0 0
        %9904 = vmatpush.bf16.msra.mxu0 0
        %9905 = vmatpush.bf16.msra.mxu0 0
        %9906 = vmatpush.bf16.msra.mxu0 %v9898
        %9907 = vmatpush.bf16.msra.mxu0 %v9871
        %9908 = vmatmul.bf16.gmra.mxu0 %v9876
        %v9909 = vpop.f32.mrf.mxu0
        %v9910 = vadd.f32 0.0, %v9909
        %v9911 = vpop.f32.mrf.mxu0
        %v9912 = vadd.f32 0.0, %v9911
        %9913 = vmatmul.bf16.gmra.mxu0 %v9878
        %v9914 = vpop.f32.mrf.mxu0
        %v9915 = vadd.f32 0.0, %v9914
        %v9916 = vpop.f32.mrf.mxu0
        %v9917 = vadd.f32 0.0, %v9916
        %9918 = vmatmul.bf16.gmra.mxu0 %v9881
        %v9919 = vpop.f32.mrf.mxu0
        %v9920 = vadd.f32 0.0, %v9919
        %v9921 = vpop.f32.mrf.mxu0
        %v9922 = vadd.f32 0.0, %v9921
        %9923 = vmatmul.bf16.gmra.mxu0 %v9884
        %v9924 = vpop.f32.mrf.mxu0
        %v9925 = vadd.f32 0.0, %v9924
        %v9926 = vpop.f32.mrf.mxu0
        %v9927 = vadd.f32 0.0, %v9926
        %9928 = vmatmul.bf16.gmra.mxu0 %v9886
        %v9929 = vpop.f32.mrf.mxu0
        %v9930 = vadd.f32 0.0, %v9929
        %v9931 = vpop.f32.mrf.mxu0
        %v9932 = vadd.f32 0.0, %v9931
        %9933 = vmatmul.bf16.gmra.mxu0 %v9889
        %v9934 = vpop.f32.mrf.mxu0
        %v9935 = vadd.f32 0.0, %v9934
        %v9936 = vpop.f32.mrf.mxu0
        %v9937 = vadd.f32 0.0, %v9936
        %9938 = vmatmul.bf16.gmra.mxu0 %v9892
        %v9939 = vpop.f32.mrf.mxu0
        %v9940 = vadd.f32 0.0, %v9939
        %v9941 = vpop.f32.mrf.mxu0
        %v9942 = vadd.f32 0.0, %v9941
        %9943 = vmatmul.bf16.gmra.mxu0 %v9895
        %v9944 = vpop.f32.mrf.mxu0
        %v9945 = vadd.f32 0.0, %v9944
        %v9946 = vpop.f32.mrf.mxu0
        %9947 = vdwg.mxu0
        %v9948 = vpack.c.bf16 %v9910, %v9910
        %v9949 = vpack.c.bf16 %v9912, %v9912
        %v9950 = vpack.c.bf16 %v9915, %v9915
        %v9951 = vpack.c.bf16 %v9917, %v9917
        %v9952 = vpack.c.bf16 %v9920, %v9920
        %v9953 = vpack.c.bf16 %v9922, %v9922
        %v9954 = vpack.c.bf16 %v9925, %v9925
        %v9955 = vpack.c.bf16 %v9927, %v9927
        %v9956 = vpack.c.bf16 %v9930, %v9930
        %v9957 = vpack.c.bf16 %v9932, %v9932
        %v9958 = vpack.c.bf16 %v9935, %v9935
        %v9959 = vpack.c.bf16 %v9937, %v9937
        %v9960 = vpack.c.bf16 %v9940, %v9940
        %v9961 = vpack.c.bf16 %v9942, %v9942
        %v9962 = vpack.c.bf16 %v9945, %v9945
        %v9965 = vunpack.c.l.b16 %v9789
        %v9966 = vunpack.c.l.b16 %v9790
        %v9967 = vpack.c.b16 %v9966, %v9965
        %v9971 = vunpack.c.l.b16 %v9948
        %v9972 = vunpack.c.l.b16 %v9949
        %v9973 = vunpack.c.l.b16 %v9950
        %v9974 = vpack.c.b16 %v9972, %v9971
        %v9975 = vpack.c.b16 %v9973, %v9973
        %v9978 = vsel %vm9874, %v9967, 0
        %v9981 = vsel %vm9858, %v9975, 0
        %9983 = vmatpush.bf16.msra.mxu0 0
        %9984 = vmatpush.bf16.msra.mxu0 0
        %9985 = vmatpush.bf16.msra.mxu0 0
        %9986 = vmatpush.bf16.msra.mxu0 0
        %9987 = vmatpush.bf16.msra.mxu0 0
        %9988 = vmatpush.bf16.msra.mxu0 0
        %9989 = vmatpush.bf16.msra.mxu0 %v9981
        %9990 = vmatpush.bf16.msra.mxu0 %v9974
        %9991 = vmatmul.bf16.gmra.mxu0 %v9978
        %v9992 = vpop.f32.mrf.mxu0
        %v9993 = vadd.f32 0.0, %v9992
        %v9994 = vpop.f32.mrf.mxu0
        %v9995 = vadd.f32 0.0, %v9994
        %9996 = vdwg.mxu0
        %v10000 = vunpack.c.l.b16 %v9951
        %v10001 = vunpack.c.l.b16 %v9952
        %v10002 = vunpack.c.l.b16 %v9953
        %v10003 = vpack.c.b16 %v10001, %v10000
        %v10004 = vpack.c.b16 %v10002, %v10002
        %v10007 = vsel %vm9858, %v10004, 0
        %10009 = vmatpush.bf16.msra.mxu0 0
        %10010 = vmatpush.bf16.msra.mxu0 0
        %10011 = vmatpush.bf16.msra.mxu0 0
        %10012 = vmatpush.bf16.msra.mxu0 0
        %10013 = vmatpush.bf16.msra.mxu0 0
        %10014 = vmatpush.bf16.msra.mxu0 0
        %10015 = vmatpush.bf16.msra.mxu0 %v10007
        %10016 = vmatpush.bf16.msra.mxu0 %v10003
        %10017 = vmatmul.bf16.gmra.mxu0 %v9978
        %v10018 = vpop.f32.mrf.mxu0
        %v10019 = vadd.f32 0.0, %v10018
        %v10020 = vpop.f32.mrf.mxu0
        %v10021 = vadd.f32 0.0, %v10020
        %10022 = vdwg.mxu0
        %v10026 = vunpack.c.l.b16 %v9954
        %v10027 = vunpack.c.l.b16 %v9955
        %v10028 = vunpack.c.l.b16 %v9956
        %v10029 = vpack.c.b16 %v10027, %v10026
        %v10030 = vpack.c.b16 %v10028, %v10028
        %v10033 = vsel %vm9858, %v10030, 0
        %10035 = vmatpush.bf16.msra.mxu0 0
        %10036 = vmatpush.bf16.msra.mxu0 0
        %10037 = vmatpush.bf16.msra.mxu0 0
        %10038 = vmatpush.bf16.msra.mxu0 0
        %10039 = vmatpush.bf16.msra.mxu0 0
        %10040 = vmatpush.bf16.msra.mxu0 0
        %10041 = vmatpush.bf16.msra.mxu0 %v10033
        %10042 = vmatpush.bf16.msra.mxu0 %v10029
        %10043 = vmatmul.bf16.gmra.mxu0 %v9978
        %v10044 = vpop.f32.mrf.mxu0
        %v10045 = vadd.f32 0.0, %v10044
        %v10046 = vpop.f32.mrf.mxu0
        %v10047 = vadd.f32 0.0, %v10046
        %10048 = vdwg.mxu0
        %v10052 = vunpack.c.l.b16 %v9957
        %v10053 = vunpack.c.l.b16 %v9958
        %v10054 = vunpack.c.l.b16 %v9959
        %v10055 = vpack.c.b16 %v10053, %v10052
        %v10056 = vpack.c.b16 %v10054, %v10054
        %v10059 = vsel %vm9858, %v10056, 0
        %10061 = vmatpush.bf16.msra.mxu0 0
        %10062 = vmatpush.bf16.msra.mxu0 0
        %10063 = vmatpush.bf16.msra.mxu0 0
        %10064 = vmatpush.bf16.msra.mxu0 0
        %10065 = vmatpush.bf16.msra.mxu0 0
        %10066 = vmatpush.bf16.msra.mxu0 0
        %10067 = vmatpush.bf16.msra.mxu0 %v10059
        %10068 = vmatpush.bf16.msra.mxu0 %v10055
        %10069 = vmatmul.bf16.gmra.mxu0 %v9978
        %v10070 = vpop.f32.mrf.mxu0
        %v10071 = vadd.f32 0.0, %v10070
        %v10072 = vpop.f32.mrf.mxu0
        %v10073 = vadd.f32 0.0, %v10072
        %10074 = vdwg.mxu0
        %v10078 = vunpack.c.l.b16 %v9960
        %v10079 = vunpack.c.l.b16 %v9961
        %v10080 = vunpack.c.l.b16 %v9962
        %v10081 = vpack.c.b16 %v10079, %v10078
        %v10082 = vpack.c.b16 %v10080, %v10080
        %v10085 = vsel %vm9858, %v10082, 0
        %10087 = vmatpush.bf16.msra.mxu0 0
        %10088 = vmatpush.bf16.msra.mxu0 0
        %10089 = vmatpush.bf16.msra.mxu0 0
        %10090 = vmatpush.bf16.msra.mxu0 0
        %10091 = vmatpush.bf16.msra.mxu0 0
        %10092 = vmatpush.bf16.msra.mxu0 0
        %10093 = vmatpush.bf16.msra.mxu0 %v10085
        %10094 = vmatpush.bf16.msra.mxu0 %v10081
        %10095 = vmatmul.bf16.gmra.mxu0 %v9978
        %v10096 = vpop.f32.mrf.mxu0
        %v10097 = vadd.f32 0.0, %v10096
        %v10098 = vpop.f32.mrf.mxu0
        %v10099 = vadd.f32 0.0, %v10098
        %10100 = vdwg.mxu0
        %v10101 = vmul.f32 %v9993, %v9993
        %v10102 = vmul.f32 %v9995, %v9995
        %v10103 = vsub.f32 %v10045, %v10101
        %v10104 = vsub.f32 %v10047, %v10102
        %v10105 = vmul.f32 %v10019, %v10019
        %v10106 = vmul.f32 %v10021, %v10021
        %v10107 = vsub.f32 %v10071, %v10105
        %v10108 = vsub.f32 %v10073, %v10106
        %v10109 = vmul.f32 %v9993, %v10019
        %v10110 = vmul.f32 %v9995, %v10021
        %v10111 = vsub.f32 %v10097, %v10109
        %v10112 = vsub.f32 %v10099, %v10110
        %v10113 = vmul.f32 %v10111, 2.0
        %v10114 = vmul.f32 %v10112, 2.0
        %v10115 = vadd.f32 %v10113, 0.0009
        %v10116 = vadd.f32 %v10114, 0.0009
        %v10117 = vadd.f32 %v10103, %v10107
        %v10118 = vadd.f32 %v10104, %v10108
        %v10119 = vadd.f32 %v10117, 0.0009
        %v10120 = vadd.f32 %v10118, 0.0009
        %v10121 = vrcp.pop %v10119
        %v10122 = vrcp.pop %v10120
        %v10123 = vmul.f32 %v10115, %v10121
        %v10124 = vmul.f32 %v10116, %v10122
        %vm10125 = vcmask 113664
        %v10126 = vsel %vm10125, %v10123, 0.0
        %vm10127 = vcmask 111616
        %v10128 = vsel %vm10127, %v10124, 0.0
        %v10129 = vadd.f32 %v10126, %v10128
        %10130 = vadd.xlane.f32.xlu0 %v10129
        %v10131 = vpop.xlane.xlu0 %10130
        %v10132 = vrot.slane %v10131, 4
        %v10133 = vadd.f32 %v10131, %v10132
        %v10134 = vrot.slane %v10133, 2
        %v10135 = vadd.f32 %v10133, %v10134
        %v10136 = vrot.slane %v10135, 1
        %v10137 = vadd.f32 %v10135, %v10136
        %s10138 = vtos %v10137
        %v10139 = vrcp.pop 196.0
        %v10140 = vmul.f32 196.0, %v10139
        %v10141 = vsub.f32 1.0, %v10140
        %v10142 = vmul.f32 %v10139, %v10141
        %v10143 = vadd.f32 %v10139, %v10142
        %vm10144 = vweird.f32 %v10139
        %v10145 = vsel %vm10144, %v10139, %v10143
        %s10146 = vtos %v10145
        %s10147 = smul.f32 %s10138, %s10146
        %s10148 = smax.f32 %s10147, 0.0
        %vm10149 = vcmp.eq.s32.totalorder %v1009, 3
        %v10150 = vstv %s10148
        %v10151 = vsel %vm10149, %v10150, %v9717
        %v10152 = vld [vmem:[#allocation25] sm:$0xf]
        %v10153 = vld [vmem:[#allocation25 + $0x4] sm:$0xf]
        %v10156 = vunpack.c.l.b16 %v10152
        %v10157 = vunpack.c.l.b16 %v10153
        %v10158 = vpack.c.b16 %v10157, %v10156
        %10159 = vrot.lane.b32.xlu0 %v9974, 114
        %v10160 = vpop.permute.xlu0 %10159
        %10161 = vrot.lane.b32.xlu0 %v9975, 114
        %v10162 = vpop.permute.xlu0 %10161
        %v10165 = vsel %vm9874, %v10158, 0
        %v10168 = vsel %vm9858, %v10162, 0
        %10170 = vmatpush.bf16.msra.mxu0 0
        %10171 = vmatpush.bf16.msra.mxu0 0
        %10172 = vmatpush.bf16.msra.mxu0 0
        %10173 = vmatpush.bf16.msra.mxu0 0
        %10174 = vmatpush.bf16.msra.mxu0 0
        %10175 = vmatpush.bf16.msra.mxu0 0
        %10176 = vmatpush.bf16.msra.mxu0 %v10168
        %10177 = vmatpush.bf16.msra.mxu0 %v10160
        %10178 = vmatmul.bf16.gmra.mxu0 %v10165
        %v10179 = vpop.f32.mrf.mxu0
        %v10180 = vadd.f32 0.0, %v10179
        %v10181 = vpop.f32.mrf.mxu0
        %v10182 = vadd.f32 0.0, %v10181
        %10183 = vdwg.mxu0
        %10184 = vrot.lane.b32.xlu0 %v10003, 114
        %v10185 = vpop.permute.xlu0 %10184
        %10186 = vrot.lane.b32.xlu0 %v10004, 114
        %v10187 = vpop.permute.xlu0 %10186
        %v10190 = vsel %vm9858, %v10187, 0
        %10192 = vmatpush.bf16.msra.mxu0 0
        %10193 = vmatpush.bf16.msra.mxu0 0
        %10194 = vmatpush.bf16.msra.mxu0 0
        %10195 = vmatpush.bf16.msra.mxu0 0
        %10196 = vmatpush.bf16.msra.mxu0 0
        %10197 = vmatpush.bf16.msra.mxu0 0
        %10198 = vmatpush.bf16.msra.mxu0 %v10190
        %10199 = vmatpush.bf16.msra.mxu0 %v10185
        %10200 = vmatmul.bf16.gmra.mxu0 %v10165
        %v10201 = vpop.f32.mrf.mxu0
        %v10202 = vadd.f32 0.0, %v10201
        %v10203 = vpop.f32.mrf.mxu0
        %v10204 = vadd.f32 0.0, %v10203
        %10205 = vdwg.mxu0
        %v10206 = vld [vmem:[#allocation12] sm:$0x1]
        %v10207 = vld [vmem:[#allocation19] sm:$0xf]
        %v10208 = vld [vmem:[#allocation19 + $0x4] sm:$0x3]
        %v10209 = vpack.c.bf16 %v10180, %v10180
        %v10210 = vpack.c.bf16 %v10182, %v10182
        %v10211 = vpack.c.bf16 %v10202, %v10202
        %v10212 = vpack.c.bf16 %v10204, %v10204
        %v10213 = vmul.f32 %v10180, %v10180
        %v10214 = vmul.f32 %v10182, %v10182
        %v10215 = vpack.c.bf16 %v10213, %v10213
        %v10216 = vpack.c.bf16 %v10214, %v10214
        %v10217 = vmul.f32 %v10202, %v10202
        %v10218 = vmul.f32 %v10204, %v10204
        %v10219 = vpack.c.bf16 %v10217, %v10217
        %v10220 = vpack.c.bf16 %v10218, %v10218
        %v10221 = vmul.f32 %v10180, %v10202
        %v10222 = vmul.f32 %v10182, %v10204
        %v10223 = vpack.c.bf16 %v10221, %v10221
        %v10224 = vpack.c.bf16 %v10222, %v10222
        %v10227 = vunpack.c.l.b16 %v10209
        %v10228 = vunpack.c.l.b16 %v10210
        %v10229 = vpack.c.b16 %v10228, %v10227
        %v10232 = vunpack.c.l.b16 %v10211
        %v10233 = vunpack.c.l.b16 %v10212
        %v10234 = vpack.c.b16 %v10233, %v10232
        %v10237 = vunpack.c.l.b16 %v10215
        %v10238 = vunpack.c.l.b16 %v10216
        %v10239 = vpack.c.b16 %v10238, %v10237
        %v10242 = vunpack.c.l.b16 %v10219
        %v10243 = vunpack.c.l.b16 %v10220
        %v10244 = vpack.c.b16 %v10243, %v10242
        %v10247 = vunpack.c.l.b16 %v10223
        %v10248 = vunpack.c.l.b16 %v10224
        %v10249 = vpack.c.b16 %v10248, %v10247
        %v10252 = vunpack.c.l.b16 %v10207
        %v10253 = vunpack.c.l.b16 %v10208
        %v10254 = vpack.c.b16 %v10253, %v10252
        %vm10255 = vcmask 97280
        %v10257 = vsel %vm10255, %v10229, 0
        %v10260 = vsel %vm10255, %v10234, 0
        %v10263 = vsel %vm10255, %v10239, 0
        %v10266 = vsel %vm10255, %v10244, 0
        %v10269 = vsel %vm10255, %v10249, 0
        %v10272 = vsel %vm6807, %v10254, 0
        %10274 = vmatpush.bf16.msra.mxu0 0
        %10275 = vmatpush.bf16.msra.mxu0 0
        %10276 = vmatpush.bf16.msra.mxu0 0
        %10277 = vmatpush.bf16.msra.mxu0 0
        %10278 = vmatpush.bf16.msra.mxu0 0
        %10279 = vmatpush.bf16.msra.mxu0 0
        %10280 = vmatpush.bf16.msra.mxu0 0
        %10281 = vmatpush.bf16.msra.mxu0 %v10272
        %10282 = vmatmul.bf16.gmra.mxu0 %v10257
        %v10283 = vpop.f32.mrf.mxu0
        %v10284 = vadd.f32 0.0, %v10283
        %v10285 = vpop.f32.mrf.mxu0
        %v10286 = vadd.f32 0.0, %v10285
        %10287 = vmatmul.bf16.gmra.mxu0 %v10260
        %v10288 = vpop.f32.mrf.mxu0
        %v10289 = vadd.f32 0.0, %v10288
        %v10290 = vpop.f32.mrf.mxu0
        %v10291 = vadd.f32 0.0, %v10290
        %10292 = vmatmul.bf16.gmra.mxu0 %v10263
        %v10293 = vpop.f32.mrf.mxu0
        %v10294 = vadd.f32 0.0, %v10293
        %v10295 = vpop.f32.mrf.mxu0
        %v10296 = vadd.f32 0.0, %v10295
        %10297 = vmatmul.bf16.gmra.mxu0 %v10266
        %v10298 = vpop.f32.mrf.mxu0
        %v10299 = vadd.f32 0.0, %v10298
        %v10300 = vpop.f32.mrf.mxu0
        %v10301 = vadd.f32 0.0, %v10300
        %10302 = vmatmul.bf16.gmra.mxu0 %v10269
        %v10303 = vpop.f32.mrf.mxu0
        %v10304 = vadd.f32 0.0, %v10303
        %v10305 = vpop.f32.mrf.mxu0
        %v10306 = vadd.f32 0.0, %v10305
        %10307 = vdwg.mxu0
        %v10308 = vpack.c.bf16 %v10284, %v10284
        %v10309 = vpack.c.bf16 %v10286, %v10286
        %v10310 = vpack.c.bf16 %v10289, %v10289
        %v10311 = vpack.c.bf16 %v10291, %v10291
        %v10312 = vpack.c.bf16 %v10294, %v10294
        %v10313 = vpack.c.bf16 %v10296, %v10296
        %v10314 = vpack.c.bf16 %v10299, %v10299
        %v10315 = vpack.c.bf16 %v10301, %v10301
        %v10316 = vpack.c.bf16 %v10304, %v10304
        %v10317 = vpack.c.bf16 %v10306, %v10306
        %v10320 = vunpack.c.l.b16 %v10308
        %v10321 = vunpack.c.l.b16 %v10309
        %v10322 = vpack.c.b16 %v10321, %v10320
        %vm10324 = vcmask 130048
        %v10326 = vsel %vm10324, %v10206, 0
        %10328 = vmatpush.bf16.msra.mxu0 0
        %10329 = vmatpush.bf16.msra.mxu0 0
        %10330 = vmatpush.bf16.msra.mxu0 0
        %10331 = vmatpush.bf16.msra.mxu0 0
        %10332 = vmatpush.bf16.msra.mxu0 0
        %10333 = vmatpush.bf16.msra.mxu0 0
        %10334 = vmatpush.bf16.msra.mxu0 0
        %10335 = vmatpush.bf16.msra.mxu0 %v10322
        %10336 = vmatmul.bf16.gmra.mxu0 %v10326
        %v10337 = vpop.f32.mrf.mxu0
        %v10338 = vadd.f32 0.0, %v10337
        %v10339 = vpop.f32.mrf.mxu0
        %10340 = vdwg.mxu0
        %v10343 = vunpack.c.l.b16 %v10310
        %v10344 = vunpack.c.l.b16 %v10311
        %v10345 = vpack.c.b16 %v10344, %v10343
        %10347 = vmatpush.bf16.msra.mxu0 0
        %10348 = vmatpush.bf16.msra.mxu0 0
        %10349 = vmatpush.bf16.msra.mxu0 0
        %10350 = vmatpush.bf16.msra.mxu0 0
        %10351 = vmatpush.bf16.msra.mxu0 0
        %10352 = vmatpush.bf16.msra.mxu0 0
        %10353 = vmatpush.bf16.msra.mxu0 0
        %10354 = vmatpush.bf16.msra.mxu0 %v10345
        %10355 = vmatmul.bf16.gmra.mxu0 %v10326
        %v10356 = vpop.f32.mrf.mxu0
        %v10357 = vadd.f32 0.0, %v10356
        %v10358 = vpop.f32.mrf.mxu0
        %10359 = vdwg.mxu0
        %v10362 = vunpack.c.l.b16 %v10312
        %v10363 = vunpack.c.l.b16 %v10313
        %v10364 = vpack.c.b16 %v10363, %v10362
        %10366 = vmatpush.bf16.msra.mxu0 0
        %10367 = vmatpush.bf16.msra.mxu0 0
        %10368 = vmatpush.bf16.msra.mxu0 0
        %10369 = vmatpush.bf16.msra.mxu0 0
        %10370 = vmatpush.bf16.msra.mxu0 0
        %10371 = vmatpush.bf16.msra.mxu0 0
        %10372 = vmatpush.bf16.msra.mxu0 0
        %10373 = vmatpush.bf16.msra.mxu0 %v10364
        %10374 = vmatmul.bf16.gmra.mxu0 %v10326
        %v10375 = vpop.f32.mrf.mxu0
        %v10376 = vadd.f32 0.0, %v10375
        %v10377 = vpop.f32.mrf.mxu0
        %10378 = vdwg.mxu0
        %v10381 = vunpack.c.l.b16 %v10314
        %v10382 = vunpack.c.l.b16 %v10315
        %v10383 = vpack.c.b16 %v10382, %v10381
        %10385 = vmatpush.bf16.msra.mxu0 0
        %10386 = vmatpush.bf16.msra.mxu0 0
        %10387 = vmatpush.bf16.msra.mxu0 0
        %10388 = vmatpush.bf16.msra.mxu0 0
        %10389 = vmatpush.bf16.msra.mxu0 0
        %10390 = vmatpush.bf16.msra.mxu0 0
        %10391 = vmatpush.bf16.msra.mxu0 0
        %10392 = vmatpush.bf16.msra.mxu0 %v10383
        %10393 = vmatmul.bf16.gmra.mxu0 %v10326
        %v10394 = vpop.f32.mrf.mxu0
        %v10395 = vadd.f32 0.0, %v10394
        %v10396 = vpop.f32.mrf.mxu0
        %10397 = vdwg.mxu0
        %v10400 = vunpack.c.l.b16 %v10316
        %v10401 = vunpack.c.l.b16 %v10317
        %v10402 = vpack.c.b16 %v10401, %v10400
        %10404 = vmatpush.bf16.msra.mxu0 0
        %10405 = vmatpush.bf16.msra.mxu0 0
        %10406 = vmatpush.bf16.msra.mxu0 0
        %10407 = vmatpush.bf16.msra.mxu0 0
        %10408 = vmatpush.bf16.msra.mxu0 0
        %10409 = vmatpush.bf16.msra.mxu0 0
        %10410 = vmatpush.bf16.msra.mxu0 0
        %10411 = vmatpush.bf16.msra.mxu0 %v10402
        %10412 = vmatmul.bf16.gmra.mxu0 %v10326
        %v10413 = vpop.f32.mrf.mxu0
        %v10414 = vadd.f32 0.0, %v10413
        %v10415 = vpop.f32.mrf.mxu0
        %10416 = vdwg.mxu0
        %v10417 = vmul.f32 %v10338, %v10338
        %v10418 = vsub.f32 %v10376, %v10417
        %v10419 = vmul.f32 %v10357, %v10357
        %v10420 = vsub.f32 %v10395, %v10419
        %v10421 = vmul.f32 %v10338, %v10357
        %v10422 = vsub.f32 %v10414, %v10421
        %v10423 = vmul.f32 %v10422, 2.0
        %v10424 = vadd.f32 %v10423, 0.0009
        %v10425 = vadd.f32 %v10418, %v10420
        %v10426 = vadd.f32 %v10425, 0.0009
        %v10427 = vrcp.pop %v10426
        %v10428 = vmul.f32 %v10424, %v10427
        %v10429 = vadd.f32 %v10338, 0.5
        %v10430 = vadd.f32 %v10357, 0.5
        %v10431 = vmul.f32 %v10429, 2.0
        %v10432 = vmul.f32 %v10431, %v10430
        %v10433 = vadd.f32 %v10432, 0.0001
        %v10434 = vmul.f32 %v10429, %v10429
        %v10435 = vmul.f32 %v10430, %v10430
        %v10436 = vadd.f32 %v10434, %v10435
        %v10437 = vadd.f32 %v10436, 0.0001
        %v10438 = vrcp.pop %v10437
        %v10439 = vmul.f32 %v10433, %v10438
        %v10440 = vmul.f32 %v10439, %v10428
        %vm10441 = vcmask 9216
        %v10442 = vsel %vm10441, %v10440, 0.0
        %10443 = vadd.xlane.f32.xlu0 %v10442
        %v10444 = vpop.xlane.xlu0 %10443
        %v10445 = vrot.slane %v10444, 4
        %v10446 = vadd.f32 %v10444, %v10445
        %v10447 = vrot.slane %v10446, 2
        %v10448 = vadd.f32 %v10446, %v10447
        %v10449 = vrot.slane %v10448, 1
        %v10450 = vadd.f32 %v10448, %v10449
        %s10451 = vtos %v10450
        %v10452 = vrcp.pop 4.0
        %v10453 = vmul.f32 4.0, %v10452
        %v10454 = vsub.f32 1.0, %v10453
        %v10455 = vmul.f32 %v10452, %v10454
        %v10456 = vadd.f32 %v10452, %v10455
        %vm10457 = vweird.f32 %v10452
        %v10458 = vsel %vm10457, %v10452, %v10456
        %s10459 = vtos %v10458
        %s10460 = smul.f32 %s10451, %s10459
        %s10461 = smax.f32 %s10460, 0.0
        %vm10462 = vcmp.eq.s32.totalorder %v1009, 4
        %v10463 = vstv %s10461
        %v10464 = vsel %vm10462, %v10463, %v10151
        %10465 = vst [vmem:[%s814] sm:$0xff] %v10464
        %p10466 = scmp.lt.s32.totalorder %s40, 1
        %s10467 = scalar_select %p10466, %s40, 1
        %s10468 = smul.addr %s10467, 8
        %s10469 = scalar_lea.vmem %s16, %s10468
        // Predicated region
        $region149: #{g_ms_ssim_loss.1} parent=83 // pred_check
          %p10470 = pneg %p404
        $region150: #{g_ms_ssim_loss.1} parent=83 // pred_check_branch
          %10472 = sbr.rel (%p10470) target = $region152
        $region151: #{g_ms_ssim_loss.1} parent=83 // pred_region
          _
        $region152: #{g_ms_ssim_loss.1} parent=83 // pred_fallthru
          _
      $region84: #{g_ms_ssim_loss.1} parent=5 // pred_fallthru
        _
      %p10473 = scmp.le.s32.totalorder 2, %s35
      // Predicated region
      $region153: #{g_ms_ssim_loss.1} parent=5 // pred_check
        %p10474 = pneg %p10473
      $region154: #{g_ms_ssim_loss.1} parent=5 // pred_check_branch
        %10476 = sbr.rel (%p10474) target = $region156
      $region155: #{g_ms_ssim_loss.1} parent=5 // pred_region
        %s10477 = ssub.s32 %s35, 2
        // Predicated region
        $region157: #{g_ms_ssim_loss.1} parent=155 // pred_check
          %p10478 = pneg %p410
        $region158: #{g_ms_ssim_loss.1} parent=155 // pred_check_branch
          %10480 = sbr.rel (%p10478) target = $region160
        $region159: #{g_ms_ssim_loss.1} parent=155 // pred_region
          %p10481 = scmp.lt.s32.totalorder %s41, 1
          %s10482 = scalar_select %p10481, %s41, 1
          %s10483 = smul.addr %s10482, 8
          %s10484 = scalar_lea.vmem %s16, %s10483
        $region160: #{g_ms_ssim_loss.1} parent=155 // pred_fallthru
          _
      $region156: #{g_ms_ssim_loss.1} parent=5 // pred_fallthru
        _
    $region6: #{g_ms_ssim_loss.1} parent=1 // loop_footer
      %s39 = sadd.s32 1, %s35
    $region7: #{g_ms_ssim_loss.1} parent=1 // loop_footer_branch
      %34 = sbr.rel target = $region3
    $region8: #{g_ms_ssim_loss.1} parent=1 // loop_exit
      _
    %10485 = vsyncpa [#allocation3], 1
    %s10486 = scalar_lea.sflag [#allocation3], 1
    %10487 = vsyncpa %s10486, 1
    %10488 = vsyncpa [#allocation5], 1
    %s10489 = scalar_lea.sflag [#allocation5], 1
    %10490 = vsyncpa %s10489, 1
    %10491 = vsyncpa [#allocation8], 1
    %10492 = vsyncpa [#allocation11], 1
    %10493 = vsyncpa [#allocation14], 1
    %10494 = vsyncpa [#allocation17], 1
    %10495 = vsyncpa [#allocation20], 1
    %10496 = vsyncpa [#allocation23], 1
    %10497 = vsyncpa [#allocation26], 1

</llo_original>
